<compile_context>
chip_gen: v7x
topology: tpu7x:2x2x1
jax: 0.10.0
libtpu: 0.0.40
codegen_flags: <defaults>
</compile_context>

<pallas_src>
import math
from functools import partial

import jax
import jax.numpy as jnp
from jax.experimental import pallas as pl
from jax.experimental.pallas import tpu as pltpu

D, H, Z = 784, 512, 2          # flattened 28x28 image, hidden width, z_dim
XE = D + 2 * Z                 # packed per-sample row: [x | e1 | e2]
NH = 4 * Z                     # fused z-heads: mean, std, sec_mean, sec_std
SM_ROWS = 8                    # rows of the packed small-parameter array
EPS = 1e-8


# ---------------------------------------------------------------------------
# kernel helpers (traced inside the Pallas kernel body)
# ---------------------------------------------------------------------------
def _softplus(x):
    # stable: never exponentiates a positive argument
    return jnp.maximum(x, 0.0) + jnp.log(1.0 + jnp.exp(-jnp.abs(x)))


def _sigmoid(x):
    # stable sigmoid; reciprocal on the EUP; clipped so log(1-|d|+eps) is safe
    e = jnp.exp(-jnp.abs(x))
    s = jnp.where(x >= 0.0, 1.0, e) * pl.reciprocal(1.0 + e, approx=True)
    return jnp.clip(s, 0.0, 1.0)


def _decode(z, w1_r0, w1_r1, b1, w2_ref, b2):
    # First layer has K = Z = 2: VPU broadcast-FMAs, not a wasted MXU tile.
    h = z[:, 0:1] * w1_r0 + z[:, 1:2] * w1_r1 + b1                 # (BT, H)
    h = jnp.maximum(h, 0.0)
    # Second layer: bf16 operands, f32 accumulation on the MXU.
    logits = jnp.dot(h.astype(jnp.bfloat16), w2_ref[...],
                     preferred_element_type=jnp.float32) + b2
    return _sigmoid(logits)                                        # (BT, D)


# ---------------------------------------------------------------------------
# the Pallas kernel: VAE forward for one batch tile + ELBO accumulation
# ---------------------------------------------------------------------------
def vae_elbo_kernel(xe_ref, enc_w1_ref, heads_w_ref, dw2_ref, sdw2_ref,
                    sm_ref, out_ref):
    @pl.when(pl.program_id(0) == 0)
    def _init():
        out_ref[...] = jnp.zeros_like(out_ref)

    # ----- unpack the consolidated small parameters (static slices) -----
    sm = sm_ref[...]                                   # (8, 2H) f32
    enc_b1 = sm[0:1, :]                                # (1, 2H)
    heads_b = sm[1:2, 0:NH]                            # (1, 4Z)
    dw1_r0, dw1_r1 = sm[2:3, 0:H], sm[2:3, H:2 * H]
    sdw1_r0, sdw1_r1 = sm[3:4, 0:H], sm[3:4, H:2 * H]
    db1, sdb1 = sm[4:5, 0:H], sm[4:5, H:2 * H]
    db2 = sm[5:6, 0:D]
    sdb2 = sm[6:7, 0:D]

    # ----- packed per-sample input: [x | e1 | e2] -----
    xe = xe_ref[...]                                   # (BT, D + 2Z) f32
    x = xe[:, 0:D]
    e1 = xe[:, D:D + Z]
    e2 = xe[:, D + Z:D + 2 * Z]

    # ----- both encoder first layers in one bf16 matmul -----
    h_all = jnp.dot(x.astype(jnp.bfloat16), enc_w1_ref[...],
                    preferred_element_type=jnp.float32) + enc_b1
    h_all = jnp.maximum(h_all, 0.0)                    # (BT, 2H): [h | sec_h]

    # ----- all four Z-heads in one block-diagonal bf16 matmul -----
    heads = jnp.dot(h_all.astype(jnp.bfloat16), heads_w_ref[...],
                    preferred_element_type=jnp.float32) + heads_b
    mean = heads[:, 0:Z]
    std = _softplus(heads[:, Z:2 * Z])
    sec_mean = heads[:, 2 * Z:3 * Z]
    sec_std = _softplus(heads[:, 3 * Z:4 * Z])

    # ----- reparameterize + decode; reduce early to keep live set small -----
    z = std * e1 + mean
    out = _decode(z, dw1_r0, dw1_r1, db1, dw2_ref, db2)            # (BT, D)
    l_rec = jnp.sum(jnp.log(1.0 - jnp.abs(out - x) + EPS),
                    axis=-1, keepdims=True)                        # (BT, 1)

    sec_z = sec_std * e2 + sec_mean
    sec_out = _decode(sec_z, sdw1_r0, sdw1_r1, sdb1, sdw2_ref, sdb2)
    sec_l_rec = jnp.sum(jnp.log(1.0 - jnp.abs(sec_out - out) + EPS),
                        axis=-1, keepdims=True)                    # (BT, 1)

    var = std * std
    kld = jnp.sum(0.5 * (var + mean * mean - 1.0 - jnp.log(var + EPS)),
                  axis=-1, keepdims=True)                          # (BT, 1)

    elbo = kld - sec_l_rec - l_rec                                 # (BT, 1)
    out_ref[...] = out_ref[...] + jnp.sum(elbo, axis=0, keepdims=True)


# ---------------------------------------------------------------------------
# wrapper: fuse / pack / down-cast params once, batch-gridded pallas_call
# ---------------------------------------------------------------------------
def pack_params(params):
    """Fuse / pack / down-cast the 20 per-layer tensors into 5 kernel inputs."""
    (ew1, eb1, ewm, ebm, ews, ebs, dw1, db1, dw2, db2,
     sew1, seb1, sewm, sebm, sews, sebs, sdw1, sdb1, sdw2, sdb2) = params

    # both encoder first layers fused along N; bf16 weights, f32 accumulation
    enc_w1 = jnp.concatenate([ew1, sew1], axis=1).astype(jnp.bfloat16)   # (D,2H)

    # block-diagonal fusion of the four (H, Z) heads -> one (2H, 4Z) matmul
    zb = jnp.zeros((H, Z), jnp.float32)
    heads_w = jnp.concatenate(
        [jnp.concatenate([ewm, ews, zb, zb], axis=1),
         jnp.concatenate([zb, zb, sewm, sews], axis=1)],
        axis=0).astype(jnp.bfloat16)                                     # (2H,4Z)

    dw2_bf = dw2.astype(jnp.bfloat16)                                    # (H, D)
    sdw2_bf = sdw2.astype(jnp.bfloat16)

    # every remaining tiny f32 tensor packed into one (8, 2H) array
    sm = jnp.zeros((SM_ROWS, 2 * H), jnp.float32)
    sm = sm.at[0, :].set(jnp.concatenate([eb1, seb1], axis=1)[0])
    sm = sm.at[1, 0:NH].set(jnp.concatenate([ebm, ebs, sebm, sebs], axis=1)[0])
    sm = sm.at[2, 0:H].set(dw1[0]);  sm = sm.at[2, H:2 * H].set(dw1[1])
    sm = sm.at[3, 0:H].set(sdw1[0]); sm = sm.at[3, H:2 * H].set(sdw1[1])
    sm = sm.at[4, 0:H].set(db1[0]);  sm = sm.at[4, H:2 * H].set(sdb1[0])
    sm = sm.at[5, 0:D].set(db2[0])
    sm = sm.at[6, 0:D].set(sdb2[0])
    return enc_w1, heads_w, dw2_bf, sdw2_bf, sm


@partial(jax.jit, static_argnames=("b_tile",))
def vae_forward(x, e1, e2, packed, b_tile=128):
    """Negative average ELBO for the batch (reference VAE.forward)."""
    enc_w1, heads_w, dw2, sdw2, sm = packed
    batch = x.shape[0]
    bt = min(b_tile, batch)
    assert batch % bt == 0 and bt % 8 == 0, "batch must tile into multiples of 8"

    xe = jnp.concatenate([x, e1, e2], axis=1)            # (B, D + 2Z)
    const2 = lambda b: (0, 0)                            # weights: fetched once

    res = pl.pallas_call(
        vae_elbo_kernel,
        out_shape=jax.ShapeDtypeStruct((1, 1), jnp.float32),
        grid_spec=pltpu.PrefetchScalarGridSpec(
            num_scalar_prefetch=0,
            grid=(batch // bt,),
            in_specs=[
                pl.BlockSpec((bt, XE), lambda b: (b, 0)),      # batch-tiled
                pl.BlockSpec((D, 2 * H), const2),              # VMEM-resident
                pl.BlockSpec((2 * H, NH), const2),             # weights (constant
                pl.BlockSpec((H, D), const2),                  #  block index ->
                pl.BlockSpec((H, D), const2),                  #  DMA'd once)
                pl.BlockSpec((SM_ROWS, 2 * H), const2),
            ],
            out_specs=pl.BlockSpec((1, 1), lambda b: (0, 0)),
        ),
        compiler_params=pltpu.CompilerParams(
            # batch axis accumulates into one output block -> reduction axis
            dimension_semantics=("arbitrary",),
            vmem_limit_bytes=32 * 1024 * 1024,
        ),
    )(xe, enc_w1, heads_w, dw2, sdw2, sm)
    return res[0, 0] / batch                              # .mean() over batch


# ---------------------------------------------------------------------------
# pure-JAX reference (same packed params, exact sigmoid) for validation
# ---------------------------------------------------------------------------
def vae_ref(x, e1, e2, packed):
    enc_w1, heads_w, dw2, sdw2, sm = packed

    def dec(zz, r0, r1, b1, w2, b2):
        h = jnp.maximum(zz[:, 0:1] * r0 + zz[:, 1:2] * r1 + b1, 0.0)
        logits = jnp.dot(h.astype(jnp.bfloat16), w2,
                         preferred_element_type=jnp.float32) + b2
        return jnp.clip(jax.nn.sigmoid(logits), 0.0, 1.0)

    h_all = jnp.maximum(
        jnp.dot(x.astype(jnp.bfloat16), enc_w1,
                preferred_element_type=jnp.float32) + sm[0:1, :], 0.0)
    heads = jnp.dot(h_all.astype(jnp.bfloat16), heads_w,
                    preferred_element_type=jnp.float32) + sm[1:2, 0:NH]
    mean, std = heads[:, 0:Z], jax.nn.softplus(heads[:, Z:2 * Z])
    sec_mean, sec_std = heads[:, 2 * Z:3 * Z], jax.nn.softplus(heads[:, 3 * Z:4 * Z])
    out = dec(std * e1 + mean, sm[2:3, 0:H], sm[2:3, H:2 * H], sm[4:5, 0:H],
              dw2, sm[5:6, 0:D])
    sec_out = dec(sec_std * e2 + sec_mean, sm[3:4, 0:H], sm[3:4, H:2 * H],
                  sm[4:5, H:2 * H], sdw2, sm[6:7, 0:D])
    l_rec = jnp.log(1.0 - jnp.abs(out - x) + EPS).sum(-1)
    sec_l_rec = jnp.log(1.0 - jnp.abs(sec_out - out) + EPS).sum(-1)
    kld = (0.5 * (std ** 2 + mean ** 2 - 1.0 - jnp.log(std ** 2 + EPS))).sum(-1)
    return jnp.mean(kld - sec_l_rec - l_rec)


# ---------------------------------------------------------------------------
# deterministic parameter init (PyTorch-Linear-style uniform(-1/sqrt(fan_in)))
# ---------------------------------------------------------------------------
def linear_params(key, fan_in, fan_out):
    kw, kb = jax.random.split(key)
    bound = 1.0 / math.sqrt(fan_in)
    w = jax.random.uniform(kw, (fan_in, fan_out), jnp.float32, -bound, bound)
    b = jax.random.uniform(kb, (1, fan_out), jnp.float32, -bound, bound)
    return w, b


def make_params(key):
    keys = jax.random.split(key, 10)
    ew1, eb1 = linear_params(keys[0], D, H)
    ewm, ebm = linear_params(keys[1], H, Z)
    ews, ebs = linear_params(keys[2], H, Z)
    dw1, db1 = linear_params(keys[3], Z, H)
    dw2, db2 = linear_params(keys[4], H, D)
    sew1, seb1 = linear_params(keys[5], D, H)
    sewm, sebm = linear_params(keys[6], H, Z)
    sews, sebs = linear_params(keys[7], H, Z)
    sdw1, sdb1 = linear_params(keys[8], Z, H)
    sdw2, sdb2 = linear_params(keys[9], H, D)
    return (ew1, eb1, ewm, ebm, ews, ebs, dw1, db1, dw2, db2,
            sew1, seb1, sewm, sebm, sews, sebs, sdw1, sdb1, sdw2, sdb2)


if __name__ == "__main__":
    root = jax.random.PRNGKey(0)
    kx, ke1, ke2, kp = jax.random.split(root, 4)

    B = 16                                               # small demo batch
    x = jax.random.uniform(kx, (B, D), jnp.float32)      # pixel values in [0,1)
    e1 = jax.random.normal(ke1, (B, Z), jnp.float32)     # reparam noise, VAE 1
    e2 = jax.random.normal(ke2, (B, Z), jnp.float32)     # reparam noise, VAE 2
    packed = pack_params(make_params(kp))

    # b_tile=8 gives a 2-step batch grid (exercises weight-resident
    # accumulation); use 128 (v5e) / 256 (v6e, v7x) for real training batches.
    elbo = jax.block_until_ready(vae_forward(x, e1, e2, packed, b_tile=8))
    assert elbo.shape == () and bool(jnp.isfinite(elbo))

    ref = float(vae_ref(x, e1, e2, packed))
    assert abs(float(elbo) - ref) <= 0.05 * abs(ref) + 1.0, (float(elbo), ref)
    print("KERNEL_OK")
</pallas_src>

<mosaic_0001>
module attributes {stable_mosaic.version = 11 : i64} {
  func.func @vae_elbo_kernel(%arg0: i32, %arg1: memref<8x788xf32, #tpu.memory_space<vmem>>, %arg2: memref<784x1024xbf16, #tpu.memory_space<vmem>>, %arg3: memref<1024x8xbf16, #tpu.memory_space<vmem>>, %arg4: memref<512x784xbf16, #tpu.memory_space<vmem>>, %arg5: memref<512x784xbf16, #tpu.memory_space<vmem>>, %arg6: memref<8x1024xf32, #tpu.memory_space<vmem>>, %arg7: memref<1x1xf32, #tpu.memory_space<vmem>>) attributes {dimension_semantics = [#tpu.dimension_semantics<arbitrary>], iteration_bounds = array<i64: 2>, scalar_prefetch = 0 : i64, scratch_operands = 0 : i64, tpu.core_type = #tpu.core_type<tc>, window_params = [{transform_indices = @transform_0, window_bounds = array<i64: 8, 788>}, {pipeline_mode = #tpu.pipeline_mode<synchronous>, transform_indices = @transform_1, window_bounds = array<i64: 784, 1024>}, {pipeline_mode = #tpu.pipeline_mode<synchronous>, transform_indices = @transform_2, window_bounds = array<i64: 1024, 8>}, {pipeline_mode = #tpu.pipeline_mode<synchronous>, transform_indices = @transform_3, window_bounds = array<i64: 512, 784>}, {pipeline_mode = #tpu.pipeline_mode<synchronous>, transform_indices = @transform_4, window_bounds = array<i64: 512, 784>}, {pipeline_mode = #tpu.pipeline_mode<synchronous>, transform_indices = @transform_5, window_bounds = array<i64: 8, 1024>}, {pipeline_mode = #tpu.pipeline_mode<synchronous>, transform_indices = @transform_6, window_bounds = array<i64: 1, 1>}]} {
    %c0_i32 = arith.constant 0 : i32
    %0 = arith.cmpi eq, %arg0, %c0_i32 : i32
    %1 = arith.extui %0 : i1 to i32
    %c0_i32_0 = arith.constant 0 : i32
    %2 = arith.cmpi ne, %1, %c0_i32_0 : i32
    scf.if %2 {
      %cst_51 = arith.constant 0.000000e+00 : f32
      %164 = vector.broadcast %cst_51 : f32 to vector<1x1xf32>
      %c0_52 = arith.constant 0 : index
      %c0_53 = arith.constant 0 : index
      %165 = vector.load %arg7[%c0_52, %c0_53] : memref<1x1xf32, #tpu.memory_space<vmem>>, vector<1x1xf32>
      tpu.vector_store %arg7[%c0_52, %c0_53], %164 {strides = array<i32>} : memref<1x1xf32, #tpu.memory_space<vmem>>, vector<1x1xf32>,
    } else {
    }
    %c0 = arith.constant 0 : index
    %c0_1 = arith.constant 0 : index
    %3 = vector.load %arg6[%c0, %c0_1] : memref<8x1024xf32, #tpu.memory_space<vmem>>, vector<8x1024xf32>
    %4 = vector.extract_strided_slice %3 {offsets = [0, 0], sizes = [1, 1024], strides = [1, 1]} : vector<8x1024xf32> to vector<1x1024xf32>
    %5 = vector.extract_strided_slice %3 {offsets = [1, 0], sizes = [1, 8], strides = [1, 1]} : vector<8x1024xf32> to vector<1x8xf32>
    %6 = vector.extract_strided_slice %3 {offsets = [2, 0], sizes = [1, 512], strides = [1, 1]} : vector<8x1024xf32> to vector<1x512xf32>
    %7 = vector.extract_strided_slice %3 {offsets = [2, 512], sizes = [1, 512], strides = [1, 1]} : vector<8x1024xf32> to vector<1x512xf32>
    %8 = vector.extract_strided_slice %3 {offsets = [3, 0], sizes = [1, 512], strides = [1, 1]} : vector<8x1024xf32> to vector<1x512xf32>
    %9 = vector.extract_strided_slice %3 {offsets = [3, 512], sizes = [1, 512], strides = [1, 1]} : vector<8x1024xf32> to vector<1x512xf32>
    %10 = vector.extract_strided_slice %3 {offsets = [4, 0], sizes = [1, 512], strides = [1, 1]} : vector<8x1024xf32> to vector<1x512xf32>
    %11 = vector.extract_strided_slice %3 {offsets = [4, 512], sizes = [1, 512], strides = [1, 1]} : vector<8x1024xf32> to vector<1x512xf32>
    %12 = vector.extract_strided_slice %3 {offsets = [5, 0], sizes = [1, 784], strides = [1, 1]} : vector<8x1024xf32> to vector<1x784xf32>
    %13 = vector.extract_strided_slice %3 {offsets = [6, 0], sizes = [1, 784], strides = [1, 1]} : vector<8x1024xf32> to vector<1x784xf32>
    %c0_2 = arith.constant 0 : index
    %c0_3 = arith.constant 0 : index
    %14 = vector.load %arg1[%c0_2, %c0_3] : memref<8x788xf32, #tpu.memory_space<vmem>>, vector<8x788xf32>
    %15 = vector.extract_strided_slice %14 {offsets = [0, 0], sizes = [8, 784], strides = [1, 1]} : vector<8x788xf32> to vector<8x784xf32>
    %16 = vector.extract_strided_slice %14 {offsets = [0, 784], sizes = [8, 2], strides = [1, 1]} : vector<8x788xf32> to vector<8x2xf32>
    %17 = vector.extract_strided_slice %14 {offsets = [0, 786], sizes = [8, 2], strides = [1, 1]} : vector<8x788xf32> to vector<8x2xf32>
    %18 = arith.truncf %15 : vector<8x784xf32> to vector<8x784xbf16>
    %c0_4 = arith.constant 0 : index
    %c0_5 = arith.constant 0 : index
    %19 = vector.load %arg2[%c0_4, %c0_5] : memref<784x1024xbf16, #tpu.memory_space<vmem>>, vector<784x1024xbf16>
    %cst = arith.constant dense<0.000000e+00> : vector<8x1024xf32>
    %20 = tpu.matmul %18, %19, %cst {dimension_numbers = #tpu.dot_dimension_numbers<[1], [0], [0], [1], [0, 0, 1, 1], [], []>} : vector<8x784xbf16>, vector<784x1024xbf16>, vector<8x1024xf32> -> vector<8x1024xf32>
    %21 = vector.broadcast %4 : vector<1x1024xf32> to vector<8x1024xf32>
    %22 = arith.addf %20, %21 : vector<8x1024xf32>
    %cst_6 = arith.constant 0.000000e+00 : f32
    %23 = vector.broadcast %cst_6 : f32 to vector<8x1024xf32>
    %24 = arith.maximumf %22, %23 : vector<8x1024xf32>
    %25 = arith.truncf %24 : vector<8x1024xf32> to vector<8x1024xbf16>
    %c0_7 = arith.constant 0 : index
    %c0_8 = arith.constant 0 : index
    %26 = vector.load %arg3[%c0_7, %c0_8] : memref<1024x8xbf16, #tpu.memory_space<vmem>>, vector<1024x8xbf16>
    %cst_9 = arith.constant dense<0.000000e+00> : vector<8x8xf32>
    %27 = tpu.matmul %25, %26, %cst_9 {dimension_numbers = #tpu.dot_dimension_numbers<[1], [0], [0], [1], [0, 0, 1, 1], [], []>} : vector<8x1024xbf16>, vector<1024x8xbf16>, vector<8x8xf32> -> vector<8x8xf32>
    %28 = vector.broadcast %5 : vector<1x8xf32> to vector<8x8xf32>
    %29 = arith.addf %27, %28 : vector<8x8xf32>
    %30 = vector.extract_strided_slice %29 {offsets = [0, 0], sizes = [8, 2], strides = [1, 1]} : vector<8x8xf32> to vector<8x2xf32>
    %31 = vector.extract_strided_slice %29 {offsets = [0, 2], sizes = [8, 2], strides = [1, 1]} : vector<8x8xf32> to vector<8x2xf32>
    %cst_10 = arith.constant 0.000000e+00 : f32
    %32 = vector.broadcast %cst_10 : f32 to vector<8x2xf32>
    %33 = arith.maximumf %31, %32 : vector<8x2xf32>
    %34 = math.absf %31 : vector<8x2xf32>
    %cst_11 = arith.constant 0.000000e+00 : f32
    %35 = vector.broadcast %cst_11 : f32 to vector<8x2xf32>
    %36 = arith.subf %35, %34 : vector<8x2xf32>
    %37 = math.exp %36 : vector<8x2xf32>
    %cst_12 = arith.constant 1.000000e+00 : f32
    %38 = vector.broadcast %cst_12 : f32 to vector<8x2xf32>
    %39 = arith.addf %38, %37 : vector<8x2xf32>
    %40 = math.log %39 : vector<8x2xf32>
    %41 = arith.addf %33, %40 : vector<8x2xf32>
    %42 = vector.extract_strided_slice %29 {offsets = [0, 4], sizes = [8, 2], strides = [1, 1]} : vector<8x8xf32> to vector<8x2xf32>
    %43 = vector.extract_strided_slice %29 {offsets = [0, 6], sizes = [8, 2], strides = [1, 1]} : vector<8x8xf32> to vector<8x2xf32>
    %cst_13 = arith.constant 0.000000e+00 : f32
    %44 = vector.broadcast %cst_13 : f32 to vector<8x2xf32>
    %45 = arith.maximumf %43, %44 : vector<8x2xf32>
    %46 = math.absf %43 : vector<8x2xf32>
    %cst_14 = arith.constant 0.000000e+00 : f32
    %47 = vector.broadcast %cst_14 : f32 to vector<8x2xf32>
    %48 = arith.subf %47, %46 : vector<8x2xf32>
    %49 = math.exp %48 : vector<8x2xf32>
    %cst_15 = arith.constant 1.000000e+00 : f32
    %50 = vector.broadcast %cst_15 : f32 to vector<8x2xf32>
    %51 = arith.addf %50, %49 : vector<8x2xf32>
    %52 = math.log %51 : vector<8x2xf32>
    %53 = arith.addf %45, %52 : vector<8x2xf32>
    %54 = arith.mulf %41, %16 : vector<8x2xf32>
    %55 = arith.addf %54, %30 : vector<8x2xf32>
    %56 = vector.extract_strided_slice %55 {offsets = [0, 0], sizes = [8, 1], strides = [1, 1]} : vector<8x2xf32> to vector<8x1xf32>
    %57 = vector.broadcast %56 : vector<8x1xf32> to vector<8x512xf32>
    %58 = vector.broadcast %6 : vector<1x512xf32> to vector<8x512xf32>
    %59 = arith.mulf %57, %58 : vector<8x512xf32>
    %60 = vector.extract_strided_slice %55 {offsets = [0, 1], sizes = [8, 1], strides = [1, 1]} : vector<8x2xf32> to vector<8x1xf32>
    %61 = vector.broadcast %60 : vector<8x1xf32> to vector<8x512xf32>
    %62 = vector.broadcast %7 : vector<1x512xf32> to vector<8x512xf32>
    %63 = arith.mulf %61, %62 : vector<8x512xf32>
    %64 = arith.addf %59, %63 : vector<8x512xf32>
    %65 = vector.broadcast %10 : vector<1x512xf32> to vector<8x512xf32>
    %66 = arith.addf %64, %65 : vector<8x512xf32>
    %cst_16 = arith.constant 0.000000e+00 : f32
    %67 = vector.broadcast %cst_16 : f32 to vector<8x512xf32>
    %68 = arith.maximumf %66, %67 : vector<8x512xf32>
    %69 = arith.truncf %68 : vector<8x512xf32> to vector<8x512xbf16>
    %c0_17 = arith.constant 0 : index
    %c0_18 = arith.constant 0 : index
    %70 = vector.load %arg4[%c0_17, %c0_18] : memref<512x784xbf16, #tpu.memory_space<vmem>>, vector<512x784xbf16>
    %cst_19 = arith.constant dense<0.000000e+00> : vector<8x784xf32>
    %71 = tpu.matmul %69, %70, %cst_19 {dimension_numbers = #tpu.dot_dimension_numbers<[1], [0], [0], [1], [0, 0, 1, 1], [], []>} : vector<8x512xbf16>, vector<512x784xbf16>, vector<8x784xf32> -> vector<8x784xf32>
    %72 = vector.broadcast %12 : vector<1x784xf32> to vector<8x784xf32>
    %73 = arith.addf %71, %72 : vector<8x784xf32>
    %74 = math.absf %73 : vector<8x784xf32>
    %cst_20 = arith.constant 0.000000e+00 : f32
    %75 = vector.broadcast %cst_20 : f32 to vector<8x784xf32>
    %76 = arith.subf %75, %74 : vector<8x784xf32>
    %77 = math.exp %76 : vector<8x784xf32>
    %cst_21 = arith.constant 0.000000e+00 : f32
    %78 = vector.broadcast %cst_21 : f32 to vector<8x784xf32>
    %79 = arith.cmpf oge, %73, %78 : vector<8x784xf32>
    %cst_22 = arith.constant 1.000000e+00 : f32
    %80 = vector.broadcast %cst_22 : f32 to vector<8x784xf32>
    %81 = arith.select %79, %80, %77 : vector<8x784xi1>, vector<8x784xf32>
    %cst_23 = arith.constant 1.000000e+00 : f32
    %82 = vector.broadcast %cst_23 : f32 to vector<8x784xf32>
    %83 = arith.addf %82, %77 : vector<8x784xf32>
    %84 = tpu.reciprocal %83 {approx = true} : vector<8x784xf32> -> vector<8x784xf32>
    %85 = arith.mulf %81, %84 : vector<8x784xf32>
    %cst_24 = arith.constant 0.000000e+00 : f32
    %cst_25 = arith.constant 1.000000e+00 : f32
    %86 = vector.broadcast %cst_24 : f32 to vector<8x784xf32>
    %87 = arith.maximumf %86, %85 : vector<8x784xf32>
    %88 = vector.broadcast %cst_25 : f32 to vector<8x784xf32>
    %89 = arith.minimumf %88, %87 : vector<8x784xf32>
    %90 = arith.subf %89, %15 : vector<8x784xf32>
    %91 = math.absf %90 : vector<8x784xf32>
    %cst_26 = arith.constant 1.000000e+00 : f32
    %92 = vector.broadcast %cst_26 : f32 to vector<8x784xf32>
    %93 = arith.subf %92, %91 : vector<8x784xf32>
    %cst_27 = arith.constant 9.99999993E-9 : f32
    %94 = vector.broadcast %cst_27 : f32 to vector<8x784xf32>
    %95 = arith.addf %93, %94 : vector<8x784xf32>
    %96 = math.log %95 : vector<8x784xf32>
    %cst_28 = arith.constant dense<0.000000e+00> : vector<8xf32>
    %97 = vector.multi_reduction <add>, %96, %cst_28 [1] : vector<8x784xf32> to vector<8xf32>
    %98 = vector.shape_cast %97 : vector<8xf32> to vector<8x1xf32>
    %99 = arith.mulf %53, %17 : vector<8x2xf32>
    %100 = arith.addf %99, %42 : vector<8x2xf32>
    %101 = vector.extract_strided_slice %100 {offsets = [0, 0], sizes = [8, 1], strides = [1, 1]} : vector<8x2xf32> to vector<8x1xf32>
    %102 = vector.broadcast %101 : vector<8x1xf32> to vector<8x512xf32>
    %103 = vector.broadcast %8 : vector<1x512xf32> to vector<8x512xf32>
    %104 = arith.mulf %102, %103 : vector<8x512xf32>
    %105 = vector.extract_strided_slice %100 {offsets = [0, 1], sizes = [8, 1], strides = [1, 1]} : vector<8x2xf32> to vector<8x1xf32>
    %106 = vector.broadcast %105 : vector<8x1xf32> to vector<8x512xf32>
    %107 = vector.broadcast %9 : vector<1x512xf32> to vector<8x512xf32>
    %108 = arith.mulf %106, %107 : vector<8x512xf32>
    %109 = arith.addf %104, %108 : vector<8x512xf32>
    %110 = vector.broadcast %11 : vector<1x512xf32> to vector<8x512xf32>
    %111 = arith.addf %109, %110 : vector<8x512xf32>
    %cst_29 = arith.constant 0.000000e+00 : f32
    %112 = vector.broadcast %cst_29 : f32 to vector<8x512xf32>
    %113 = arith.maximumf %111, %112 : vector<8x512xf32>
    %114 = arith.truncf %113 : vector<8x512xf32> to vector<8x512xbf16>
    %c0_30 = arith.constant 0 : index
    %c0_31 = arith.constant 0 : index
    %115 = vector.load %arg5[%c0_30, %c0_31] : memref<512x784xbf16, #tpu.memory_space<vmem>>, vector<512x784xbf16>
    %cst_32 = arith.constant dense<0.000000e+00> : vector<8x784xf32>
    %116 = tpu.matmul %114, %115, %cst_32 {dimension_numbers = #tpu.dot_dimension_numbers<[1], [0], [0], [1], [0, 0, 1, 1], [], []>} : vector<8x512xbf16>, vector<512x784xbf16>, vector<8x784xf32> -> vector<8x784xf32>
    %117 = vector.broadcast %13 : vector<1x784xf32> to vector<8x784xf32>
    %118 = arith.addf %116, %117 : vector<8x784xf32>
    %119 = math.absf %118 : vector<8x784xf32>
    %cst_33 = arith.constant 0.000000e+00 : f32
    %120 = vector.broadcast %cst_33 : f32 to vector<8x784xf32>
    %121 = arith.subf %120, %119 : vector<8x784xf32>
    %122 = math.exp %121 : vector<8x784xf32>
    %cst_34 = arith.constant 0.000000e+00 : f32
    %123 = vector.broadcast %cst_34 : f32 to vector<8x784xf32>
    %124 = arith.cmpf oge, %118, %123 : vector<8x784xf32>
    %cst_35 = arith.constant 1.000000e+00 : f32
    %125 = vector.broadcast %cst_35 : f32 to vector<8x784xf32>
    %126 = arith.select %124, %125, %122 : vector<8x784xi1>, vector<8x784xf32>
    %cst_36 = arith.constant 1.000000e+00 : f32
    %127 = vector.broadcast %cst_36 : f32 to vector<8x784xf32>
    %128 = arith.addf %127, %122 : vector<8x784xf32>
    %129 = tpu.reciprocal %128 {approx = true} : vector<8x784xf32> -> vector<8x784xf32>
    %130 = arith.mulf %126, %129 : vector<8x784xf32>
    %cst_37 = arith.constant 0.000000e+00 : f32
    %cst_38 = arith.constant 1.000000e+00 : f32
    %131 = vector.broadcast %cst_37 : f32 to vector<8x784xf32>
    %132 = arith.maximumf %131, %130 : vector<8x784xf32>
    %133 = vector.broadcast %cst_38 : f32 to vector<8x784xf32>
    %134 = arith.minimumf %133, %132 : vector<8x784xf32>
    %135 = arith.subf %134, %89 : vector<8x784xf32>
    %136 = math.absf %135 : vector<8x784xf32>
    %cst_39 = arith.constant 1.000000e+00 : f32
    %137 = vector.broadcast %cst_39 : f32 to vector<8x784xf32>
    %138 = arith.subf %137, %136 : vector<8x784xf32>
    %cst_40 = arith.constant 9.99999993E-9 : f32
    %139 = vector.broadcast %cst_40 : f32 to vector<8x784xf32>
    %140 = arith.addf %138, %139 : vector<8x784xf32>
    %141 = math.log %140 : vector<8x784xf32>
    %cst_41 = arith.constant dense<0.000000e+00> : vector<8xf32>
    %142 = vector.multi_reduction <add>, %141, %cst_41 [1] : vector<8x784xf32> to vector<8xf32>
    %143 = vector.shape_cast %142 : vector<8xf32> to vector<8x1xf32>
    %144 = arith.mulf %41, %41 : vector<8x2xf32>
    %145 = arith.mulf %30, %30 : vector<8x2xf32>
    %146 = arith.addf %144, %145 : vector<8x2xf32>
    %cst_42 = arith.constant 1.000000e+00 : f32
    %147 = vector.broadcast %cst_42 : f32 to vector<8x2xf32>
    %148 = arith.subf %146, %147 : vector<8x2xf32>
    %cst_43 = arith.constant 9.99999993E-9 : f32
    %149 = vector.broadcast %cst_43 : f32 to vector<8x2xf32>
    %150 = arith.addf %144, %149 : vector<8x2xf32>
    %151 = math.log %150 : vector<8x2xf32>
    %152 = arith.subf %148, %151 : vector<8x2xf32>
    %cst_44 = arith.constant 5.000000e-01 : f32
    %153 = vector.broadcast %cst_44 : f32 to vector<8x2xf32>
    %154 = arith.mulf %153, %152 : vector<8x2xf32>
    %cst_45 = arith.constant dense<0.000000e+00> : vector<8xf32>
    %155 = vector.multi_reduction <add>, %154, %cst_45 [1] : vector<8x2xf32> to vector<8xf32>
    %156 = vector.shape_cast %155 : vector<8xf32> to vector<8x1xf32>
    %157 = arith.subf %156, %143 : vector<8x1xf32>
    %158 = arith.subf %157, %98 : vector<8x1xf32>
    %c0_46 = arith.constant 0 : index
    %c0_47 = arith.constant 0 : index
    %159 = vector.load %arg7[%c0_46, %c0_47] : memref<1x1xf32, #tpu.memory_space<vmem>>, vector<1x1xf32>
    %cst_48 = arith.constant dense<0.000000e+00> : vector<1xf32>
    %160 = vector.multi_reduction <add>, %158, %cst_48 [0] : vector<8x1xf32> to vector<1xf32>
    %161 = vector.shape_cast %160 : vector<1xf32> to vector<1x1xf32>
    %162 = arith.addf %159, %161 : vector<1x1xf32>
    %c0_49 = arith.constant 0 : index
    %c0_50 = arith.constant 0 : index
    %163 = vector.load %arg7[%c0_49, %c0_50] : memref<1x1xf32, #tpu.memory_space<vmem>>, vector<1x1xf32>
    tpu.vector_store %arg7[%c0_49, %c0_50], %162 {strides = array<i32>} : memref<1x1xf32, #tpu.memory_space<vmem>>, vector<1x1xf32>,
    return
  }
  func.func @transform_0(%arg0: i32) -> (i32, i32) {
    %c0_i32 = arith.constant 0 : i32
    %c0_i32_0 = arith.constant 0 : i32
    return %arg0, %c0_i32 : i32, i32
  }
  func.func @transform_1(%arg0: i32) -> (i32, i32) {
    %c0_i32 = arith.constant 0 : i32
    %c0_i32_0 = arith.constant 0 : i32
    %c0_i32_1 = arith.constant 0 : i32
    return %c0_i32, %c0_i32_0 : i32, i32
  }
  func.func @transform_2(%arg0: i32) -> (i32, i32) {
    %c0_i32 = arith.constant 0 : i32
    %c0_i32_0 = arith.constant 0 : i32
    %c0_i32_1 = arith.constant 0 : i32
    return %c0_i32, %c0_i32_0 : i32, i32
  }
  func.func @transform_3(%arg0: i32) -> (i32, i32) {
    %c0_i32 = arith.constant 0 : i32
    %c0_i32_0 = arith.constant 0 : i32
    %c0_i32_1 = arith.constant 0 : i32
    return %c0_i32, %c0_i32_0 : i32, i32
  }
  func.func @transform_4(%arg0: i32) -> (i32, i32) {
    %c0_i32 = arith.constant 0 : i32
    %c0_i32_0 = arith.constant 0 : i32
    %c0_i32_1 = arith.constant 0 : i32
    return %c0_i32, %c0_i32_0 : i32, i32
  }
  func.func @transform_5(%arg0: i32) -> (i32, i32) {
    %c0_i32 = arith.constant 0 : i32
    %c0_i32_0 = arith.constant 0 : i32
    %c0_i32_1 = arith.constant 0 : i32
    return %c0_i32, %c0_i32_0 : i32, i32
  }
  func.func @transform_6(%arg0: i32) -> (i32, i32) {
    %c0_i32 = arith.constant 0 : i32
    %c0_i32_0 = arith.constant 0 : i32
    %c0_i32_1 = arith.constant 0 : i32
    return %c0_i32, %c0_i32_0 : i32, i32
  }
}

</mosaic_0001>

<llo_original>
// kernel: vae_forward.1
$region0: #{vae_forward.1}
  #allocation0 [shape = 'u32[]', space=smem, size = 0x4, offset = 0x4, fixed_abs, tag = 'smem constant byte address 0x4 - core index']
  #allocation1 [shape = 'u32[144,128]{1,0:T(1,128)}', space=vmem, size = 0x12000, scoped, tag = 'internal scratch']
  %s0 = inlined_call_operand.vmem [shape: f32[16,788], index: 0, kind: input, shape index: {}]
  %s1 = inlined_call_operand.vmem [shape: bf16[784,1024], index: 1, kind: input, shape index: {}]
  %s2 = inlined_call_operand.vmem [shape: bf16[1024,8], index: 2, kind: input, shape index: {}]
  %s3 = inlined_call_operand.vmem [shape: bf16[512,784], index: 3, kind: input, shape index: {}]
  %s4 = inlined_call_operand.vmem [shape: bf16[512,784], index: 4, kind: input, shape index: {}]
  %s5 = inlined_call_operand.vmem [shape: f32[8,1024], index: 5, kind: input, shape index: {}]
  %s6 = inlined_call_operand.hbm [shape: f32[1,1], index: 6, kind: output, shape index: {}]
  %s7 = sld [smem:[#allocation0]]
  $region61: #{vae_forward.1} parent=0
    _
  %s9 = ssub.s32 1, %s7
  %s10 = scalar_select 0, %s9, %s7
  $region1: #{vae_forward.1} parent=0
    #allocation2 [shape = 'u8[512]{0}', space=vmem, size = 0x400, scoped, tag = 'output window, operand 0, single buffered']
    #allocation3 [shape = 's32[2]{0}', space=sflag, size = 0x8, scoped, tag = 'scoped memory for vae_forward.1']
    %11 = vsyncpa [#allocation3], 0
    loop: start=0, step=1, limit=4
    $region2: #{vae_forward.1} parent=1 // loop_pre_header
      _
    $region3: #{vae_forward.1} parent=1 // loop_header
      %s13 = sphi 0, %s17
      %p14 = scmp.ge.s32.totalorder %s13, 4
      %s23 = sphi 0, %s25
      %s26 = sphi 0, %s23
      %s27 = sphi 0, %s26
      %s43 = sphi 0, %s27
      %s47 = sphi 0, %s47
      %s49 = sphi 0, %s47
      %s50 = sphi 0, %s49
      %s64 = sphi 0, %s50
      %s68 = sphi 0, %s68
      %s70 = sphi 0, %s68
      %s71 = sphi 0, %s70
      %s85 = sphi 0, %s71
      %s89 = sphi 0, %s89
      %s91 = sphi 0, %s89
      %s92 = sphi 0, %s91
      %s106 = sphi 0, %s92
      %s110 = sphi 0, %s110
      %s112 = sphi 0, %s110
      %s113 = sphi 0, %s112
      %s127 = sphi 0, %s113
      %s131 = sphi 0, %s131
      %s133 = sphi 0, %s131
      %s134 = sphi 0, %s133
      %s148 = sphi 0, %s134
      %s152 = sphi 0, %s152
      %s154 = sphi 0, %s152
      %s155 = sphi 0, %s154
      %s169 = sphi 0, %s155
    $region4: #{vae_forward.1} parent=1 // loop_header_branch
      %16 = sbr.rel (%p14) target = $region8
    $region5: #{vae_forward.1} parent=1 // loop_body
      %s18 = ssub.s32 %s13, 1
      %s19 = ssub.s32 %s13, 2
      %s20 = sadd.s32 %s13, 1
      %s21 = ssub.s32 %s13, %s20
      %p22 = scmp.eq.s32.totalorder %s21, 0
      %s24 = sadd.s32 %s23, 1
      %s25 = scalar_select %p22, %s23, %s24
      %p28 = pneg %p22
      %p29 = scmp.eq.s32.totalorder %s13, 1
      %p30 = por %p28, %p29
      %p31 = scmp.ne.s32.totalorder %s23, %s26
      %p32 = scmp.eq.s32.totalorder %s13, 0
      %p33 = por %p31, %p32
      %p34 = scmp.ne.s32.totalorder %s23, %s26
      %p35 = scmp.eq.s32.totalorder %s18, 1
      %p36 = por %p34, %p35
      %p37 = scmp.ne.s32.totalorder %s26, %s27
      %p38 = scmp.eq.s32.totalorder %s18, 0
      %p39 = por %p37, %p38
      %p40 = scmp.ne.s32.totalorder %s26, %s27
      %p41 = scmp.eq.s32.totalorder %s19, 1
      %p42 = por %p40, %p41
      %p44 = scmp.ne.s32.totalorder %s27, %s43
      %p45 = scmp.eq.s32.totalorder %s19, 0
      %p46 = por %p44, %p45
      %s48 = sadd.s32 %s47, 1
      %p51 = scmp.eq.s32.totalorder %s13, 1
      %p52 = scmp.ne.s32.totalorder %s47, %s49
      %p53 = scmp.eq.s32.totalorder %s13, 0
      %p54 = por %p52, %p53
      %p55 = scmp.ne.s32.totalorder %s47, %s49
      %p56 = scmp.eq.s32.totalorder %s18, 1
      %p57 = por %p55, %p56
      %p58 = scmp.ne.s32.totalorder %s49, %s50
      %p59 = scmp.eq.s32.totalorder %s18, 0
      %p60 = por %p58, %p59
      %p61 = scmp.ne.s32.totalorder %s49, %s50
      %p62 = scmp.eq.s32.totalorder %s19, 1
      %p63 = por %p61, %p62
      %p65 = scmp.ne.s32.totalorder %s50, %s64
      %p66 = scmp.eq.s32.totalorder %s19, 0
      %p67 = por %p65, %p66
      %s69 = sadd.s32 %s68, 1
      %p72 = scmp.eq.s32.totalorder %s13, 1
      %p73 = scmp.ne.s32.totalorder %s68, %s70
      %p74 = scmp.eq.s32.totalorder %s13, 0
      %p75 = por %p73, %p74
      %p76 = scmp.ne.s32.totalorder %s68, %s70
      %p77 = scmp.eq.s32.totalorder %s18, 1
      %p78 = por %p76, %p77
      %p79 = scmp.ne.s32.totalorder %s70, %s71
      %p80 = scmp.eq.s32.totalorder %s18, 0
      %p81 = por %p79, %p80
      %p82 = scmp.ne.s32.totalorder %s70, %s71
      %p83 = scmp.eq.s32.totalorder %s19, 1
      %p84 = por %p82, %p83
      %p86 = scmp.ne.s32.totalorder %s71, %s85
      %p87 = scmp.eq.s32.totalorder %s19, 0
      %p88 = por %p86, %p87
      %s90 = sadd.s32 %s89, 1
      %p93 = scmp.eq.s32.totalorder %s13, 1
      %p94 = scmp.ne.s32.totalorder %s89, %s91
      %p95 = scmp.eq.s32.totalorder %s13, 0
      %p96 = por %p94, %p95
      %p97 = scmp.ne.s32.totalorder %s89, %s91
      %p98 = scmp.eq.s32.totalorder %s18, 1
      %p99 = por %p97, %p98
      %p100 = scmp.ne.s32.totalorder %s91, %s92
      %p101 = scmp.eq.s32.totalorder %s18, 0
      %p102 = por %p100, %p101
      %p103 = scmp.ne.s32.totalorder %s91, %s92
      %p104 = scmp.eq.s32.totalorder %s19, 1
      %p105 = por %p103, %p104
      %p107 = scmp.ne.s32.totalorder %s92, %s106
      %p108 = scmp.eq.s32.totalorder %s19, 0
      %p109 = por %p107, %p108
      %s111 = sadd.s32 %s110, 1
      %p114 = scmp.eq.s32.totalorder %s13, 1
      %p115 = scmp.ne.s32.totalorder %s110, %s112
      %p116 = scmp.eq.s32.totalorder %s13, 0
      %p117 = por %p115, %p116
      %p118 = scmp.ne.s32.totalorder %s110, %s112
      %p119 = scmp.eq.s32.totalorder %s18, 1
      %p120 = por %p118, %p119
      %p121 = scmp.ne.s32.totalorder %s112, %s113
      %p122 = scmp.eq.s32.totalorder %s18, 0
      %p123 = por %p121, %p122
      %p124 = scmp.ne.s32.totalorder %s112, %s113
      %p125 = scmp.eq.s32.totalorder %s19, 1
      %p126 = por %p124, %p125
      %p128 = scmp.ne.s32.totalorder %s113, %s127
      %p129 = scmp.eq.s32.totalorder %s19, 0
      %p130 = por %p128, %p129
      %s132 = sadd.s32 %s131, 1
      %p135 = scmp.eq.s32.totalorder %s13, 1
      %p136 = scmp.ne.s32.totalorder %s131, %s133
      %p137 = scmp.eq.s32.totalorder %s13, 0
      %p138 = por %p136, %p137
      %p139 = scmp.ne.s32.totalorder %s131, %s133
      %p140 = scmp.eq.s32.totalorder %s18, 1
      %p141 = por %p139, %p140
      %p142 = scmp.ne.s32.totalorder %s133, %s134
      %p143 = scmp.eq.s32.totalorder %s18, 0
      %p144 = por %p142, %p143
      %p145 = scmp.ne.s32.totalorder %s133, %s134
      %p146 = scmp.eq.s32.totalorder %s19, 1
      %p147 = por %p145, %p146
      %p149 = scmp.ne.s32.totalorder %s134, %s148
      %p150 = scmp.eq.s32.totalorder %s19, 0
      %p151 = por %p149, %p150
      %s153 = sadd.s32 %s152, 1
      %p156 = scmp.eq.s32.totalorder %s13, 1
      %p157 = scmp.ne.s32.totalorder %s152, %s154
      %p158 = scmp.eq.s32.totalorder %s13, 0
      %p159 = por %p157, %p158
      %p160 = scmp.ne.s32.totalorder %s152, %s154
      %p161 = scmp.eq.s32.totalorder %s18, 1
      %p162 = por %p160, %p161
      %p163 = scmp.ne.s32.totalorder %s154, %s155
      %p164 = scmp.eq.s32.totalorder %s18, 0
      %p165 = por %p163, %p164
      %p166 = scmp.ne.s32.totalorder %s154, %s155
      %p167 = scmp.eq.s32.totalorder %s19, 1
      %p168 = por %p166, %p167
      %p170 = scmp.ne.s32.totalorder %s155, %s169
      %p171 = scmp.eq.s32.totalorder %s19, 0
      %p172 = por %p170, %p171
      %p173 = scmp.le.s32.totalorder 1, %s13
      %p174 = scmp.lt.s32.totalorder %s13, 3
      %p175 = pnand %p173, %p174
      %p176 = pneg %p175
      // Predicated region
      $region9: #{vae_forward.1} parent=5 // pred_check
        _
      $region10: #{vae_forward.1} parent=5 // pred_check_branch
        %178 = sbr.rel (%p175) target = $region12
      $region11: #{vae_forward.1} parent=5 // pred_region
        %s179 = ssub.s32 %s13, 1
        // Predicated region
        $region13: #{vae_forward.1} parent=11 // pred_check
          %p180 = pneg %p60
        $region14: #{vae_forward.1} parent=11 // pred_check_branch
          %182 = sbr.rel (%p180) target = $region16
        $region15: #{vae_forward.1} parent=11 // pred_region
          _
        $region16: #{vae_forward.1} parent=11 // pred_fallthru
          _
        // Predicated region
        $region17: #{vae_forward.1} parent=11 // pred_check
          %p183 = pneg %p81
        $region18: #{vae_forward.1} parent=11 // pred_check_branch
          %185 = sbr.rel (%p183) target = $region20
        $region19: #{vae_forward.1} parent=11 // pred_region
          _
        $region20: #{vae_forward.1} parent=11 // pred_fallthru
          _
        // Predicated region
        $region21: #{vae_forward.1} parent=11 // pred_check
          %p186 = pneg %p102
        $region22: #{vae_forward.1} parent=11 // pred_check_branch
          %188 = sbr.rel (%p186) target = $region24
        $region23: #{vae_forward.1} parent=11 // pred_region
          _
        $region24: #{vae_forward.1} parent=11 // pred_fallthru
          _
        // Predicated region
        $region25: #{vae_forward.1} parent=11 // pred_check
          %p189 = pneg %p123
        $region26: #{vae_forward.1} parent=11 // pred_check_branch
          %191 = sbr.rel (%p189) target = $region28
        $region27: #{vae_forward.1} parent=11 // pred_region
          _
        $region28: #{vae_forward.1} parent=11 // pred_fallthru
          _
        // Predicated region
        $region29: #{vae_forward.1} parent=11 // pred_check
          %p192 = pneg %p144
        $region30: #{vae_forward.1} parent=11 // pred_check_branch
          %194 = sbr.rel (%p192) target = $region32
        $region31: #{vae_forward.1} parent=11 // pred_region
          _
        $region32: #{vae_forward.1} parent=11 // pred_fallthru
          _
      $region12: #{vae_forward.1} parent=5 // pred_fallthru
        _
      %p195 = scmp.lt.s32.totalorder %s13, 2
      // Predicated region
      $region33: #{vae_forward.1} parent=5 // pred_check
        %p196 = pneg %p195
      $region34: #{vae_forward.1} parent=5 // pred_check_branch
        %198 = sbr.rel (%p196) target = $region36
      $region35: #{vae_forward.1} parent=5 // pred_region
        // Predicated region
        $region37: #{vae_forward.1} parent=35 // pred_check
          %p199 = pneg %p33
        $region38: #{vae_forward.1} parent=35 // pred_check_branch
          %201 = sbr.rel (%p199) target = $region40
        $region39: #{vae_forward.1} parent=35 // pred_region
          %p202 = scmp.lt.s32.totalorder %s13, 1
          %s203 = scalar_select %p202, %s13, 1
          %s204 = smul.addr %s203, 7
          %s205 = smul.addr %s204, 8
          %s206 = scalar_lea.vmem %s0, %s205
        $region40: #{vae_forward.1} parent=35 // pred_fallthru
          _
      $region36: #{vae_forward.1} parent=5 // pred_fallthru
        _
      %p207 = scmp.le.s32.totalorder 1, %s13
      %p208 = scmp.lt.s32.totalorder %s13, 3
      %p209 = pnand %p207, %p208
      %p210 = pneg %p209
      // Predicated region
      $region41: #{vae_forward.1} parent=5 // pred_check
        _
      $region42: #{vae_forward.1} parent=5 // pred_check_branch
        %212 = sbr.rel (%p209) target = $region44
      $region43: #{vae_forward.1} parent=5 // pred_region
        %s213 = ssub.s32 %s13, 1
        %p214 = scmp.lt.s32.totalorder %s18, 1
        %s215 = scalar_select %p214, %s18, 1
        %s216 = smul.addr %s215, 7
        %s217 = smul.addr %s216, 8
        %s218 = scalar_lea.vmem %s0, %s217
        %p219 = pneg %p39
        %p220 = pneg %p36
        %p221 = pneg %p60
        %p222 = pneg %p57
        %p223 = pneg %p81
        %p224 = pneg %p78
        %p225 = pneg %p102
        %p226 = pneg %p99
        %p227 = pneg %p123
        %p228 = pneg %p120
        %p229 = pneg %p144
        %p230 = pneg %p141
        %p231 = pneg %p165
        %p232 = pneg %p162
        %p233 = scmp.lt.s32.totalorder %s18, 1
        %s234 = scalar_select %p233, %s18, 1
        %s235 = smul.addr %s234, 7
        %s236 = smul.addr %s235, 8
        %s237 = scalar_lea.vmem %s0, %s236
        %p239 = scmp.eq.s32.totalorder %s18, 0
        // Predicated region
        $region45: #{vae_forward.1} parent=43 // pred_check
          %p240 = pneg %p239
        $region46: #{vae_forward.1} parent=43 // pred_check_branch
          %242 = sbr.rel (%p240) target = $region48
        $region47: #{vae_forward.1} parent=43 // pred_region
          %vm243 = vcmask 0
          %244 = vst.msk [vmem:[#allocation2] sm:$0x1] %vm243, 0.0
        $region48: #{vae_forward.1} parent=43 // pred_fallthru
          _
        %v245 = vld [vmem:[%s5] sm:$0xff]
        %v246 = vld [vmem:[%s5 + $0x8] sm:$0xff]
        %v247 = vld [vmem:[%s5 + $0x10] sm:$0xff]
        %v248 = vld [vmem:[%s5 + $0x18] sm:$0xff]
        %v249 = vld [vmem:[%s5 + $0x20] sm:$0xff]
        %v250 = vld [vmem:[%s5 + $0x28] sm:$0xff]
        %v251 = vld [vmem:[%s5 + $0x30] sm:$0xff]
        %v252 = vld [vmem:[%s5 + $0x38] sm:$0xff]
        %v253 = vld [vmem:[%s237] sm:$0xff]
        %v254 = vld [vmem:[%s237 + $0x8] sm:$0xff]
        %v255 = vld [vmem:[%s237 + $0x10] sm:$0xff]
        %v256 = vld [vmem:[%s237 + $0x18] sm:$0xff]
        %v257 = vld [vmem:[%s237 + $0x20] sm:$0xff]
        %v258 = vld [vmem:[%s237 + $0x28] sm:$0xff]
        %v259 = vld [vmem:[%s237 + $0x30] sm:$0xff]
        %v260 = vpack.c.bf16 %v253, %v253
        %v261 = vpack.c.bf16 %v254, %v254
        %v262 = vpack.c.bf16 %v255, %v255
        %v263 = vpack.c.bf16 %v256, %v256
        %v264 = vpack.c.bf16 %v257, %v257
        %v265 = vpack.c.bf16 %v258, %v258
        %v266 = vpack.c.bf16 %v259, %v259
        %v267 = vld [vmem:[%s1] sm:$0xff]
        %v268 = vld [vmem:[%s1 + $0x8] sm:$0xff]
        %v269 = vld [vmem:[%s1 + $0x10] sm:$0xff]
        %v270 = vld [vmem:[%s1 + $0x18] sm:$0xff]
        %v271 = vld [vmem:[%s1 + $0x20] sm:$0xff]
        %v272 = vld [vmem:[%s1 + $0x28] sm:$0xff]
        %v273 = vld [vmem:[%s1 + $0x30] sm:$0xff]
        %v274 = vld [vmem:[%s1 + $0x38] sm:$0xff]
        %v275 = vld [vmem:[%s1 + $0x40] sm:$0xff]
        %v276 = vld [vmem:[%s1 + $0x48] sm:$0xff]
        %v277 = vld [vmem:[%s1 + $0x50] sm:$0xff]
        %v278 = vld [vmem:[%s1 + $0x58] sm:$0xff]
        %v279 = vld [vmem:[%s1 + $0x60] sm:$0xff]
        %v280 = vld [vmem:[%s1 + $0x68] sm:$0xff]
        %v281 = vld [vmem:[%s1 + $0x70] sm:$0xff]
        %v282 = vld [vmem:[%s1 + $0x78] sm:$0xff]
        %v283 = vld [vmem:[%s1 + $0x80] sm:$0xff]
        %v284 = vld [vmem:[%s1 + $0x88] sm:$0xff]
        %v285 = vld [vmem:[%s1 + $0x90] sm:$0xff]
        %v286 = vld [vmem:[%s1 + $0x98] sm:$0xff]
        %v287 = vld [vmem:[%s1 + $0xa0] sm:$0xff]
        %v288 = vld [vmem:[%s1 + $0xa8] sm:$0xff]
        %v289 = vld [vmem:[%s1 + $0xb0] sm:$0xff]
        %v290 = vld [vmem:[%s1 + $0xb8] sm:$0xff]
        %v291 = vld [vmem:[%s1 + $0xc0] sm:$0xff]
        %v292 = vld [vmem:[%s1 + $0xc8] sm:$0xff]
        %v293 = vld [vmem:[%s1 + $0xd0] sm:$0xff]
        %v294 = vld [vmem:[%s1 + $0xd8] sm:$0xff]
        %v295 = vld [vmem:[%s1 + $0xe0] sm:$0xff]
        %v296 = vld [vmem:[%s1 + $0xe8] sm:$0xff]
        %v297 = vld [vmem:[%s1 + $0xf0] sm:$0xff]
        %v298 = vld [vmem:[%s1 + $0xf8] sm:$0xff]
        %v299 = vld [vmem:[%s1 + $0x100] sm:$0xff]
        %v300 = vld [vmem:[%s1 + $0x108] sm:$0xff]
        %v301 = vld [vmem:[%s1 + $0x110] sm:$0xff]
        %v302 = vld [vmem:[%s1 + $0x118] sm:$0xff]
        %v303 = vld [vmem:[%s1 + $0x120] sm:$0xff]
        %v304 = vld [vmem:[%s1 + $0x128] sm:$0xff]
        %v305 = vld [vmem:[%s1 + $0x130] sm:$0xff]
        %v306 = vld [vmem:[%s1 + $0x138] sm:$0xff]
        %v307 = vld [vmem:[%s1 + $0x140] sm:$0xff]
        %v308 = vld [vmem:[%s1 + $0x148] sm:$0xff]
        %v309 = vld [vmem:[%s1 + $0x150] sm:$0xff]
        %v310 = vld [vmem:[%s1 + $0x158] sm:$0xff]
        %v311 = vld [vmem:[%s1 + $0x160] sm:$0xff]
        %v312 = vld [vmem:[%s1 + $0x168] sm:$0xff]
        %v313 = vld [vmem:[%s1 + $0x170] sm:$0xff]
        %v314 = vld [vmem:[%s1 + $0x178] sm:$0xff]
        %v315 = vld [vmem:[%s1 + $0x180] sm:$0xff]
        %v316 = vld [vmem:[%s1 + $0x188] sm:$0xff]
        %v317 = vld [vmem:[%s1 + $0x190] sm:$0xff]
        %v318 = vld [vmem:[%s1 + $0x198] sm:$0xff]
        %v319 = vld [vmem:[%s1 + $0x1a0] sm:$0xff]
        %v320 = vld [vmem:[%s1 + $0x1a8] sm:$0xff]
        %v321 = vld [vmem:[%s1 + $0x1b0] sm:$0xff]
        %v322 = vld [vmem:[%s1 + $0x1b8] sm:$0xff]
        %v323 = vld [vmem:[%s1 + $0x1c0] sm:$0xff]
        %v324 = vld [vmem:[%s1 + $0x1c8] sm:$0xff]
        %v325 = vld [vmem:[%s1 + $0x1d0] sm:$0xff]
        %v326 = vld [vmem:[%s1 + $0x1d8] sm:$0xff]
        %v327 = vld [vmem:[%s1 + $0x1e0] sm:$0xff]
        %v328 = vld [vmem:[%s1 + $0x1e8] sm:$0xff]
        %v329 = vld [vmem:[%s1 + $0x1f0] sm:$0xff]
        %v330 = vld [vmem:[%s1 + $0x1f8] sm:$0xff]
        %v331 = vld [vmem:[%s1 + $0x200] sm:$0xff]
        %v332 = vld [vmem:[%s1 + $0x208] sm:$0xff]
        %v333 = vld [vmem:[%s1 + $0x210] sm:$0xff]
        %v334 = vld [vmem:[%s1 + $0x218] sm:$0xff]
        %v335 = vld [vmem:[%s1 + $0x220] sm:$0xff]
        %v336 = vld [vmem:[%s1 + $0x228] sm:$0xff]
        %v337 = vld [vmem:[%s1 + $0x230] sm:$0xff]
        %v338 = vld [vmem:[%s1 + $0x238] sm:$0xff]
        %v339 = vld [vmem:[%s1 + $0x240] sm:$0xff]
        %v340 = vld [vmem:[%s1 + $0x248] sm:$0xff]
        %v341 = vld [vmem:[%s1 + $0x250] sm:$0xff]
        %v342 = vld [vmem:[%s1 + $0x258] sm:$0xff]
        %v343 = vld [vmem:[%s1 + $0x260] sm:$0xff]
        %v344 = vld [vmem:[%s1 + $0x268] sm:$0xff]
        %v345 = vld [vmem:[%s1 + $0x270] sm:$0xff]
        %v346 = vld [vmem:[%s1 + $0x278] sm:$0xff]
        %v347 = vld [vmem:[%s1 + $0x280] sm:$0xff]
        %v348 = vld [vmem:[%s1 + $0x288] sm:$0xff]
        %v349 = vld [vmem:[%s1 + $0x290] sm:$0xff]
        %v350 = vld [vmem:[%s1 + $0x298] sm:$0xff]
        %v351 = vld [vmem:[%s1 + $0x2a0] sm:$0xff]
        %v352 = vld [vmem:[%s1 + $0x2a8] sm:$0xff]
        %v353 = vld [vmem:[%s1 + $0x2b0] sm:$0xff]
        %v354 = vld [vmem:[%s1 + $0x2b8] sm:$0xff]
        %v355 = vld [vmem:[%s1 + $0x2c0] sm:$0xff]
        %v356 = vld [vmem:[%s1 + $0x2c8] sm:$0xff]
        %v357 = vld [vmem:[%s1 + $0x2d0] sm:$0xff]
        %v358 = vld [vmem:[%s1 + $0x2d8] sm:$0xff]
        %v359 = vld [vmem:[%s1 + $0x2e0] sm:$0xff]
        %v360 = vld [vmem:[%s1 + $0x2e8] sm:$0xff]
        %v361 = vld [vmem:[%s1 + $0x2f0] sm:$0xff]
        %v362 = vld [vmem:[%s1 + $0x2f8] sm:$0xff]
        %v363 = vld [vmem:[%s1 + $0x300] sm:$0xff]
        %v364 = vld [vmem:[%s1 + $0x308] sm:$0xff]
        %v365 = vld [vmem:[%s1 + $0x310] sm:$0xff]
        %v366 = vld [vmem:[%s1 + $0x318] sm:$0xff]
        %v367 = vld [vmem:[%s1 + $0x320] sm:$0xff]
        %v368 = vld [vmem:[%s1 + $0x328] sm:$0xff]
        %v369 = vld [vmem:[%s1 + $0x330] sm:$0xff]
        %v370 = vld [vmem:[%s1 + $0x338] sm:$0xff]
        %v371 = vld [vmem:[%s1 + $0x340] sm:$0xff]
        %v372 = vld [vmem:[%s1 + $0x348] sm:$0xff]
        %v373 = vld [vmem:[%s1 + $0x350] sm:$0xff]
        %v374 = vld [vmem:[%s1 + $0x358] sm:$0xff]
        %v375 = vld [vmem:[%s1 + $0x360] sm:$0xff]
        %v376 = vld [vmem:[%s1 + $0x368] sm:$0xff]
        %v377 = vld [vmem:[%s1 + $0x370] sm:$0xff]
        %v378 = vld [vmem:[%s1 + $0x378] sm:$0xff]
        %v379 = vld [vmem:[%s1 + $0x380] sm:$0xff]
        %v380 = vld [vmem:[%s1 + $0x388] sm:$0xff]
        %v381 = vld [vmem:[%s1 + $0x390] sm:$0xff]
        %v382 = vld [vmem:[%s1 + $0x398] sm:$0xff]
        %v383 = vld [vmem:[%s1 + $0x3a0] sm:$0xff]
        %v384 = vld [vmem:[%s1 + $0x3a8] sm:$0xff]
        %v385 = vld [vmem:[%s1 + $0x3b0] sm:$0xff]
        %v386 = vld [vmem:[%s1 + $0x3b8] sm:$0xff]
        %v387 = vld [vmem:[%s1 + $0x3c0] sm:$0xff]
        %v388 = vld [vmem:[%s1 + $0x3c8] sm:$0xff]
        %v389 = vld [vmem:[%s1 + $0x3d0] sm:$0xff]
        %v390 = vld [vmem:[%s1 + $0x3d8] sm:$0xff]
        %v391 = vld [vmem:[%s1 + $0x3e0] sm:$0xff]
        %v392 = vld [vmem:[%s1 + $0x3e8] sm:$0xff]
        %v393 = vld [vmem:[%s1 + $0x3f0] sm:$0xff]
        %v394 = vld [vmem:[%s1 + $0x3f8] sm:$0xff]
        %v395 = vld [vmem:[%s1 + $0x400] sm:$0xff]
        %v396 = vld [vmem:[%s1 + $0x408] sm:$0xff]
        %v397 = vld [vmem:[%s1 + $0x410] sm:$0xff]
        %v398 = vld [vmem:[%s1 + $0x418] sm:$0xff]
        %v399 = vld [vmem:[%s1 + $0x420] sm:$0xff]
        %v400 = vld [vmem:[%s1 + $0x428] sm:$0xff]
        %v401 = vld [vmem:[%s1 + $0x430] sm:$0xff]
        %v402 = vld [vmem:[%s1 + $0x438] sm:$0xff]
        %v403 = vld [vmem:[%s1 + $0x440] sm:$0xff]
        %v404 = vld [vmem:[%s1 + $0x448] sm:$0xff]
        %v405 = vld [vmem:[%s1 + $0x450] sm:$0xff]
        %v406 = vld [vmem:[%s1 + $0x458] sm:$0xff]
        %v407 = vld [vmem:[%s1 + $0x460] sm:$0xff]
        %v408 = vld [vmem:[%s1 + $0x468] sm:$0xff]
        %v409 = vld [vmem:[%s1 + $0x470] sm:$0xff]
        %v410 = vld [vmem:[%s1 + $0x478] sm:$0xff]
        %v411 = vld [vmem:[%s1 + $0x480] sm:$0xff]
        %v412 = vld [vmem:[%s1 + $0x488] sm:$0xff]
        %v413 = vld [vmem:[%s1 + $0x490] sm:$0xff]
        %v414 = vld [vmem:[%s1 + $0x498] sm:$0xff]
        %v415 = vld [vmem:[%s1 + $0x4a0] sm:$0xff]
        %v416 = vld [vmem:[%s1 + $0x4a8] sm:$0xff]
        %v417 = vld [vmem:[%s1 + $0x4b0] sm:$0xff]
        %v418 = vld [vmem:[%s1 + $0x4b8] sm:$0xff]
        %v419 = vld [vmem:[%s1 + $0x4c0] sm:$0xff]
        %v420 = vld [vmem:[%s1 + $0x4c8] sm:$0xff]
        %v421 = vld [vmem:[%s1 + $0x4d0] sm:$0xff]
        %v422 = vld [vmem:[%s1 + $0x4d8] sm:$0xff]
        %v423 = vld [vmem:[%s1 + $0x4e0] sm:$0xff]
        %v424 = vld [vmem:[%s1 + $0x4e8] sm:$0xff]
        %v425 = vld [vmem:[%s1 + $0x4f0] sm:$0xff]
        %v426 = vld [vmem:[%s1 + $0x4f8] sm:$0xff]
        %v427 = vld [vmem:[%s1 + $0x500] sm:$0xff]
        %v428 = vld [vmem:[%s1 + $0x508] sm:$0xff]
        %v429 = vld [vmem:[%s1 + $0x510] sm:$0xff]
        %v430 = vld [vmem:[%s1 + $0x518] sm:$0xff]
        %v431 = vld [vmem:[%s1 + $0x520] sm:$0xff]
        %v432 = vld [vmem:[%s1 + $0x528] sm:$0xff]
        %v433 = vld [vmem:[%s1 + $0x530] sm:$0xff]
        %v434 = vld [vmem:[%s1 + $0x538] sm:$0xff]
        %v435 = vld [vmem:[%s1 + $0x540] sm:$0xff]
        %v436 = vld [vmem:[%s1 + $0x548] sm:$0xff]
        %v437 = vld [vmem:[%s1 + $0x550] sm:$0xff]
        %v438 = vld [vmem:[%s1 + $0x558] sm:$0xff]
        %v439 = vld [vmem:[%s1 + $0x560] sm:$0xff]
        %v440 = vld [vmem:[%s1 + $0x568] sm:$0xff]
        %v441 = vld [vmem:[%s1 + $0x570] sm:$0xff]
        %v442 = vld [vmem:[%s1 + $0x578] sm:$0xff]
        %v443 = vld [vmem:[%s1 + $0x580] sm:$0xff]
        %v444 = vld [vmem:[%s1 + $0x588] sm:$0xff]
        %v445 = vld [vmem:[%s1 + $0x590] sm:$0xff]
        %v446 = vld [vmem:[%s1 + $0x598] sm:$0xff]
        %v447 = vld [vmem:[%s1 + $0x5a0] sm:$0xff]
        %v448 = vld [vmem:[%s1 + $0x5a8] sm:$0xff]
        %v449 = vld [vmem:[%s1 + $0x5b0] sm:$0xff]
        %v450 = vld [vmem:[%s1 + $0x5b8] sm:$0xff]
        %v451 = vld [vmem:[%s1 + $0x5c0] sm:$0xff]
        %v452 = vld [vmem:[%s1 + $0x5c8] sm:$0xff]
        %v453 = vld [vmem:[%s1 + $0x5d0] sm:$0xff]
        %v454 = vld [vmem:[%s1 + $0x5d8] sm:$0xff]
        %v455 = vld [vmem:[%s1 + $0x5e0] sm:$0xff]
        %v456 = vld [vmem:[%s1 + $0x5e8] sm:$0xff]
        %v457 = vld [vmem:[%s1 + $0x5f0] sm:$0xff]
        %v458 = vld [vmem:[%s1 + $0x5f8] sm:$0xff]
        %v459 = vld [vmem:[%s1 + $0x600] sm:$0xff]
        %v460 = vld [vmem:[%s1 + $0x608] sm:$0xff]
        %v461 = vld [vmem:[%s1 + $0x610] sm:$0xff]
        %v462 = vld [vmem:[%s1 + $0x618] sm:$0xff]
        %v463 = vld [vmem:[%s1 + $0x620] sm:$0xff]
        %v464 = vld [vmem:[%s1 + $0x628] sm:$0xff]
        %v465 = vld [vmem:[%s1 + $0x630] sm:$0xff]
        %v466 = vld [vmem:[%s1 + $0x638] sm:$0xff]
        %v467 = vld [vmem:[%s1 + $0x640] sm:$0xff]
        %v468 = vld [vmem:[%s1 + $0x648] sm:$0xff]
        %v469 = vld [vmem:[%s1 + $0x650] sm:$0xff]
        %v470 = vld [vmem:[%s1 + $0x658] sm:$0xff]
        %v471 = vld [vmem:[%s1 + $0x660] sm:$0xff]
        %v472 = vld [vmem:[%s1 + $0x668] sm:$0xff]
        %v473 = vld [vmem:[%s1 + $0x670] sm:$0xff]
        %v474 = vld [vmem:[%s1 + $0x678] sm:$0xff]
        %v475 = vld [vmem:[%s1 + $0x680] sm:$0xff]
        %v476 = vld [vmem:[%s1 + $0x688] sm:$0xff]
        %v477 = vld [vmem:[%s1 + $0x690] sm:$0xff]
        %v478 = vld [vmem:[%s1 + $0x698] sm:$0xff]
        %v479 = vld [vmem:[%s1 + $0x6a0] sm:$0xff]
        %v480 = vld [vmem:[%s1 + $0x6a8] sm:$0xff]
        %v481 = vld [vmem:[%s1 + $0x6b0] sm:$0xff]
        %v482 = vld [vmem:[%s1 + $0x6b8] sm:$0xff]
        %v483 = vld [vmem:[%s1 + $0x6c0] sm:$0xff]
        %v484 = vld [vmem:[%s1 + $0x6c8] sm:$0xff]
        %v485 = vld [vmem:[%s1 + $0x6d0] sm:$0xff]
        %v486 = vld [vmem:[%s1 + $0x6d8] sm:$0xff]
        %v487 = vld [vmem:[%s1 + $0x6e0] sm:$0xff]
        %v488 = vld [vmem:[%s1 + $0x6e8] sm:$0xff]
        %v489 = vld [vmem:[%s1 + $0x6f0] sm:$0xff]
        %v490 = vld [vmem:[%s1 + $0x6f8] sm:$0xff]
        %v491 = vld [vmem:[%s1 + $0x700] sm:$0xff]
        %v492 = vld [vmem:[%s1 + $0x708] sm:$0xff]
        %v493 = vld [vmem:[%s1 + $0x710] sm:$0xff]
        %v494 = vld [vmem:[%s1 + $0x718] sm:$0xff]
        %v495 = vld [vmem:[%s1 + $0x720] sm:$0xff]
        %v496 = vld [vmem:[%s1 + $0x728] sm:$0xff]
        %v497 = vld [vmem:[%s1 + $0x730] sm:$0xff]
        %v498 = vld [vmem:[%s1 + $0x738] sm:$0xff]
        %v499 = vld [vmem:[%s1 + $0x740] sm:$0xff]
        %v500 = vld [vmem:[%s1 + $0x748] sm:$0xff]
        %v501 = vld [vmem:[%s1 + $0x750] sm:$0xff]
        %v502 = vld [vmem:[%s1 + $0x758] sm:$0xff]
        %v503 = vld [vmem:[%s1 + $0x760] sm:$0xff]
        %v504 = vld [vmem:[%s1 + $0x768] sm:$0xff]
        %v505 = vld [vmem:[%s1 + $0x770] sm:$0xff]
        %v506 = vld [vmem:[%s1 + $0x778] sm:$0xff]
        %v507 = vld [vmem:[%s1 + $0x780] sm:$0xff]
        %v508 = vld [vmem:[%s1 + $0x788] sm:$0xff]
        %v509 = vld [vmem:[%s1 + $0x790] sm:$0xff]
        %v510 = vld [vmem:[%s1 + $0x798] sm:$0xff]
        %v511 = vld [vmem:[%s1 + $0x7a0] sm:$0xff]
        %v512 = vld [vmem:[%s1 + $0x7a8] sm:$0xff]
        %v513 = vld [vmem:[%s1 + $0x7b0] sm:$0xff]
        %v514 = vld [vmem:[%s1 + $0x7b8] sm:$0xff]
        %v515 = vld [vmem:[%s1 + $0x7c0] sm:$0xff]
        %v516 = vld [vmem:[%s1 + $0x7c8] sm:$0xff]
        %v517 = vld [vmem:[%s1 + $0x7d0] sm:$0xff]
        %v518 = vld [vmem:[%s1 + $0x7d8] sm:$0xff]
        %v519 = vld [vmem:[%s1 + $0x7e0] sm:$0xff]
        %v520 = vld [vmem:[%s1 + $0x7e8] sm:$0xff]
        %v521 = vld [vmem:[%s1 + $0x7f0] sm:$0xff]
        %v522 = vld [vmem:[%s1 + $0x7f8] sm:$0xff]
        %v523 = vld [vmem:[%s1 + $0x800] sm:$0xff]
        %v524 = vld [vmem:[%s1 + $0x808] sm:$0xff]
        %v525 = vld [vmem:[%s1 + $0x810] sm:$0xff]
        %v526 = vld [vmem:[%s1 + $0x818] sm:$0xff]
        %v527 = vld [vmem:[%s1 + $0x820] sm:$0xff]
        %v528 = vld [vmem:[%s1 + $0x828] sm:$0xff]
        %v529 = vld [vmem:[%s1 + $0x830] sm:$0xff]
        %v530 = vld [vmem:[%s1 + $0x838] sm:$0xff]
        %v531 = vld [vmem:[%s1 + $0x840] sm:$0xff]
        %v532 = vld [vmem:[%s1 + $0x848] sm:$0xff]
        %v533 = vld [vmem:[%s1 + $0x850] sm:$0xff]
        %v534 = vld [vmem:[%s1 + $0x858] sm:$0xff]
        %v535 = vld [vmem:[%s1 + $0x860] sm:$0xff]
        %v536 = vld [vmem:[%s1 + $0x868] sm:$0xff]
        %v537 = vld [vmem:[%s1 + $0x870] sm:$0xff]
        %v538 = vld [vmem:[%s1 + $0x878] sm:$0xff]
        %v539 = vld [vmem:[%s1 + $0x880] sm:$0xff]
        %v540 = vld [vmem:[%s1 + $0x888] sm:$0xff]
        %v541 = vld [vmem:[%s1 + $0x890] sm:$0xff]
        %v542 = vld [vmem:[%s1 + $0x898] sm:$0xff]
        %v543 = vld [vmem:[%s1 + $0x8a0] sm:$0xff]
        %v544 = vld [vmem:[%s1 + $0x8a8] sm:$0xff]
        %v545 = vld [vmem:[%s1 + $0x8b0] sm:$0xff]
        %v546 = vld [vmem:[%s1 + $0x8b8] sm:$0xff]
        %v547 = vld [vmem:[%s1 + $0x8c0] sm:$0xff]
        %v548 = vld [vmem:[%s1 + $0x8c8] sm:$0xff]
        %v549 = vld [vmem:[%s1 + $0x8d0] sm:$0xff]
        %v550 = vld [vmem:[%s1 + $0x8d8] sm:$0xff]
        %v551 = vld [vmem:[%s1 + $0x8e0] sm:$0xff]
        %v552 = vld [vmem:[%s1 + $0x8e8] sm:$0xff]
        %v553 = vld [vmem:[%s1 + $0x8f0] sm:$0xff]
        %v554 = vld [vmem:[%s1 + $0x8f8] sm:$0xff]
        %v555 = vld [vmem:[%s1 + $0x900] sm:$0xff]
        %v556 = vld [vmem:[%s1 + $0x908] sm:$0xff]
        %v557 = vld [vmem:[%s1 + $0x910] sm:$0xff]
        %v558 = vld [vmem:[%s1 + $0x918] sm:$0xff]
        %v559 = vld [vmem:[%s1 + $0x920] sm:$0xff]
        %v560 = vld [vmem:[%s1 + $0x928] sm:$0xff]
        %v561 = vld [vmem:[%s1 + $0x930] sm:$0xff]
        %v562 = vld [vmem:[%s1 + $0x938] sm:$0xff]
        %v563 = vld [vmem:[%s1 + $0x940] sm:$0xff]
        %v564 = vld [vmem:[%s1 + $0x948] sm:$0xff]
        %v565 = vld [vmem:[%s1 + $0x950] sm:$0xff]
        %v566 = vld [vmem:[%s1 + $0x958] sm:$0xff]
        %v567 = vld [vmem:[%s1 + $0x960] sm:$0xff]
        %v568 = vld [vmem:[%s1 + $0x968] sm:$0xff]
        %v569 = vld [vmem:[%s1 + $0x970] sm:$0xff]
        %v570 = vld [vmem:[%s1 + $0x978] sm:$0xff]
        %v571 = vld [vmem:[%s1 + $0x980] sm:$0xff]
        %v572 = vld [vmem:[%s1 + $0x988] sm:$0xff]
        %v573 = vld [vmem:[%s1 + $0x990] sm:$0xff]
        %v574 = vld [vmem:[%s1 + $0x998] sm:$0xff]
        %v575 = vld [vmem:[%s1 + $0x9a0] sm:$0xff]
        %v576 = vld [vmem:[%s1 + $0x9a8] sm:$0xff]
        %v577 = vld [vmem:[%s1 + $0x9b0] sm:$0xff]
        %v578 = vld [vmem:[%s1 + $0x9b8] sm:$0xff]
        %v579 = vld [vmem:[%s1 + $0x9c0] sm:$0xff]
        %v580 = vld [vmem:[%s1 + $0x9c8] sm:$0xff]
        %v581 = vld [vmem:[%s1 + $0x9d0] sm:$0xff]
        %v582 = vld [vmem:[%s1 + $0x9d8] sm:$0xff]
        %v583 = vld [vmem:[%s1 + $0x9e0] sm:$0xff]
        %v584 = vld [vmem:[%s1 + $0x9e8] sm:$0xff]
        %v585 = vld [vmem:[%s1 + $0x9f0] sm:$0xff]
        %v586 = vld [vmem:[%s1 + $0x9f8] sm:$0xff]
        %v587 = vld [vmem:[%s1 + $0xa00] sm:$0xff]
        %v588 = vld [vmem:[%s1 + $0xa08] sm:$0xff]
        %v589 = vld [vmem:[%s1 + $0xa10] sm:$0xff]
        %v590 = vld [vmem:[%s1 + $0xa18] sm:$0xff]
        %v591 = vld [vmem:[%s1 + $0xa20] sm:$0xff]
        %v592 = vld [vmem:[%s1 + $0xa28] sm:$0xff]
        %v593 = vld [vmem:[%s1 + $0xa30] sm:$0xff]
        %v594 = vld [vmem:[%s1 + $0xa38] sm:$0xff]
        %v595 = vld [vmem:[%s1 + $0xa40] sm:$0xff]
        %v596 = vld [vmem:[%s1 + $0xa48] sm:$0xff]
        %v597 = vld [vmem:[%s1 + $0xa50] sm:$0xff]
        %v598 = vld [vmem:[%s1 + $0xa58] sm:$0xff]
        %v599 = vld [vmem:[%s1 + $0xa60] sm:$0xff]
        %v600 = vld [vmem:[%s1 + $0xa68] sm:$0xff]
        %v601 = vld [vmem:[%s1 + $0xa70] sm:$0xff]
        %v602 = vld [vmem:[%s1 + $0xa78] sm:$0xff]
        %v603 = vld [vmem:[%s1 + $0xa80] sm:$0xff]
        %v604 = vld [vmem:[%s1 + $0xa88] sm:$0xff]
        %v605 = vld [vmem:[%s1 + $0xa90] sm:$0xff]
        %v606 = vld [vmem:[%s1 + $0xa98] sm:$0xff]
        %v607 = vld [vmem:[%s1 + $0xaa0] sm:$0xff]
        %v608 = vld [vmem:[%s1 + $0xaa8] sm:$0xff]
        %v609 = vld [vmem:[%s1 + $0xab0] sm:$0xff]
        %v610 = vld [vmem:[%s1 + $0xab8] sm:$0xff]
        %v611 = vld [vmem:[%s1 + $0xac0] sm:$0xff]
        %v612 = vld [vmem:[%s1 + $0xac8] sm:$0xff]
        %v613 = vld [vmem:[%s1 + $0xad0] sm:$0xff]
        %v614 = vld [vmem:[%s1 + $0xad8] sm:$0xff]
        %v615 = vld [vmem:[%s1 + $0xae0] sm:$0xff]
        %v616 = vld [vmem:[%s1 + $0xae8] sm:$0xff]
        %v617 = vld [vmem:[%s1 + $0xaf0] sm:$0xff]
        %v618 = vld [vmem:[%s1 + $0xaf8] sm:$0xff]
        %v619 = vld [vmem:[%s1 + $0xb00] sm:$0xff]
        %v620 = vld [vmem:[%s1 + $0xb08] sm:$0xff]
        %v621 = vld [vmem:[%s1 + $0xb10] sm:$0xff]
        %v622 = vld [vmem:[%s1 + $0xb18] sm:$0xff]
        %v623 = vld [vmem:[%s1 + $0xb20] sm:$0xff]
        %v624 = vld [vmem:[%s1 + $0xb28] sm:$0xff]
        %v625 = vld [vmem:[%s1 + $0xb30] sm:$0xff]
        %v626 = vld [vmem:[%s1 + $0xb38] sm:$0xff]
        %v627 = vld [vmem:[%s1 + $0xb40] sm:$0xff]
        %v628 = vld [vmem:[%s1 + $0xb48] sm:$0xff]
        %v629 = vld [vmem:[%s1 + $0xb50] sm:$0xff]
        %v630 = vld [vmem:[%s1 + $0xb58] sm:$0xff]
        %v631 = vld [vmem:[%s1 + $0xb60] sm:$0xff]
        %v632 = vld [vmem:[%s1 + $0xb68] sm:$0xff]
        %v633 = vld [vmem:[%s1 + $0xb70] sm:$0xff]
        %v634 = vld [vmem:[%s1 + $0xb78] sm:$0xff]
        %v635 = vld [vmem:[%s1 + $0xb80] sm:$0xff]
        %v636 = vld [vmem:[%s1 + $0xb88] sm:$0xff]
        %v637 = vld [vmem:[%s1 + $0xb90] sm:$0xff]
        %v638 = vld [vmem:[%s1 + $0xb98] sm:$0xff]
        %v639 = vld [vmem:[%s1 + $0xba0] sm:$0xff]
        %v640 = vld [vmem:[%s1 + $0xba8] sm:$0xff]
        %v641 = vld [vmem:[%s1 + $0xbb0] sm:$0xff]
        %v642 = vld [vmem:[%s1 + $0xbb8] sm:$0xff]
        %v643 = vld [vmem:[%s1 + $0xbc0] sm:$0xff]
        %v644 = vld [vmem:[%s1 + $0xbc8] sm:$0xff]
        %v645 = vld [vmem:[%s1 + $0xbd0] sm:$0xff]
        %v646 = vld [vmem:[%s1 + $0xbd8] sm:$0xff]
        %v647 = vld [vmem:[%s1 + $0xbe0] sm:$0xff]
        %v648 = vld [vmem:[%s1 + $0xbe8] sm:$0xff]
        %v649 = vld [vmem:[%s1 + $0xbf0] sm:$0xff]
        %v650 = vld [vmem:[%s1 + $0xbf8] sm:$0xff]
        %v651 = vld [vmem:[%s1 + $0xc00] sm:$0xff]
        %v652 = vld [vmem:[%s1 + $0xc08] sm:$0xff]
        %v653 = vld [vmem:[%s1 + $0xc10] sm:$0xff]
        %v654 = vld [vmem:[%s1 + $0xc18] sm:$0xff]
        %v655 = vld [vmem:[%s1 + $0xc20] sm:$0xff]
        %v656 = vld [vmem:[%s1 + $0xc28] sm:$0xff]
        %v657 = vld [vmem:[%s1 + $0xc30] sm:$0xff]
        %v658 = vld [vmem:[%s1 + $0xc38] sm:$0xff]
        %v659 = vlaneseq
        %v660 = vshrl.u32 %v659, 7
        %v661 = vsub.s32 0, %v660
        %v662 = vrot.slane %v245, %v661
        %v663 = vlaneseq
        %v664 = vshrl.u32 %v663, 7
        %v665 = vsub.s32 0, %v664
        %v666 = vrot.slane %v246, %v665
        %v667 = vlaneseq
        %v668 = vshrl.u32 %v667, 7
        %v669 = vsub.s32 0, %v668
        %v670 = vrot.slane %v247, %v669
        %v671 = vlaneseq
        %v672 = vshrl.u32 %v671, 7
        %v673 = vsub.s32 0, %v672
        %v674 = vrot.slane %v248, %v673
        %v675 = vlaneseq
        %v676 = vshrl.u32 %v675, 7
        %v677 = vsub.s32 0, %v676
        %v678 = vrot.slane %v249, %v677
        %v679 = vlaneseq
        %v680 = vshrl.u32 %v679, 7
        %v681 = vsub.s32 0, %v680
        %v682 = vrot.slane %v250, %v681
        %v683 = vlaneseq
        %v684 = vshrl.u32 %v683, 7
        %v685 = vsub.s32 0, %v684
        %v686 = vrot.slane %v251, %v685
        %v687 = vlaneseq
        %v688 = vshrl.u32 %v687, 7
        %v689 = vsub.s32 0, %v688
        %v690 = vrot.slane %v252, %v689
        %v1083 = vunpack.c.l.b16 %v267
        %v1084 = vunpack.c.h.b16 %v267
        %v1085 = vunpack.c.l.b16 %v268
        %v1086 = vunpack.c.h.b16 %v268
        %v1087 = vunpack.c.l.b16 %v269
        %v1088 = vunpack.c.h.b16 %v269
        %v1089 = vunpack.c.l.b16 %v270
        %v1090 = vunpack.c.h.b16 %v270
        %v1091 = vunpack.c.l.b16 %v271
        %v1092 = vunpack.c.h.b16 %v271
        %v1093 = vunpack.c.l.b16 %v272
        %v1094 = vunpack.c.h.b16 %v272
        %v1095 = vunpack.c.l.b16 %v273
        %v1096 = vunpack.c.h.b16 %v273
        %v1097 = vunpack.c.l.b16 %v274
        %v1098 = vunpack.c.h.b16 %v274
        %v1099 = vunpack.c.l.b16 %v275
        %v1100 = vunpack.c.h.b16 %v275
        %v1101 = vunpack.c.l.b16 %v276
        %v1102 = vunpack.c.h.b16 %v276
        %v1103 = vunpack.c.l.b16 %v277
        %v1104 = vunpack.c.h.b16 %v277
        %v1105 = vunpack.c.l.b16 %v278
        %v1106 = vunpack.c.h.b16 %v278
        %v1107 = vunpack.c.l.b16 %v279
        %v1108 = vunpack.c.h.b16 %v279
        %v1109 = vunpack.c.l.b16 %v280
        %v1110 = vunpack.c.h.b16 %v280
        %v1111 = vunpack.c.l.b16 %v281
        %v1112 = vunpack.c.h.b16 %v281
        %v1113 = vunpack.c.l.b16 %v282
        %v1114 = vunpack.c.h.b16 %v282
        %v1115 = vunpack.c.l.b16 %v283
        %v1116 = vunpack.c.h.b16 %v283
        %v1117 = vunpack.c.l.b16 %v284
        %v1118 = vunpack.c.h.b16 %v284
        %v1119 = vunpack.c.l.b16 %v285
        %v1120 = vunpack.c.h.b16 %v285
        %v1121 = vunpack.c.l.b16 %v286
        %v1122 = vunpack.c.h.b16 %v286
        %v1123 = vunpack.c.l.b16 %v287
        %v1124 = vunpack.c.h.b16 %v287
        %v1125 = vunpack.c.l.b16 %v288
        %v1126 = vunpack.c.h.b16 %v288
        %v1127 = vunpack.c.l.b16 %v289
        %v1128 = vunpack.c.h.b16 %v289
        %v1129 = vunpack.c.l.b16 %v290
        %v1130 = vunpack.c.h.b16 %v290
        %v1131 = vunpack.c.l.b16 %v291
        %v1132 = vunpack.c.h.b16 %v291
        %v1133 = vunpack.c.l.b16 %v292
        %v1134 = vunpack.c.h.b16 %v292
        %v1135 = vunpack.c.l.b16 %v293
        %v1136 = vunpack.c.h.b16 %v293
        %v1137 = vunpack.c.l.b16 %v294
        %v1138 = vunpack.c.h.b16 %v294
        %v1139 = vunpack.c.l.b16 %v295
        %v1140 = vunpack.c.h.b16 %v295
        %v1141 = vunpack.c.l.b16 %v296
        %v1142 = vunpack.c.h.b16 %v296
        %v1143 = vunpack.c.l.b16 %v297
        %v1144 = vunpack.c.h.b16 %v297
        %v1145 = vunpack.c.l.b16 %v298
        %v1146 = vunpack.c.h.b16 %v298
        %v1147 = vunpack.c.l.b16 %v299
        %v1148 = vunpack.c.h.b16 %v299
        %v1149 = vunpack.c.l.b16 %v300
        %v1150 = vunpack.c.h.b16 %v300
        %v1151 = vunpack.c.l.b16 %v301
        %v1152 = vunpack.c.h.b16 %v301
        %v1153 = vunpack.c.l.b16 %v302
        %v1154 = vunpack.c.h.b16 %v302
        %v1155 = vunpack.c.l.b16 %v303
        %v1156 = vunpack.c.h.b16 %v303
        %v1157 = vunpack.c.l.b16 %v304
        %v1158 = vunpack.c.h.b16 %v304
        %v1159 = vunpack.c.l.b16 %v305
        %v1160 = vunpack.c.h.b16 %v305
        %v1161 = vunpack.c.l.b16 %v306
        %v1162 = vunpack.c.h.b16 %v306
        %v1163 = vunpack.c.l.b16 %v307
        %v1164 = vunpack.c.h.b16 %v307
        %v1165 = vunpack.c.l.b16 %v308
        %v1166 = vunpack.c.h.b16 %v308
        %v1167 = vunpack.c.l.b16 %v309
        %v1168 = vunpack.c.h.b16 %v309
        %v1169 = vunpack.c.l.b16 %v310
        %v1170 = vunpack.c.h.b16 %v310
        %v1171 = vunpack.c.l.b16 %v311
        %v1172 = vunpack.c.h.b16 %v311
        %v1173 = vunpack.c.l.b16 %v312
        %v1174 = vunpack.c.h.b16 %v312
        %v1175 = vunpack.c.l.b16 %v313
        %v1176 = vunpack.c.h.b16 %v313
        %v1177 = vunpack.c.l.b16 %v314
        %v1178 = vunpack.c.h.b16 %v314
        %v1179 = vunpack.c.l.b16 %v315
        %v1180 = vunpack.c.h.b16 %v315
        %v1181 = vunpack.c.l.b16 %v316
        %v1182 = vunpack.c.h.b16 %v316
        %v1183 = vunpack.c.l.b16 %v317
        %v1184 = vunpack.c.h.b16 %v317
        %v1185 = vunpack.c.l.b16 %v318
        %v1186 = vunpack.c.h.b16 %v318
        %v1187 = vunpack.c.l.b16 %v319
        %v1188 = vunpack.c.h.b16 %v319
        %v1189 = vunpack.c.l.b16 %v320
        %v1190 = vunpack.c.h.b16 %v320
        %v1191 = vunpack.c.l.b16 %v321
        %v1192 = vunpack.c.h.b16 %v321
        %v1193 = vunpack.c.l.b16 %v322
        %v1194 = vunpack.c.h.b16 %v322
        %v1195 = vunpack.c.l.b16 %v323
        %v1196 = vunpack.c.h.b16 %v323
        %v1197 = vunpack.c.l.b16 %v324
        %v1198 = vunpack.c.h.b16 %v324
        %v1199 = vunpack.c.l.b16 %v325
        %v1200 = vunpack.c.h.b16 %v325
        %v1201 = vunpack.c.l.b16 %v326
        %v1202 = vunpack.c.h.b16 %v326
        %v1203 = vunpack.c.l.b16 %v327
        %v1204 = vunpack.c.h.b16 %v327
        %v1205 = vunpack.c.l.b16 %v328
        %v1206 = vunpack.c.h.b16 %v328
        %v1207 = vunpack.c.l.b16 %v329
        %v1208 = vunpack.c.h.b16 %v329
        %v1209 = vunpack.c.l.b16 %v330
        %v1210 = vunpack.c.h.b16 %v330
        %v1211 = vunpack.c.l.b16 %v331
        %v1212 = vunpack.c.h.b16 %v331
        %v1213 = vunpack.c.l.b16 %v332
        %v1214 = vunpack.c.h.b16 %v332
        %v1215 = vunpack.c.l.b16 %v333
        %v1216 = vunpack.c.h.b16 %v333
        %v1217 = vunpack.c.l.b16 %v334
        %v1218 = vunpack.c.h.b16 %v334
        %v1219 = vunpack.c.l.b16 %v335
        %v1220 = vunpack.c.h.b16 %v335
        %v1221 = vunpack.c.l.b16 %v336
        %v1222 = vunpack.c.h.b16 %v336
        %v1223 = vunpack.c.l.b16 %v337
        %v1224 = vunpack.c.h.b16 %v337
        %v1225 = vunpack.c.l.b16 %v338
        %v1226 = vunpack.c.h.b16 %v338
        %v1227 = vunpack.c.l.b16 %v339
        %v1228 = vunpack.c.h.b16 %v339
        %v1229 = vunpack.c.l.b16 %v340
        %v1230 = vunpack.c.h.b16 %v340
        %v1231 = vunpack.c.l.b16 %v341
        %v1232 = vunpack.c.h.b16 %v341
        %v1233 = vunpack.c.l.b16 %v342
        %v1234 = vunpack.c.h.b16 %v342
        %v1235 = vunpack.c.l.b16 %v343
        %v1236 = vunpack.c.h.b16 %v343
        %v1237 = vunpack.c.l.b16 %v344
        %v1238 = vunpack.c.h.b16 %v344
        %v1239 = vunpack.c.l.b16 %v345
        %v1240 = vunpack.c.h.b16 %v345
        %v1241 = vunpack.c.l.b16 %v346
        %v1242 = vunpack.c.h.b16 %v346
        %v1243 = vunpack.c.l.b16 %v347
        %v1244 = vunpack.c.h.b16 %v347
        %v1245 = vunpack.c.l.b16 %v348
        %v1246 = vunpack.c.h.b16 %v348
        %v1247 = vunpack.c.l.b16 %v349
        %v1248 = vunpack.c.h.b16 %v349
        %v1249 = vunpack.c.l.b16 %v350
        %v1250 = vunpack.c.h.b16 %v350
        %v1251 = vunpack.c.l.b16 %v351
        %v1252 = vunpack.c.h.b16 %v351
        %v1253 = vunpack.c.l.b16 %v352
        %v1254 = vunpack.c.h.b16 %v352
        %v1255 = vunpack.c.l.b16 %v353
        %v1256 = vunpack.c.h.b16 %v353
        %v1257 = vunpack.c.l.b16 %v354
        %v1258 = vunpack.c.h.b16 %v354
        %v1259 = vunpack.c.l.b16 %v355
        %v1260 = vunpack.c.h.b16 %v355
        %v1261 = vunpack.c.l.b16 %v356
        %v1262 = vunpack.c.h.b16 %v356
        %v1263 = vunpack.c.l.b16 %v357
        %v1264 = vunpack.c.h.b16 %v357
        %v1265 = vunpack.c.l.b16 %v358
        %v1266 = vunpack.c.h.b16 %v358
        %v1267 = vunpack.c.l.b16 %v359
        %v1268 = vunpack.c.h.b16 %v359
        %v1269 = vunpack.c.l.b16 %v360
        %v1270 = vunpack.c.h.b16 %v360
        %v1271 = vunpack.c.l.b16 %v361
        %v1272 = vunpack.c.h.b16 %v361
        %v1273 = vunpack.c.l.b16 %v362
        %v1274 = vunpack.c.h.b16 %v362
        %v1275 = vunpack.c.l.b16 %v363
        %v1276 = vunpack.c.h.b16 %v363
        %v1277 = vunpack.c.l.b16 %v364
        %v1278 = vunpack.c.h.b16 %v364
        %v1279 = vunpack.c.l.b16 %v365
        %v1280 = vunpack.c.h.b16 %v365
        %v1281 = vunpack.c.l.b16 %v366
        %v1282 = vunpack.c.h.b16 %v366
        %v1283 = vunpack.c.l.b16 %v367
        %v1284 = vunpack.c.h.b16 %v367
        %v1285 = vunpack.c.l.b16 %v368
        %v1286 = vunpack.c.h.b16 %v368
        %v1287 = vunpack.c.l.b16 %v369
        %v1288 = vunpack.c.h.b16 %v369
        %v1289 = vunpack.c.l.b16 %v370
        %v1290 = vunpack.c.h.b16 %v370
        %v1291 = vunpack.c.l.b16 %v371
        %v1292 = vunpack.c.h.b16 %v371
        %v1293 = vunpack.c.l.b16 %v372
        %v1294 = vunpack.c.h.b16 %v372
        %v1295 = vunpack.c.l.b16 %v373
        %v1296 = vunpack.c.h.b16 %v373
        %v1297 = vunpack.c.l.b16 %v374
        %v1298 = vunpack.c.h.b16 %v374
        %v1299 = vunpack.c.l.b16 %v375
        %v1300 = vunpack.c.h.b16 %v375
        %v1301 = vunpack.c.l.b16 %v376
        %v1302 = vunpack.c.h.b16 %v376
        %v1303 = vunpack.c.l.b16 %v377
        %v1304 = vunpack.c.h.b16 %v377
        %v1305 = vunpack.c.l.b16 %v378
        %v1306 = vunpack.c.h.b16 %v378
        %v1307 = vunpack.c.l.b16 %v379
        %v1308 = vunpack.c.h.b16 %v379
        %v1309 = vunpack.c.l.b16 %v380
        %v1310 = vunpack.c.h.b16 %v380
        %v1311 = vunpack.c.l.b16 %v381
        %v1312 = vunpack.c.h.b16 %v381
        %v1313 = vunpack.c.l.b16 %v382
        %v1314 = vunpack.c.h.b16 %v382
        %v1315 = vunpack.c.l.b16 %v383
        %v1316 = vunpack.c.h.b16 %v383
        %v1317 = vunpack.c.l.b16 %v384
        %v1318 = vunpack.c.h.b16 %v384
        %v1319 = vunpack.c.l.b16 %v385
        %v1320 = vunpack.c.h.b16 %v385
        %v1321 = vunpack.c.l.b16 %v386
        %v1322 = vunpack.c.h.b16 %v386
        %v1323 = vunpack.c.l.b16 %v387
        %v1324 = vunpack.c.h.b16 %v387
        %v1325 = vunpack.c.l.b16 %v388
        %v1326 = vunpack.c.h.b16 %v388
        %v1327 = vunpack.c.l.b16 %v389
        %v1328 = vunpack.c.h.b16 %v389
        %v1329 = vunpack.c.l.b16 %v390
        %v1330 = vunpack.c.h.b16 %v390
        %v1331 = vunpack.c.l.b16 %v391
        %v1332 = vunpack.c.h.b16 %v391
        %v1333 = vunpack.c.l.b16 %v392
        %v1334 = vunpack.c.h.b16 %v392
        %v1335 = vunpack.c.l.b16 %v393
        %v1336 = vunpack.c.h.b16 %v393
        %v1337 = vunpack.c.l.b16 %v394
        %v1338 = vunpack.c.h.b16 %v394
        %v1339 = vunpack.c.l.b16 %v395
        %v1340 = vunpack.c.h.b16 %v395
        %v1341 = vunpack.c.l.b16 %v396
        %v1342 = vunpack.c.h.b16 %v396
        %v1343 = vunpack.c.l.b16 %v397
        %v1344 = vunpack.c.h.b16 %v397
        %v1345 = vunpack.c.l.b16 %v398
        %v1346 = vunpack.c.h.b16 %v398
        %v1347 = vunpack.c.l.b16 %v399
        %v1348 = vunpack.c.h.b16 %v399
        %v1349 = vunpack.c.l.b16 %v400
        %v1350 = vunpack.c.h.b16 %v400
        %v1351 = vunpack.c.l.b16 %v401
        %v1352 = vunpack.c.h.b16 %v401
        %v1353 = vunpack.c.l.b16 %v402
        %v1354 = vunpack.c.h.b16 %v402
        %v1355 = vunpack.c.l.b16 %v403
        %v1356 = vunpack.c.h.b16 %v403
        %v1357 = vunpack.c.l.b16 %v404
        %v1358 = vunpack.c.h.b16 %v404
        %v1359 = vunpack.c.l.b16 %v405
        %v1360 = vunpack.c.h.b16 %v405
        %v1361 = vunpack.c.l.b16 %v406
        %v1362 = vunpack.c.h.b16 %v406
        %v1363 = vunpack.c.l.b16 %v407
        %v1364 = vunpack.c.h.b16 %v407
        %v1365 = vunpack.c.l.b16 %v408
        %v1366 = vunpack.c.h.b16 %v408
        %v1367 = vunpack.c.l.b16 %v409
        %v1368 = vunpack.c.h.b16 %v409
        %v1369 = vunpack.c.l.b16 %v410
        %v1370 = vunpack.c.h.b16 %v410
        %v1371 = vunpack.c.l.b16 %v411
        %v1372 = vunpack.c.h.b16 %v411
        %v1373 = vunpack.c.l.b16 %v412
        %v1374 = vunpack.c.h.b16 %v412
        %v1375 = vunpack.c.l.b16 %v413
        %v1376 = vunpack.c.h.b16 %v413
        %v1377 = vunpack.c.l.b16 %v414
        %v1378 = vunpack.c.h.b16 %v414
        %v1379 = vunpack.c.l.b16 %v415
        %v1380 = vunpack.c.h.b16 %v415
        %v1381 = vunpack.c.l.b16 %v416
        %v1382 = vunpack.c.h.b16 %v416
        %v1383 = vunpack.c.l.b16 %v417
        %v1384 = vunpack.c.h.b16 %v417
        %v1385 = vunpack.c.l.b16 %v418
        %v1386 = vunpack.c.h.b16 %v418
        %v1387 = vunpack.c.l.b16 %v419
        %v1388 = vunpack.c.h.b16 %v419
        %v1389 = vunpack.c.l.b16 %v420
        %v1390 = vunpack.c.h.b16 %v420
        %v1391 = vunpack.c.l.b16 %v421
        %v1392 = vunpack.c.h.b16 %v421
        %v1393 = vunpack.c.l.b16 %v422
        %v1394 = vunpack.c.h.b16 %v422
        %v1395 = vunpack.c.l.b16 %v423
        %v1396 = vunpack.c.h.b16 %v423
        %v1397 = vunpack.c.l.b16 %v424
        %v1398 = vunpack.c.h.b16 %v424
        %v1399 = vunpack.c.l.b16 %v425
        %v1400 = vunpack.c.h.b16 %v425
        %v1401 = vunpack.c.l.b16 %v426
        %v1402 = vunpack.c.h.b16 %v426
        %v1403 = vunpack.c.l.b16 %v427
        %v1404 = vunpack.c.h.b16 %v427
        %v1405 = vunpack.c.l.b16 %v428
        %v1406 = vunpack.c.h.b16 %v428
        %v1407 = vunpack.c.l.b16 %v429
        %v1408 = vunpack.c.h.b16 %v429
        %v1409 = vunpack.c.l.b16 %v430
        %v1410 = vunpack.c.h.b16 %v430
        %v1411 = vunpack.c.l.b16 %v431
        %v1412 = vunpack.c.h.b16 %v431
        %v1413 = vunpack.c.l.b16 %v432
        %v1414 = vunpack.c.h.b16 %v432
        %v1415 = vunpack.c.l.b16 %v433
        %v1416 = vunpack.c.h.b16 %v433
        %v1417 = vunpack.c.l.b16 %v434
        %v1418 = vunpack.c.h.b16 %v434
        %v1419 = vunpack.c.l.b16 %v435
        %v1420 = vunpack.c.h.b16 %v435
        %v1421 = vunpack.c.l.b16 %v436
        %v1422 = vunpack.c.h.b16 %v436
        %v1423 = vunpack.c.l.b16 %v437
        %v1424 = vunpack.c.h.b16 %v437
        %v1425 = vunpack.c.l.b16 %v438
        %v1426 = vunpack.c.h.b16 %v438
        %v1427 = vunpack.c.l.b16 %v439
        %v1428 = vunpack.c.h.b16 %v439
        %v1429 = vunpack.c.l.b16 %v440
        %v1430 = vunpack.c.h.b16 %v440
        %v1431 = vunpack.c.l.b16 %v441
        %v1432 = vunpack.c.h.b16 %v441
        %v1433 = vunpack.c.l.b16 %v442
        %v1434 = vunpack.c.h.b16 %v442
        %v1435 = vunpack.c.l.b16 %v443
        %v1436 = vunpack.c.h.b16 %v443
        %v1437 = vunpack.c.l.b16 %v444
        %v1438 = vunpack.c.h.b16 %v444
        %v1439 = vunpack.c.l.b16 %v445
        %v1440 = vunpack.c.h.b16 %v445
        %v1441 = vunpack.c.l.b16 %v446
        %v1442 = vunpack.c.h.b16 %v446
        %v1443 = vunpack.c.l.b16 %v447
        %v1444 = vunpack.c.h.b16 %v447
        %v1445 = vunpack.c.l.b16 %v448
        %v1446 = vunpack.c.h.b16 %v448
        %v1447 = vunpack.c.l.b16 %v449
        %v1448 = vunpack.c.h.b16 %v449
        %v1449 = vunpack.c.l.b16 %v450
        %v1450 = vunpack.c.h.b16 %v450
        %v1451 = vunpack.c.l.b16 %v451
        %v1452 = vunpack.c.h.b16 %v451
        %v1453 = vunpack.c.l.b16 %v452
        %v1454 = vunpack.c.h.b16 %v452
        %v1455 = vunpack.c.l.b16 %v453
        %v1456 = vunpack.c.h.b16 %v453
        %v1457 = vunpack.c.l.b16 %v454
        %v1458 = vunpack.c.h.b16 %v454
        %v1459 = vunpack.c.l.b16 %v455
        %v1460 = vunpack.c.h.b16 %v455
        %v1461 = vunpack.c.l.b16 %v456
        %v1462 = vunpack.c.h.b16 %v456
        %v1463 = vunpack.c.l.b16 %v457
        %v1464 = vunpack.c.h.b16 %v457
        %v1465 = vunpack.c.l.b16 %v458
        %v1466 = vunpack.c.h.b16 %v458
        %v1467 = vunpack.c.l.b16 %v459
        %v1468 = vunpack.c.h.b16 %v459
        %v1469 = vunpack.c.l.b16 %v460
        %v1470 = vunpack.c.h.b16 %v460
        %v1471 = vunpack.c.l.b16 %v461
        %v1472 = vunpack.c.h.b16 %v461
        %v1473 = vunpack.c.l.b16 %v462
        %v1474 = vunpack.c.h.b16 %v462
        %v1475 = vunpack.c.l.b16 %v463
        %v1476 = vunpack.c.h.b16 %v463
        %v1477 = vunpack.c.l.b16 %v464
        %v1478 = vunpack.c.h.b16 %v464
        %v1479 = vunpack.c.l.b16 %v465
        %v1480 = vunpack.c.h.b16 %v465
        %v1481 = vunpack.c.l.b16 %v466
        %v1482 = vunpack.c.h.b16 %v466
        %v1483 = vunpack.c.l.b16 %v467
        %v1484 = vunpack.c.h.b16 %v467
        %v1485 = vunpack.c.l.b16 %v468
        %v1486 = vunpack.c.h.b16 %v468
        %v1487 = vunpack.c.l.b16 %v469
        %v1488 = vunpack.c.h.b16 %v469
        %v1489 = vunpack.c.l.b16 %v470
        %v1490 = vunpack.c.h.b16 %v470
        %v1491 = vunpack.c.l.b16 %v471
        %v1492 = vunpack.c.h.b16 %v471
        %v1493 = vunpack.c.l.b16 %v472
        %v1494 = vunpack.c.h.b16 %v472
        %v1495 = vunpack.c.l.b16 %v473
        %v1496 = vunpack.c.h.b16 %v473
        %v1497 = vunpack.c.l.b16 %v474
        %v1498 = vunpack.c.h.b16 %v474
        %v1499 = vunpack.c.l.b16 %v475
        %v1500 = vunpack.c.h.b16 %v475
        %v1501 = vunpack.c.l.b16 %v476
        %v1502 = vunpack.c.h.b16 %v476
        %v1503 = vunpack.c.l.b16 %v477
        %v1504 = vunpack.c.h.b16 %v477
        %v1505 = vunpack.c.l.b16 %v478
        %v1506 = vunpack.c.h.b16 %v478
        %v1507 = vunpack.c.l.b16 %v479
        %v1508 = vunpack.c.h.b16 %v479
        %v1509 = vunpack.c.l.b16 %v480
        %v1510 = vunpack.c.h.b16 %v480
        %v1511 = vunpack.c.l.b16 %v481
        %v1512 = vunpack.c.h.b16 %v481
        %v1513 = vunpack.c.l.b16 %v482
        %v1514 = vunpack.c.h.b16 %v482
        %v1515 = vunpack.c.l.b16 %v483
        %v1516 = vunpack.c.h.b16 %v483
        %v1517 = vunpack.c.l.b16 %v484
        %v1518 = vunpack.c.h.b16 %v484
        %v1519 = vunpack.c.l.b16 %v485
        %v1520 = vunpack.c.h.b16 %v485
        %v1521 = vunpack.c.l.b16 %v486
        %v1522 = vunpack.c.h.b16 %v486
        %v1523 = vunpack.c.l.b16 %v487
        %v1524 = vunpack.c.h.b16 %v487
        %v1525 = vunpack.c.l.b16 %v488
        %v1526 = vunpack.c.h.b16 %v488
        %v1527 = vunpack.c.l.b16 %v489
        %v1528 = vunpack.c.h.b16 %v489
        %v1529 = vunpack.c.l.b16 %v490
        %v1530 = vunpack.c.h.b16 %v490
        %v1531 = vunpack.c.l.b16 %v491
        %v1532 = vunpack.c.h.b16 %v491
        %v1533 = vunpack.c.l.b16 %v492
        %v1534 = vunpack.c.h.b16 %v492
        %v1535 = vunpack.c.l.b16 %v493
        %v1536 = vunpack.c.h.b16 %v493
        %v1537 = vunpack.c.l.b16 %v494
        %v1538 = vunpack.c.h.b16 %v494
        %v1539 = vunpack.c.l.b16 %v495
        %v1540 = vunpack.c.h.b16 %v495
        %v1541 = vunpack.c.l.b16 %v496
        %v1542 = vunpack.c.h.b16 %v496
        %v1543 = vunpack.c.l.b16 %v497
        %v1544 = vunpack.c.h.b16 %v497
        %v1545 = vunpack.c.l.b16 %v498
        %v1546 = vunpack.c.h.b16 %v498
        %v1547 = vunpack.c.l.b16 %v499
        %v1548 = vunpack.c.h.b16 %v499
        %v1549 = vunpack.c.l.b16 %v500
        %v1550 = vunpack.c.h.b16 %v500
        %v1551 = vunpack.c.l.b16 %v501
        %v1552 = vunpack.c.h.b16 %v501
        %v1553 = vunpack.c.l.b16 %v502
        %v1554 = vunpack.c.h.b16 %v502
        %v1555 = vunpack.c.l.b16 %v503
        %v1556 = vunpack.c.h.b16 %v503
        %v1557 = vunpack.c.l.b16 %v504
        %v1558 = vunpack.c.h.b16 %v504
        %v1559 = vunpack.c.l.b16 %v505
        %v1560 = vunpack.c.h.b16 %v505
        %v1561 = vunpack.c.l.b16 %v506
        %v1562 = vunpack.c.h.b16 %v506
        %v1563 = vunpack.c.l.b16 %v507
        %v1564 = vunpack.c.h.b16 %v507
        %v1565 = vunpack.c.l.b16 %v508
        %v1566 = vunpack.c.h.b16 %v508
        %v1567 = vunpack.c.l.b16 %v509
        %v1568 = vunpack.c.h.b16 %v509
        %v1569 = vunpack.c.l.b16 %v510
        %v1570 = vunpack.c.h.b16 %v510
        %v1571 = vunpack.c.l.b16 %v511
        %v1572 = vunpack.c.h.b16 %v511
        %v1573 = vunpack.c.l.b16 %v512
        %v1574 = vunpack.c.h.b16 %v512
        %v1575 = vunpack.c.l.b16 %v513
        %v1576 = vunpack.c.h.b16 %v513
        %v1577 = vunpack.c.l.b16 %v514
        %v1578 = vunpack.c.h.b16 %v514
        %v1579 = vunpack.c.l.b16 %v515
        %v1580 = vunpack.c.h.b16 %v515
        %v1581 = vunpack.c.l.b16 %v516
        %v1582 = vunpack.c.h.b16 %v516
        %v1583 = vunpack.c.l.b16 %v517
        %v1584 = vunpack.c.h.b16 %v517
        %v1585 = vunpack.c.l.b16 %v518
        %v1586 = vunpack.c.h.b16 %v518
        %v1587 = vunpack.c.l.b16 %v519
        %v1588 = vunpack.c.h.b16 %v519
        %v1589 = vunpack.c.l.b16 %v520
        %v1590 = vunpack.c.h.b16 %v520
        %v1591 = vunpack.c.l.b16 %v521
        %v1592 = vunpack.c.h.b16 %v521
        %v1593 = vunpack.c.l.b16 %v522
        %v1594 = vunpack.c.h.b16 %v522
        %v1595 = vunpack.c.l.b16 %v523
        %v1596 = vunpack.c.h.b16 %v523
        %v1597 = vunpack.c.l.b16 %v524
        %v1598 = vunpack.c.h.b16 %v524
        %v1599 = vunpack.c.l.b16 %v525
        %v1600 = vunpack.c.h.b16 %v525
        %v1601 = vunpack.c.l.b16 %v526
        %v1602 = vunpack.c.h.b16 %v526
        %v1603 = vunpack.c.l.b16 %v527
        %v1604 = vunpack.c.h.b16 %v527
        %v1605 = vunpack.c.l.b16 %v528
        %v1606 = vunpack.c.h.b16 %v528
        %v1607 = vunpack.c.l.b16 %v529
        %v1608 = vunpack.c.h.b16 %v529
        %v1609 = vunpack.c.l.b16 %v530
        %v1610 = vunpack.c.h.b16 %v530
        %v1611 = vunpack.c.l.b16 %v531
        %v1612 = vunpack.c.h.b16 %v531
        %v1613 = vunpack.c.l.b16 %v532
        %v1614 = vunpack.c.h.b16 %v532
        %v1615 = vunpack.c.l.b16 %v533
        %v1616 = vunpack.c.h.b16 %v533
        %v1617 = vunpack.c.l.b16 %v534
        %v1618 = vunpack.c.h.b16 %v534
        %v1619 = vunpack.c.l.b16 %v535
        %v1620 = vunpack.c.h.b16 %v535
        %v1621 = vunpack.c.l.b16 %v536
        %v1622 = vunpack.c.h.b16 %v536
        %v1623 = vunpack.c.l.b16 %v537
        %v1624 = vunpack.c.h.b16 %v537
        %v1625 = vunpack.c.l.b16 %v538
        %v1626 = vunpack.c.h.b16 %v538
        %v1627 = vunpack.c.l.b16 %v539
        %v1628 = vunpack.c.h.b16 %v539
        %v1629 = vunpack.c.l.b16 %v540
        %v1630 = vunpack.c.h.b16 %v540
        %v1631 = vunpack.c.l.b16 %v541
        %v1632 = vunpack.c.h.b16 %v541
        %v1633 = vunpack.c.l.b16 %v542
        %v1634 = vunpack.c.h.b16 %v542
        %v1635 = vunpack.c.l.b16 %v543
        %v1636 = vunpack.c.h.b16 %v543
        %v1637 = vunpack.c.l.b16 %v544
        %v1638 = vunpack.c.h.b16 %v544
        %v1639 = vunpack.c.l.b16 %v545
        %v1640 = vunpack.c.h.b16 %v545
        %v1641 = vunpack.c.l.b16 %v546
        %v1642 = vunpack.c.h.b16 %v546
        %v1643 = vunpack.c.l.b16 %v547
        %v1644 = vunpack.c.h.b16 %v547
        %v1645 = vunpack.c.l.b16 %v548
        %v1646 = vunpack.c.h.b16 %v548
        %v1647 = vunpack.c.l.b16 %v549
        %v1648 = vunpack.c.h.b16 %v549
        %v1649 = vunpack.c.l.b16 %v550
        %v1650 = vunpack.c.h.b16 %v550
        %v1651 = vunpack.c.l.b16 %v551
        %v1652 = vunpack.c.h.b16 %v551
        %v1653 = vunpack.c.l.b16 %v552
        %v1654 = vunpack.c.h.b16 %v552
        %v1655 = vunpack.c.l.b16 %v553
        %v1656 = vunpack.c.h.b16 %v553
        %v1657 = vunpack.c.l.b16 %v554
        %v1658 = vunpack.c.h.b16 %v554
        %v1659 = vunpack.c.l.b16 %v555
        %v1660 = vunpack.c.h.b16 %v555
        %v1661 = vunpack.c.l.b16 %v556
        %v1662 = vunpack.c.h.b16 %v556
        %v1663 = vunpack.c.l.b16 %v557
        %v1664 = vunpack.c.h.b16 %v557
        %v1665 = vunpack.c.l.b16 %v558
        %v1666 = vunpack.c.h.b16 %v558
        %v1667 = vunpack.c.l.b16 %v559
        %v1668 = vunpack.c.h.b16 %v559
        %v1669 = vunpack.c.l.b16 %v560
        %v1670 = vunpack.c.h.b16 %v560
        %v1671 = vunpack.c.l.b16 %v561
        %v1672 = vunpack.c.h.b16 %v561
        %v1673 = vunpack.c.l.b16 %v562
        %v1674 = vunpack.c.h.b16 %v562
        %v1675 = vunpack.c.l.b16 %v563
        %v1676 = vunpack.c.h.b16 %v563
        %v1677 = vunpack.c.l.b16 %v564
        %v1678 = vunpack.c.h.b16 %v564
        %v1679 = vunpack.c.l.b16 %v565
        %v1680 = vunpack.c.h.b16 %v565
        %v1681 = vunpack.c.l.b16 %v566
        %v1682 = vunpack.c.h.b16 %v566
        %v1683 = vunpack.c.l.b16 %v567
        %v1684 = vunpack.c.h.b16 %v567
        %v1685 = vunpack.c.l.b16 %v568
        %v1686 = vunpack.c.h.b16 %v568
        %v1687 = vunpack.c.l.b16 %v569
        %v1688 = vunpack.c.h.b16 %v569
        %v1689 = vunpack.c.l.b16 %v570
        %v1690 = vunpack.c.h.b16 %v570
        %v1691 = vunpack.c.l.b16 %v571
        %v1692 = vunpack.c.h.b16 %v571
        %v1693 = vunpack.c.l.b16 %v572
        %v1694 = vunpack.c.h.b16 %v572
        %v1695 = vunpack.c.l.b16 %v573
        %v1696 = vunpack.c.h.b16 %v573
        %v1697 = vunpack.c.l.b16 %v574
        %v1698 = vunpack.c.h.b16 %v574
        %v1699 = vunpack.c.l.b16 %v575
        %v1700 = vunpack.c.h.b16 %v575
        %v1701 = vunpack.c.l.b16 %v576
        %v1702 = vunpack.c.h.b16 %v576
        %v1703 = vunpack.c.l.b16 %v577
        %v1704 = vunpack.c.h.b16 %v577
        %v1705 = vunpack.c.l.b16 %v578
        %v1706 = vunpack.c.h.b16 %v578
        %v1707 = vunpack.c.l.b16 %v579
        %v1708 = vunpack.c.h.b16 %v579
        %v1709 = vunpack.c.l.b16 %v580
        %v1710 = vunpack.c.h.b16 %v580
        %v1711 = vunpack.c.l.b16 %v581
        %v1712 = vunpack.c.h.b16 %v581
        %v1713 = vunpack.c.l.b16 %v582
        %v1714 = vunpack.c.h.b16 %v582
        %v1715 = vunpack.c.l.b16 %v583
        %v1716 = vunpack.c.h.b16 %v583
        %v1717 = vunpack.c.l.b16 %v584
        %v1718 = vunpack.c.h.b16 %v584
        %v1719 = vunpack.c.l.b16 %v585
        %v1720 = vunpack.c.h.b16 %v585
        %v1721 = vunpack.c.l.b16 %v586
        %v1722 = vunpack.c.h.b16 %v586
        %v1723 = vunpack.c.l.b16 %v587
        %v1724 = vunpack.c.h.b16 %v587
        %v1725 = vunpack.c.l.b16 %v588
        %v1726 = vunpack.c.h.b16 %v588
        %v1727 = vunpack.c.l.b16 %v589
        %v1728 = vunpack.c.h.b16 %v589
        %v1729 = vunpack.c.l.b16 %v590
        %v1730 = vunpack.c.h.b16 %v590
        %v1731 = vunpack.c.l.b16 %v591
        %v1732 = vunpack.c.h.b16 %v591
        %v1733 = vunpack.c.l.b16 %v592
        %v1734 = vunpack.c.h.b16 %v592
        %v1735 = vunpack.c.l.b16 %v593
        %v1736 = vunpack.c.h.b16 %v593
        %v1737 = vunpack.c.l.b16 %v594
        %v1738 = vunpack.c.h.b16 %v594
        %v1739 = vunpack.c.l.b16 %v595
        %v1740 = vunpack.c.h.b16 %v595
        %v1741 = vunpack.c.l.b16 %v596
        %v1742 = vunpack.c.h.b16 %v596
        %v1743 = vunpack.c.l.b16 %v597
        %v1744 = vunpack.c.h.b16 %v597
        %v1745 = vunpack.c.l.b16 %v598
        %v1746 = vunpack.c.h.b16 %v598
        %v1747 = vunpack.c.l.b16 %v599
        %v1748 = vunpack.c.h.b16 %v599
        %v1749 = vunpack.c.l.b16 %v600
        %v1750 = vunpack.c.h.b16 %v600
        %v1751 = vunpack.c.l.b16 %v601
        %v1752 = vunpack.c.h.b16 %v601
        %v1753 = vunpack.c.l.b16 %v602
        %v1754 = vunpack.c.h.b16 %v602
        %v1755 = vunpack.c.l.b16 %v603
        %v1756 = vunpack.c.h.b16 %v603
        %v1757 = vunpack.c.l.b16 %v604
        %v1758 = vunpack.c.h.b16 %v604
        %v1759 = vunpack.c.l.b16 %v605
        %v1760 = vunpack.c.h.b16 %v605
        %v1761 = vunpack.c.l.b16 %v606
        %v1762 = vunpack.c.h.b16 %v606
        %v1763 = vunpack.c.l.b16 %v607
        %v1764 = vunpack.c.h.b16 %v607
        %v1765 = vunpack.c.l.b16 %v608
        %v1766 = vunpack.c.h.b16 %v608
        %v1767 = vunpack.c.l.b16 %v609
        %v1768 = vunpack.c.h.b16 %v609
        %v1769 = vunpack.c.l.b16 %v610
        %v1770 = vunpack.c.h.b16 %v610
        %v1771 = vunpack.c.l.b16 %v611
        %v1772 = vunpack.c.h.b16 %v611
        %v1773 = vunpack.c.l.b16 %v612
        %v1774 = vunpack.c.h.b16 %v612
        %v1775 = vunpack.c.l.b16 %v613
        %v1776 = vunpack.c.h.b16 %v613
        %v1777 = vunpack.c.l.b16 %v614
        %v1778 = vunpack.c.h.b16 %v614
        %v1779 = vunpack.c.l.b16 %v615
        %v1780 = vunpack.c.h.b16 %v615
        %v1781 = vunpack.c.l.b16 %v616
        %v1782 = vunpack.c.h.b16 %v616
        %v1783 = vunpack.c.l.b16 %v617
        %v1784 = vunpack.c.h.b16 %v617
        %v1785 = vunpack.c.l.b16 %v618
        %v1786 = vunpack.c.h.b16 %v618
        %v1787 = vunpack.c.l.b16 %v619
        %v1788 = vunpack.c.h.b16 %v619
        %v1789 = vunpack.c.l.b16 %v620
        %v1790 = vunpack.c.h.b16 %v620
        %v1791 = vunpack.c.l.b16 %v621
        %v1792 = vunpack.c.h.b16 %v621
        %v1793 = vunpack.c.l.b16 %v622
        %v1794 = vunpack.c.h.b16 %v622
        %v1795 = vunpack.c.l.b16 %v623
        %v1796 = vunpack.c.h.b16 %v623
        %v1797 = vunpack.c.l.b16 %v624
        %v1798 = vunpack.c.h.b16 %v624
        %v1799 = vunpack.c.l.b16 %v625
        %v1800 = vunpack.c.h.b16 %v625
        %v1801 = vunpack.c.l.b16 %v626
        %v1802 = vunpack.c.h.b16 %v626
        %v1803 = vunpack.c.l.b16 %v627
        %v1804 = vunpack.c.h.b16 %v627
        %v1805 = vunpack.c.l.b16 %v628
        %v1806 = vunpack.c.h.b16 %v628
        %v1807 = vunpack.c.l.b16 %v629
        %v1808 = vunpack.c.h.b16 %v629
        %v1809 = vunpack.c.l.b16 %v630
        %v1810 = vunpack.c.h.b16 %v630
        %v1811 = vunpack.c.l.b16 %v631
        %v1812 = vunpack.c.h.b16 %v631
        %v1813 = vunpack.c.l.b16 %v632
        %v1814 = vunpack.c.h.b16 %v632
        %v1815 = vunpack.c.l.b16 %v633
        %v1816 = vunpack.c.h.b16 %v633
        %v1817 = vunpack.c.l.b16 %v634
        %v1818 = vunpack.c.h.b16 %v634
        %v1819 = vunpack.c.l.b16 %v635
        %v1820 = vunpack.c.h.b16 %v635
        %v1821 = vunpack.c.l.b16 %v636
        %v1822 = vunpack.c.h.b16 %v636
        %v1823 = vunpack.c.l.b16 %v637
        %v1824 = vunpack.c.h.b16 %v637
        %v1825 = vunpack.c.l.b16 %v638
        %v1826 = vunpack.c.h.b16 %v638
        %v1827 = vunpack.c.l.b16 %v639
        %v1828 = vunpack.c.h.b16 %v639
        %v1829 = vunpack.c.l.b16 %v640
        %v1830 = vunpack.c.h.b16 %v640
        %v1831 = vunpack.c.l.b16 %v641
        %v1832 = vunpack.c.h.b16 %v641
        %v1833 = vunpack.c.l.b16 %v642
        %v1834 = vunpack.c.h.b16 %v642
        %v1835 = vunpack.c.l.b16 %v643
        %v1836 = vunpack.c.h.b16 %v643
        %v1837 = vunpack.c.l.b16 %v644
        %v1838 = vunpack.c.h.b16 %v644
        %v1839 = vunpack.c.l.b16 %v645
        %v1840 = vunpack.c.h.b16 %v645
        %v1841 = vunpack.c.l.b16 %v646
        %v1842 = vunpack.c.h.b16 %v646
        %v1843 = vunpack.c.l.b16 %v647
        %v1844 = vunpack.c.h.b16 %v647
        %v1845 = vunpack.c.l.b16 %v648
        %v1846 = vunpack.c.h.b16 %v648
        %v1847 = vunpack.c.l.b16 %v649
        %v1848 = vunpack.c.h.b16 %v649
        %v1849 = vunpack.c.l.b16 %v650
        %v1850 = vunpack.c.h.b16 %v650
        %v1851 = vunpack.c.l.b16 %v651
        %v1852 = vunpack.c.h.b16 %v651
        %v1853 = vunpack.c.l.b16 %v652
        %v1854 = vunpack.c.h.b16 %v652
        %v1855 = vunpack.c.l.b16 %v653
        %v1856 = vunpack.c.h.b16 %v653
        %v1857 = vunpack.c.l.b16 %v654
        %v1858 = vunpack.c.h.b16 %v654
        %v1859 = vunpack.c.l.b16 %v655
        %v1860 = vunpack.c.h.b16 %v655
        %v1861 = vunpack.c.l.b16 %v656
        %v1862 = vunpack.c.h.b16 %v656
        %v1863 = vunpack.c.l.b16 %v657
        %v1864 = vunpack.c.h.b16 %v657
        %v1865 = vunpack.c.l.b16 %v658
        %v1866 = vunpack.c.h.b16 %v658
        %v1867 = vpack.c.b16 %v1091, %v1083
        %v1868 = vpack.c.b16 %v1092, %v1084
        %v1869 = vpack.c.b16 %v1093, %v1085
        %v1870 = vpack.c.b16 %v1094, %v1086
        %v1871 = vpack.c.b16 %v1095, %v1087
        %v1872 = vpack.c.b16 %v1096, %v1088
        %v1873 = vpack.c.b16 %v1097, %v1089
        %v1874 = vpack.c.b16 %v1098, %v1090
        %v1875 = vpack.c.b16 %v1107, %v1099
        %v1876 = vpack.c.b16 %v1108, %v1100
        %v1877 = vpack.c.b16 %v1109, %v1101
        %v1878 = vpack.c.b16 %v1110, %v1102
        %v1879 = vpack.c.b16 %v1111, %v1103
        %v1880 = vpack.c.b16 %v1112, %v1104
        %v1881 = vpack.c.b16 %v1113, %v1105
        %v1882 = vpack.c.b16 %v1114, %v1106
        %v1883 = vpack.c.b16 %v1123, %v1115
        %v1884 = vpack.c.b16 %v1124, %v1116
        %v1885 = vpack.c.b16 %v1125, %v1117
        %v1886 = vpack.c.b16 %v1126, %v1118
        %v1887 = vpack.c.b16 %v1127, %v1119
        %v1888 = vpack.c.b16 %v1128, %v1120
        %v1889 = vpack.c.b16 %v1129, %v1121
        %v1890 = vpack.c.b16 %v1130, %v1122
        %v1891 = vpack.c.b16 %v1139, %v1131
        %v1892 = vpack.c.b16 %v1140, %v1132
        %v1893 = vpack.c.b16 %v1141, %v1133
        %v1894 = vpack.c.b16 %v1142, %v1134
        %v1895 = vpack.c.b16 %v1143, %v1135
        %v1896 = vpack.c.b16 %v1144, %v1136
        %v1897 = vpack.c.b16 %v1145, %v1137
        %v1898 = vpack.c.b16 %v1146, %v1138
        %v1899 = vpack.c.b16 %v1155, %v1147
        %v1900 = vpack.c.b16 %v1156, %v1148
        %v1901 = vpack.c.b16 %v1157, %v1149
        %v1902 = vpack.c.b16 %v1158, %v1150
        %v1903 = vpack.c.b16 %v1159, %v1151
        %v1904 = vpack.c.b16 %v1160, %v1152
        %v1905 = vpack.c.b16 %v1161, %v1153
        %v1906 = vpack.c.b16 %v1162, %v1154
        %v1907 = vpack.c.b16 %v1171, %v1163
        %v1908 = vpack.c.b16 %v1172, %v1164
        %v1909 = vpack.c.b16 %v1173, %v1165
        %v1910 = vpack.c.b16 %v1174, %v1166
        %v1911 = vpack.c.b16 %v1175, %v1167
        %v1912 = vpack.c.b16 %v1176, %v1168
        %v1913 = vpack.c.b16 %v1177, %v1169
        %v1914 = vpack.c.b16 %v1178, %v1170
        %v1915 = vpack.c.b16 %v1187, %v1179
        %v1916 = vpack.c.b16 %v1188, %v1180
        %v1917 = vpack.c.b16 %v1189, %v1181
        %v1918 = vpack.c.b16 %v1190, %v1182
        %v1919 = vpack.c.b16 %v1191, %v1183
        %v1920 = vpack.c.b16 %v1192, %v1184
        %v1921 = vpack.c.b16 %v1193, %v1185
        %v1922 = vpack.c.b16 %v1194, %v1186
        %v1923 = vpack.c.b16 %v1203, %v1195
        %v1924 = vpack.c.b16 %v1204, %v1196
        %v1925 = vpack.c.b16 %v1205, %v1197
        %v1926 = vpack.c.b16 %v1206, %v1198
        %v1927 = vpack.c.b16 %v1207, %v1199
        %v1928 = vpack.c.b16 %v1208, %v1200
        %v1929 = vpack.c.b16 %v1209, %v1201
        %v1930 = vpack.c.b16 %v1210, %v1202
        %v1931 = vpack.c.b16 %v1219, %v1211
        %v1932 = vpack.c.b16 %v1220, %v1212
        %v1933 = vpack.c.b16 %v1221, %v1213
        %v1934 = vpack.c.b16 %v1222, %v1214
        %v1935 = vpack.c.b16 %v1223, %v1215
        %v1936 = vpack.c.b16 %v1224, %v1216
        %v1937 = vpack.c.b16 %v1225, %v1217
        %v1938 = vpack.c.b16 %v1226, %v1218
        %v1939 = vpack.c.b16 %v1235, %v1227
        %v1940 = vpack.c.b16 %v1236, %v1228
        %v1941 = vpack.c.b16 %v1237, %v1229
        %v1942 = vpack.c.b16 %v1238, %v1230
        %v1943 = vpack.c.b16 %v1239, %v1231
        %v1944 = vpack.c.b16 %v1240, %v1232
        %v1945 = vpack.c.b16 %v1241, %v1233
        %v1946 = vpack.c.b16 %v1242, %v1234
        %v1947 = vpack.c.b16 %v1251, %v1243
        %v1948 = vpack.c.b16 %v1252, %v1244
        %v1949 = vpack.c.b16 %v1253, %v1245
        %v1950 = vpack.c.b16 %v1254, %v1246
        %v1951 = vpack.c.b16 %v1255, %v1247
        %v1952 = vpack.c.b16 %v1256, %v1248
        %v1953 = vpack.c.b16 %v1257, %v1249
        %v1954 = vpack.c.b16 %v1258, %v1250
        %v1955 = vpack.c.b16 %v1267, %v1259
        %v1956 = vpack.c.b16 %v1268, %v1260
        %v1957 = vpack.c.b16 %v1269, %v1261
        %v1958 = vpack.c.b16 %v1270, %v1262
        %v1959 = vpack.c.b16 %v1271, %v1263
        %v1960 = vpack.c.b16 %v1272, %v1264
        %v1961 = vpack.c.b16 %v1273, %v1265
        %v1962 = vpack.c.b16 %v1274, %v1266
        %v1963 = vpack.c.b16 %v1283, %v1275
        %v1964 = vpack.c.b16 %v1284, %v1276
        %v1965 = vpack.c.b16 %v1285, %v1277
        %v1966 = vpack.c.b16 %v1286, %v1278
        %v1967 = vpack.c.b16 %v1287, %v1279
        %v1968 = vpack.c.b16 %v1288, %v1280
        %v1969 = vpack.c.b16 %v1289, %v1281
        %v1970 = vpack.c.b16 %v1290, %v1282
        %v1971 = vpack.c.b16 %v1299, %v1291
        %v1972 = vpack.c.b16 %v1300, %v1292
        %v1973 = vpack.c.b16 %v1301, %v1293
        %v1974 = vpack.c.b16 %v1302, %v1294
        %v1975 = vpack.c.b16 %v1303, %v1295
        %v1976 = vpack.c.b16 %v1304, %v1296
        %v1977 = vpack.c.b16 %v1305, %v1297
        %v1978 = vpack.c.b16 %v1306, %v1298
        %v1979 = vpack.c.b16 %v1315, %v1307
        %v1980 = vpack.c.b16 %v1316, %v1308
        %v1981 = vpack.c.b16 %v1317, %v1309
        %v1982 = vpack.c.b16 %v1318, %v1310
        %v1983 = vpack.c.b16 %v1319, %v1311
        %v1984 = vpack.c.b16 %v1320, %v1312
        %v1985 = vpack.c.b16 %v1321, %v1313
        %v1986 = vpack.c.b16 %v1322, %v1314
        %v1987 = vpack.c.b16 %v1331, %v1323
        %v1988 = vpack.c.b16 %v1332, %v1324
        %v1989 = vpack.c.b16 %v1333, %v1325
        %v1990 = vpack.c.b16 %v1334, %v1326
        %v1991 = vpack.c.b16 %v1335, %v1327
        %v1992 = vpack.c.b16 %v1336, %v1328
        %v1993 = vpack.c.b16 %v1337, %v1329
        %v1994 = vpack.c.b16 %v1338, %v1330
        %v1995 = vpack.c.b16 %v1347, %v1339
        %v1996 = vpack.c.b16 %v1348, %v1340
        %v1997 = vpack.c.b16 %v1349, %v1341
        %v1998 = vpack.c.b16 %v1350, %v1342
        %v1999 = vpack.c.b16 %v1351, %v1343
        %v2000 = vpack.c.b16 %v1352, %v1344
        %v2001 = vpack.c.b16 %v1353, %v1345
        %v2002 = vpack.c.b16 %v1354, %v1346
        %v2003 = vpack.c.b16 %v1363, %v1355
        %v2004 = vpack.c.b16 %v1364, %v1356
        %v2005 = vpack.c.b16 %v1365, %v1357
        %v2006 = vpack.c.b16 %v1366, %v1358
        %v2007 = vpack.c.b16 %v1367, %v1359
        %v2008 = vpack.c.b16 %v1368, %v1360
        %v2009 = vpack.c.b16 %v1369, %v1361
        %v2010 = vpack.c.b16 %v1370, %v1362
        %v2011 = vpack.c.b16 %v1379, %v1371
        %v2012 = vpack.c.b16 %v1380, %v1372
        %v2013 = vpack.c.b16 %v1381, %v1373
        %v2014 = vpack.c.b16 %v1382, %v1374
        %v2015 = vpack.c.b16 %v1383, %v1375
        %v2016 = vpack.c.b16 %v1384, %v1376
        %v2017 = vpack.c.b16 %v1385, %v1377
        %v2018 = vpack.c.b16 %v1386, %v1378
        %v2019 = vpack.c.b16 %v1395, %v1387
        %v2020 = vpack.c.b16 %v1396, %v1388
        %v2021 = vpack.c.b16 %v1397, %v1389
        %v2022 = vpack.c.b16 %v1398, %v1390
        %v2023 = vpack.c.b16 %v1399, %v1391
        %v2024 = vpack.c.b16 %v1400, %v1392
        %v2025 = vpack.c.b16 %v1401, %v1393
        %v2026 = vpack.c.b16 %v1402, %v1394
        %v2027 = vpack.c.b16 %v1411, %v1403
        %v2028 = vpack.c.b16 %v1412, %v1404
        %v2029 = vpack.c.b16 %v1413, %v1405
        %v2030 = vpack.c.b16 %v1414, %v1406
        %v2031 = vpack.c.b16 %v1415, %v1407
        %v2032 = vpack.c.b16 %v1416, %v1408
        %v2033 = vpack.c.b16 %v1417, %v1409
        %v2034 = vpack.c.b16 %v1418, %v1410
        %v2035 = vpack.c.b16 %v1427, %v1419
        %v2036 = vpack.c.b16 %v1428, %v1420
        %v2037 = vpack.c.b16 %v1429, %v1421
        %v2038 = vpack.c.b16 %v1430, %v1422
        %v2039 = vpack.c.b16 %v1431, %v1423
        %v2040 = vpack.c.b16 %v1432, %v1424
        %v2041 = vpack.c.b16 %v1433, %v1425
        %v2042 = vpack.c.b16 %v1434, %v1426
        %v2043 = vpack.c.b16 %v1443, %v1435
        %v2044 = vpack.c.b16 %v1444, %v1436
        %v2045 = vpack.c.b16 %v1445, %v1437
        %v2046 = vpack.c.b16 %v1446, %v1438
        %v2047 = vpack.c.b16 %v1447, %v1439
        %v2048 = vpack.c.b16 %v1448, %v1440
        %v2049 = vpack.c.b16 %v1449, %v1441
        %v2050 = vpack.c.b16 %v1450, %v1442
        %v2051 = vpack.c.b16 %v1459, %v1451
        %v2052 = vpack.c.b16 %v1460, %v1452
        %v2053 = vpack.c.b16 %v1461, %v1453
        %v2054 = vpack.c.b16 %v1462, %v1454
        %v2055 = vpack.c.b16 %v1463, %v1455
        %v2056 = vpack.c.b16 %v1464, %v1456
        %v2057 = vpack.c.b16 %v1465, %v1457
        %v2058 = vpack.c.b16 %v1466, %v1458
        %v2059 = vpack.c.b16 %v1475, %v1467
        %v2060 = vpack.c.b16 %v1476, %v1468
        %v2061 = vpack.c.b16 %v1477, %v1469
        %v2062 = vpack.c.b16 %v1478, %v1470
        %v2063 = vpack.c.b16 %v1479, %v1471
        %v2064 = vpack.c.b16 %v1480, %v1472
        %v2065 = vpack.c.b16 %v1481, %v1473
        %v2066 = vpack.c.b16 %v1482, %v1474
        %v2067 = vpack.c.b16 %v1491, %v1483
        %v2068 = vpack.c.b16 %v1492, %v1484
        %v2069 = vpack.c.b16 %v1493, %v1485
        %v2070 = vpack.c.b16 %v1494, %v1486
        %v2071 = vpack.c.b16 %v1495, %v1487
        %v2072 = vpack.c.b16 %v1496, %v1488
        %v2073 = vpack.c.b16 %v1497, %v1489
        %v2074 = vpack.c.b16 %v1498, %v1490
        %v2075 = vpack.c.b16 %v1507, %v1499
        %v2076 = vpack.c.b16 %v1508, %v1500
        %v2077 = vpack.c.b16 %v1509, %v1501
        %v2078 = vpack.c.b16 %v1510, %v1502
        %v2079 = vpack.c.b16 %v1511, %v1503
        %v2080 = vpack.c.b16 %v1512, %v1504
        %v2081 = vpack.c.b16 %v1513, %v1505
        %v2082 = vpack.c.b16 %v1514, %v1506
        %v2083 = vpack.c.b16 %v1523, %v1515
        %v2084 = vpack.c.b16 %v1524, %v1516
        %v2085 = vpack.c.b16 %v1525, %v1517
        %v2086 = vpack.c.b16 %v1526, %v1518
        %v2087 = vpack.c.b16 %v1527, %v1519
        %v2088 = vpack.c.b16 %v1528, %v1520
        %v2089 = vpack.c.b16 %v1529, %v1521
        %v2090 = vpack.c.b16 %v1530, %v1522
        %v2091 = vpack.c.b16 %v1539, %v1531
        %v2092 = vpack.c.b16 %v1540, %v1532
        %v2093 = vpack.c.b16 %v1541, %v1533
        %v2094 = vpack.c.b16 %v1542, %v1534
        %v2095 = vpack.c.b16 %v1543, %v1535
        %v2096 = vpack.c.b16 %v1544, %v1536
        %v2097 = vpack.c.b16 %v1545, %v1537
        %v2098 = vpack.c.b16 %v1546, %v1538
        %v2099 = vpack.c.b16 %v1555, %v1547
        %v2100 = vpack.c.b16 %v1556, %v1548
        %v2101 = vpack.c.b16 %v1557, %v1549
        %v2102 = vpack.c.b16 %v1558, %v1550
        %v2103 = vpack.c.b16 %v1559, %v1551
        %v2104 = vpack.c.b16 %v1560, %v1552
        %v2105 = vpack.c.b16 %v1561, %v1553
        %v2106 = vpack.c.b16 %v1562, %v1554
        %v2107 = vpack.c.b16 %v1571, %v1563
        %v2108 = vpack.c.b16 %v1572, %v1564
        %v2109 = vpack.c.b16 %v1573, %v1565
        %v2110 = vpack.c.b16 %v1574, %v1566
        %v2111 = vpack.c.b16 %v1575, %v1567
        %v2112 = vpack.c.b16 %v1576, %v1568
        %v2113 = vpack.c.b16 %v1577, %v1569
        %v2114 = vpack.c.b16 %v1578, %v1570
        %v2115 = vpack.c.b16 %v1587, %v1579
        %v2116 = vpack.c.b16 %v1588, %v1580
        %v2117 = vpack.c.b16 %v1589, %v1581
        %v2118 = vpack.c.b16 %v1590, %v1582
        %v2119 = vpack.c.b16 %v1591, %v1583
        %v2120 = vpack.c.b16 %v1592, %v1584
        %v2121 = vpack.c.b16 %v1593, %v1585
        %v2122 = vpack.c.b16 %v1594, %v1586
        %v2123 = vpack.c.b16 %v1603, %v1595
        %v2124 = vpack.c.b16 %v1604, %v1596
        %v2125 = vpack.c.b16 %v1605, %v1597
        %v2126 = vpack.c.b16 %v1606, %v1598
        %v2127 = vpack.c.b16 %v1607, %v1599
        %v2128 = vpack.c.b16 %v1608, %v1600
        %v2129 = vpack.c.b16 %v1609, %v1601
        %v2130 = vpack.c.b16 %v1610, %v1602
        %v2131 = vpack.c.b16 %v1619, %v1611
        %v2132 = vpack.c.b16 %v1620, %v1612
        %v2133 = vpack.c.b16 %v1621, %v1613
        %v2134 = vpack.c.b16 %v1622, %v1614
        %v2135 = vpack.c.b16 %v1623, %v1615
        %v2136 = vpack.c.b16 %v1624, %v1616
        %v2137 = vpack.c.b16 %v1625, %v1617
        %v2138 = vpack.c.b16 %v1626, %v1618
        %v2139 = vpack.c.b16 %v1635, %v1627
        %v2140 = vpack.c.b16 %v1636, %v1628
        %v2141 = vpack.c.b16 %v1637, %v1629
        %v2142 = vpack.c.b16 %v1638, %v1630
        %v2143 = vpack.c.b16 %v1639, %v1631
        %v2144 = vpack.c.b16 %v1640, %v1632
        %v2145 = vpack.c.b16 %v1641, %v1633
        %v2146 = vpack.c.b16 %v1642, %v1634
        %v2147 = vpack.c.b16 %v1651, %v1643
        %v2148 = vpack.c.b16 %v1652, %v1644
        %v2149 = vpack.c.b16 %v1653, %v1645
        %v2150 = vpack.c.b16 %v1654, %v1646
        %v2151 = vpack.c.b16 %v1655, %v1647
        %v2152 = vpack.c.b16 %v1656, %v1648
        %v2153 = vpack.c.b16 %v1657, %v1649
        %v2154 = vpack.c.b16 %v1658, %v1650
        %v2155 = vpack.c.b16 %v1667, %v1659
        %v2156 = vpack.c.b16 %v1668, %v1660
        %v2157 = vpack.c.b16 %v1669, %v1661
        %v2158 = vpack.c.b16 %v1670, %v1662
        %v2159 = vpack.c.b16 %v1671, %v1663
        %v2160 = vpack.c.b16 %v1672, %v1664
        %v2161 = vpack.c.b16 %v1673, %v1665
        %v2162 = vpack.c.b16 %v1674, %v1666
        %v2163 = vpack.c.b16 %v1683, %v1675
        %v2164 = vpack.c.b16 %v1684, %v1676
        %v2165 = vpack.c.b16 %v1685, %v1677
        %v2166 = vpack.c.b16 %v1686, %v1678
        %v2167 = vpack.c.b16 %v1687, %v1679
        %v2168 = vpack.c.b16 %v1688, %v1680
        %v2169 = vpack.c.b16 %v1689, %v1681
        %v2170 = vpack.c.b16 %v1690, %v1682
        %v2171 = vpack.c.b16 %v1699, %v1691
        %v2172 = vpack.c.b16 %v1700, %v1692
        %v2173 = vpack.c.b16 %v1701, %v1693
        %v2174 = vpack.c.b16 %v1702, %v1694
        %v2175 = vpack.c.b16 %v1703, %v1695
        %v2176 = vpack.c.b16 %v1704, %v1696
        %v2177 = vpack.c.b16 %v1705, %v1697
        %v2178 = vpack.c.b16 %v1706, %v1698
        %v2179 = vpack.c.b16 %v1715, %v1707
        %v2180 = vpack.c.b16 %v1716, %v1708
        %v2181 = vpack.c.b16 %v1717, %v1709
        %v2182 = vpack.c.b16 %v1718, %v1710
        %v2183 = vpack.c.b16 %v1719, %v1711
        %v2184 = vpack.c.b16 %v1720, %v1712
        %v2185 = vpack.c.b16 %v1721, %v1713
        %v2186 = vpack.c.b16 %v1722, %v1714
        %v2187 = vpack.c.b16 %v1731, %v1723
        %v2188 = vpack.c.b16 %v1732, %v1724
        %v2189 = vpack.c.b16 %v1733, %v1725
        %v2190 = vpack.c.b16 %v1734, %v1726
        %v2191 = vpack.c.b16 %v1735, %v1727
        %v2192 = vpack.c.b16 %v1736, %v1728
        %v2193 = vpack.c.b16 %v1737, %v1729
        %v2194 = vpack.c.b16 %v1738, %v1730
        %v2195 = vpack.c.b16 %v1747, %v1739
        %v2196 = vpack.c.b16 %v1748, %v1740
        %v2197 = vpack.c.b16 %v1749, %v1741
        %v2198 = vpack.c.b16 %v1750, %v1742
        %v2199 = vpack.c.b16 %v1751, %v1743
        %v2200 = vpack.c.b16 %v1752, %v1744
        %v2201 = vpack.c.b16 %v1753, %v1745
        %v2202 = vpack.c.b16 %v1754, %v1746
        %v2203 = vpack.c.b16 %v1763, %v1755
        %v2204 = vpack.c.b16 %v1764, %v1756
        %v2205 = vpack.c.b16 %v1765, %v1757
        %v2206 = vpack.c.b16 %v1766, %v1758
        %v2207 = vpack.c.b16 %v1767, %v1759
        %v2208 = vpack.c.b16 %v1768, %v1760
        %v2209 = vpack.c.b16 %v1769, %v1761
        %v2210 = vpack.c.b16 %v1770, %v1762
        %v2211 = vpack.c.b16 %v1779, %v1771
        %v2212 = vpack.c.b16 %v1780, %v1772
        %v2213 = vpack.c.b16 %v1781, %v1773
        %v2214 = vpack.c.b16 %v1782, %v1774
        %v2215 = vpack.c.b16 %v1783, %v1775
        %v2216 = vpack.c.b16 %v1784, %v1776
        %v2217 = vpack.c.b16 %v1785, %v1777
        %v2218 = vpack.c.b16 %v1786, %v1778
        %v2219 = vpack.c.b16 %v1795, %v1787
        %v2220 = vpack.c.b16 %v1796, %v1788
        %v2221 = vpack.c.b16 %v1797, %v1789
        %v2222 = vpack.c.b16 %v1798, %v1790
        %v2223 = vpack.c.b16 %v1799, %v1791
        %v2224 = vpack.c.b16 %v1800, %v1792
        %v2225 = vpack.c.b16 %v1801, %v1793
        %v2226 = vpack.c.b16 %v1802, %v1794
        %v2227 = vpack.c.b16 %v1811, %v1803
        %v2228 = vpack.c.b16 %v1812, %v1804
        %v2229 = vpack.c.b16 %v1813, %v1805
        %v2230 = vpack.c.b16 %v1814, %v1806
        %v2231 = vpack.c.b16 %v1815, %v1807
        %v2232 = vpack.c.b16 %v1816, %v1808
        %v2233 = vpack.c.b16 %v1817, %v1809
        %v2234 = vpack.c.b16 %v1818, %v1810
        %v2235 = vpack.c.b16 %v1827, %v1819
        %v2236 = vpack.c.b16 %v1828, %v1820
        %v2237 = vpack.c.b16 %v1829, %v1821
        %v2238 = vpack.c.b16 %v1830, %v1822
        %v2239 = vpack.c.b16 %v1831, %v1823
        %v2240 = vpack.c.b16 %v1832, %v1824
        %v2241 = vpack.c.b16 %v1833, %v1825
        %v2242 = vpack.c.b16 %v1834, %v1826
        %v2243 = vpack.c.b16 %v1843, %v1835
        %v2244 = vpack.c.b16 %v1844, %v1836
        %v2245 = vpack.c.b16 %v1845, %v1837
        %v2246 = vpack.c.b16 %v1846, %v1838
        %v2247 = vpack.c.b16 %v1847, %v1839
        %v2248 = vpack.c.b16 %v1848, %v1840
        %v2249 = vpack.c.b16 %v1849, %v1841
        %v2250 = vpack.c.b16 %v1850, %v1842
        %v2251 = vpack.c.b16 %v1859, %v1851
        %v2252 = vpack.c.b16 %v1860, %v1852
        %v2253 = vpack.c.b16 %v1861, %v1853
        %v2254 = vpack.c.b16 %v1862, %v1854
        %v2255 = vpack.c.b16 %v1863, %v1855
        %v2256 = vpack.c.b16 %v1864, %v1856
        %v2257 = vpack.c.b16 %v1865, %v1857
        %v2258 = vpack.c.b16 %v1866, %v1858
        %vm2651 = vcmask 130048
        %v2653 = vsel %vm2651, %v266, 0
        %2655 = vmatprep.subr.bf16.mxu0 %v1868
        %2656 = vmatpush1.bf16.msra.mxu0 %v1867
        %2657 = vmatprep.subr.bf16.mxu0 %v1876
        %2658 = vmatpush1.bf16.msra.mxu0 %v1875
        %2659 = vmatprep.subr.bf16.mxu0 %v1884
        %2660 = vmatpush1.bf16.msra.mxu0 %v1883
        %2661 = vmatprep.subr.bf16.mxu0 %v1892
        %2662 = vmatpush1.bf16.msra.mxu0 %v1891
        %2663 = vmatprep.subr.bf16.mxu0 %v1900
        %2664 = vmatpush1.bf16.msra.mxu0 %v1899
        %2665 = vmatprep.subr.bf16.mxu0 %v1908
        %2666 = vmatpush1.bf16.msra.mxu0 %v1907
        %2667 = vmatprep.subr.bf16.mxu0 %v1916
        %2668 = vmatpush1.bf16.msra.mxu0 %v1915
        %2669 = vmatprep.subr.bf16.mxu0 %v1924
        %2670 = vmatpush1.bf16.msra.mxu0 %v1923
        %2671 = vmatprep.subr.bf16.mxu0 %v1932
        %2672 = vmatpush1.bf16.msra.mxu0 %v1931
        %2673 = vmatprep.subr.bf16.mxu0 %v1940
        %2674 = vmatpush1.bf16.msra.mxu0 %v1939
        %2675 = vmatprep.subr.bf16.mxu0 %v1948
        %2676 = vmatpush1.bf16.msra.mxu0 %v1947
        %2677 = vmatprep.subr.bf16.mxu0 %v1956
        %2678 = vmatpush1.bf16.msra.mxu0 %v1955
        %2679 = vmatprep.subr.bf16.mxu0 %v1964
        %2680 = vmatpush1.bf16.msra.mxu0 %v1963
        %2681 = vmatprep.subr.bf16.mxu0 %v1972
        %2682 = vmatpush1.bf16.msra.mxu0 %v1971
        %2683 = vmatprep.subr.bf16.mxu0 %v1980
        %2684 = vmatpush1.bf16.msra.mxu0 %v1979
        %2685 = vmatprep.subr.bf16.mxu0 %v1988
        %2686 = vmatpush1.bf16.msra.mxu0 %v1987
        %2687 = vmatprep.mubr.bf16.mxu0 %v261
        %2688 = vmatmul.mubr.bf16.gmra.mrb[0].mxu0 %v260
        %v2689 = vpop.f32.mrb[0].mxu0
        %v2690 = vadd.f32 %v662, %v2689
        %v2691 = vpop.f32.mrb[0].mxu0
        %v2692 = vadd.f32 %v666, %v2691
        %v2693 = vpop.f32.mrb[0].mxu0
        %v2694 = vpop.f32.mrb[0].mxu0
        %2695 = vdwg.mxu0
        %2696 = vmatprep.subr.bf16.mxu0 %v1996
        %2697 = vmatpush1.bf16.msra.mxu0 %v1995
        %2698 = vmatprep.subr.bf16.mxu0 %v2004
        %2699 = vmatpush1.bf16.msra.mxu0 %v2003
        %2700 = vmatprep.subr.bf16.mxu0 %v2012
        %2701 = vmatpush1.bf16.msra.mxu0 %v2011
        %2702 = vmatprep.subr.bf16.mxu0 %v2020
        %2703 = vmatpush1.bf16.msra.mxu0 %v2019
        %2704 = vmatprep.subr.bf16.mxu0 %v2028
        %2705 = vmatpush1.bf16.msra.mxu0 %v2027
        %2706 = vmatprep.subr.bf16.mxu0 %v2036
        %2707 = vmatpush1.bf16.msra.mxu0 %v2035
        %2708 = vmatprep.subr.bf16.mxu0 %v2044
        %2709 = vmatpush1.bf16.msra.mxu0 %v2043
        %2710 = vmatprep.subr.bf16.mxu0 %v2052
        %2711 = vmatpush1.bf16.msra.mxu0 %v2051
        %2712 = vmatprep.subr.bf16.mxu0 %v2060
        %2713 = vmatpush1.bf16.msra.mxu0 %v2059
        %2714 = vmatprep.subr.bf16.mxu0 %v2068
        %2715 = vmatpush1.bf16.msra.mxu0 %v2067
        %2716 = vmatprep.subr.bf16.mxu0 %v2076
        %2717 = vmatpush1.bf16.msra.mxu0 %v2075
        %2718 = vmatprep.subr.bf16.mxu0 %v2084
        %2719 = vmatpush1.bf16.msra.mxu0 %v2083
        %2720 = vmatprep.subr.bf16.mxu0 %v2092
        %2721 = vmatpush1.bf16.msra.mxu0 %v2091
        %2722 = vmatprep.subr.bf16.mxu0 %v2100
        %2723 = vmatpush1.bf16.msra.mxu0 %v2099
        %2724 = vmatprep.subr.bf16.mxu0 %v2108
        %2725 = vmatpush1.bf16.msra.mxu0 %v2107
        %2726 = vmatprep.subr.bf16.mxu0 %v2116
        %2727 = vmatpush1.bf16.msra.mxu0 %v2115
        %2728 = vmatprep.mubr.bf16.mxu0 %v263
        %2729 = vmatmul.mubr.bf16.gmra.mrb[0].mxu0 %v262
        %v2730 = vpop.f32.mrb[0].mxu0
        %v2731 = vadd.f32 %v2690, %v2730
        %v2732 = vpop.f32.mrb[0].mxu0
        %v2733 = vadd.f32 %v2692, %v2732
        %v2734 = vpop.f32.mrb[0].mxu0
        %v2735 = vpop.f32.mrb[0].mxu0
        %2736 = vdwg.mxu0
        %2737 = vmatprep.subr.bf16.mxu0 %v2124
        %2738 = vmatpush1.bf16.msra.mxu0 %v2123
        %2739 = vmatprep.subr.bf16.mxu0 %v2132
        %2740 = vmatpush1.bf16.msra.mxu0 %v2131
        %2741 = vmatprep.subr.bf16.mxu0 %v2140
        %2742 = vmatpush1.bf16.msra.mxu0 %v2139
        %2743 = vmatprep.subr.bf16.mxu0 %v2148
        %2744 = vmatpush1.bf16.msra.mxu0 %v2147
        %2745 = vmatprep.subr.bf16.mxu0 %v2156
        %2746 = vmatpush1.bf16.msra.mxu0 %v2155
        %2747 = vmatprep.subr.bf16.mxu0 %v2164
        %2748 = vmatpush1.bf16.msra.mxu0 %v2163
        %2749 = vmatprep.subr.bf16.mxu0 %v2172
        %2750 = vmatpush1.bf16.msra.mxu0 %v2171
        %2751 = vmatprep.subr.bf16.mxu0 %v2180
        %2752 = vmatpush1.bf16.msra.mxu0 %v2179
        %2753 = vmatprep.subr.bf16.mxu0 %v2188
        %2754 = vmatpush1.bf16.msra.mxu0 %v2187
        %2755 = vmatprep.subr.bf16.mxu0 %v2196
        %2756 = vmatpush1.bf16.msra.mxu0 %v2195
        %2757 = vmatprep.subr.bf16.mxu0 %v2204
        %2758 = vmatpush1.bf16.msra.mxu0 %v2203
        %2759 = vmatprep.subr.bf16.mxu0 %v2212
        %2760 = vmatpush1.bf16.msra.mxu0 %v2211
        %2761 = vmatprep.subr.bf16.mxu0 %v2220
        %2762 = vmatpush1.bf16.msra.mxu0 %v2219
        %2763 = vmatprep.subr.bf16.mxu0 %v2228
        %2764 = vmatpush1.bf16.msra.mxu0 %v2227
        %2765 = vmatprep.subr.bf16.mxu0 %v2236
        %2766 = vmatpush1.bf16.msra.mxu0 %v2235
        %2767 = vmatprep.subr.bf16.mxu0 %v2244
        %2768 = vmatpush1.bf16.msra.mxu0 %v2243
        %2769 = vmatprep.mubr.bf16.mxu0 %v265
        %2770 = vmatmul.mubr.bf16.gmra.mrb[0].mxu0 %v264
        %v2771 = vpop.f32.mrb[0].mxu0
        %v2772 = vadd.f32 %v2731, %v2771
        %v2773 = vpop.f32.mrb[0].mxu0
        %v2774 = vadd.f32 %v2733, %v2773
        %v2775 = vpop.f32.mrb[0].mxu0
        %v2776 = vpop.f32.mrb[0].mxu0
        %2777 = vdwg.mxu0
        %2778 = vmatprep.subr.bf16.mxu0 %v2252
        %2779 = vmatpush1.bf16.msra.mxu0 %v2251
        %2780 = vmatprep.subr.bf16.mxu0 0
        %2781 = vmatpush1.bf16.msra.mxu0 0
        %2782 = vmatprep.subr.bf16.mxu0 0
        %2783 = vmatpush1.bf16.msra.mxu0 0
        %2784 = vmatprep.subr.bf16.mxu0 0
        %2785 = vmatpush1.bf16.msra.mxu0 0
        %2786 = vmatprep.subr.bf16.mxu0 0
        %2787 = vmatpush1.bf16.msra.mxu0 0
        %2788 = vmatprep.subr.bf16.mxu0 0
        %2789 = vmatpush1.bf16.msra.mxu0 0
        %2790 = vmatprep.subr.bf16.mxu0 0
        %2791 = vmatpush1.bf16.msra.mxu0 0
        %2792 = vmatprep.subr.bf16.mxu0 0
        %2793 = vmatpush1.bf16.msra.mxu0 0
        %2794 = vmatprep.subr.bf16.mxu0 0
        %2795 = vmatpush1.bf16.msra.mxu0 0
        %2796 = vmatprep.subr.bf16.mxu0 0
        %2797 = vmatpush1.bf16.msra.mxu0 0
        %2798 = vmatprep.subr.bf16.mxu0 0
        %2799 = vmatpush1.bf16.msra.mxu0 0
        %2800 = vmatprep.subr.bf16.mxu0 0
        %2801 = vmatpush1.bf16.msra.mxu0 0
        %2802 = vmatprep.subr.bf16.mxu0 0
        %2803 = vmatpush1.bf16.msra.mxu0 0
        %2804 = vmatprep.subr.bf16.mxu0 0
        %2805 = vmatpush1.bf16.msra.mxu0 0
        %2806 = vmatprep.subr.bf16.mxu0 0
        %2807 = vmatpush1.bf16.msra.mxu0 0
        %2808 = vmatprep.subr.bf16.mxu0 0
        %2809 = vmatpush1.bf16.msra.mxu0 0
        %2810 = vmatprep.mubr.bf16.mxu0 0
        %2811 = vmatmul.mubr.bf16.gmra.mrb[0].mxu0 %v2653
        %v2812 = vpop.f32.mrb[0].mxu0
        %v2813 = vadd.f32 %v2772, %v2812
        %v2814 = vpop.f32.mrb[0].mxu0
        %v2815 = vadd.f32 %v2774, %v2814
        %v2816 = vpop.f32.mrb[0].mxu0
        %v2817 = vpop.f32.mrb[0].mxu0
        %2818 = vdwg.mxu0
        %2819 = vmatprep.subr.bf16.mxu0 %v1870
        %2820 = vmatpush1.bf16.msra.mxu0 %v1869
        %2821 = vmatprep.subr.bf16.mxu0 %v1878
        %2822 = vmatpush1.bf16.msra.mxu0 %v1877
        %2823 = vmatprep.subr.bf16.mxu0 %v1886
        %2824 = vmatpush1.bf16.msra.mxu0 %v1885
        %2825 = vmatprep.subr.bf16.mxu0 %v1894
        %2826 = vmatpush1.bf16.msra.mxu0 %v1893
        %2827 = vmatprep.subr.bf16.mxu0 %v1902
        %2828 = vmatpush1.bf16.msra.mxu0 %v1901
        %2829 = vmatprep.subr.bf16.mxu0 %v1910
        %2830 = vmatpush1.bf16.msra.mxu0 %v1909
        %2831 = vmatprep.subr.bf16.mxu0 %v1918
        %2832 = vmatpush1.bf16.msra.mxu0 %v1917
        %2833 = vmatprep.subr.bf16.mxu0 %v1926
        %2834 = vmatpush1.bf16.msra.mxu0 %v1925
        %2835 = vmatprep.subr.bf16.mxu0 %v1934
        %2836 = vmatpush1.bf16.msra.mxu0 %v1933
        %2837 = vmatprep.subr.bf16.mxu0 %v1942
        %2838 = vmatpush1.bf16.msra.mxu0 %v1941
        %2839 = vmatprep.subr.bf16.mxu0 %v1950
        %2840 = vmatpush1.bf16.msra.mxu0 %v1949
        %2841 = vmatprep.subr.bf16.mxu0 %v1958
        %2842 = vmatpush1.bf16.msra.mxu0 %v1957
        %2843 = vmatprep.subr.bf16.mxu0 %v1966
        %2844 = vmatpush1.bf16.msra.mxu0 %v1965
        %2845 = vmatprep.subr.bf16.mxu0 %v1974
        %2846 = vmatpush1.bf16.msra.mxu0 %v1973
        %2847 = vmatprep.subr.bf16.mxu0 %v1982
        %2848 = vmatpush1.bf16.msra.mxu0 %v1981
        %2849 = vmatprep.subr.bf16.mxu0 %v1990
        %2850 = vmatpush1.bf16.msra.mxu0 %v1989
        %2851 = vmatprep.mubr.bf16.mxu0 %v261
        %2852 = vmatmul.mubr.bf16.gmra.mrb[0].mxu0 %v260
        %v2853 = vpop.f32.mrb[0].mxu0
        %v2854 = vadd.f32 %v670, %v2853
        %v2855 = vpop.f32.mrb[0].mxu0
        %v2856 = vadd.f32 %v674, %v2855
        %v2857 = vpop.f32.mrb[0].mxu0
        %v2858 = vpop.f32.mrb[0].mxu0
        %2859 = vdwg.mxu0
        %2860 = vmatprep.subr.bf16.mxu0 %v1998
        %2861 = vmatpush1.bf16.msra.mxu0 %v1997
        %2862 = vmatprep.subr.bf16.mxu0 %v2006
        %2863 = vmatpush1.bf16.msra.mxu0 %v2005
        %2864 = vmatprep.subr.bf16.mxu0 %v2014
        %2865 = vmatpush1.bf16.msra.mxu0 %v2013
        %2866 = vmatprep.subr.bf16.mxu0 %v2022
        %2867 = vmatpush1.bf16.msra.mxu0 %v2021
        %2868 = vmatprep.subr.bf16.mxu0 %v2030
        %2869 = vmatpush1.bf16.msra.mxu0 %v2029
        %2870 = vmatprep.subr.bf16.mxu0 %v2038
        %2871 = vmatpush1.bf16.msra.mxu0 %v2037
        %2872 = vmatprep.subr.bf16.mxu0 %v2046
        %2873 = vmatpush1.bf16.msra.mxu0 %v2045
        %2874 = vmatprep.subr.bf16.mxu0 %v2054
        %2875 = vmatpush1.bf16.msra.mxu0 %v2053
        %2876 = vmatprep.subr.bf16.mxu0 %v2062
        %2877 = vmatpush1.bf16.msra.mxu0 %v2061
        %2878 = vmatprep.subr.bf16.mxu0 %v2070
        %2879 = vmatpush1.bf16.msra.mxu0 %v2069
        %2880 = vmatprep.subr.bf16.mxu0 %v2078
        %2881 = vmatpush1.bf16.msra.mxu0 %v2077
        %2882 = vmatprep.subr.bf16.mxu0 %v2086
        %2883 = vmatpush1.bf16.msra.mxu0 %v2085
        %2884 = vmatprep.subr.bf16.mxu0 %v2094
        %2885 = vmatpush1.bf16.msra.mxu0 %v2093
        %2886 = vmatprep.subr.bf16.mxu0 %v2102
        %2887 = vmatpush1.bf16.msra.mxu0 %v2101
        %2888 = vmatprep.subr.bf16.mxu0 %v2110
        %2889 = vmatpush1.bf16.msra.mxu0 %v2109
        %2890 = vmatprep.subr.bf16.mxu0 %v2118
        %2891 = vmatpush1.bf16.msra.mxu0 %v2117
        %2892 = vmatprep.mubr.bf16.mxu0 %v263
        %2893 = vmatmul.mubr.bf16.gmra.mrb[0].mxu0 %v262
        %v2894 = vpop.f32.mrb[0].mxu0
        %v2895 = vadd.f32 %v2854, %v2894
        %v2896 = vpop.f32.mrb[0].mxu0
        %v2897 = vadd.f32 %v2856, %v2896
        %v2898 = vpop.f32.mrb[0].mxu0
        %v2899 = vpop.f32.mrb[0].mxu0
        %2900 = vdwg.mxu0
        %2901 = vmatprep.subr.bf16.mxu0 %v2126
        %2902 = vmatpush1.bf16.msra.mxu0 %v2125
        %2903 = vmatprep.subr.bf16.mxu0 %v2134
        %2904 = vmatpush1.bf16.msra.mxu0 %v2133
        %2905 = vmatprep.subr.bf16.mxu0 %v2142
        %2906 = vmatpush1.bf16.msra.mxu0 %v2141
        %2907 = vmatprep.subr.bf16.mxu0 %v2150
        %2908 = vmatpush1.bf16.msra.mxu0 %v2149
        %2909 = vmatprep.subr.bf16.mxu0 %v2158
        %2910 = vmatpush1.bf16.msra.mxu0 %v2157
        %2911 = vmatprep.subr.bf16.mxu0 %v2166
        %2912 = vmatpush1.bf16.msra.mxu0 %v2165
        %2913 = vmatprep.subr.bf16.mxu0 %v2174
        %2914 = vmatpush1.bf16.msra.mxu0 %v2173
        %2915 = vmatprep.subr.bf16.mxu0 %v2182
        %2916 = vmatpush1.bf16.msra.mxu0 %v2181
        %2917 = vmatprep.subr.bf16.mxu0 %v2190
        %2918 = vmatpush1.bf16.msra.mxu0 %v2189
        %2919 = vmatprep.subr.bf16.mxu0 %v2198
        %2920 = vmatpush1.bf16.msra.mxu0 %v2197
        %2921 = vmatprep.subr.bf16.mxu0 %v2206
        %2922 = vmatpush1.bf16.msra.mxu0 %v2205
        %2923 = vmatprep.subr.bf16.mxu0 %v2214
        %2924 = vmatpush1.bf16.msra.mxu0 %v2213
        %2925 = vmatprep.subr.bf16.mxu0 %v2222
        %2926 = vmatpush1.bf16.msra.mxu0 %v2221
        %2927 = vmatprep.subr.bf16.mxu0 %v2230
        %2928 = vmatpush1.bf16.msra.mxu0 %v2229
        %2929 = vmatprep.subr.bf16.mxu0 %v2238
        %2930 = vmatpush1.bf16.msra.mxu0 %v2237
        %2931 = vmatprep.subr.bf16.mxu0 %v2246
        %2932 = vmatpush1.bf16.msra.mxu0 %v2245
        %2933 = vmatprep.mubr.bf16.mxu0 %v265
        %2934 = vmatmul.mubr.bf16.gmra.mrb[0].mxu0 %v264
        %v2935 = vpop.f32.mrb[0].mxu0
        %v2936 = vadd.f32 %v2895, %v2935
        %v2937 = vpop.f32.mrb[0].mxu0
        %v2938 = vadd.f32 %v2897, %v2937
        %v2939 = vpop.f32.mrb[0].mxu0
        %v2940 = vpop.f32.mrb[0].mxu0
        %2941 = vdwg.mxu0
        %2942 = vmatprep.subr.bf16.mxu0 %v2254
        %2943 = vmatpush1.bf16.msra.mxu0 %v2253
        %2944 = vmatprep.subr.bf16.mxu0 0
        %2945 = vmatpush1.bf16.msra.mxu0 0
        %2946 = vmatprep.subr.bf16.mxu0 0
        %2947 = vmatpush1.bf16.msra.mxu0 0
        %2948 = vmatprep.subr.bf16.mxu0 0
        %2949 = vmatpush1.bf16.msra.mxu0 0
        %2950 = vmatprep.subr.bf16.mxu0 0
        %2951 = vmatpush1.bf16.msra.mxu0 0
        %2952 = vmatprep.subr.bf16.mxu0 0
        %2953 = vmatpush1.bf16.msra.mxu0 0
        %2954 = vmatprep.subr.bf16.mxu0 0
        %2955 = vmatpush1.bf16.msra.mxu0 0
        %2956 = vmatprep.subr.bf16.mxu0 0
        %2957 = vmatpush1.bf16.msra.mxu0 0
        %2958 = vmatprep.subr.bf16.mxu0 0
        %2959 = vmatpush1.bf16.msra.mxu0 0
        %2960 = vmatprep.subr.bf16.mxu0 0
        %2961 = vmatpush1.bf16.msra.mxu0 0
        %2962 = vmatprep.subr.bf16.mxu0 0
        %2963 = vmatpush1.bf16.msra.mxu0 0
        %2964 = vmatprep.subr.bf16.mxu0 0
        %2965 = vmatpush1.bf16.msra.mxu0 0
        %2966 = vmatprep.subr.bf16.mxu0 0
        %2967 = vmatpush1.bf16.msra.mxu0 0
        %2968 = vmatprep.subr.bf16.mxu0 0
        %2969 = vmatpush1.bf16.msra.mxu0 0
        %2970 = vmatprep.subr.bf16.mxu0 0
        %2971 = vmatpush1.bf16.msra.mxu0 0
        %2972 = vmatprep.subr.bf16.mxu0 0
        %2973 = vmatpush1.bf16.msra.mxu0 0
        %2974 = vmatprep.mubr.bf16.mxu0 0
        %2975 = vmatmul.mubr.bf16.gmra.mrb[0].mxu0 %v2653
        %v2976 = vpop.f32.mrb[0].mxu0
        %v2977 = vadd.f32 %v2936, %v2976
        %v2978 = vpop.f32.mrb[0].mxu0
        %v2979 = vadd.f32 %v2938, %v2978
        %v2980 = vpop.f32.mrb[0].mxu0
        %v2981 = vpop.f32.mrb[0].mxu0
        %2982 = vdwg.mxu0
        %2983 = vmatprep.subr.bf16.mxu0 %v1872
        %2984 = vmatpush1.bf16.msra.mxu0 %v1871
        %2985 = vmatprep.subr.bf16.mxu0 %v1880
        %2986 = vmatpush1.bf16.msra.mxu0 %v1879
        %2987 = vmatprep.subr.bf16.mxu0 %v1888
        %2988 = vmatpush1.bf16.msra.mxu0 %v1887
        %2989 = vmatprep.subr.bf16.mxu0 %v1896
        %2990 = vmatpush1.bf16.msra.mxu0 %v1895
        %2991 = vmatprep.subr.bf16.mxu0 %v1904
        %2992 = vmatpush1.bf16.msra.mxu0 %v1903
        %2993 = vmatprep.subr.bf16.mxu0 %v1912
        %2994 = vmatpush1.bf16.msra.mxu0 %v1911
        %2995 = vmatprep.subr.bf16.mxu0 %v1920
        %2996 = vmatpush1.bf16.msra.mxu0 %v1919
        %2997 = vmatprep.subr.bf16.mxu0 %v1928
        %2998 = vmatpush1.bf16.msra.mxu0 %v1927
        %2999 = vmatprep.subr.bf16.mxu0 %v1936
        %3000 = vmatpush1.bf16.msra.mxu0 %v1935
        %3001 = vmatprep.subr.bf16.mxu0 %v1944
        %3002 = vmatpush1.bf16.msra.mxu0 %v1943
        %3003 = vmatprep.subr.bf16.mxu0 %v1952
        %3004 = vmatpush1.bf16.msra.mxu0 %v1951
        %3005 = vmatprep.subr.bf16.mxu0 %v1960
        %3006 = vmatpush1.bf16.msra.mxu0 %v1959
        %3007 = vmatprep.subr.bf16.mxu0 %v1968
        %3008 = vmatpush1.bf16.msra.mxu0 %v1967
        %3009 = vmatprep.subr.bf16.mxu0 %v1976
        %3010 = vmatpush1.bf16.msra.mxu0 %v1975
        %3011 = vmatprep.subr.bf16.mxu0 %v1984
        %3012 = vmatpush1.bf16.msra.mxu0 %v1983
        %3013 = vmatprep.subr.bf16.mxu0 %v1992
        %3014 = vmatpush1.bf16.msra.mxu0 %v1991
        %3015 = vmatprep.mubr.bf16.mxu0 %v261
        %3016 = vmatmul.mubr.bf16.gmra.mrb[0].mxu0 %v260
        %v3017 = vpop.f32.mrb[0].mxu0
        %v3018 = vadd.f32 %v678, %v3017
        %v3019 = vpop.f32.mrb[0].mxu0
        %v3020 = vadd.f32 %v682, %v3019
        %v3021 = vpop.f32.mrb[0].mxu0
        %v3022 = vpop.f32.mrb[0].mxu0
        %3023 = vdwg.mxu0
        %3024 = vmatprep.subr.bf16.mxu0 %v2000
        %3025 = vmatpush1.bf16.msra.mxu0 %v1999
        %3026 = vmatprep.subr.bf16.mxu0 %v2008
        %3027 = vmatpush1.bf16.msra.mxu0 %v2007
        %3028 = vmatprep.subr.bf16.mxu0 %v2016
        %3029 = vmatpush1.bf16.msra.mxu0 %v2015
        %3030 = vmatprep.subr.bf16.mxu0 %v2024
        %3031 = vmatpush1.bf16.msra.mxu0 %v2023
        %3032 = vmatprep.subr.bf16.mxu0 %v2032
        %3033 = vmatpush1.bf16.msra.mxu0 %v2031
        %3034 = vmatprep.subr.bf16.mxu0 %v2040
        %3035 = vmatpush1.bf16.msra.mxu0 %v2039
        %3036 = vmatprep.subr.bf16.mxu0 %v2048
        %3037 = vmatpush1.bf16.msra.mxu0 %v2047
        %3038 = vmatprep.subr.bf16.mxu0 %v2056
        %3039 = vmatpush1.bf16.msra.mxu0 %v2055
        %3040 = vmatprep.subr.bf16.mxu0 %v2064
        %3041 = vmatpush1.bf16.msra.mxu0 %v2063
        %3042 = vmatprep.subr.bf16.mxu0 %v2072
        %3043 = vmatpush1.bf16.msra.mxu0 %v2071
        %3044 = vmatprep.subr.bf16.mxu0 %v2080
        %3045 = vmatpush1.bf16.msra.mxu0 %v2079
        %3046 = vmatprep.subr.bf16.mxu0 %v2088
        %3047 = vmatpush1.bf16.msra.mxu0 %v2087
        %3048 = vmatprep.subr.bf16.mxu0 %v2096
        %3049 = vmatpush1.bf16.msra.mxu0 %v2095
        %3050 = vmatprep.subr.bf16.mxu0 %v2104
        %3051 = vmatpush1.bf16.msra.mxu0 %v2103
        %3052 = vmatprep.subr.bf16.mxu0 %v2112
        %3053 = vmatpush1.bf16.msra.mxu0 %v2111
        %3054 = vmatprep.subr.bf16.mxu0 %v2120
        %3055 = vmatpush1.bf16.msra.mxu0 %v2119
        %3056 = vmatprep.mubr.bf16.mxu0 %v263
        %3057 = vmatmul.mubr.bf16.gmra.mrb[0].mxu0 %v262
        %v3058 = vpop.f32.mrb[0].mxu0
        %v3059 = vadd.f32 %v3018, %v3058
        %v3060 = vpop.f32.mrb[0].mxu0
        %v3061 = vadd.f32 %v3020, %v3060
        %v3062 = vpop.f32.mrb[0].mxu0
        %v3063 = vpop.f32.mrb[0].mxu0
        %3064 = vdwg.mxu0
        %3065 = vmatprep.subr.bf16.mxu0 %v2128
        %3066 = vmatpush1.bf16.msra.mxu0 %v2127
        %3067 = vmatprep.subr.bf16.mxu0 %v2136
        %3068 = vmatpush1.bf16.msra.mxu0 %v2135
        %3069 = vmatprep.subr.bf16.mxu0 %v2144
        %3070 = vmatpush1.bf16.msra.mxu0 %v2143
        %3071 = vmatprep.subr.bf16.mxu0 %v2152
        %3072 = vmatpush1.bf16.msra.mxu0 %v2151
        %3073 = vmatprep.subr.bf16.mxu0 %v2160
        %3074 = vmatpush1.bf16.msra.mxu0 %v2159
        %3075 = vmatprep.subr.bf16.mxu0 %v2168
        %3076 = vmatpush1.bf16.msra.mxu0 %v2167
        %3077 = vmatprep.subr.bf16.mxu0 %v2176
        %3078 = vmatpush1.bf16.msra.mxu0 %v2175
        %3079 = vmatprep.subr.bf16.mxu0 %v2184
        %3080 = vmatpush1.bf16.msra.mxu0 %v2183
        %3081 = vmatprep.subr.bf16.mxu0 %v2192
        %3082 = vmatpush1.bf16.msra.mxu0 %v2191
        %3083 = vmatprep.subr.bf16.mxu0 %v2200
        %3084 = vmatpush1.bf16.msra.mxu0 %v2199
        %3085 = vmatprep.subr.bf16.mxu0 %v2208
        %3086 = vmatpush1.bf16.msra.mxu0 %v2207
        %3087 = vmatprep.subr.bf16.mxu0 %v2216
        %3088 = vmatpush1.bf16.msra.mxu0 %v2215
        %3089 = vmatprep.subr.bf16.mxu0 %v2224
        %3090 = vmatpush1.bf16.msra.mxu0 %v2223
        %3091 = vmatprep.subr.bf16.mxu0 %v2232
        %3092 = vmatpush1.bf16.msra.mxu0 %v2231
        %3093 = vmatprep.subr.bf16.mxu0 %v2240
        %3094 = vmatpush1.bf16.msra.mxu0 %v2239
        %3095 = vmatprep.subr.bf16.mxu0 %v2248
        %3096 = vmatpush1.bf16.msra.mxu0 %v2247
        %3097 = vmatprep.mubr.bf16.mxu0 %v265
        %3098 = vmatmul.mubr.bf16.gmra.mrb[0].mxu0 %v264
        %v3099 = vpop.f32.mrb[0].mxu0
        %v3100 = vadd.f32 %v3059, %v3099
        %v3101 = vpop.f32.mrb[0].mxu0
        %v3102 = vadd.f32 %v3061, %v3101
        %v3103 = vpop.f32.mrb[0].mxu0
        %v3104 = vpop.f32.mrb[0].mxu0
        %3105 = vdwg.mxu0
        %3106 = vmatprep.subr.bf16.mxu0 %v2256
        %3107 = vmatpush1.bf16.msra.mxu0 %v2255
        %3108 = vmatprep.subr.bf16.mxu0 0
        %3109 = vmatpush1.bf16.msra.mxu0 0
        %3110 = vmatprep.subr.bf16.mxu0 0
        %3111 = vmatpush1.bf16.msra.mxu0 0
        %3112 = vmatprep.subr.bf16.mxu0 0
        %3113 = vmatpush1.bf16.msra.mxu0 0
        %3114 = vmatprep.subr.bf16.mxu0 0
        %3115 = vmatpush1.bf16.msra.mxu0 0
        %3116 = vmatprep.subr.bf16.mxu0 0
        %3117 = vmatpush1.bf16.msra.mxu0 0
        %3118 = vmatprep.subr.bf16.mxu0 0
        %3119 = vmatpush1.bf16.msra.mxu0 0
        %3120 = vmatprep.subr.bf16.mxu0 0
        %3121 = vmatpush1.bf16.msra.mxu0 0
        %3122 = vmatprep.subr.bf16.mxu0 0
        %3123 = vmatpush1.bf16.msra.mxu0 0
        %3124 = vmatprep.subr.bf16.mxu0 0
        %3125 = vmatpush1.bf16.msra.mxu0 0
        %3126 = vmatprep.subr.bf16.mxu0 0
        %3127 = vmatpush1.bf16.msra.mxu0 0
        %3128 = vmatprep.subr.bf16.mxu0 0
        %3129 = vmatpush1.bf16.msra.mxu0 0
        %3130 = vmatprep.subr.bf16.mxu0 0
        %3131 = vmatpush1.bf16.msra.mxu0 0
        %3132 = vmatprep.subr.bf16.mxu0 0
        %3133 = vmatpush1.bf16.msra.mxu0 0
        %3134 = vmatprep.subr.bf16.mxu0 0
        %3135 = vmatpush1.bf16.msra.mxu0 0
        %3136 = vmatprep.subr.bf16.mxu0 0
        %3137 = vmatpush1.bf16.msra.mxu0 0
        %3138 = vmatprep.mubr.bf16.mxu0 0
        %3139 = vmatmul.mubr.bf16.gmra.mrb[0].mxu0 %v2653
        %v3140 = vpop.f32.mrb[0].mxu0
        %v3141 = vadd.f32 %v3100, %v3140
        %v3142 = vpop.f32.mrb[0].mxu0
        %v3143 = vadd.f32 %v3102, %v3142
        %v3144 = vpop.f32.mrb[0].mxu0
        %v3145 = vpop.f32.mrb[0].mxu0
        %3146 = vdwg.mxu0
        %3147 = vmatprep.subr.bf16.mxu0 %v1874
        %3148 = vmatpush1.bf16.msra.mxu0 %v1873
        %3149 = vmatprep.subr.bf16.mxu0 %v1882
        %3150 = vmatpush1.bf16.msra.mxu0 %v1881
        %3151 = vmatprep.subr.bf16.mxu0 %v1890
        %3152 = vmatpush1.bf16.msra.mxu0 %v1889
        %3153 = vmatprep.subr.bf16.mxu0 %v1898
        %3154 = vmatpush1.bf16.msra.mxu0 %v1897
        %3155 = vmatprep.subr.bf16.mxu0 %v1906
        %3156 = vmatpush1.bf16.msra.mxu0 %v1905
        %3157 = vmatprep.subr.bf16.mxu0 %v1914
        %3158 = vmatpush1.bf16.msra.mxu0 %v1913
        %3159 = vmatprep.subr.bf16.mxu0 %v1922
        %3160 = vmatpush1.bf16.msra.mxu0 %v1921
        %3161 = vmatprep.subr.bf16.mxu0 %v1930
        %3162 = vmatpush1.bf16.msra.mxu0 %v1929
        %3163 = vmatprep.subr.bf16.mxu0 %v1938
        %3164 = vmatpush1.bf16.msra.mxu0 %v1937
        %3165 = vmatprep.subr.bf16.mxu0 %v1946
        %3166 = vmatpush1.bf16.msra.mxu0 %v1945
        %3167 = vmatprep.subr.bf16.mxu0 %v1954
        %3168 = vmatpush1.bf16.msra.mxu0 %v1953
        %3169 = vmatprep.subr.bf16.mxu0 %v1962
        %3170 = vmatpush1.bf16.msra.mxu0 %v1961
        %3171 = vmatprep.subr.bf16.mxu0 %v1970
        %3172 = vmatpush1.bf16.msra.mxu0 %v1969
        %3173 = vmatprep.subr.bf16.mxu0 %v1978
        %3174 = vmatpush1.bf16.msra.mxu0 %v1977
        %3175 = vmatprep.subr.bf16.mxu0 %v1986
        %3176 = vmatpush1.bf16.msra.mxu0 %v1985
        %3177 = vmatprep.subr.bf16.mxu0 %v1994
        %3178 = vmatpush1.bf16.msra.mxu0 %v1993
        %3179 = vmatprep.mubr.bf16.mxu0 %v261
        %3180 = vmatmul.mubr.bf16.gmra.mrb[0].mxu0 %v260
        %v3181 = vpop.f32.mrb[0].mxu0
        %v3182 = vadd.f32 %v686, %v3181
        %v3183 = vpop.f32.mrb[0].mxu0
        %v3184 = vadd.f32 %v690, %v3183
        %v3185 = vpop.f32.mrb[0].mxu0
        %v3186 = vpop.f32.mrb[0].mxu0
        %3187 = vdwg.mxu0
        %3188 = vmatprep.subr.bf16.mxu0 %v2002
        %3189 = vmatpush1.bf16.msra.mxu0 %v2001
        %3190 = vmatprep.subr.bf16.mxu0 %v2010
        %3191 = vmatpush1.bf16.msra.mxu0 %v2009
        %3192 = vmatprep.subr.bf16.mxu0 %v2018
        %3193 = vmatpush1.bf16.msra.mxu0 %v2017
        %3194 = vmatprep.subr.bf16.mxu0 %v2026
        %3195 = vmatpush1.bf16.msra.mxu0 %v2025
        %3196 = vmatprep.subr.bf16.mxu0 %v2034
        %3197 = vmatpush1.bf16.msra.mxu0 %v2033
        %3198 = vmatprep.subr.bf16.mxu0 %v2042
        %3199 = vmatpush1.bf16.msra.mxu0 %v2041
        %3200 = vmatprep.subr.bf16.mxu0 %v2050
        %3201 = vmatpush1.bf16.msra.mxu0 %v2049
        %3202 = vmatprep.subr.bf16.mxu0 %v2058
        %3203 = vmatpush1.bf16.msra.mxu0 %v2057
        %3204 = vmatprep.subr.bf16.mxu0 %v2066
        %3205 = vmatpush1.bf16.msra.mxu0 %v2065
        %3206 = vmatprep.subr.bf16.mxu0 %v2074
        %3207 = vmatpush1.bf16.msra.mxu0 %v2073
        %3208 = vmatprep.subr.bf16.mxu0 %v2082
        %3209 = vmatpush1.bf16.msra.mxu0 %v2081
        %3210 = vmatprep.subr.bf16.mxu0 %v2090
        %3211 = vmatpush1.bf16.msra.mxu0 %v2089
        %3212 = vmatprep.subr.bf16.mxu0 %v2098
        %3213 = vmatpush1.bf16.msra.mxu0 %v2097
        %3214 = vmatprep.subr.bf16.mxu0 %v2106
        %3215 = vmatpush1.bf16.msra.mxu0 %v2105
        %3216 = vmatprep.subr.bf16.mxu0 %v2114
        %3217 = vmatpush1.bf16.msra.mxu0 %v2113
        %3218 = vmatprep.subr.bf16.mxu0 %v2122
        %3219 = vmatpush1.bf16.msra.mxu0 %v2121
        %3220 = vmatprep.mubr.bf16.mxu0 %v263
        %3221 = vmatmul.mubr.bf16.gmra.mrb[0].mxu0 %v262
        %v3222 = vpop.f32.mrb[0].mxu0
        %v3223 = vadd.f32 %v3182, %v3222
        %v3224 = vpop.f32.mrb[0].mxu0
        %v3225 = vadd.f32 %v3184, %v3224
        %v3226 = vpop.f32.mrb[0].mxu0
        %v3227 = vpop.f32.mrb[0].mxu0
        %3228 = vdwg.mxu0
        %3229 = vmatprep.subr.bf16.mxu0 %v2130
        %3230 = vmatpush1.bf16.msra.mxu0 %v2129
        %3231 = vmatprep.subr.bf16.mxu0 %v2138
        %3232 = vmatpush1.bf16.msra.mxu0 %v2137
        %3233 = vmatprep.subr.bf16.mxu0 %v2146
        %3234 = vmatpush1.bf16.msra.mxu0 %v2145
        %3235 = vmatprep.subr.bf16.mxu0 %v2154
        %3236 = vmatpush1.bf16.msra.mxu0 %v2153
        %3237 = vmatprep.subr.bf16.mxu0 %v2162
        %3238 = vmatpush1.bf16.msra.mxu0 %v2161
        %3239 = vmatprep.subr.bf16.mxu0 %v2170
        %3240 = vmatpush1.bf16.msra.mxu0 %v2169
        %3241 = vmatprep.subr.bf16.mxu0 %v2178
        %3242 = vmatpush1.bf16.msra.mxu0 %v2177
        %3243 = vmatprep.subr.bf16.mxu0 %v2186
        %3244 = vmatpush1.bf16.msra.mxu0 %v2185
        %3245 = vmatprep.subr.bf16.mxu0 %v2194
        %3246 = vmatpush1.bf16.msra.mxu0 %v2193
        %3247 = vmatprep.subr.bf16.mxu0 %v2202
        %3248 = vmatpush1.bf16.msra.mxu0 %v2201
        %3249 = vmatprep.subr.bf16.mxu0 %v2210
        %3250 = vmatpush1.bf16.msra.mxu0 %v2209
        %3251 = vmatprep.subr.bf16.mxu0 %v2218
        %3252 = vmatpush1.bf16.msra.mxu0 %v2217
        %3253 = vmatprep.subr.bf16.mxu0 %v2226
        %3254 = vmatpush1.bf16.msra.mxu0 %v2225
        %3255 = vmatprep.subr.bf16.mxu0 %v2234
        %3256 = vmatpush1.bf16.msra.mxu0 %v2233
        %3257 = vmatprep.subr.bf16.mxu0 %v2242
        %3258 = vmatpush1.bf16.msra.mxu0 %v2241
        %3259 = vmatprep.subr.bf16.mxu0 %v2250
        %3260 = vmatpush1.bf16.msra.mxu0 %v2249
        %3261 = vmatprep.mubr.bf16.mxu0 %v265
        %3262 = vmatmul.mubr.bf16.gmra.mrb[0].mxu0 %v264
        %v3263 = vpop.f32.mrb[0].mxu0
        %v3264 = vadd.f32 %v3223, %v3263
        %v3265 = vpop.f32.mrb[0].mxu0
        %v3266 = vadd.f32 %v3225, %v3265
        %v3267 = vpop.f32.mrb[0].mxu0
        %v3268 = vpop.f32.mrb[0].mxu0
        %3269 = vdwg.mxu0
        %3270 = vmatprep.subr.bf16.mxu0 %v2258
        %3271 = vmatpush1.bf16.msra.mxu0 %v2257
        %3272 = vmatprep.subr.bf16.mxu0 0
        %3273 = vmatpush1.bf16.msra.mxu0 0
        %3274 = vmatprep.subr.bf16.mxu0 0
        %3275 = vmatpush1.bf16.msra.mxu0 0
        %3276 = vmatprep.subr.bf16.mxu0 0
        %3277 = vmatpush1.bf16.msra.mxu0 0
        %3278 = vmatprep.subr.bf16.mxu0 0
        %3279 = vmatpush1.bf16.msra.mxu0 0
        %3280 = vmatprep.subr.bf16.mxu0 0
        %3281 = vmatpush1.bf16.msra.mxu0 0
        %3282 = vmatprep.subr.bf16.mxu0 0
        %3283 = vmatpush1.bf16.msra.mxu0 0
        %3284 = vmatprep.subr.bf16.mxu0 0
        %3285 = vmatpush1.bf16.msra.mxu0 0
        %3286 = vmatprep.subr.bf16.mxu0 0
        %3287 = vmatpush1.bf16.msra.mxu0 0
        %3288 = vmatprep.subr.bf16.mxu0 0
        %3289 = vmatpush1.bf16.msra.mxu0 0
        %3290 = vmatprep.subr.bf16.mxu0 0
        %3291 = vmatpush1.bf16.msra.mxu0 0
        %3292 = vmatprep.subr.bf16.mxu0 0
        %3293 = vmatpush1.bf16.msra.mxu0 0
        %3294 = vmatprep.subr.bf16.mxu0 0
        %3295 = vmatpush1.bf16.msra.mxu0 0
        %3296 = vmatprep.subr.bf16.mxu0 0
        %3297 = vmatpush1.bf16.msra.mxu0 0
        %3298 = vmatprep.subr.bf16.mxu0 0
        %3299 = vmatpush1.bf16.msra.mxu0 0
        %3300 = vmatprep.subr.bf16.mxu0 0
        %3301 = vmatpush1.bf16.msra.mxu0 0
        %3302 = vmatprep.mubr.bf16.mxu0 0
        %3303 = vmatmul.mubr.bf16.gmra.mrb[0].mxu0 %v2653
        %v3304 = vpop.f32.mrb[0].mxu0
        %v3305 = vadd.f32 %v3264, %v3304
        %v3306 = vpop.f32.mrb[0].mxu0
        %v3307 = vadd.f32 %v3266, %v3306
        %v3308 = vpop.f32.mrb[0].mxu0
        %v3309 = vpop.f32.mrb[0].mxu0
        %3310 = vdwg.mxu0
        %v3311 = vmax.f32 %v2813, 0.0
        %v3312 = vmax.f32 %v2815, 0.0
        %v3313 = vmax.f32 %v2977, 0.0
        %v3314 = vmax.f32 %v2979, 0.0
        %v3315 = vmax.f32 %v3141, 0.0
        %v3316 = vmax.f32 %v3143, 0.0
        %v3317 = vmax.f32 %v3305, 0.0
        %v3318 = vmax.f32 %v3307, 0.0
        %v3319 = vpack.c.bf16 %v3311, %v3311
        %v3320 = vpack.c.bf16 %v3312, %v3312
        %v3321 = vpack.c.bf16 %v3313, %v3313
        %v3322 = vpack.c.bf16 %v3314, %v3314
        %v3323 = vpack.c.bf16 %v3315, %v3315
        %v3324 = vpack.c.bf16 %v3316, %v3316
        %v3325 = vpack.c.bf16 %v3317, %v3317
        %v3326 = vpack.c.bf16 %v3318, %v3318
        %v3327 = vld [vmem:[%s2] sm:$0xf]
        %v3328 = vld [vmem:[%s2 + $0x4] sm:$0xf]
        %v3329 = vld [vmem:[%s2 + $0x8] sm:$0xf]
        %v3330 = vld [vmem:[%s2 + $0xc] sm:$0xf]
        %v3331 = vld [vmem:[%s2 + $0x10] sm:$0xf]
        %v3332 = vld [vmem:[%s2 + $0x14] sm:$0xf]
        %v3333 = vld [vmem:[%s2 + $0x18] sm:$0xf]
        %v3334 = vld [vmem:[%s2 + $0x1c] sm:$0xf]
        %v3335 = vld [vmem:[%s2 + $0x20] sm:$0xf]
        %v3336 = vld [vmem:[%s2 + $0x24] sm:$0xf]
        %v3337 = vld [vmem:[%s2 + $0x28] sm:$0xf]
        %v3338 = vld [vmem:[%s2 + $0x2c] sm:$0xf]
        %v3339 = vld [vmem:[%s2 + $0x30] sm:$0xf]
        %v3340 = vld [vmem:[%s2 + $0x34] sm:$0xf]
        %v3341 = vld [vmem:[%s2 + $0x38] sm:$0xf]
        %v3342 = vld [vmem:[%s2 + $0x3c] sm:$0xf]
        %v3343 = vld [vmem:[%s2 + $0x40] sm:$0xf]
        %v3344 = vld [vmem:[%s2 + $0x44] sm:$0xf]
        %v3345 = vld [vmem:[%s2 + $0x48] sm:$0xf]
        %v3346 = vld [vmem:[%s2 + $0x4c] sm:$0xf]
        %v3347 = vld [vmem:[%s2 + $0x50] sm:$0xf]
        %v3348 = vld [vmem:[%s2 + $0x54] sm:$0xf]
        %v3349 = vld [vmem:[%s2 + $0x58] sm:$0xf]
        %v3350 = vld [vmem:[%s2 + $0x5c] sm:$0xf]
        %v3351 = vld [vmem:[%s2 + $0x60] sm:$0xf]
        %v3352 = vld [vmem:[%s2 + $0x64] sm:$0xf]
        %v3353 = vld [vmem:[%s2 + $0x68] sm:$0xf]
        %v3354 = vld [vmem:[%s2 + $0x6c] sm:$0xf]
        %v3355 = vld [vmem:[%s2 + $0x70] sm:$0xf]
        %v3356 = vld [vmem:[%s2 + $0x74] sm:$0xf]
        %v3357 = vld [vmem:[%s2 + $0x78] sm:$0xf]
        %v3358 = vld [vmem:[%s2 + $0x7c] sm:$0xf]
        %v3359 = vld [vmem:[%s2 + $0x80] sm:$0xf]
        %v3360 = vld [vmem:[%s2 + $0x84] sm:$0xf]
        %v3361 = vld [vmem:[%s2 + $0x88] sm:$0xf]
        %v3362 = vld [vmem:[%s2 + $0x8c] sm:$0xf]
        %v3363 = vld [vmem:[%s2 + $0x90] sm:$0xf]
        %v3364 = vld [vmem:[%s2 + $0x94] sm:$0xf]
        %v3365 = vld [vmem:[%s2 + $0x98] sm:$0xf]
        %v3366 = vld [vmem:[%s2 + $0x9c] sm:$0xf]
        %v3367 = vld [vmem:[%s2 + $0xa0] sm:$0xf]
        %v3368 = vld [vmem:[%s2 + $0xa4] sm:$0xf]
        %v3369 = vld [vmem:[%s2 + $0xa8] sm:$0xf]
        %v3370 = vld [vmem:[%s2 + $0xac] sm:$0xf]
        %v3371 = vld [vmem:[%s2 + $0xb0] sm:$0xf]
        %v3372 = vld [vmem:[%s2 + $0xb4] sm:$0xf]
        %v3373 = vld [vmem:[%s2 + $0xb8] sm:$0xf]
        %v3374 = vld [vmem:[%s2 + $0xbc] sm:$0xf]
        %v3375 = vld [vmem:[%s2 + $0xc0] sm:$0xf]
        %v3376 = vld [vmem:[%s2 + $0xc4] sm:$0xf]
        %v3377 = vld [vmem:[%s2 + $0xc8] sm:$0xf]
        %v3378 = vld [vmem:[%s2 + $0xcc] sm:$0xf]
        %v3379 = vld [vmem:[%s2 + $0xd0] sm:$0xf]
        %v3380 = vld [vmem:[%s2 + $0xd4] sm:$0xf]
        %v3381 = vld [vmem:[%s2 + $0xd8] sm:$0xf]
        %v3382 = vld [vmem:[%s2 + $0xdc] sm:$0xf]
        %v3383 = vld [vmem:[%s2 + $0xe0] sm:$0xf]
        %v3384 = vld [vmem:[%s2 + $0xe4] sm:$0xf]
        %v3385 = vld [vmem:[%s2 + $0xe8] sm:$0xf]
        %v3386 = vld [vmem:[%s2 + $0xec] sm:$0xf]
        %v3387 = vld [vmem:[%s2 + $0xf0] sm:$0xf]
        %v3388 = vld [vmem:[%s2 + $0xf4] sm:$0xf]
        %v3389 = vld [vmem:[%s2 + $0xf8] sm:$0xf]
        %v3390 = vld [vmem:[%s2 + $0xfc] sm:$0xf]
        %v3391 = vld [vmem:[%s2 + $0x100] sm:$0xf]
        %v3392 = vld [vmem:[%s2 + $0x104] sm:$0xf]
        %v3393 = vld [vmem:[%s2 + $0x108] sm:$0xf]
        %v3394 = vld [vmem:[%s2 + $0x10c] sm:$0xf]
        %v3395 = vld [vmem:[%s2 + $0x110] sm:$0xf]
        %v3396 = vld [vmem:[%s2 + $0x114] sm:$0xf]
        %v3397 = vld [vmem:[%s2 + $0x118] sm:$0xf]
        %v3398 = vld [vmem:[%s2 + $0x11c] sm:$0xf]
        %v3399 = vld [vmem:[%s2 + $0x120] sm:$0xf]
        %v3400 = vld [vmem:[%s2 + $0x124] sm:$0xf]
        %v3401 = vld [vmem:[%s2 + $0x128] sm:$0xf]
        %v3402 = vld [vmem:[%s2 + $0x12c] sm:$0xf]
        %v3403 = vld [vmem:[%s2 + $0x130] sm:$0xf]
        %v3404 = vld [vmem:[%s2 + $0x134] sm:$0xf]
        %v3405 = vld [vmem:[%s2 + $0x138] sm:$0xf]
        %v3406 = vld [vmem:[%s2 + $0x13c] sm:$0xf]
        %v3407 = vld [vmem:[%s2 + $0x140] sm:$0xf]
        %v3408 = vld [vmem:[%s2 + $0x144] sm:$0xf]
        %v3409 = vld [vmem:[%s2 + $0x148] sm:$0xf]
        %v3410 = vld [vmem:[%s2 + $0x14c] sm:$0xf]
        %v3411 = vld [vmem:[%s2 + $0x150] sm:$0xf]
        %v3412 = vld [vmem:[%s2 + $0x154] sm:$0xf]
        %v3413 = vld [vmem:[%s2 + $0x158] sm:$0xf]
        %v3414 = vld [vmem:[%s2 + $0x15c] sm:$0xf]
        %v3415 = vld [vmem:[%s2 + $0x160] sm:$0xf]
        %v3416 = vld [vmem:[%s2 + $0x164] sm:$0xf]
        %v3417 = vld [vmem:[%s2 + $0x168] sm:$0xf]
        %v3418 = vld [vmem:[%s2 + $0x16c] sm:$0xf]
        %v3419 = vld [vmem:[%s2 + $0x170] sm:$0xf]
        %v3420 = vld [vmem:[%s2 + $0x174] sm:$0xf]
        %v3421 = vld [vmem:[%s2 + $0x178] sm:$0xf]
        %v3422 = vld [vmem:[%s2 + $0x17c] sm:$0xf]
        %v3423 = vld [vmem:[%s2 + $0x180] sm:$0xf]
        %v3424 = vld [vmem:[%s2 + $0x184] sm:$0xf]
        %v3425 = vld [vmem:[%s2 + $0x188] sm:$0xf]
        %v3426 = vld [vmem:[%s2 + $0x18c] sm:$0xf]
        %v3427 = vld [vmem:[%s2 + $0x190] sm:$0xf]
        %v3428 = vld [vmem:[%s2 + $0x194] sm:$0xf]
        %v3429 = vld [vmem:[%s2 + $0x198] sm:$0xf]
        %v3430 = vld [vmem:[%s2 + $0x19c] sm:$0xf]
        %v3431 = vld [vmem:[%s2 + $0x1a0] sm:$0xf]
        %v3432 = vld [vmem:[%s2 + $0x1a4] sm:$0xf]
        %v3433 = vld [vmem:[%s2 + $0x1a8] sm:$0xf]
        %v3434 = vld [vmem:[%s2 + $0x1ac] sm:$0xf]
        %v3435 = vld [vmem:[%s2 + $0x1b0] sm:$0xf]
        %v3436 = vld [vmem:[%s2 + $0x1b4] sm:$0xf]
        %v3437 = vld [vmem:[%s2 + $0x1b8] sm:$0xf]
        %v3438 = vld [vmem:[%s2 + $0x1bc] sm:$0xf]
        %v3439 = vld [vmem:[%s2 + $0x1c0] sm:$0xf]
        %v3440 = vld [vmem:[%s2 + $0x1c4] sm:$0xf]
        %v3441 = vld [vmem:[%s2 + $0x1c8] sm:$0xf]
        %v3442 = vld [vmem:[%s2 + $0x1cc] sm:$0xf]
        %v3443 = vld [vmem:[%s2 + $0x1d0] sm:$0xf]
        %v3444 = vld [vmem:[%s2 + $0x1d4] sm:$0xf]
        %v3445 = vld [vmem:[%s2 + $0x1d8] sm:$0xf]
        %v3446 = vld [vmem:[%s2 + $0x1dc] sm:$0xf]
        %v3447 = vld [vmem:[%s2 + $0x1e0] sm:$0xf]
        %v3448 = vld [vmem:[%s2 + $0x1e4] sm:$0xf]
        %v3449 = vld [vmem:[%s2 + $0x1e8] sm:$0xf]
        %v3450 = vld [vmem:[%s2 + $0x1ec] sm:$0xf]
        %v3451 = vld [vmem:[%s2 + $0x1f0] sm:$0xf]
        %v3452 = vld [vmem:[%s2 + $0x1f4] sm:$0xf]
        %v3453 = vld [vmem:[%s2 + $0x1f8] sm:$0xf]
        %v3454 = vld [vmem:[%s2 + $0x1fc] sm:$0xf]
        %v3455 = vlaneseq
        %v3456 = vshrl.u32 %v3455, 7
        %v3457 = vsub.s32 1, %v3456
        %v3458 = vrot.slane %v245, %v3457
        %v3587 = vunpack.c.l.b16 %v3327
        %v3588 = vunpack.c.l.b16 %v3328
        %v3589 = vunpack.c.l.b16 %v3329
        %v3590 = vunpack.c.l.b16 %v3330
        %v3591 = vunpack.c.l.b16 %v3331
        %v3592 = vunpack.c.l.b16 %v3332
        %v3593 = vunpack.c.l.b16 %v3333
        %v3594 = vunpack.c.l.b16 %v3334
        %v3595 = vunpack.c.l.b16 %v3335
        %v3596 = vunpack.c.l.b16 %v3336
        %v3597 = vunpack.c.l.b16 %v3337
        %v3598 = vunpack.c.l.b16 %v3338
        %v3599 = vunpack.c.l.b16 %v3339
        %v3600 = vunpack.c.l.b16 %v3340
        %v3601 = vunpack.c.l.b16 %v3341
        %v3602 = vunpack.c.l.b16 %v3342
        %v3603 = vunpack.c.l.b16 %v3343
        %v3604 = vunpack.c.l.b16 %v3344
        %v3605 = vunpack.c.l.b16 %v3345
        %v3606 = vunpack.c.l.b16 %v3346
        %v3607 = vunpack.c.l.b16 %v3347
        %v3608 = vunpack.c.l.b16 %v3348
        %v3609 = vunpack.c.l.b16 %v3349
        %v3610 = vunpack.c.l.b16 %v3350
        %v3611 = vunpack.c.l.b16 %v3351
        %v3612 = vunpack.c.l.b16 %v3352
        %v3613 = vunpack.c.l.b16 %v3353
        %v3614 = vunpack.c.l.b16 %v3354
        %v3615 = vunpack.c.l.b16 %v3355
        %v3616 = vunpack.c.l.b16 %v3356
        %v3617 = vunpack.c.l.b16 %v3357
        %v3618 = vunpack.c.l.b16 %v3358
        %v3619 = vunpack.c.l.b16 %v3359
        %v3620 = vunpack.c.l.b16 %v3360
        %v3621 = vunpack.c.l.b16 %v3361
        %v3622 = vunpack.c.l.b16 %v3362
        %v3623 = vunpack.c.l.b16 %v3363
        %v3624 = vunpack.c.l.b16 %v3364
        %v3625 = vunpack.c.l.b16 %v3365
        %v3626 = vunpack.c.l.b16 %v3366
        %v3627 = vunpack.c.l.b16 %v3367
        %v3628 = vunpack.c.l.b16 %v3368
        %v3629 = vunpack.c.l.b16 %v3369
        %v3630 = vunpack.c.l.b16 %v3370
        %v3631 = vunpack.c.l.b16 %v3371
        %v3632 = vunpack.c.l.b16 %v3372
        %v3633 = vunpack.c.l.b16 %v3373
        %v3634 = vunpack.c.l.b16 %v3374
        %v3635 = vunpack.c.l.b16 %v3375
        %v3636 = vunpack.c.l.b16 %v3376
        %v3637 = vunpack.c.l.b16 %v3377
        %v3638 = vunpack.c.l.b16 %v3378
        %v3639 = vunpack.c.l.b16 %v3379
        %v3640 = vunpack.c.l.b16 %v3380
        %v3641 = vunpack.c.l.b16 %v3381
        %v3642 = vunpack.c.l.b16 %v3382
        %v3643 = vunpack.c.l.b16 %v3383
        %v3644 = vunpack.c.l.b16 %v3384
        %v3645 = vunpack.c.l.b16 %v3385
        %v3646 = vunpack.c.l.b16 %v3386
        %v3647 = vunpack.c.l.b16 %v3387
        %v3648 = vunpack.c.l.b16 %v3388
        %v3649 = vunpack.c.l.b16 %v3389
        %v3650 = vunpack.c.l.b16 %v3390
        %v3651 = vunpack.c.l.b16 %v3391
        %v3652 = vunpack.c.l.b16 %v3392
        %v3653 = vunpack.c.l.b16 %v3393
        %v3654 = vunpack.c.l.b16 %v3394
        %v3655 = vunpack.c.l.b16 %v3395
        %v3656 = vunpack.c.l.b16 %v3396
        %v3657 = vunpack.c.l.b16 %v3397
        %v3658 = vunpack.c.l.b16 %v3398
        %v3659 = vunpack.c.l.b16 %v3399
        %v3660 = vunpack.c.l.b16 %v3400
        %v3661 = vunpack.c.l.b16 %v3401
        %v3662 = vunpack.c.l.b16 %v3402
        %v3663 = vunpack.c.l.b16 %v3403
        %v3664 = vunpack.c.l.b16 %v3404
        %v3665 = vunpack.c.l.b16 %v3405
        %v3666 = vunpack.c.l.b16 %v3406
        %v3667 = vunpack.c.l.b16 %v3407
        %v3668 = vunpack.c.l.b16 %v3408
        %v3669 = vunpack.c.l.b16 %v3409
        %v3670 = vunpack.c.l.b16 %v3410
        %v3671 = vunpack.c.l.b16 %v3411
        %v3672 = vunpack.c.l.b16 %v3412
        %v3673 = vunpack.c.l.b16 %v3413
        %v3674 = vunpack.c.l.b16 %v3414
        %v3675 = vunpack.c.l.b16 %v3415
        %v3676 = vunpack.c.l.b16 %v3416
        %v3677 = vunpack.c.l.b16 %v3417
        %v3678 = vunpack.c.l.b16 %v3418
        %v3679 = vunpack.c.l.b16 %v3419
        %v3680 = vunpack.c.l.b16 %v3420
        %v3681 = vunpack.c.l.b16 %v3421
        %v3682 = vunpack.c.l.b16 %v3422
        %v3683 = vunpack.c.l.b16 %v3423
        %v3684 = vunpack.c.l.b16 %v3424
        %v3685 = vunpack.c.l.b16 %v3425
        %v3686 = vunpack.c.l.b16 %v3426
        %v3687 = vunpack.c.l.b16 %v3427
        %v3688 = vunpack.c.l.b16 %v3428
        %v3689 = vunpack.c.l.b16 %v3429
        %v3690 = vunpack.c.l.b16 %v3430
        %v3691 = vunpack.c.l.b16 %v3431
        %v3692 = vunpack.c.l.b16 %v3432
        %v3693 = vunpack.c.l.b16 %v3433
        %v3694 = vunpack.c.l.b16 %v3434
        %v3695 = vunpack.c.l.b16 %v3435
        %v3696 = vunpack.c.l.b16 %v3436
        %v3697 = vunpack.c.l.b16 %v3437
        %v3698 = vunpack.c.l.b16 %v3438
        %v3699 = vunpack.c.l.b16 %v3439
        %v3700 = vunpack.c.l.b16 %v3440
        %v3701 = vunpack.c.l.b16 %v3441
        %v3702 = vunpack.c.l.b16 %v3442
        %v3703 = vunpack.c.l.b16 %v3443
        %v3704 = vunpack.c.l.b16 %v3444
        %v3705 = vunpack.c.l.b16 %v3445
        %v3706 = vunpack.c.l.b16 %v3446
        %v3707 = vunpack.c.l.b16 %v3447
        %v3708 = vunpack.c.l.b16 %v3448
        %v3709 = vunpack.c.l.b16 %v3449
        %v3710 = vunpack.c.l.b16 %v3450
        %v3711 = vunpack.c.l.b16 %v3451
        %v3712 = vunpack.c.l.b16 %v3452
        %v3713 = vunpack.c.l.b16 %v3453
        %v3714 = vunpack.c.l.b16 %v3454
        %v3715 = vpack.c.b16 %v3588, %v3587
        %v3716 = vpack.c.b16 %v3590, %v3589
        %v3717 = vpack.c.b16 %v3592, %v3591
        %v3718 = vpack.c.b16 %v3594, %v3593
        %v3719 = vpack.c.b16 %v3596, %v3595
        %v3720 = vpack.c.b16 %v3598, %v3597
        %v3721 = vpack.c.b16 %v3600, %v3599
        %v3722 = vpack.c.b16 %v3602, %v3601
        %v3723 = vpack.c.b16 %v3604, %v3603
        %v3724 = vpack.c.b16 %v3606, %v3605
        %v3725 = vpack.c.b16 %v3608, %v3607
        %v3726 = vpack.c.b16 %v3610, %v3609
        %v3727 = vpack.c.b16 %v3612, %v3611
        %v3728 = vpack.c.b16 %v3614, %v3613
        %v3729 = vpack.c.b16 %v3616, %v3615
        %v3730 = vpack.c.b16 %v3618, %v3617
        %v3731 = vpack.c.b16 %v3620, %v3619
        %v3732 = vpack.c.b16 %v3622, %v3621
        %v3733 = vpack.c.b16 %v3624, %v3623
        %v3734 = vpack.c.b16 %v3626, %v3625
        %v3735 = vpack.c.b16 %v3628, %v3627
        %v3736 = vpack.c.b16 %v3630, %v3629
        %v3737 = vpack.c.b16 %v3632, %v3631
        %v3738 = vpack.c.b16 %v3634, %v3633
        %v3739 = vpack.c.b16 %v3636, %v3635
        %v3740 = vpack.c.b16 %v3638, %v3637
        %v3741 = vpack.c.b16 %v3640, %v3639
        %v3742 = vpack.c.b16 %v3642, %v3641
        %v3743 = vpack.c.b16 %v3644, %v3643
        %v3744 = vpack.c.b16 %v3646, %v3645
        %v3745 = vpack.c.b16 %v3648, %v3647
        %v3746 = vpack.c.b16 %v3650, %v3649
        %v3747 = vpack.c.b16 %v3652, %v3651
        %v3748 = vpack.c.b16 %v3654, %v3653
        %v3749 = vpack.c.b16 %v3656, %v3655
        %v3750 = vpack.c.b16 %v3658, %v3657
        %v3751 = vpack.c.b16 %v3660, %v3659
        %v3752 = vpack.c.b16 %v3662, %v3661
        %v3753 = vpack.c.b16 %v3664, %v3663
        %v3754 = vpack.c.b16 %v3666, %v3665
        %v3755 = vpack.c.b16 %v3668, %v3667
        %v3756 = vpack.c.b16 %v3670, %v3669
        %v3757 = vpack.c.b16 %v3672, %v3671
        %v3758 = vpack.c.b16 %v3674, %v3673
        %v3759 = vpack.c.b16 %v3676, %v3675
        %v3760 = vpack.c.b16 %v3678, %v3677
        %v3761 = vpack.c.b16 %v3680, %v3679
        %v3762 = vpack.c.b16 %v3682, %v3681
        %v3763 = vpack.c.b16 %v3684, %v3683
        %v3764 = vpack.c.b16 %v3686, %v3685
        %v3765 = vpack.c.b16 %v3688, %v3687
        %v3766 = vpack.c.b16 %v3690, %v3689
        %v3767 = vpack.c.b16 %v3692, %v3691
        %v3768 = vpack.c.b16 %v3694, %v3693
        %v3769 = vpack.c.b16 %v3696, %v3695
        %v3770 = vpack.c.b16 %v3698, %v3697
        %v3771 = vpack.c.b16 %v3700, %v3699
        %v3772 = vpack.c.b16 %v3702, %v3701
        %v3773 = vpack.c.b16 %v3704, %v3703
        %v3774 = vpack.c.b16 %v3706, %v3705
        %v3775 = vpack.c.b16 %v3708, %v3707
        %v3776 = vpack.c.b16 %v3710, %v3709
        %v3777 = vpack.c.b16 %v3712, %v3711
        %v3778 = vpack.c.b16 %v3714, %v3713
        %3843 = vmatprep.subr.bf16.mxu0 0
        %3844 = vmatpush1.bf16.msra.mxu0 %v3715
        %3845 = vmatprep.subr.bf16.mxu0 0
        %3846 = vmatpush1.bf16.msra.mxu0 %v3716
        %3847 = vmatprep.subr.bf16.mxu0 0
        %3848 = vmatpush1.bf16.msra.mxu0 %v3717
        %3849 = vmatprep.subr.bf16.mxu0 0
        %3850 = vmatpush1.bf16.msra.mxu0 %v3718
        %3851 = vmatprep.subr.bf16.mxu0 0
        %3852 = vmatpush1.bf16.msra.mxu0 %v3719
        %3853 = vmatprep.subr.bf16.mxu0 0
        %3854 = vmatpush1.bf16.msra.mxu0 %v3720
        %3855 = vmatprep.subr.bf16.mxu0 0
        %3856 = vmatpush1.bf16.msra.mxu0 %v3721
        %3857 = vmatprep.subr.bf16.mxu0 0
        %3858 = vmatpush1.bf16.msra.mxu0 %v3722
        %3859 = vmatprep.subr.bf16.mxu0 0
        %3860 = vmatpush1.bf16.msra.mxu0 %v3723
        %3861 = vmatprep.subr.bf16.mxu0 0
        %3862 = vmatpush1.bf16.msra.mxu0 %v3724
        %3863 = vmatprep.subr.bf16.mxu0 0
        %3864 = vmatpush1.bf16.msra.mxu0 %v3725
        %3865 = vmatprep.subr.bf16.mxu0 0
        %3866 = vmatpush1.bf16.msra.mxu0 %v3726
        %3867 = vmatprep.subr.bf16.mxu0 0
        %3868 = vmatpush1.bf16.msra.mxu0 %v3727
        %3869 = vmatprep.subr.bf16.mxu0 0
        %3870 = vmatpush1.bf16.msra.mxu0 %v3728
        %3871 = vmatprep.subr.bf16.mxu0 0
        %3872 = vmatpush1.bf16.msra.mxu0 %v3729
        %3873 = vmatprep.subr.bf16.mxu0 0
        %3874 = vmatpush1.bf16.msra.mxu0 %v3730
        %3875 = vmatprep.mubr.bf16.mxu0 %v3320
        %3876 = vmatmul.mubr.bf16.gmra.mrb[0].mxu0 %v3319
        %v3877 = vpop.f32.mrb[0].mxu0
        %v3878 = vadd.f32 %v3458, %v3877
        %v3879 = vpop.f32.mrb[0].mxu0
        %v3880 = vpop.f32.mrb[0].mxu0
        %v3881 = vpop.f32.mrb[0].mxu0
        %3882 = vdwg.mxu0
        %3883 = vmatprep.subr.bf16.mxu0 0
        %3884 = vmatpush1.bf16.msra.mxu0 %v3731
        %3885 = vmatprep.subr.bf16.mxu0 0
        %3886 = vmatpush1.bf16.msra.mxu0 %v3732
        %3887 = vmatprep.subr.bf16.mxu0 0
        %3888 = vmatpush1.bf16.msra.mxu0 %v3733
        %3889 = vmatprep.subr.bf16.mxu0 0
        %3890 = vmatpush1.bf16.msra.mxu0 %v3734
        %3891 = vmatprep.subr.bf16.mxu0 0
        %3892 = vmatpush1.bf16.msra.mxu0 %v3735
        %3893 = vmatprep.subr.bf16.mxu0 0
        %3894 = vmatpush1.bf16.msra.mxu0 %v3736
        %3895 = vmatprep.subr.bf16.mxu0 0
        %3896 = vmatpush1.bf16.msra.mxu0 %v3737
        %3897 = vmatprep.subr.bf16.mxu0 0
        %3898 = vmatpush1.bf16.msra.mxu0 %v3738
        %3899 = vmatprep.subr.bf16.mxu0 0
        %3900 = vmatpush1.bf16.msra.mxu0 %v3739
        %3901 = vmatprep.subr.bf16.mxu0 0
        %3902 = vmatpush1.bf16.msra.mxu0 %v3740
        %3903 = vmatprep.subr.bf16.mxu0 0
        %3904 = vmatpush1.bf16.msra.mxu0 %v3741
        %3905 = vmatprep.subr.bf16.mxu0 0
        %3906 = vmatpush1.bf16.msra.mxu0 %v3742
        %3907 = vmatprep.subr.bf16.mxu0 0
        %3908 = vmatpush1.bf16.msra.mxu0 %v3743
        %3909 = vmatprep.subr.bf16.mxu0 0
        %3910 = vmatpush1.bf16.msra.mxu0 %v3744
        %3911 = vmatprep.subr.bf16.mxu0 0
        %3912 = vmatpush1.bf16.msra.mxu0 %v3745
        %3913 = vmatprep.subr.bf16.mxu0 0
        %3914 = vmatpush1.bf16.msra.mxu0 %v3746
        %3915 = vmatprep.mubr.bf16.mxu0 %v3322
        %3916 = vmatmul.mubr.bf16.gmra.mrb[0].mxu0 %v3321
        %v3917 = vpop.f32.mrb[0].mxu0
        %v3918 = vadd.f32 %v3878, %v3917
        %v3919 = vpop.f32.mrb[0].mxu0
        %v3920 = vpop.f32.mrb[0].mxu0
        %v3921 = vpop.f32.mrb[0].mxu0
        %3922 = vdwg.mxu0
        %3923 = vmatprep.subr.bf16.mxu0 0
        %3924 = vmatpush1.bf16.msra.mxu0 %v3747
        %3925 = vmatprep.subr.bf16.mxu0 0
        %3926 = vmatpush1.bf16.msra.mxu0 %v3748
        %3927 = vmatprep.subr.bf16.mxu0 0
        %3928 = vmatpush1.bf16.msra.mxu0 %v3749
        %3929 = vmatprep.subr.bf16.mxu0 0
        %3930 = vmatpush1.bf16.msra.mxu0 %v3750
        %3931 = vmatprep.subr.bf16.mxu0 0
        %3932 = vmatpush1.bf16.msra.mxu0 %v3751
        %3933 = vmatprep.subr.bf16.mxu0 0
        %3934 = vmatpush1.bf16.msra.mxu0 %v3752
        %3935 = vmatprep.subr.bf16.mxu0 0
        %3936 = vmatpush1.bf16.msra.mxu0 %v3753
        %3937 = vmatprep.subr.bf16.mxu0 0
        %3938 = vmatpush1.bf16.msra.mxu0 %v3754
        %3939 = vmatprep.subr.bf16.mxu0 0
        %3940 = vmatpush1.bf16.msra.mxu0 %v3755
        %3941 = vmatprep.subr.bf16.mxu0 0
        %3942 = vmatpush1.bf16.msra.mxu0 %v3756
        %3943 = vmatprep.subr.bf16.mxu0 0
        %3944 = vmatpush1.bf16.msra.mxu0 %v3757
        %3945 = vmatprep.subr.bf16.mxu0 0
        %3946 = vmatpush1.bf16.msra.mxu0 %v3758
        %3947 = vmatprep.subr.bf16.mxu0 0
        %3948 = vmatpush1.bf16.msra.mxu0 %v3759
        %3949 = vmatprep.subr.bf16.mxu0 0
        %3950 = vmatpush1.bf16.msra.mxu0 %v3760
        %3951 = vmatprep.subr.bf16.mxu0 0
        %3952 = vmatpush1.bf16.msra.mxu0 %v3761
        %3953 = vmatprep.subr.bf16.mxu0 0
        %3954 = vmatpush1.bf16.msra.mxu0 %v3762
        %3955 = vmatprep.mubr.bf16.mxu0 %v3324
        %3956 = vmatmul.mubr.bf16.gmra.mrb[0].mxu0 %v3323
        %v3957 = vpop.f32.mrb[0].mxu0
        %v3958 = vadd.f32 %v3918, %v3957
        %v3959 = vpop.f32.mrb[0].mxu0
        %v3960 = vpop.f32.mrb[0].mxu0
        %v3961 = vpop.f32.mrb[0].mxu0
        %3962 = vdwg.mxu0
        %3963 = vmatprep.subr.bf16.mxu0 0
        %3964 = vmatpush1.bf16.msra.mxu0 %v3763
        %3965 = vmatprep.subr.bf16.mxu0 0
        %3966 = vmatpush1.bf16.msra.mxu0 %v3764
        %3967 = vmatprep.subr.bf16.mxu0 0
        %3968 = vmatpush1.bf16.msra.mxu0 %v3765
        %3969 = vmatprep.subr.bf16.mxu0 0
        %3970 = vmatpush1.bf16.msra.mxu0 %v3766
        %3971 = vmatprep.subr.bf16.mxu0 0
        %3972 = vmatpush1.bf16.msra.mxu0 %v3767
        %3973 = vmatprep.subr.bf16.mxu0 0
        %3974 = vmatpush1.bf16.msra.mxu0 %v3768
        %3975 = vmatprep.subr.bf16.mxu0 0
        %3976 = vmatpush1.bf16.msra.mxu0 %v3769
        %3977 = vmatprep.subr.bf16.mxu0 0
        %3978 = vmatpush1.bf16.msra.mxu0 %v3770
        %3979 = vmatprep.subr.bf16.mxu0 0
        %3980 = vmatpush1.bf16.msra.mxu0 %v3771
        %3981 = vmatprep.subr.bf16.mxu0 0
        %3982 = vmatpush1.bf16.msra.mxu0 %v3772
        %3983 = vmatprep.subr.bf16.mxu0 0
        %3984 = vmatpush1.bf16.msra.mxu0 %v3773
        %3985 = vmatprep.subr.bf16.mxu0 0
        %3986 = vmatpush1.bf16.msra.mxu0 %v3774
        %3987 = vmatprep.subr.bf16.mxu0 0
        %3988 = vmatpush1.bf16.msra.mxu0 %v3775
        %3989 = vmatprep.subr.bf16.mxu0 0
        %3990 = vmatpush1.bf16.msra.mxu0 %v3776
        %3991 = vmatprep.subr.bf16.mxu0 0
        %3992 = vmatpush1.bf16.msra.mxu0 %v3777
        %3993 = vmatprep.subr.bf16.mxu0 0
        %3994 = vmatpush1.bf16.msra.mxu0 %v3778
        %3995 = vmatprep.mubr.bf16.mxu0 %v3326
        %3996 = vmatmul.mubr.bf16.gmra.mrb[0].mxu0 %v3325
        %v3997 = vpop.f32.mrb[0].mxu0
        %v3998 = vadd.f32 %v3958, %v3997
        %v3999 = vpop.f32.mrb[0].mxu0
        %v4000 = vpop.f32.mrb[0].mxu0
        %v4001 = vpop.f32.mrb[0].mxu0
        %4002 = vdwg.mxu0
        %v4003 = vmax.f32 %v3998, 0.0
        %v4004 = vand.u32 2147483647, %v3998
        %v4005 = vsub.f32 0.0, %v4004
        %v4006 = vmul.f32 %v4005, 1.442695
        %v4007 = vpow.pop %v4006
        %v4008 = vadd.f32 %v4007, 1.0
        %v4009 = vlog2.pop %v4008
        %v4010 = vmul.f32 %v4009, 0.6931472
        %v4011 = vadd.f32 %v4003, %v4010
        %4013 = vrot.lane.b32.xlu0 %v259, 114
        %v4014 = vpop.permute.xlu0 %4013
        %v4016 = vmul.f32 %v4011, %v4014
        %4018 = vrot.lane.b32.xlu0 %v3998, 2
        %v4019 = vpop.permute.xlu0 %4018
        %v4021 = vadd.f32 %v4016, %v4019
        %4023 = vset.pattern.permute.xlu0 2
        %4024 = vperm.xlu0 %4023, %v4021
        %v4025 = vpop.permute.xlu0 %4024
        %v4027 = vlaneseq
        %v4028 = vshrl.u32 %v4027, 7
        %v4029 = vsub.s32 2, %v4028
        %v4030 = vrot.slane %v245, %v4029
        %v4031 = vlaneseq
        %v4032 = vshrl.u32 %v4031, 7
        %v4033 = vsub.s32 2, %v4032
        %v4034 = vrot.slane %v246, %v4033
        %v4035 = vlaneseq
        %v4036 = vshrl.u32 %v4035, 7
        %v4037 = vsub.s32 2, %v4036
        %v4038 = vrot.slane %v247, %v4037
        %v4039 = vlaneseq
        %v4040 = vshrl.u32 %v4039, 7
        %v4041 = vsub.s32 2, %v4040
        %v4042 = vrot.slane %v248, %v4041
        %v4043 = vmul.f32 %v4025, %v4030
        %v4044 = vmul.f32 %v4025, %v4034
        %v4045 = vmul.f32 %v4025, %v4038
        %v4046 = vmul.f32 %v4025, %v4042
        %4047 = vset.pattern.permute.xlu0 3
        %4048 = vperm.xlu0 %4047, %v4021
        %v4049 = vpop.permute.xlu0 %4048
        %v4051 = vlaneseq
        %v4052 = vshrl.u32 %v4051, 7
        %v4053 = vsub.s32 2, %v4052
        %v4054 = vrot.slane %v249, %v4053
        %v4055 = vlaneseq
        %v4056 = vshrl.u32 %v4055, 7
        %v4057 = vsub.s32 2, %v4056
        %v4058 = vrot.slane %v250, %v4057
        %v4059 = vlaneseq
        %v4060 = vshrl.u32 %v4059, 7
        %v4061 = vsub.s32 2, %v4060
        %v4062 = vrot.slane %v251, %v4061
        %v4063 = vlaneseq
        %v4064 = vshrl.u32 %v4063, 7
        %v4065 = vsub.s32 2, %v4064
        %v4066 = vrot.slane %v252, %v4065
        %v4067 = vmul.f32 %v4049, %v4054
        %v4068 = vmul.f32 %v4049, %v4058
        %v4069 = vmul.f32 %v4049, %v4062
        %v4070 = vmul.f32 %v4049, %v4066
        %v4071 = vadd.f32 %v4043, %v4067
        %v4072 = vadd.f32 %v4044, %v4068
        %v4073 = vadd.f32 %v4045, %v4069
        %v4074 = vadd.f32 %v4046, %v4070
        %v4075 = vlaneseq
        %v4076 = vshrl.u32 %v4075, 7
        %v4077 = vsub.s32 4, %v4076
        %v4078 = vrot.slane %v245, %v4077
        %v4079 = vlaneseq
        %v4080 = vshrl.u32 %v4079, 7
        %v4081 = vsub.s32 4, %v4080
        %v4082 = vrot.slane %v246, %v4081
        %v4083 = vlaneseq
        %v4084 = vshrl.u32 %v4083, 7
        %v4085 = vsub.s32 4, %v4084
        %v4086 = vrot.slane %v247, %v4085
        %v4087 = vlaneseq
        %v4088 = vshrl.u32 %v4087, 7
        %v4089 = vsub.s32 4, %v4088
        %v4090 = vrot.slane %v248, %v4089
        %v4091 = vadd.f32 %v4071, %v4078
        %v4092 = vadd.f32 %v4072, %v4082
        %v4093 = vadd.f32 %v4073, %v4086
        %v4094 = vadd.f32 %v4074, %v4090
        %v4095 = vmax.f32 %v4091, 0.0
        %v4096 = vmax.f32 %v4092, 0.0
        %v4097 = vmax.f32 %v4093, 0.0
        %v4098 = vmax.f32 %v4094, 0.0
        %v4099 = vpack.c.bf16 %v4095, %v4095
        %v4100 = vpack.c.bf16 %v4096, %v4096
        %v4101 = vpack.c.bf16 %v4097, %v4097
        %v4102 = vpack.c.bf16 %v4098, %v4098
        %v4103 = vld [vmem:[%s3] sm:$0xff]
        %v4104 = vld [vmem:[%s3 + $0x8] sm:$0xff]
        %v4105 = vld [vmem:[%s3 + $0x10] sm:$0xff]
        %v4106 = vld [vmem:[%s3 + $0x18] sm:$0xf]
        %v4107 = vld [vmem:[%s3 + $0x1c] sm:$0xff]
        %v4108 = vld [vmem:[%s3 + $0x24] sm:$0xff]
        %v4109 = vld [vmem:[%s3 + $0x2c] sm:$0xff]
        %v4110 = vld [vmem:[%s3 + $0x34] sm:$0xf]
        %v4111 = vld [vmem:[%s3 + $0x38] sm:$0xff]
        %v4112 = vld [vmem:[%s3 + $0x40] sm:$0xff]
        %v4113 = vld [vmem:[%s3 + $0x48] sm:$0xff]
        %v4114 = vld [vmem:[%s3 + $0x50] sm:$0xf]
        %v4115 = vld [vmem:[%s3 + $0x54] sm:$0xff]
        %v4116 = vld [vmem:[%s3 + $0x5c] sm:$0xff]
        %v4117 = vld [vmem:[%s3 + $0x64] sm:$0xff]
        %v4118 = vld [vmem:[%s3 + $0x6c] sm:$0xf]
        %v4119 = vld [vmem:[%s3 + $0x70] sm:$0xff]
        %v4120 = vld [vmem:[%s3 + $0x78] sm:$0xff]
        %v4121 = vld [vmem:[%s3 + $0x80] sm:$0xff]
        %v4122 = vld [vmem:[%s3 + $0x88] sm:$0xf]
        %v4123 = vld [vmem:[%s3 + $0x8c] sm:$0xff]
        %v4124 = vld [vmem:[%s3 + $0x94] sm:$0xff]
        %v4125 = vld [vmem:[%s3 + $0x9c] sm:$0xff]
        %v4126 = vld [vmem:[%s3 + $0xa4] sm:$0xf]
        %v4127 = vld [vmem:[%s3 + $0xa8] sm:$0xff]
        %v4128 = vld [vmem:[%s3 + $0xb0] sm:$0xff]
        %v4129 = vld [vmem:[%s3 + $0xb8] sm:$0xff]
        %v4130 = vld [vmem:[%s3 + $0xc0] sm:$0xf]
        %v4131 = vld [vmem:[%s3 + $0xc4] sm:$0xff]
        %v4132 = vld [vmem:[%s3 + $0xcc] sm:$0xff]
        %v4133 = vld [vmem:[%s3 + $0xd4] sm:$0xff]
        %v4134 = vld [vmem:[%s3 + $0xdc] sm:$0xf]
        %v4135 = vld [vmem:[%s3 + $0xe0] sm:$0xff]
        %v4136 = vld [vmem:[%s3 + $0xe8] sm:$0xff]
        %v4137 = vld [vmem:[%s3 + $0xf0] sm:$0xff]
        %v4138 = vld [vmem:[%s3 + $0xf8] sm:$0xf]
        %v4139 = vld [vmem:[%s3 + $0xfc] sm:$0xff]
        %v4140 = vld [vmem:[%s3 + $0x104] sm:$0xff]
        %v4141 = vld [vmem:[%s3 + $0x10c] sm:$0xff]
        %v4142 = vld [vmem:[%s3 + $0x114] sm:$0xf]
        %v4143 = vld [vmem:[%s3 + $0x118] sm:$0xff]
        %v4144 = vld [vmem:[%s3 + $0x120] sm:$0xff]
        %v4145 = vld [vmem:[%s3 + $0x128] sm:$0xff]
        %v4146 = vld [vmem:[%s3 + $0x130] sm:$0xf]
        %v4147 = vld [vmem:[%s3 + $0x134] sm:$0xff]
        %v4148 = vld [vmem:[%s3 + $0x13c] sm:$0xff]
        %v4149 = vld [vmem:[%s3 + $0x144] sm:$0xff]
        %v4150 = vld [vmem:[%s3 + $0x14c] sm:$0xf]
        %v4151 = vld [vmem:[%s3 + $0x150] sm:$0xff]
        %v4152 = vld [vmem:[%s3 + $0x158] sm:$0xff]
        %v4153 = vld [vmem:[%s3 + $0x160] sm:$0xff]
        %v4154 = vld [vmem:[%s3 + $0x168] sm:$0xf]
        %v4155 = vld [vmem:[%s3 + $0x16c] sm:$0xff]
        %v4156 = vld [vmem:[%s3 + $0x174] sm:$0xff]
        %v4157 = vld [vmem:[%s3 + $0x17c] sm:$0xff]
        %v4158 = vld [vmem:[%s3 + $0x184] sm:$0xf]
        %v4159 = vld [vmem:[%s3 + $0x188] sm:$0xff]
        %v4160 = vld [vmem:[%s3 + $0x190] sm:$0xff]
        %v4161 = vld [vmem:[%s3 + $0x198] sm:$0xff]
        %v4162 = vld [vmem:[%s3 + $0x1a0] sm:$0xf]
        %v4163 = vld [vmem:[%s3 + $0x1a4] sm:$0xff]
        %v4164 = vld [vmem:[%s3 + $0x1ac] sm:$0xff]
        %v4165 = vld [vmem:[%s3 + $0x1b4] sm:$0xff]
        %v4166 = vld [vmem:[%s3 + $0x1bc] sm:$0xf]
        %v4167 = vld [vmem:[%s3 + $0x1c0] sm:$0xff]
        %v4168 = vld [vmem:[%s3 + $0x1c8] sm:$0xff]
        %v4169 = vld [vmem:[%s3 + $0x1d0] sm:$0xff]
        %v4170 = vld [vmem:[%s3 + $0x1d8] sm:$0xf]
        %v4171 = vld [vmem:[%s3 + $0x1dc] sm:$0xff]
        %v4172 = vld [vmem:[%s3 + $0x1e4] sm:$0xff]
        %v4173 = vld [vmem:[%s3 + $0x1ec] sm:$0xff]
        %v4174 = vld [vmem:[%s3 + $0x1f4] sm:$0xf]
        %v4175 = vld [vmem:[%s3 + $0x1f8] sm:$0xff]
        %v4176 = vld [vmem:[%s3 + $0x200] sm:$0xff]
        %v4177 = vld [vmem:[%s3 + $0x208] sm:$0xff]
        %v4178 = vld [vmem:[%s3 + $0x210] sm:$0xf]
        %v4179 = vld [vmem:[%s3 + $0x214] sm:$0xff]
        %v4180 = vld [vmem:[%s3 + $0x21c] sm:$0xff]
        %v4181 = vld [vmem:[%s3 + $0x224] sm:$0xff]
        %v4182 = vld [vmem:[%s3 + $0x22c] sm:$0xf]
        %v4183 = vld [vmem:[%s3 + $0x230] sm:$0xff]
        %v4184 = vld [vmem:[%s3 + $0x238] sm:$0xff]
        %v4185 = vld [vmem:[%s3 + $0x240] sm:$0xff]
        %v4186 = vld [vmem:[%s3 + $0x248] sm:$0xf]
        %v4187 = vld [vmem:[%s3 + $0x24c] sm:$0xff]
        %v4188 = vld [vmem:[%s3 + $0x254] sm:$0xff]
        %v4189 = vld [vmem:[%s3 + $0x25c] sm:$0xff]
        %v4190 = vld [vmem:[%s3 + $0x264] sm:$0xf]
        %v4191 = vld [vmem:[%s3 + $0x268] sm:$0xff]
        %v4192 = vld [vmem:[%s3 + $0x270] sm:$0xff]
        %v4193 = vld [vmem:[%s3 + $0x278] sm:$0xff]
        %v4194 = vld [vmem:[%s3 + $0x280] sm:$0xf]
        %v4195 = vld [vmem:[%s3 + $0x284] sm:$0xff]
        %v4196 = vld [vmem:[%s3 + $0x28c] sm:$0xff]
        %v4197 = vld [vmem:[%s3 + $0x294] sm:$0xff]
        %v4198 = vld [vmem:[%s3 + $0x29c] sm:$0xf]
        %v4199 = vld [vmem:[%s3 + $0x2a0] sm:$0xff]
        %v4200 = vld [vmem:[%s3 + $0x2a8] sm:$0xff]
        %v4201 = vld [vmem:[%s3 + $0x2b0] sm:$0xff]
        %v4202 = vld [vmem:[%s3 + $0x2b8] sm:$0xf]
        %v4203 = vld [vmem:[%s3 + $0x2bc] sm:$0xff]
        %v4204 = vld [vmem:[%s3 + $0x2c4] sm:$0xff]
        %v4205 = vld [vmem:[%s3 + $0x2cc] sm:$0xff]
        %v4206 = vld [vmem:[%s3 + $0x2d4] sm:$0xf]
        %v4207 = vld [vmem:[%s3 + $0x2d8] sm:$0xff]
        %v4208 = vld [vmem:[%s3 + $0x2e0] sm:$0xff]
        %v4209 = vld [vmem:[%s3 + $0x2e8] sm:$0xff]
        %v4210 = vld [vmem:[%s3 + $0x2f0] sm:$0xf]
        %v4211 = vld [vmem:[%s3 + $0x2f4] sm:$0xff]
        %v4212 = vld [vmem:[%s3 + $0x2fc] sm:$0xff]
        %v4213 = vld [vmem:[%s3 + $0x304] sm:$0xff]
        %v4214 = vld [vmem:[%s3 + $0x30c] sm:$0xf]
        %v4215 = vld [vmem:[%s3 + $0x310] sm:$0xff]
        %v4216 = vld [vmem:[%s3 + $0x318] sm:$0xff]
        %v4217 = vld [vmem:[%s3 + $0x320] sm:$0xff]
        %v4218 = vld [vmem:[%s3 + $0x328] sm:$0xf]
        %v4219 = vld [vmem:[%s3 + $0x32c] sm:$0xff]
        %v4220 = vld [vmem:[%s3 + $0x334] sm:$0xff]
        %v4221 = vld [vmem:[%s3 + $0x33c] sm:$0xff]
        %v4222 = vld [vmem:[%s3 + $0x344] sm:$0xf]
        %v4223 = vld [vmem:[%s3 + $0x348] sm:$0xff]
        %v4224 = vld [vmem:[%s3 + $0x350] sm:$0xff]
        %v4225 = vld [vmem:[%s3 + $0x358] sm:$0xff]
        %v4226 = vld [vmem:[%s3 + $0x360] sm:$0xf]
        %v4227 = vld [vmem:[%s3 + $0x364] sm:$0xff]
        %v4228 = vld [vmem:[%s3 + $0x36c] sm:$0xff]
        %v4229 = vld [vmem:[%s3 + $0x374] sm:$0xff]
        %v4230 = vld [vmem:[%s3 + $0x37c] sm:$0xf]
        %v4231 = vld [vmem:[%s3 + $0x380] sm:$0xff]
        %v4232 = vld [vmem:[%s3 + $0x388] sm:$0xff]
        %v4233 = vld [vmem:[%s3 + $0x390] sm:$0xff]
        %v4234 = vld [vmem:[%s3 + $0x398] sm:$0xf]
        %v4235 = vld [vmem:[%s3 + $0x39c] sm:$0xff]
        %v4236 = vld [vmem:[%s3 + $0x3a4] sm:$0xff]
        %v4237 = vld [vmem:[%s3 + $0x3ac] sm:$0xff]
        %v4238 = vld [vmem:[%s3 + $0x3b4] sm:$0xf]
        %v4239 = vld [vmem:[%s3 + $0x3b8] sm:$0xff]
        %v4240 = vld [vmem:[%s3 + $0x3c0] sm:$0xff]
        %v4241 = vld [vmem:[%s3 + $0x3c8] sm:$0xff]
        %v4242 = vld [vmem:[%s3 + $0x3d0] sm:$0xf]
        %v4243 = vld [vmem:[%s3 + $0x3d4] sm:$0xff]
        %v4244 = vld [vmem:[%s3 + $0x3dc] sm:$0xff]
        %v4245 = vld [vmem:[%s3 + $0x3e4] sm:$0xff]
        %v4246 = vld [vmem:[%s3 + $0x3ec] sm:$0xf]
        %v4247 = vld [vmem:[%s3 + $0x3f0] sm:$0xff]
        %v4248 = vld [vmem:[%s3 + $0x3f8] sm:$0xff]
        %v4249 = vld [vmem:[%s3 + $0x400] sm:$0xff]
        %v4250 = vld [vmem:[%s3 + $0x408] sm:$0xf]
        %v4251 = vld [vmem:[%s3 + $0x40c] sm:$0xff]
        %v4252 = vld [vmem:[%s3 + $0x414] sm:$0xff]
        %v4253 = vld [vmem:[%s3 + $0x41c] sm:$0xff]
        %v4254 = vld [vmem:[%s3 + $0x424] sm:$0xf]
        %v4255 = vld [vmem:[%s3 + $0x428] sm:$0xff]
        %v4256 = vld [vmem:[%s3 + $0x430] sm:$0xff]
        %v4257 = vld [vmem:[%s3 + $0x438] sm:$0xff]
        %v4258 = vld [vmem:[%s3 + $0x440] sm:$0xf]
        %v4259 = vld [vmem:[%s3 + $0x444] sm:$0xff]
        %v4260 = vld [vmem:[%s3 + $0x44c] sm:$0xff]
        %v4261 = vld [vmem:[%s3 + $0x454] sm:$0xff]
        %v4262 = vld [vmem:[%s3 + $0x45c] sm:$0xf]
        %v4263 = vld [vmem:[%s3 + $0x460] sm:$0xff]
        %v4264 = vld [vmem:[%s3 + $0x468] sm:$0xff]
        %v4265 = vld [vmem:[%s3 + $0x470] sm:$0xff]
        %v4266 = vld [vmem:[%s3 + $0x478] sm:$0xf]
        %v4267 = vld [vmem:[%s3 + $0x47c] sm:$0xff]
        %v4268 = vld [vmem:[%s3 + $0x484] sm:$0xff]
        %v4269 = vld [vmem:[%s3 + $0x48c] sm:$0xff]
        %v4270 = vld [vmem:[%s3 + $0x494] sm:$0xf]
        %v4271 = vld [vmem:[%s3 + $0x498] sm:$0xff]
        %v4272 = vld [vmem:[%s3 + $0x4a0] sm:$0xff]
        %v4273 = vld [vmem:[%s3 + $0x4a8] sm:$0xff]
        %v4274 = vld [vmem:[%s3 + $0x4b0] sm:$0xf]
        %v4275 = vld [vmem:[%s3 + $0x4b4] sm:$0xff]
        %v4276 = vld [vmem:[%s3 + $0x4bc] sm:$0xff]
        %v4277 = vld [vmem:[%s3 + $0x4c4] sm:$0xff]
        %v4278 = vld [vmem:[%s3 + $0x4cc] sm:$0xf]
        %v4279 = vld [vmem:[%s3 + $0x4d0] sm:$0xff]
        %v4280 = vld [vmem:[%s3 + $0x4d8] sm:$0xff]
        %v4281 = vld [vmem:[%s3 + $0x4e0] sm:$0xff]
        %v4282 = vld [vmem:[%s3 + $0x4e8] sm:$0xf]
        %v4283 = vld [vmem:[%s3 + $0x4ec] sm:$0xff]
        %v4284 = vld [vmem:[%s3 + $0x4f4] sm:$0xff]
        %v4285 = vld [vmem:[%s3 + $0x4fc] sm:$0xff]
        %v4286 = vld [vmem:[%s3 + $0x504] sm:$0xf]
        %v4287 = vld [vmem:[%s3 + $0x508] sm:$0xff]
        %v4288 = vld [vmem:[%s3 + $0x510] sm:$0xff]
        %v4289 = vld [vmem:[%s3 + $0x518] sm:$0xff]
        %v4290 = vld [vmem:[%s3 + $0x520] sm:$0xf]
        %v4291 = vld [vmem:[%s3 + $0x524] sm:$0xff]
        %v4292 = vld [vmem:[%s3 + $0x52c] sm:$0xff]
        %v4293 = vld [vmem:[%s3 + $0x534] sm:$0xff]
        %v4294 = vld [vmem:[%s3 + $0x53c] sm:$0xf]
        %v4295 = vld [vmem:[%s3 + $0x540] sm:$0xff]
        %v4296 = vld [vmem:[%s3 + $0x548] sm:$0xff]
        %v4297 = vld [vmem:[%s3 + $0x550] sm:$0xff]
        %v4298 = vld [vmem:[%s3 + $0x558] sm:$0xf]
        %v4299 = vld [vmem:[%s3 + $0x55c] sm:$0xff]
        %v4300 = vld [vmem:[%s3 + $0x564] sm:$0xff]
        %v4301 = vld [vmem:[%s3 + $0x56c] sm:$0xff]
        %v4302 = vld [vmem:[%s3 + $0x574] sm:$0xf]
        %v4303 = vld [vmem:[%s3 + $0x578] sm:$0xff]
        %v4304 = vld [vmem:[%s3 + $0x580] sm:$0xff]
        %v4305 = vld [vmem:[%s3 + $0x588] sm:$0xff]
        %v4306 = vld [vmem:[%s3 + $0x590] sm:$0xf]
        %v4307 = vld [vmem:[%s3 + $0x594] sm:$0xff]
        %v4308 = vld [vmem:[%s3 + $0x59c] sm:$0xff]
        %v4309 = vld [vmem:[%s3 + $0x5a4] sm:$0xff]
        %v4310 = vld [vmem:[%s3 + $0x5ac] sm:$0xf]
        %v4311 = vld [vmem:[%s3 + $0x5b0] sm:$0xff]
        %v4312 = vld [vmem:[%s3 + $0x5b8] sm:$0xff]
        %v4313 = vld [vmem:[%s3 + $0x5c0] sm:$0xff]
        %v4314 = vld [vmem:[%s3 + $0x5c8] sm:$0xf]
        %v4315 = vld [vmem:[%s3 + $0x5cc] sm:$0xff]
        %v4316 = vld [vmem:[%s3 + $0x5d4] sm:$0xff]
        %v4317 = vld [vmem:[%s3 + $0x5dc] sm:$0xff]
        %v4318 = vld [vmem:[%s3 + $0x5e4] sm:$0xf]
        %v4319 = vld [vmem:[%s3 + $0x5e8] sm:$0xff]
        %v4320 = vld [vmem:[%s3 + $0x5f0] sm:$0xff]
        %v4321 = vld [vmem:[%s3 + $0x5f8] sm:$0xff]
        %v4322 = vld [vmem:[%s3 + $0x600] sm:$0xf]
        %v4323 = vld [vmem:[%s3 + $0x604] sm:$0xff]
        %v4324 = vld [vmem:[%s3 + $0x60c] sm:$0xff]
        %v4325 = vld [vmem:[%s3 + $0x614] sm:$0xff]
        %v4326 = vld [vmem:[%s3 + $0x61c] sm:$0xf]
        %v4327 = vld [vmem:[%s3 + $0x620] sm:$0xff]
        %v4328 = vld [vmem:[%s3 + $0x628] sm:$0xff]
        %v4329 = vld [vmem:[%s3 + $0x630] sm:$0xff]
        %v4330 = vld [vmem:[%s3 + $0x638] sm:$0xf]
        %v4331 = vld [vmem:[%s3 + $0x63c] sm:$0xff]
        %v4332 = vld [vmem:[%s3 + $0x644] sm:$0xff]
        %v4333 = vld [vmem:[%s3 + $0x64c] sm:$0xff]
        %v4334 = vld [vmem:[%s3 + $0x654] sm:$0xf]
        %v4335 = vld [vmem:[%s3 + $0x658] sm:$0xff]
        %v4336 = vld [vmem:[%s3 + $0x660] sm:$0xff]
        %v4337 = vld [vmem:[%s3 + $0x668] sm:$0xff]
        %v4338 = vld [vmem:[%s3 + $0x670] sm:$0xf]
        %v4339 = vld [vmem:[%s3 + $0x674] sm:$0xff]
        %v4340 = vld [vmem:[%s3 + $0x67c] sm:$0xff]
        %v4341 = vld [vmem:[%s3 + $0x684] sm:$0xff]
        %v4342 = vld [vmem:[%s3 + $0x68c] sm:$0xf]
        %v4343 = vld [vmem:[%s3 + $0x690] sm:$0xff]
        %v4344 = vld [vmem:[%s3 + $0x698] sm:$0xff]
        %v4345 = vld [vmem:[%s3 + $0x6a0] sm:$0xff]
        %v4346 = vld [vmem:[%s3 + $0x6a8] sm:$0xf]
        %v4347 = vld [vmem:[%s3 + $0x6ac] sm:$0xff]
        %v4348 = vld [vmem:[%s3 + $0x6b4] sm:$0xff]
        %v4349 = vld [vmem:[%s3 + $0x6bc] sm:$0xff]
        %v4350 = vld [vmem:[%s3 + $0x6c4] sm:$0xf]
        %v4351 = vld [vmem:[%s3 + $0x6c8] sm:$0xff]
        %v4352 = vld [vmem:[%s3 + $0x6d0] sm:$0xff]
        %v4353 = vld [vmem:[%s3 + $0x6d8] sm:$0xff]
        %v4354 = vld [vmem:[%s3 + $0x6e0] sm:$0xf]
        %v4355 = vld [vmem:[%s3 + $0x6e4] sm:$0xff]
        %v4356 = vld [vmem:[%s3 + $0x6ec] sm:$0xff]
        %v4357 = vld [vmem:[%s3 + $0x6f4] sm:$0xff]
        %v4358 = vld [vmem:[%s3 + $0x6fc] sm:$0xf]
        %v4359 = vlaneseq
        %v4360 = vshrl.u32 %v4359, 7
        %v4361 = vsub.s32 5, %v4360
        %v4362 = vrot.slane %v245, %v4361
        %v4363 = vlaneseq
        %v4364 = vshrl.u32 %v4363, 7
        %v4365 = vsub.s32 5, %v4364
        %v4366 = vrot.slane %v246, %v4365
        %v4367 = vlaneseq
        %v4368 = vshrl.u32 %v4367, 7
        %v4369 = vsub.s32 5, %v4368
        %v4370 = vrot.slane %v247, %v4369
        %v4371 = vlaneseq
        %v4372 = vshrl.u32 %v4371, 7
        %v4373 = vsub.s32 5, %v4372
        %v4374 = vrot.slane %v248, %v4373
        %v4375 = vlaneseq
        %v4376 = vshrl.u32 %v4375, 7
        %v4377 = vsub.s32 5, %v4376
        %v4378 = vrot.slane %v249, %v4377
        %v4379 = vlaneseq
        %v4380 = vshrl.u32 %v4379, 7
        %v4381 = vsub.s32 5, %v4380
        %v4382 = vrot.slane %v250, %v4381
        %v4383 = vlaneseq
        %v4384 = vshrl.u32 %v4383, 7
        %v4385 = vsub.s32 5, %v4384
        %v4386 = vrot.slane %v251, %v4385
        %v4643 = vunpack.c.l.b16 %v4103
        %v4644 = vunpack.c.h.b16 %v4103
        %v4645 = vunpack.c.l.b16 %v4104
        %v4646 = vunpack.c.h.b16 %v4104
        %v4647 = vunpack.c.l.b16 %v4105
        %v4648 = vunpack.c.h.b16 %v4105
        %v4649 = vunpack.c.l.b16 %v4106
        %v4650 = vunpack.c.l.b16 %v4107
        %v4651 = vunpack.c.h.b16 %v4107
        %v4652 = vunpack.c.l.b16 %v4108
        %v4653 = vunpack.c.h.b16 %v4108
        %v4654 = vunpack.c.l.b16 %v4109
        %v4655 = vunpack.c.h.b16 %v4109
        %v4656 = vunpack.c.l.b16 %v4110
        %v4657 = vunpack.c.l.b16 %v4111
        %v4658 = vunpack.c.h.b16 %v4111
        %v4659 = vunpack.c.l.b16 %v4112
        %v4660 = vunpack.c.h.b16 %v4112
        %v4661 = vunpack.c.l.b16 %v4113
        %v4662 = vunpack.c.h.b16 %v4113
        %v4663 = vunpack.c.l.b16 %v4114
        %v4664 = vunpack.c.l.b16 %v4115
        %v4665 = vunpack.c.h.b16 %v4115
        %v4666 = vunpack.c.l.b16 %v4116
        %v4667 = vunpack.c.h.b16 %v4116
        %v4668 = vunpack.c.l.b16 %v4117
        %v4669 = vunpack.c.h.b16 %v4117
        %v4670 = vunpack.c.l.b16 %v4118
        %v4671 = vunpack.c.l.b16 %v4119
        %v4672 = vunpack.c.h.b16 %v4119
        %v4673 = vunpack.c.l.b16 %v4120
        %v4674 = vunpack.c.h.b16 %v4120
        %v4675 = vunpack.c.l.b16 %v4121
        %v4676 = vunpack.c.h.b16 %v4121
        %v4677 = vunpack.c.l.b16 %v4122
        %v4678 = vunpack.c.l.b16 %v4123
        %v4679 = vunpack.c.h.b16 %v4123
        %v4680 = vunpack.c.l.b16 %v4124
        %v4681 = vunpack.c.h.b16 %v4124
        %v4682 = vunpack.c.l.b16 %v4125
        %v4683 = vunpack.c.h.b16 %v4125
        %v4684 = vunpack.c.l.b16 %v4126
        %v4685 = vunpack.c.l.b16 %v4127
        %v4686 = vunpack.c.h.b16 %v4127
        %v4687 = vunpack.c.l.b16 %v4128
        %v4688 = vunpack.c.h.b16 %v4128
        %v4689 = vunpack.c.l.b16 %v4129
        %v4690 = vunpack.c.h.b16 %v4129
        %v4691 = vunpack.c.l.b16 %v4130
        %v4692 = vunpack.c.l.b16 %v4131
        %v4693 = vunpack.c.h.b16 %v4131
        %v4694 = vunpack.c.l.b16 %v4132
        %v4695 = vunpack.c.h.b16 %v4132
        %v4696 = vunpack.c.l.b16 %v4133
        %v4697 = vunpack.c.h.b16 %v4133
        %v4698 = vunpack.c.l.b16 %v4134
        %v4699 = vunpack.c.l.b16 %v4135
        %v4700 = vunpack.c.h.b16 %v4135
        %v4701 = vunpack.c.l.b16 %v4136
        %v4702 = vunpack.c.h.b16 %v4136
        %v4703 = vunpack.c.l.b16 %v4137
        %v4704 = vunpack.c.h.b16 %v4137
        %v4705 = vunpack.c.l.b16 %v4138
        %v4706 = vunpack.c.l.b16 %v4139
        %v4707 = vunpack.c.h.b16 %v4139
        %v4708 = vunpack.c.l.b16 %v4140
        %v4709 = vunpack.c.h.b16 %v4140
        %v4710 = vunpack.c.l.b16 %v4141
        %v4711 = vunpack.c.h.b16 %v4141
        %v4712 = vunpack.c.l.b16 %v4142
        %v4713 = vunpack.c.l.b16 %v4143
        %v4714 = vunpack.c.h.b16 %v4143
        %v4715 = vunpack.c.l.b16 %v4144
        %v4716 = vunpack.c.h.b16 %v4144
        %v4717 = vunpack.c.l.b16 %v4145
        %v4718 = vunpack.c.h.b16 %v4145
        %v4719 = vunpack.c.l.b16 %v4146
        %v4720 = vunpack.c.l.b16 %v4147
        %v4721 = vunpack.c.h.b16 %v4147
        %v4722 = vunpack.c.l.b16 %v4148
        %v4723 = vunpack.c.h.b16 %v4148
        %v4724 = vunpack.c.l.b16 %v4149
        %v4725 = vunpack.c.h.b16 %v4149
        %v4726 = vunpack.c.l.b16 %v4150
        %v4727 = vunpack.c.l.b16 %v4151
        %v4728 = vunpack.c.h.b16 %v4151
        %v4729 = vunpack.c.l.b16 %v4152
        %v4730 = vunpack.c.h.b16 %v4152
        %v4731 = vunpack.c.l.b16 %v4153
        %v4732 = vunpack.c.h.b16 %v4153
        %v4733 = vunpack.c.l.b16 %v4154
        %v4734 = vunpack.c.l.b16 %v4155
        %v4735 = vunpack.c.h.b16 %v4155
        %v4736 = vunpack.c.l.b16 %v4156
        %v4737 = vunpack.c.h.b16 %v4156
        %v4738 = vunpack.c.l.b16 %v4157
        %v4739 = vunpack.c.h.b16 %v4157
        %v4740 = vunpack.c.l.b16 %v4158
        %v4741 = vunpack.c.l.b16 %v4159
        %v4742 = vunpack.c.h.b16 %v4159
        %v4743 = vunpack.c.l.b16 %v4160
        %v4744 = vunpack.c.h.b16 %v4160
        %v4745 = vunpack.c.l.b16 %v4161
        %v4746 = vunpack.c.h.b16 %v4161
        %v4747 = vunpack.c.l.b16 %v4162
        %v4748 = vunpack.c.l.b16 %v4163
        %v4749 = vunpack.c.h.b16 %v4163
        %v4750 = vunpack.c.l.b16 %v4164
        %v4751 = vunpack.c.h.b16 %v4164
        %v4752 = vunpack.c.l.b16 %v4165
        %v4753 = vunpack.c.h.b16 %v4165
        %v4754 = vunpack.c.l.b16 %v4166
        %v4755 = vunpack.c.l.b16 %v4167
        %v4756 = vunpack.c.h.b16 %v4167
        %v4757 = vunpack.c.l.b16 %v4168
        %v4758 = vunpack.c.h.b16 %v4168
        %v4759 = vunpack.c.l.b16 %v4169
        %v4760 = vunpack.c.h.b16 %v4169
        %v4761 = vunpack.c.l.b16 %v4170
        %v4762 = vunpack.c.l.b16 %v4171
        %v4763 = vunpack.c.h.b16 %v4171
        %v4764 = vunpack.c.l.b16 %v4172
        %v4765 = vunpack.c.h.b16 %v4172
        %v4766 = vunpack.c.l.b16 %v4173
        %v4767 = vunpack.c.h.b16 %v4173
        %v4768 = vunpack.c.l.b16 %v4174
        %v4769 = vunpack.c.l.b16 %v4175
        %v4770 = vunpack.c.h.b16 %v4175
        %v4771 = vunpack.c.l.b16 %v4176
        %v4772 = vunpack.c.h.b16 %v4176
        %v4773 = vunpack.c.l.b16 %v4177
        %v4774 = vunpack.c.h.b16 %v4177
        %v4775 = vunpack.c.l.b16 %v4178
        %v4776 = vunpack.c.l.b16 %v4179
        %v4777 = vunpack.c.h.b16 %v4179
        %v4778 = vunpack.c.l.b16 %v4180
        %v4779 = vunpack.c.h.b16 %v4180
        %v4780 = vunpack.c.l.b16 %v4181
        %v4781 = vunpack.c.h.b16 %v4181
        %v4782 = vunpack.c.l.b16 %v4182
        %v4783 = vunpack.c.l.b16 %v4183
        %v4784 = vunpack.c.h.b16 %v4183
        %v4785 = vunpack.c.l.b16 %v4184
        %v4786 = vunpack.c.h.b16 %v4184
        %v4787 = vunpack.c.l.b16 %v4185
        %v4788 = vunpack.c.h.b16 %v4185
        %v4789 = vunpack.c.l.b16 %v4186
        %v4790 = vunpack.c.l.b16 %v4187
        %v4791 = vunpack.c.h.b16 %v4187
        %v4792 = vunpack.c.l.b16 %v4188
        %v4793 = vunpack.c.h.b16 %v4188
        %v4794 = vunpack.c.l.b16 %v4189
        %v4795 = vunpack.c.h.b16 %v4189
        %v4796 = vunpack.c.l.b16 %v4190
        %v4797 = vunpack.c.l.b16 %v4191
        %v4798 = vunpack.c.h.b16 %v4191
        %v4799 = vunpack.c.l.b16 %v4192
        %v4800 = vunpack.c.h.b16 %v4192
        %v4801 = vunpack.c.l.b16 %v4193
        %v4802 = vunpack.c.h.b16 %v4193
        %v4803 = vunpack.c.l.b16 %v4194
        %v4804 = vunpack.c.l.b16 %v4195
        %v4805 = vunpack.c.h.b16 %v4195
        %v4806 = vunpack.c.l.b16 %v4196
        %v4807 = vunpack.c.h.b16 %v4196
        %v4808 = vunpack.c.l.b16 %v4197
        %v4809 = vunpack.c.h.b16 %v4197
        %v4810 = vunpack.c.l.b16 %v4198
        %v4811 = vunpack.c.l.b16 %v4199
        %v4812 = vunpack.c.h.b16 %v4199
        %v4813 = vunpack.c.l.b16 %v4200
        %v4814 = vunpack.c.h.b16 %v4200
        %v4815 = vunpack.c.l.b16 %v4201
        %v4816 = vunpack.c.h.b16 %v4201
        %v4817 = vunpack.c.l.b16 %v4202
        %v4818 = vunpack.c.l.b16 %v4203
        %v4819 = vunpack.c.h.b16 %v4203
        %v4820 = vunpack.c.l.b16 %v4204
        %v4821 = vunpack.c.h.b16 %v4204
        %v4822 = vunpack.c.l.b16 %v4205
        %v4823 = vunpack.c.h.b16 %v4205
        %v4824 = vunpack.c.l.b16 %v4206
        %v4825 = vunpack.c.l.b16 %v4207
        %v4826 = vunpack.c.h.b16 %v4207
        %v4827 = vunpack.c.l.b16 %v4208
        %v4828 = vunpack.c.h.b16 %v4208
        %v4829 = vunpack.c.l.b16 %v4209
        %v4830 = vunpack.c.h.b16 %v4209
        %v4831 = vunpack.c.l.b16 %v4210
        %v4832 = vunpack.c.l.b16 %v4211
        %v4833 = vunpack.c.h.b16 %v4211
        %v4834 = vunpack.c.l.b16 %v4212
        %v4835 = vunpack.c.h.b16 %v4212
        %v4836 = vunpack.c.l.b16 %v4213
        %v4837 = vunpack.c.h.b16 %v4213
        %v4838 = vunpack.c.l.b16 %v4214
        %v4839 = vunpack.c.l.b16 %v4215
        %v4840 = vunpack.c.h.b16 %v4215
        %v4841 = vunpack.c.l.b16 %v4216
        %v4842 = vunpack.c.h.b16 %v4216
        %v4843 = vunpack.c.l.b16 %v4217
        %v4844 = vunpack.c.h.b16 %v4217
        %v4845 = vunpack.c.l.b16 %v4218
        %v4846 = vunpack.c.l.b16 %v4219
        %v4847 = vunpack.c.h.b16 %v4219
        %v4848 = vunpack.c.l.b16 %v4220
        %v4849 = vunpack.c.h.b16 %v4220
        %v4850 = vunpack.c.l.b16 %v4221
        %v4851 = vunpack.c.h.b16 %v4221
        %v4852 = vunpack.c.l.b16 %v4222
        %v4853 = vunpack.c.l.b16 %v4223
        %v4854 = vunpack.c.h.b16 %v4223
        %v4855 = vunpack.c.l.b16 %v4224
        %v4856 = vunpack.c.h.b16 %v4224
        %v4857 = vunpack.c.l.b16 %v4225
        %v4858 = vunpack.c.h.b16 %v4225
        %v4859 = vunpack.c.l.b16 %v4226
        %v4860 = vunpack.c.l.b16 %v4227
        %v4861 = vunpack.c.h.b16 %v4227
        %v4862 = vunpack.c.l.b16 %v4228
        %v4863 = vunpack.c.h.b16 %v4228
        %v4864 = vunpack.c.l.b16 %v4229
        %v4865 = vunpack.c.h.b16 %v4229
        %v4866 = vunpack.c.l.b16 %v4230
        %v4867 = vunpack.c.l.b16 %v4231
        %v4868 = vunpack.c.h.b16 %v4231
        %v4869 = vunpack.c.l.b16 %v4232
        %v4870 = vunpack.c.h.b16 %v4232
        %v4871 = vunpack.c.l.b16 %v4233
        %v4872 = vunpack.c.h.b16 %v4233
        %v4873 = vunpack.c.l.b16 %v4234
        %v4874 = vunpack.c.l.b16 %v4235
        %v4875 = vunpack.c.h.b16 %v4235
        %v4876 = vunpack.c.l.b16 %v4236
        %v4877 = vunpack.c.h.b16 %v4236
        %v4878 = vunpack.c.l.b16 %v4237
        %v4879 = vunpack.c.h.b16 %v4237
        %v4880 = vunpack.c.l.b16 %v4238
        %v4881 = vunpack.c.l.b16 %v4239
        %v4882 = vunpack.c.h.b16 %v4239
        %v4883 = vunpack.c.l.b16 %v4240
        %v4884 = vunpack.c.h.b16 %v4240
        %v4885 = vunpack.c.l.b16 %v4241
        %v4886 = vunpack.c.h.b16 %v4241
        %v4887 = vunpack.c.l.b16 %v4242
        %v4888 = vunpack.c.l.b16 %v4243
        %v4889 = vunpack.c.h.b16 %v4243
        %v4890 = vunpack.c.l.b16 %v4244
        %v4891 = vunpack.c.h.b16 %v4244
        %v4892 = vunpack.c.l.b16 %v4245
        %v4893 = vunpack.c.h.b16 %v4245
        %v4894 = vunpack.c.l.b16 %v4246
        %v4895 = vunpack.c.l.b16 %v4247
        %v4896 = vunpack.c.h.b16 %v4247
        %v4897 = vunpack.c.l.b16 %v4248
        %v4898 = vunpack.c.h.b16 %v4248
        %v4899 = vunpack.c.l.b16 %v4249
        %v4900 = vunpack.c.h.b16 %v4249
        %v4901 = vunpack.c.l.b16 %v4250
        %v4902 = vunpack.c.l.b16 %v4251
        %v4903 = vunpack.c.h.b16 %v4251
        %v4904 = vunpack.c.l.b16 %v4252
        %v4905 = vunpack.c.h.b16 %v4252
        %v4906 = vunpack.c.l.b16 %v4253
        %v4907 = vunpack.c.h.b16 %v4253
        %v4908 = vunpack.c.l.b16 %v4254
        %v4909 = vunpack.c.l.b16 %v4255
        %v4910 = vunpack.c.h.b16 %v4255
        %v4911 = vunpack.c.l.b16 %v4256
        %v4912 = vunpack.c.h.b16 %v4256
        %v4913 = vunpack.c.l.b16 %v4257
        %v4914 = vunpack.c.h.b16 %v4257
        %v4915 = vunpack.c.l.b16 %v4258
        %v4916 = vunpack.c.l.b16 %v4259
        %v4917 = vunpack.c.h.b16 %v4259
        %v4918 = vunpack.c.l.b16 %v4260
        %v4919 = vunpack.c.h.b16 %v4260
        %v4920 = vunpack.c.l.b16 %v4261
        %v4921 = vunpack.c.h.b16 %v4261
        %v4922 = vunpack.c.l.b16 %v4262
        %v4923 = vunpack.c.l.b16 %v4263
        %v4924 = vunpack.c.h.b16 %v4263
        %v4925 = vunpack.c.l.b16 %v4264
        %v4926 = vunpack.c.h.b16 %v4264
        %v4927 = vunpack.c.l.b16 %v4265
        %v4928 = vunpack.c.h.b16 %v4265
        %v4929 = vunpack.c.l.b16 %v4266
        %v4930 = vunpack.c.l.b16 %v4267
        %v4931 = vunpack.c.h.b16 %v4267
        %v4932 = vunpack.c.l.b16 %v4268
        %v4933 = vunpack.c.h.b16 %v4268
        %v4934 = vunpack.c.l.b16 %v4269
        %v4935 = vunpack.c.h.b16 %v4269
        %v4936 = vunpack.c.l.b16 %v4270
        %v4937 = vunpack.c.l.b16 %v4271
        %v4938 = vunpack.c.h.b16 %v4271
        %v4939 = vunpack.c.l.b16 %v4272
        %v4940 = vunpack.c.h.b16 %v4272
        %v4941 = vunpack.c.l.b16 %v4273
        %v4942 = vunpack.c.h.b16 %v4273
        %v4943 = vunpack.c.l.b16 %v4274
        %v4944 = vunpack.c.l.b16 %v4275
        %v4945 = vunpack.c.h.b16 %v4275
        %v4946 = vunpack.c.l.b16 %v4276
        %v4947 = vunpack.c.h.b16 %v4276
        %v4948 = vunpack.c.l.b16 %v4277
        %v4949 = vunpack.c.h.b16 %v4277
        %v4950 = vunpack.c.l.b16 %v4278
        %v4951 = vunpack.c.l.b16 %v4279
        %v4952 = vunpack.c.h.b16 %v4279
        %v4953 = vunpack.c.l.b16 %v4280
        %v4954 = vunpack.c.h.b16 %v4280
        %v4955 = vunpack.c.l.b16 %v4281
        %v4956 = vunpack.c.h.b16 %v4281
        %v4957 = vunpack.c.l.b16 %v4282
        %v4958 = vunpack.c.l.b16 %v4283
        %v4959 = vunpack.c.h.b16 %v4283
        %v4960 = vunpack.c.l.b16 %v4284
        %v4961 = vunpack.c.h.b16 %v4284
        %v4962 = vunpack.c.l.b16 %v4285
        %v4963 = vunpack.c.h.b16 %v4285
        %v4964 = vunpack.c.l.b16 %v4286
        %v4965 = vunpack.c.l.b16 %v4287
        %v4966 = vunpack.c.h.b16 %v4287
        %v4967 = vunpack.c.l.b16 %v4288
        %v4968 = vunpack.c.h.b16 %v4288
        %v4969 = vunpack.c.l.b16 %v4289
        %v4970 = vunpack.c.h.b16 %v4289
        %v4971 = vunpack.c.l.b16 %v4290
        %v4972 = vunpack.c.l.b16 %v4291
        %v4973 = vunpack.c.h.b16 %v4291
        %v4974 = vunpack.c.l.b16 %v4292
        %v4975 = vunpack.c.h.b16 %v4292
        %v4976 = vunpack.c.l.b16 %v4293
        %v4977 = vunpack.c.h.b16 %v4293
        %v4978 = vunpack.c.l.b16 %v4294
        %v4979 = vunpack.c.l.b16 %v4295
        %v4980 = vunpack.c.h.b16 %v4295
        %v4981 = vunpack.c.l.b16 %v4296
        %v4982 = vunpack.c.h.b16 %v4296
        %v4983 = vunpack.c.l.b16 %v4297
        %v4984 = vunpack.c.h.b16 %v4297
        %v4985 = vunpack.c.l.b16 %v4298
        %v4986 = vunpack.c.l.b16 %v4299
        %v4987 = vunpack.c.h.b16 %v4299
        %v4988 = vunpack.c.l.b16 %v4300
        %v4989 = vunpack.c.h.b16 %v4300
        %v4990 = vunpack.c.l.b16 %v4301
        %v4991 = vunpack.c.h.b16 %v4301
        %v4992 = vunpack.c.l.b16 %v4302
        %v4993 = vunpack.c.l.b16 %v4303
        %v4994 = vunpack.c.h.b16 %v4303
        %v4995 = vunpack.c.l.b16 %v4304
        %v4996 = vunpack.c.h.b16 %v4304
        %v4997 = vunpack.c.l.b16 %v4305
        %v4998 = vunpack.c.h.b16 %v4305
        %v4999 = vunpack.c.l.b16 %v4306
        %v5000 = vunpack.c.l.b16 %v4307
        %v5001 = vunpack.c.h.b16 %v4307
        %v5002 = vunpack.c.l.b16 %v4308
        %v5003 = vunpack.c.h.b16 %v4308
        %v5004 = vunpack.c.l.b16 %v4309
        %v5005 = vunpack.c.h.b16 %v4309
        %v5006 = vunpack.c.l.b16 %v4310
        %v5007 = vunpack.c.l.b16 %v4311
        %v5008 = vunpack.c.h.b16 %v4311
        %v5009 = vunpack.c.l.b16 %v4312
        %v5010 = vunpack.c.h.b16 %v4312
        %v5011 = vunpack.c.l.b16 %v4313
        %v5012 = vunpack.c.h.b16 %v4313
        %v5013 = vunpack.c.l.b16 %v4314
        %v5014 = vunpack.c.l.b16 %v4315
        %v5015 = vunpack.c.h.b16 %v4315
        %v5016 = vunpack.c.l.b16 %v4316
        %v5017 = vunpack.c.h.b16 %v4316
        %v5018 = vunpack.c.l.b16 %v4317
        %v5019 = vunpack.c.h.b16 %v4317
        %v5020 = vunpack.c.l.b16 %v4318
        %v5021 = vunpack.c.l.b16 %v4319
        %v5022 = vunpack.c.h.b16 %v4319
        %v5023 = vunpack.c.l.b16 %v4320
        %v5024 = vunpack.c.h.b16 %v4320
        %v5025 = vunpack.c.l.b16 %v4321
        %v5026 = vunpack.c.h.b16 %v4321
        %v5027 = vunpack.c.l.b16 %v4322
        %v5028 = vunpack.c.l.b16 %v4323
        %v5029 = vunpack.c.h.b16 %v4323
        %v5030 = vunpack.c.l.b16 %v4324
        %v5031 = vunpack.c.h.b16 %v4324
        %v5032 = vunpack.c.l.b16 %v4325
        %v5033 = vunpack.c.h.b16 %v4325
        %v5034 = vunpack.c.l.b16 %v4326
        %v5035 = vunpack.c.l.b16 %v4327
        %v5036 = vunpack.c.h.b16 %v4327
        %v5037 = vunpack.c.l.b16 %v4328
        %v5038 = vunpack.c.h.b16 %v4328
        %v5039 = vunpack.c.l.b16 %v4329
        %v5040 = vunpack.c.h.b16 %v4329
        %v5041 = vunpack.c.l.b16 %v4330
        %v5042 = vunpack.c.l.b16 %v4331
        %v5043 = vunpack.c.h.b16 %v4331
        %v5044 = vunpack.c.l.b16 %v4332
        %v5045 = vunpack.c.h.b16 %v4332
        %v5046 = vunpack.c.l.b16 %v4333
        %v5047 = vunpack.c.h.b16 %v4333
        %v5048 = vunpack.c.l.b16 %v4334
        %v5049 = vunpack.c.l.b16 %v4335
        %v5050 = vunpack.c.h.b16 %v4335
        %v5051 = vunpack.c.l.b16 %v4336
        %v5052 = vunpack.c.h.b16 %v4336
        %v5053 = vunpack.c.l.b16 %v4337
        %v5054 = vunpack.c.h.b16 %v4337
        %v5055 = vunpack.c.l.b16 %v4338
        %v5056 = vunpack.c.l.b16 %v4339
        %v5057 = vunpack.c.h.b16 %v4339
        %v5058 = vunpack.c.l.b16 %v4340
        %v5059 = vunpack.c.h.b16 %v4340
        %v5060 = vunpack.c.l.b16 %v4341
        %v5061 = vunpack.c.h.b16 %v4341
        %v5062 = vunpack.c.l.b16 %v4342
        %v5063 = vunpack.c.l.b16 %v4343
        %v5064 = vunpack.c.h.b16 %v4343
        %v5065 = vunpack.c.l.b16 %v4344
        %v5066 = vunpack.c.h.b16 %v4344
        %v5067 = vunpack.c.l.b16 %v4345
        %v5068 = vunpack.c.h.b16 %v4345
        %v5069 = vunpack.c.l.b16 %v4346
        %v5070 = vunpack.c.l.b16 %v4347
        %v5071 = vunpack.c.h.b16 %v4347
        %v5072 = vunpack.c.l.b16 %v4348
        %v5073 = vunpack.c.h.b16 %v4348
        %v5074 = vunpack.c.l.b16 %v4349
        %v5075 = vunpack.c.h.b16 %v4349
        %v5076 = vunpack.c.l.b16 %v4350
        %v5077 = vunpack.c.l.b16 %v4351
        %v5078 = vunpack.c.h.b16 %v4351
        %v5079 = vunpack.c.l.b16 %v4352
        %v5080 = vunpack.c.h.b16 %v4352
        %v5081 = vunpack.c.l.b16 %v4353
        %v5082 = vunpack.c.h.b16 %v4353
        %v5083 = vunpack.c.l.b16 %v4354
        %v5084 = vunpack.c.l.b16 %v4355
        %v5085 = vunpack.c.h.b16 %v4355
        %v5086 = vunpack.c.l.b16 %v4356
        %v5087 = vunpack.c.h.b16 %v4356
        %v5088 = vunpack.c.l.b16 %v4357
        %v5089 = vunpack.c.h.b16 %v4357
        %v5090 = vunpack.c.l.b16 %v4358
        %v5091 = vpack.c.b16 %v4650, %v4643
        %v5092 = vpack.c.b16 %v4651, %v4644
        %v5093 = vpack.c.b16 %v4652, %v4645
        %v5094 = vpack.c.b16 %v4653, %v4646
        %v5095 = vpack.c.b16 %v4654, %v4647
        %v5096 = vpack.c.b16 %v4655, %v4648
        %v5097 = vpack.c.b16 %v4656, %v4649
        %v5098 = vpack.c.b16 %v4664, %v4657
        %v5099 = vpack.c.b16 %v4665, %v4658
        %v5100 = vpack.c.b16 %v4666, %v4659
        %v5101 = vpack.c.b16 %v4667, %v4660
        %v5102 = vpack.c.b16 %v4668, %v4661
        %v5103 = vpack.c.b16 %v4669, %v4662
        %v5104 = vpack.c.b16 %v4670, %v4663
        %v5105 = vpack.c.b16 %v4678, %v4671
        %v5106 = vpack.c.b16 %v4679, %v4672
        %v5107 = vpack.c.b16 %v4680, %v4673
        %v5108 = vpack.c.b16 %v4681, %v4674
        %v5109 = vpack.c.b16 %v4682, %v4675
        %v5110 = vpack.c.b16 %v4683, %v4676
        %v5111 = vpack.c.b16 %v4684, %v4677
        %v5112 = vpack.c.b16 %v4692, %v4685
        %v5113 = vpack.c.b16 %v4693, %v4686
        %v5114 = vpack.c.b16 %v4694, %v4687
        %v5115 = vpack.c.b16 %v4695, %v4688
        %v5116 = vpack.c.b16 %v4696, %v4689
        %v5117 = vpack.c.b16 %v4697, %v4690
        %v5118 = vpack.c.b16 %v4698, %v4691
        %v5119 = vpack.c.b16 %v4706, %v4699
        %v5120 = vpack.c.b16 %v4707, %v4700
        %v5121 = vpack.c.b16 %v4708, %v4701
        %v5122 = vpack.c.b16 %v4709, %v4702
        %v5123 = vpack.c.b16 %v4710, %v4703
        %v5124 = vpack.c.b16 %v4711, %v4704
        %v5125 = vpack.c.b16 %v4712, %v4705
        %v5126 = vpack.c.b16 %v4720, %v4713
        %v5127 = vpack.c.b16 %v4721, %v4714
        %v5128 = vpack.c.b16 %v4722, %v4715
        %v5129 = vpack.c.b16 %v4723, %v4716
        %v5130 = vpack.c.b16 %v4724, %v4717
        %v5131 = vpack.c.b16 %v4725, %v4718
        %v5132 = vpack.c.b16 %v4726, %v4719
        %v5133 = vpack.c.b16 %v4734, %v4727
        %v5134 = vpack.c.b16 %v4735, %v4728
        %v5135 = vpack.c.b16 %v4736, %v4729
        %v5136 = vpack.c.b16 %v4737, %v4730
        %v5137 = vpack.c.b16 %v4738, %v4731
        %v5138 = vpack.c.b16 %v4739, %v4732
        %v5139 = vpack.c.b16 %v4740, %v4733
        %v5140 = vpack.c.b16 %v4748, %v4741
        %v5141 = vpack.c.b16 %v4749, %v4742
        %v5142 = vpack.c.b16 %v4750, %v4743
        %v5143 = vpack.c.b16 %v4751, %v4744
        %v5144 = vpack.c.b16 %v4752, %v4745
        %v5145 = vpack.c.b16 %v4753, %v4746
        %v5146 = vpack.c.b16 %v4754, %v4747
        %v5147 = vpack.c.b16 %v4762, %v4755
        %v5148 = vpack.c.b16 %v4763, %v4756
        %v5149 = vpack.c.b16 %v4764, %v4757
        %v5150 = vpack.c.b16 %v4765, %v4758
        %v5151 = vpack.c.b16 %v4766, %v4759
        %v5152 = vpack.c.b16 %v4767, %v4760
        %v5153 = vpack.c.b16 %v4768, %v4761
        %v5154 = vpack.c.b16 %v4776, %v4769
        %v5155 = vpack.c.b16 %v4777, %v4770
        %v5156 = vpack.c.b16 %v4778, %v4771
        %v5157 = vpack.c.b16 %v4779, %v4772
        %v5158 = vpack.c.b16 %v4780, %v4773
        %v5159 = vpack.c.b16 %v4781, %v4774
        %v5160 = vpack.c.b16 %v4782, %v4775
        %v5161 = vpack.c.b16 %v4790, %v4783
        %v5162 = vpack.c.b16 %v4791, %v4784
        %v5163 = vpack.c.b16 %v4792, %v4785
        %v5164 = vpack.c.b16 %v4793, %v4786
        %v5165 = vpack.c.b16 %v4794, %v4787
        %v5166 = vpack.c.b16 %v4795, %v4788
        %v5167 = vpack.c.b16 %v4796, %v4789
        %v5168 = vpack.c.b16 %v4804, %v4797
        %v5169 = vpack.c.b16 %v4805, %v4798
        %v5170 = vpack.c.b16 %v4806, %v4799
        %v5171 = vpack.c.b16 %v4807, %v4800
        %v5172 = vpack.c.b16 %v4808, %v4801
        %v5173 = vpack.c.b16 %v4809, %v4802
        %v5174 = vpack.c.b16 %v4810, %v4803
        %v5175 = vpack.c.b16 %v4818, %v4811
        %v5176 = vpack.c.b16 %v4819, %v4812
        %v5177 = vpack.c.b16 %v4820, %v4813
        %v5178 = vpack.c.b16 %v4821, %v4814
        %v5179 = vpack.c.b16 %v4822, %v4815
        %v5180 = vpack.c.b16 %v4823, %v4816
        %v5181 = vpack.c.b16 %v4824, %v4817
        %v5182 = vpack.c.b16 %v4832, %v4825
        %v5183 = vpack.c.b16 %v4833, %v4826
        %v5184 = vpack.c.b16 %v4834, %v4827
        %v5185 = vpack.c.b16 %v4835, %v4828
        %v5186 = vpack.c.b16 %v4836, %v4829
        %v5187 = vpack.c.b16 %v4837, %v4830
        %v5188 = vpack.c.b16 %v4838, %v4831
        %v5189 = vpack.c.b16 %v4846, %v4839
        %v5190 = vpack.c.b16 %v4847, %v4840
        %v5191 = vpack.c.b16 %v4848, %v4841
        %v5192 = vpack.c.b16 %v4849, %v4842
        %v5193 = vpack.c.b16 %v4850, %v4843
        %v5194 = vpack.c.b16 %v4851, %v4844
        %v5195 = vpack.c.b16 %v4852, %v4845
        %v5196 = vpack.c.b16 %v4860, %v4853
        %v5197 = vpack.c.b16 %v4861, %v4854
        %v5198 = vpack.c.b16 %v4862, %v4855
        %v5199 = vpack.c.b16 %v4863, %v4856
        %v5200 = vpack.c.b16 %v4864, %v4857
        %v5201 = vpack.c.b16 %v4865, %v4858
        %v5202 = vpack.c.b16 %v4866, %v4859
        %v5203 = vpack.c.b16 %v4874, %v4867
        %v5204 = vpack.c.b16 %v4875, %v4868
        %v5205 = vpack.c.b16 %v4876, %v4869
        %v5206 = vpack.c.b16 %v4877, %v4870
        %v5207 = vpack.c.b16 %v4878, %v4871
        %v5208 = vpack.c.b16 %v4879, %v4872
        %v5209 = vpack.c.b16 %v4880, %v4873
        %v5210 = vpack.c.b16 %v4888, %v4881
        %v5211 = vpack.c.b16 %v4889, %v4882
        %v5212 = vpack.c.b16 %v4890, %v4883
        %v5213 = vpack.c.b16 %v4891, %v4884
        %v5214 = vpack.c.b16 %v4892, %v4885
        %v5215 = vpack.c.b16 %v4893, %v4886
        %v5216 = vpack.c.b16 %v4894, %v4887
        %v5217 = vpack.c.b16 %v4902, %v4895
        %v5218 = vpack.c.b16 %v4903, %v4896
        %v5219 = vpack.c.b16 %v4904, %v4897
        %v5220 = vpack.c.b16 %v4905, %v4898
        %v5221 = vpack.c.b16 %v4906, %v4899
        %v5222 = vpack.c.b16 %v4907, %v4900
        %v5223 = vpack.c.b16 %v4908, %v4901
        %v5224 = vpack.c.b16 %v4916, %v4909
        %v5225 = vpack.c.b16 %v4917, %v4910
        %v5226 = vpack.c.b16 %v4918, %v4911
        %v5227 = vpack.c.b16 %v4919, %v4912
        %v5228 = vpack.c.b16 %v4920, %v4913
        %v5229 = vpack.c.b16 %v4921, %v4914
        %v5230 = vpack.c.b16 %v4922, %v4915
        %v5231 = vpack.c.b16 %v4930, %v4923
        %v5232 = vpack.c.b16 %v4931, %v4924
        %v5233 = vpack.c.b16 %v4932, %v4925
        %v5234 = vpack.c.b16 %v4933, %v4926
        %v5235 = vpack.c.b16 %v4934, %v4927
        %v5236 = vpack.c.b16 %v4935, %v4928
        %v5237 = vpack.c.b16 %v4936, %v4929
        %v5238 = vpack.c.b16 %v4944, %v4937
        %v5239 = vpack.c.b16 %v4945, %v4938
        %v5240 = vpack.c.b16 %v4946, %v4939
        %v5241 = vpack.c.b16 %v4947, %v4940
        %v5242 = vpack.c.b16 %v4948, %v4941
        %v5243 = vpack.c.b16 %v4949, %v4942
        %v5244 = vpack.c.b16 %v4950, %v4943
        %v5245 = vpack.c.b16 %v4958, %v4951
        %v5246 = vpack.c.b16 %v4959, %v4952
        %v5247 = vpack.c.b16 %v4960, %v4953
        %v5248 = vpack.c.b16 %v4961, %v4954
        %v5249 = vpack.c.b16 %v4962, %v4955
        %v5250 = vpack.c.b16 %v4963, %v4956
        %v5251 = vpack.c.b16 %v4964, %v4957
        %v5252 = vpack.c.b16 %v4972, %v4965
        %v5253 = vpack.c.b16 %v4973, %v4966
        %v5254 = vpack.c.b16 %v4974, %v4967
        %v5255 = vpack.c.b16 %v4975, %v4968
        %v5256 = vpack.c.b16 %v4976, %v4969
        %v5257 = vpack.c.b16 %v4977, %v4970
        %v5258 = vpack.c.b16 %v4978, %v4971
        %v5259 = vpack.c.b16 %v4986, %v4979
        %v5260 = vpack.c.b16 %v4987, %v4980
        %v5261 = vpack.c.b16 %v4988, %v4981
        %v5262 = vpack.c.b16 %v4989, %v4982
        %v5263 = vpack.c.b16 %v4990, %v4983
        %v5264 = vpack.c.b16 %v4991, %v4984
        %v5265 = vpack.c.b16 %v4992, %v4985
        %v5266 = vpack.c.b16 %v5000, %v4993
        %v5267 = vpack.c.b16 %v5001, %v4994
        %v5268 = vpack.c.b16 %v5002, %v4995
        %v5269 = vpack.c.b16 %v5003, %v4996
        %v5270 = vpack.c.b16 %v5004, %v4997
        %v5271 = vpack.c.b16 %v5005, %v4998
        %v5272 = vpack.c.b16 %v5006, %v4999
        %v5273 = vpack.c.b16 %v5014, %v5007
        %v5274 = vpack.c.b16 %v5015, %v5008
        %v5275 = vpack.c.b16 %v5016, %v5009
        %v5276 = vpack.c.b16 %v5017, %v5010
        %v5277 = vpack.c.b16 %v5018, %v5011
        %v5278 = vpack.c.b16 %v5019, %v5012
        %v5279 = vpack.c.b16 %v5020, %v5013
        %v5280 = vpack.c.b16 %v5028, %v5021
        %v5281 = vpack.c.b16 %v5029, %v5022
        %v5282 = vpack.c.b16 %v5030, %v5023
        %v5283 = vpack.c.b16 %v5031, %v5024
        %v5284 = vpack.c.b16 %v5032, %v5025
        %v5285 = vpack.c.b16 %v5033, %v5026
        %v5286 = vpack.c.b16 %v5034, %v5027
        %v5287 = vpack.c.b16 %v5042, %v5035
        %v5288 = vpack.c.b16 %v5043, %v5036
        %v5289 = vpack.c.b16 %v5044, %v5037
        %v5290 = vpack.c.b16 %v5045, %v5038
        %v5291 = vpack.c.b16 %v5046, %v5039
        %v5292 = vpack.c.b16 %v5047, %v5040
        %v5293 = vpack.c.b16 %v5048, %v5041
        %v5294 = vpack.c.b16 %v5056, %v5049
        %v5295 = vpack.c.b16 %v5057, %v5050
        %v5296 = vpack.c.b16 %v5058, %v5051
        %v5297 = vpack.c.b16 %v5059, %v5052
        %v5298 = vpack.c.b16 %v5060, %v5053
        %v5299 = vpack.c.b16 %v5061, %v5054
        %v5300 = vpack.c.b16 %v5062, %v5055
        %v5301 = vpack.c.b16 %v5070, %v5063
        %v5302 = vpack.c.b16 %v5071, %v5064
        %v5303 = vpack.c.b16 %v5072, %v5065
        %v5304 = vpack.c.b16 %v5073, %v5066
        %v5305 = vpack.c.b16 %v5074, %v5067
        %v5306 = vpack.c.b16 %v5075, %v5068
        %v5307 = vpack.c.b16 %v5076, %v5069
        %v5308 = vpack.c.b16 %v5084, %v5077
        %v5309 = vpack.c.b16 %v5085, %v5078
        %v5310 = vpack.c.b16 %v5086, %v5079
        %v5311 = vpack.c.b16 %v5087, %v5080
        %v5312 = vpack.c.b16 %v5088, %v5081
        %v5313 = vpack.c.b16 %v5089, %v5082
        %v5314 = vpack.c.b16 %v5090, %v5083
        %5539 = vmatprep.subr.bf16.mxu0 %v5092
        %5540 = vmatpush1.bf16.msra.mxu0 %v5091
        %5541 = vmatprep.subr.bf16.mxu0 %v5099
        %5542 = vmatpush1.bf16.msra.mxu0 %v5098
        %5543 = vmatprep.subr.bf16.mxu0 %v5106
        %5544 = vmatpush1.bf16.msra.mxu0 %v5105
        %5545 = vmatprep.subr.bf16.mxu0 %v5113
        %5546 = vmatpush1.bf16.msra.mxu0 %v5112
        %5547 = vmatprep.subr.bf16.mxu0 %v5120
        %5548 = vmatpush1.bf16.msra.mxu0 %v5119
        %5549 = vmatprep.subr.bf16.mxu0 %v5127
        %5550 = vmatpush1.bf16.msra.mxu0 %v5126
        %5551 = vmatprep.subr.bf16.mxu0 %v5134
        %5552 = vmatpush1.bf16.msra.mxu0 %v5133
        %5553 = vmatprep.subr.bf16.mxu0 %v5141
        %5554 = vmatpush1.bf16.msra.mxu0 %v5140
        %5555 = vmatprep.subr.bf16.mxu0 %v5148
        %5556 = vmatpush1.bf16.msra.mxu0 %v5147
        %5557 = vmatprep.subr.bf16.mxu0 %v5155
        %5558 = vmatpush1.bf16.msra.mxu0 %v5154
        %5559 = vmatprep.subr.bf16.mxu0 %v5162
        %5560 = vmatpush1.bf16.msra.mxu0 %v5161
        %5561 = vmatprep.subr.bf16.mxu0 %v5169
        %5562 = vmatpush1.bf16.msra.mxu0 %v5168
        %5563 = vmatprep.subr.bf16.mxu0 %v5176
        %5564 = vmatpush1.bf16.msra.mxu0 %v5175
        %5565 = vmatprep.subr.bf16.mxu0 %v5183
        %5566 = vmatpush1.bf16.msra.mxu0 %v5182
        %5567 = vmatprep.subr.bf16.mxu0 %v5190
        %5568 = vmatpush1.bf16.msra.mxu0 %v5189
        %5569 = vmatprep.subr.bf16.mxu0 %v5197
        %5570 = vmatpush1.bf16.msra.mxu0 %v5196
        %5571 = vmatprep.mubr.bf16.mxu0 %v4100
        %5572 = vmatmul.mubr.bf16.gmra.mrb[0].mxu0 %v4099
        %v5573 = vpop.f32.mrb[0].mxu0
        %v5574 = vadd.f32 %v4362, %v5573
        %v5575 = vpop.f32.mrb[0].mxu0
        %v5576 = vadd.f32 %v4366, %v5575
        %v5577 = vpop.f32.mrb[0].mxu0
        %v5578 = vpop.f32.mrb[0].mxu0
        %5579 = vdwg.mxu0
        %5580 = vmatprep.subr.bf16.mxu0 %v5204
        %5581 = vmatpush1.bf16.msra.mxu0 %v5203
        %5582 = vmatprep.subr.bf16.mxu0 %v5211
        %5583 = vmatpush1.bf16.msra.mxu0 %v5210
        %5584 = vmatprep.subr.bf16.mxu0 %v5218
        %5585 = vmatpush1.bf16.msra.mxu0 %v5217
        %5586 = vmatprep.subr.bf16.mxu0 %v5225
        %5587 = vmatpush1.bf16.msra.mxu0 %v5224
        %5588 = vmatprep.subr.bf16.mxu0 %v5232
        %5589 = vmatpush1.bf16.msra.mxu0 %v5231
        %5590 = vmatprep.subr.bf16.mxu0 %v5239
        %5591 = vmatpush1.bf16.msra.mxu0 %v5238
        %5592 = vmatprep.subr.bf16.mxu0 %v5246
        %5593 = vmatpush1.bf16.msra.mxu0 %v5245
        %5594 = vmatprep.subr.bf16.mxu0 %v5253
        %5595 = vmatpush1.bf16.msra.mxu0 %v5252
        %5596 = vmatprep.subr.bf16.mxu0 %v5260
        %5597 = vmatpush1.bf16.msra.mxu0 %v5259
        %5598 = vmatprep.subr.bf16.mxu0 %v5267
        %5599 = vmatpush1.bf16.msra.mxu0 %v5266
        %5600 = vmatprep.subr.bf16.mxu0 %v5274
        %5601 = vmatpush1.bf16.msra.mxu0 %v5273
        %5602 = vmatprep.subr.bf16.mxu0 %v5281
        %5603 = vmatpush1.bf16.msra.mxu0 %v5280
        %5604 = vmatprep.subr.bf16.mxu0 %v5288
        %5605 = vmatpush1.bf16.msra.mxu0 %v5287
        %5606 = vmatprep.subr.bf16.mxu0 %v5295
        %5607 = vmatpush1.bf16.msra.mxu0 %v5294
        %5608 = vmatprep.subr.bf16.mxu0 %v5302
        %5609 = vmatpush1.bf16.msra.mxu0 %v5301
        %5610 = vmatprep.subr.bf16.mxu0 %v5309
        %5611 = vmatpush1.bf16.msra.mxu0 %v5308
        %5612 = vmatprep.mubr.bf16.mxu0 %v4102
        %5613 = vmatmul.mubr.bf16.gmra.mrb[0].mxu0 %v4101
        %v5614 = vpop.f32.mrb[0].mxu0
        %v5615 = vadd.f32 %v5574, %v5614
        %v5616 = vpop.f32.mrb[0].mxu0
        %v5617 = vadd.f32 %v5576, %v5616
        %v5618 = vpop.f32.mrb[0].mxu0
        %v5619 = vpop.f32.mrb[0].mxu0
        %5620 = vdwg.mxu0
        %5621 = vmatprep.subr.bf16.mxu0 %v5094
        %5622 = vmatpush1.bf16.msra.mxu0 %v5093
        %5623 = vmatprep.subr.bf16.mxu0 %v5101
        %5624 = vmatpush1.bf16.msra.mxu0 %v5100
        %5625 = vmatprep.subr.bf16.mxu0 %v5108
        %5626 = vmatpush1.bf16.msra.mxu0 %v5107
        %5627 = vmatprep.subr.bf16.mxu0 %v5115
        %5628 = vmatpush1.bf16.msra.mxu0 %v5114
        %5629 = vmatprep.subr.bf16.mxu0 %v5122
        %5630 = vmatpush1.bf16.msra.mxu0 %v5121
        %5631 = vmatprep.subr.bf16.mxu0 %v5129
        %5632 = vmatpush1.bf16.msra.mxu0 %v5128
        %5633 = vmatprep.subr.bf16.mxu0 %v5136
        %5634 = vmatpush1.bf16.msra.mxu0 %v5135
        %5635 = vmatprep.subr.bf16.mxu0 %v5143
        %5636 = vmatpush1.bf16.msra.mxu0 %v5142
        %5637 = vmatprep.subr.bf16.mxu0 %v5150
        %5638 = vmatpush1.bf16.msra.mxu0 %v5149
        %5639 = vmatprep.subr.bf16.mxu0 %v5157
        %5640 = vmatpush1.bf16.msra.mxu0 %v5156
        %5641 = vmatprep.subr.bf16.mxu0 %v5164
        %5642 = vmatpush1.bf16.msra.mxu0 %v5163
        %5643 = vmatprep.subr.bf16.mxu0 %v5171
        %5644 = vmatpush1.bf16.msra.mxu0 %v5170
        %5645 = vmatprep.subr.bf16.mxu0 %v5178
        %5646 = vmatpush1.bf16.msra.mxu0 %v5177
        %5647 = vmatprep.subr.bf16.mxu0 %v5185
        %5648 = vmatpush1.bf16.msra.mxu0 %v5184
        %5649 = vmatprep.subr.bf16.mxu0 %v5192
        %5650 = vmatpush1.bf16.msra.mxu0 %v5191
        %5651 = vmatprep.subr.bf16.mxu0 %v5199
        %5652 = vmatpush1.bf16.msra.mxu0 %v5198
        %5653 = vmatprep.mubr.bf16.mxu0 %v4100
        %5654 = vmatmul.mubr.bf16.gmra.mrb[0].mxu0 %v4099
        %v5655 = vpop.f32.mrb[0].mxu0
        %v5656 = vadd.f32 %v4370, %v5655
        %v5657 = vpop.f32.mrb[0].mxu0
        %v5658 = vadd.f32 %v4374, %v5657
        %v5659 = vpop.f32.mrb[0].mxu0
        %v5660 = vpop.f32.mrb[0].mxu0
        %5661 = vdwg.mxu0
        %5662 = vmatprep.subr.bf16.mxu0 %v5206
        %5663 = vmatpush1.bf16.msra.mxu0 %v5205
        %5664 = vmatprep.subr.bf16.mxu0 %v5213
        %5665 = vmatpush1.bf16.msra.mxu0 %v5212
        %5666 = vmatprep.subr.bf16.mxu0 %v5220
        %5667 = vmatpush1.bf16.msra.mxu0 %v5219
        %5668 = vmatprep.subr.bf16.mxu0 %v5227
        %5669 = vmatpush1.bf16.msra.mxu0 %v5226
        %5670 = vmatprep.subr.bf16.mxu0 %v5234
        %5671 = vmatpush1.bf16.msra.mxu0 %v5233
        %5672 = vmatprep.subr.bf16.mxu0 %v5241
        %5673 = vmatpush1.bf16.msra.mxu0 %v5240
        %5674 = vmatprep.subr.bf16.mxu0 %v5248
        %5675 = vmatpush1.bf16.msra.mxu0 %v5247
        %5676 = vmatprep.subr.bf16.mxu0 %v5255
        %5677 = vmatpush1.bf16.msra.mxu0 %v5254
        %5678 = vmatprep.subr.bf16.mxu0 %v5262
        %5679 = vmatpush1.bf16.msra.mxu0 %v5261
        %5680 = vmatprep.subr.bf16.mxu0 %v5269
        %5681 = vmatpush1.bf16.msra.mxu0 %v5268
        %5682 = vmatprep.subr.bf16.mxu0 %v5276
        %5683 = vmatpush1.bf16.msra.mxu0 %v5275
        %5684 = vmatprep.subr.bf16.mxu0 %v5283
        %5685 = vmatpush1.bf16.msra.mxu0 %v5282
        %5686 = vmatprep.subr.bf16.mxu0 %v5290
        %5687 = vmatpush1.bf16.msra.mxu0 %v5289
        %5688 = vmatprep.subr.bf16.mxu0 %v5297
        %5689 = vmatpush1.bf16.msra.mxu0 %v5296
        %5690 = vmatprep.subr.bf16.mxu0 %v5304
        %5691 = vmatpush1.bf16.msra.mxu0 %v5303
        %5692 = vmatprep.subr.bf16.mxu0 %v5311
        %5693 = vmatpush1.bf16.msra.mxu0 %v5310
        %5694 = vmatprep.mubr.bf16.mxu0 %v4102
        %5695 = vmatmul.mubr.bf16.gmra.mrb[0].mxu0 %v4101
        %v5696 = vpop.f32.mrb[0].mxu0
        %v5697 = vadd.f32 %v5656, %v5696
        %v5698 = vpop.f32.mrb[0].mxu0
        %v5699 = vadd.f32 %v5658, %v5698
        %v5700 = vpop.f32.mrb[0].mxu0
        %v5701 = vpop.f32.mrb[0].mxu0
        %5702 = vdwg.mxu0
        %5703 = vmatprep.subr.bf16.mxu0 %v5096
        %5704 = vmatpush1.bf16.msra.mxu0 %v5095
        %5705 = vmatprep.subr.bf16.mxu0 %v5103
        %5706 = vmatpush1.bf16.msra.mxu0 %v5102
        %5707 = vmatprep.subr.bf16.mxu0 %v5110
        %5708 = vmatpush1.bf16.msra.mxu0 %v5109
        %5709 = vmatprep.subr.bf16.mxu0 %v5117
        %5710 = vmatpush1.bf16.msra.mxu0 %v5116
        %5711 = vmatprep.subr.bf16.mxu0 %v5124
        %5712 = vmatpush1.bf16.msra.mxu0 %v5123
        %5713 = vmatprep.subr.bf16.mxu0 %v5131
        %5714 = vmatpush1.bf16.msra.mxu0 %v5130
        %5715 = vmatprep.subr.bf16.mxu0 %v5138
        %5716 = vmatpush1.bf16.msra.mxu0 %v5137
        %5717 = vmatprep.subr.bf16.mxu0 %v5145
        %5718 = vmatpush1.bf16.msra.mxu0 %v5144
        %5719 = vmatprep.subr.bf16.mxu0 %v5152
        %5720 = vmatpush1.bf16.msra.mxu0 %v5151
        %5721 = vmatprep.subr.bf16.mxu0 %v5159
        %5722 = vmatpush1.bf16.msra.mxu0 %v5158
        %5723 = vmatprep.subr.bf16.mxu0 %v5166
        %5724 = vmatpush1.bf16.msra.mxu0 %v5165
        %5725 = vmatprep.subr.bf16.mxu0 %v5173
        %5726 = vmatpush1.bf16.msra.mxu0 %v5172
        %5727 = vmatprep.subr.bf16.mxu0 %v5180
        %5728 = vmatpush1.bf16.msra.mxu0 %v5179
        %5729 = vmatprep.subr.bf16.mxu0 %v5187
        %5730 = vmatpush1.bf16.msra.mxu0 %v5186
        %5731 = vmatprep.subr.bf16.mxu0 %v5194
        %5732 = vmatpush1.bf16.msra.mxu0 %v5193
        %5733 = vmatprep.subr.bf16.mxu0 %v5201
        %5734 = vmatpush1.bf16.msra.mxu0 %v5200
        %5735 = vmatprep.mubr.bf16.mxu0 %v4100
        %5736 = vmatmul.mubr.bf16.gmra.mrb[0].mxu0 %v4099
        %v5737 = vpop.f32.mrb[0].mxu0
        %v5738 = vadd.f32 %v4378, %v5737
        %v5739 = vpop.f32.mrb[0].mxu0
        %v5740 = vadd.f32 %v4382, %v5739
        %v5741 = vpop.f32.mrb[0].mxu0
        %v5742 = vpop.f32.mrb[0].mxu0
        %5743 = vdwg.mxu0
        %5744 = vmatprep.subr.bf16.mxu0 %v5208
        %5745 = vmatpush1.bf16.msra.mxu0 %v5207
        %5746 = vmatprep.subr.bf16.mxu0 %v5215
        %5747 = vmatpush1.bf16.msra.mxu0 %v5214
        %5748 = vmatprep.subr.bf16.mxu0 %v5222
        %5749 = vmatpush1.bf16.msra.mxu0 %v5221
        %5750 = vmatprep.subr.bf16.mxu0 %v5229
        %5751 = vmatpush1.bf16.msra.mxu0 %v5228
        %5752 = vmatprep.subr.bf16.mxu0 %v5236
        %5753 = vmatpush1.bf16.msra.mxu0 %v5235
        %5754 = vmatprep.subr.bf16.mxu0 %v5243
        %5755 = vmatpush1.bf16.msra.mxu0 %v5242
        %5756 = vmatprep.subr.bf16.mxu0 %v5250
        %5757 = vmatpush1.bf16.msra.mxu0 %v5249
        %5758 = vmatprep.subr.bf16.mxu0 %v5257
        %5759 = vmatpush1.bf16.msra.mxu0 %v5256
        %5760 = vmatprep.subr.bf16.mxu0 %v5264
        %5761 = vmatpush1.bf16.msra.mxu0 %v5263
        %5762 = vmatprep.subr.bf16.mxu0 %v5271
        %5763 = vmatpush1.bf16.msra.mxu0 %v5270
        %5764 = vmatprep.subr.bf16.mxu0 %v5278
        %5765 = vmatpush1.bf16.msra.mxu0 %v5277
        %5766 = vmatprep.subr.bf16.mxu0 %v5285
        %5767 = vmatpush1.bf16.msra.mxu0 %v5284
        %5768 = vmatprep.subr.bf16.mxu0 %v5292
        %5769 = vmatpush1.bf16.msra.mxu0 %v5291
        %5770 = vmatprep.subr.bf16.mxu0 %v5299
        %5771 = vmatpush1.bf16.msra.mxu0 %v5298
        %5772 = vmatprep.subr.bf16.mxu0 %v5306
        %5773 = vmatpush1.bf16.msra.mxu0 %v5305
        %5774 = vmatprep.subr.bf16.mxu0 %v5313
        %5775 = vmatpush1.bf16.msra.mxu0 %v5312
        %5776 = vmatprep.mubr.bf16.mxu0 %v4102
        %5777 = vmatmul.mubr.bf16.gmra.mrb[0].mxu0 %v4101
        %v5778 = vpop.f32.mrb[0].mxu0
        %v5779 = vadd.f32 %v5738, %v5778
        %v5780 = vpop.f32.mrb[0].mxu0
        %v5781 = vadd.f32 %v5740, %v5780
        %v5782 = vpop.f32.mrb[0].mxu0
        %v5783 = vpop.f32.mrb[0].mxu0
        %5784 = vdwg.mxu0
        %5785 = vmatprep.subr.bf16.mxu0 0
        %5786 = vmatpush1.bf16.msra.mxu0 %v5097
        %5787 = vmatprep.subr.bf16.mxu0 0
        %5788 = vmatpush1.bf16.msra.mxu0 %v5104
        %5789 = vmatprep.subr.bf16.mxu0 0
        %5790 = vmatpush1.bf16.msra.mxu0 %v5111
        %5791 = vmatprep.subr.bf16.mxu0 0
        %5792 = vmatpush1.bf16.msra.mxu0 %v5118
        %5793 = vmatprep.subr.bf16.mxu0 0
        %5794 = vmatpush1.bf16.msra.mxu0 %v5125
        %5795 = vmatprep.subr.bf16.mxu0 0
        %5796 = vmatpush1.bf16.msra.mxu0 %v5132
        %5797 = vmatprep.subr.bf16.mxu0 0
        %5798 = vmatpush1.bf16.msra.mxu0 %v5139
        %5799 = vmatprep.subr.bf16.mxu0 0
        %5800 = vmatpush1.bf16.msra.mxu0 %v5146
        %5801 = vmatprep.subr.bf16.mxu0 0
        %5802 = vmatpush1.bf16.msra.mxu0 %v5153
        %5803 = vmatprep.subr.bf16.mxu0 0
        %5804 = vmatpush1.bf16.msra.mxu0 %v5160
        %5805 = vmatprep.subr.bf16.mxu0 0
        %5806 = vmatpush1.bf16.msra.mxu0 %v5167
        %5807 = vmatprep.subr.bf16.mxu0 0
        %5808 = vmatpush1.bf16.msra.mxu0 %v5174
        %5809 = vmatprep.subr.bf16.mxu0 0
        %5810 = vmatpush1.bf16.msra.mxu0 %v5181
        %5811 = vmatprep.subr.bf16.mxu0 0
        %5812 = vmatpush1.bf16.msra.mxu0 %v5188
        %5813 = vmatprep.subr.bf16.mxu0 0
        %5814 = vmatpush1.bf16.msra.mxu0 %v5195
        %5815 = vmatprep.subr.bf16.mxu0 0
        %5816 = vmatpush1.bf16.msra.mxu0 %v5202
        %5817 = vmatprep.mubr.bf16.mxu0 %v4100
        %5818 = vmatmul.mubr.bf16.gmra.mrb[0].mxu0 %v4099
        %v5819 = vpop.f32.mrb[0].mxu0
        %v5820 = vadd.f32 %v4386, %v5819
        %v5821 = vpop.f32.mrb[0].mxu0
        %v5822 = vpop.f32.mrb[0].mxu0
        %v5823 = vpop.f32.mrb[0].mxu0
        %5824 = vdwg.mxu0
        %5825 = vmatprep.subr.bf16.mxu0 0
        %5826 = vmatpush1.bf16.msra.mxu0 %v5209
        %5827 = vmatprep.subr.bf16.mxu0 0
        %5828 = vmatpush1.bf16.msra.mxu0 %v5216
        %5829 = vmatprep.subr.bf16.mxu0 0
        %5830 = vmatpush1.bf16.msra.mxu0 %v5223
        %5831 = vmatprep.subr.bf16.mxu0 0
        %5832 = vmatpush1.bf16.msra.mxu0 %v5230
        %5833 = vmatprep.subr.bf16.mxu0 0
        %5834 = vmatpush1.bf16.msra.mxu0 %v5237
        %5835 = vmatprep.subr.bf16.mxu0 0
        %5836 = vmatpush1.bf16.msra.mxu0 %v5244
        %5837 = vmatprep.subr.bf16.mxu0 0
        %5838 = vmatpush1.bf16.msra.mxu0 %v5251
        %5839 = vmatprep.subr.bf16.mxu0 0
        %5840 = vmatpush1.bf16.msra.mxu0 %v5258
        %5841 = vmatprep.subr.bf16.mxu0 0
        %5842 = vmatpush1.bf16.msra.mxu0 %v5265
        %5843 = vmatprep.subr.bf16.mxu0 0
        %5844 = vmatpush1.bf16.msra.mxu0 %v5272
        %5845 = vmatprep.subr.bf16.mxu0 0
        %5846 = vmatpush1.bf16.msra.mxu0 %v5279
        %5847 = vmatprep.subr.bf16.mxu0 0
        %5848 = vmatpush1.bf16.msra.mxu0 %v5286
        %5849 = vmatprep.subr.bf16.mxu0 0
        %5850 = vmatpush1.bf16.msra.mxu0 %v5293
        %5851 = vmatprep.subr.bf16.mxu0 0
        %5852 = vmatpush1.bf16.msra.mxu0 %v5300
        %5853 = vmatprep.subr.bf16.mxu0 0
        %5854 = vmatpush1.bf16.msra.mxu0 %v5307
        %5855 = vmatprep.subr.bf16.mxu0 0
        %5856 = vmatpush1.bf16.msra.mxu0 %v5314
        %5857 = vmatprep.mubr.bf16.mxu0 %v4102
        %5858 = vmatmul.mubr.bf16.gmra.mrb[0].mxu0 %v4101
        %v5859 = vpop.f32.mrb[0].mxu0
        %v5860 = vadd.f32 %v5820, %v5859
        %v5861 = vpop.f32.mrb[0].mxu0
        %v5862 = vpop.f32.mrb[0].mxu0
        %v5863 = vpop.f32.mrb[0].mxu0
        %5864 = vdwg.mxu0
        %v5865 = vand.u32 2147483647, %v5615
        %v5866 = vand.u32 2147483647, %v5617
        %v5867 = vand.u32 2147483647, %v5697
        %v5868 = vand.u32 2147483647, %v5699
        %v5869 = vand.u32 2147483647, %v5779
        %v5870 = vand.u32 2147483647, %v5781
        %v5871 = vand.u32 2147483647, %v5860
        %v5872 = vsub.f32 0.0, %v5865
        %v5873 = vsub.f32 0.0, %v5866
        %v5874 = vsub.f32 0.0, %v5867
        %v5875 = vsub.f32 0.0, %v5868
        %v5876 = vsub.f32 0.0, %v5869
        %v5877 = vsub.f32 0.0, %v5870
        %v5878 = vsub.f32 0.0, %v5871
        %v5879 = vmul.f32 %v5872, 1.442695
        %v5880 = vpow.pop %v5879
        %v5881 = vmul.f32 %v5873, 1.442695
        %v5882 = vpow.pop %v5881
        %v5883 = vmul.f32 %v5874, 1.442695
        %v5884 = vpow.pop %v5883
        %v5885 = vmul.f32 %v5875, 1.442695
        %v5886 = vpow.pop %v5885
        %v5887 = vmul.f32 %v5876, 1.442695
        %v5888 = vpow.pop %v5887
        %v5889 = vmul.f32 %v5877, 1.442695
        %v5890 = vpow.pop %v5889
        %v5891 = vmul.f32 %v5878, 1.442695
        %v5892 = vpow.pop %v5891
        %vm5893 = vcmp.ge.f32.partialorder %v5615, 0.0
        %vm5894 = vcmp.ge.f32.partialorder %v5617, 0.0
        %vm5895 = vcmp.ge.f32.partialorder %v5697, 0.0
        %vm5896 = vcmp.ge.f32.partialorder %v5699, 0.0
        %vm5897 = vcmp.ge.f32.partialorder %v5779, 0.0
        %vm5898 = vcmp.ge.f32.partialorder %v5781, 0.0
        %vm5899 = vcmp.ge.f32.partialorder %v5860, 0.0
        %v5900 = vsel %vm5893, 1.0, %v5880
        %v5901 = vsel %vm5894, 1.0, %v5882
        %v5902 = vsel %vm5895, 1.0, %v5884
        %v5903 = vsel %vm5896, 1.0, %v5886
        %v5904 = vsel %vm5897, 1.0, %v5888
        %v5905 = vsel %vm5898, 1.0, %v5890
        %v5906 = vsel %vm5899, 1.0, %v5892
        %v5907 = vadd.f32 %v5880, 1.0
        %v5908 = vadd.f32 %v5882, 1.0
        %v5909 = vadd.f32 %v5884, 1.0
        %v5910 = vadd.f32 %v5886, 1.0
        %v5911 = vadd.f32 %v5888, 1.0
        %v5912 = vadd.f32 %v5890, 1.0
        %v5913 = vadd.f32 %v5892, 1.0
        %v5914 = vrcp.pop %v5907
        %v5915 = vrcp.pop %v5908
        %v5916 = vrcp.pop %v5909
        %v5917 = vrcp.pop %v5910
        %v5918 = vrcp.pop %v5911
        %v5919 = vrcp.pop %v5912
        %v5920 = vrcp.pop %v5913
        %v5921 = vmul.f32 %v5900, %v5914
        %v5922 = vmul.f32 %v5901, %v5915
        %v5923 = vmul.f32 %v5902, %v5916
        %v5924 = vmul.f32 %v5903, %v5917
        %v5925 = vmul.f32 %v5904, %v5918
        %v5926 = vmul.f32 %v5905, %v5919
        %v5927 = vmul.f32 %v5906, %v5920
        %v5928 = vmax.f32 %v5921, 0.0
        %v5929 = vmax.f32 %v5922, 0.0
        %v5930 = vmax.f32 %v5923, 0.0
        %v5931 = vmax.f32 %v5924, 0.0
        %v5932 = vmax.f32 %v5925, 0.0
        %v5933 = vmax.f32 %v5926, 0.0
        %v5934 = vmax.f32 %v5927, 0.0
        %v5935 = vmin.f32 %v5928, 1.0
        %v5936 = vmin.f32 %v5929, 1.0
        %v5937 = vmin.f32 %v5930, 1.0
        %v5938 = vmin.f32 %v5931, 1.0
        %v5939 = vmin.f32 %v5932, 1.0
        %v5940 = vmin.f32 %v5933, 1.0
        %v5941 = vmin.f32 %v5934, 1.0
        %v5942 = vsub.f32 %v5935, %v253
        %v5943 = vsub.f32 %v5936, %v254
        %v5944 = vsub.f32 %v5937, %v255
        %v5945 = vsub.f32 %v5938, %v256
        %v5946 = vsub.f32 %v5939, %v257
        %v5947 = vsub.f32 %v5940, %v258
        %v5948 = vsub.f32 %v5941, %v259
        %v5949 = vand.u32 2147483647, %v5942
        %v5950 = vand.u32 2147483647, %v5943
        %v5951 = vand.u32 2147483647, %v5944
        %v5952 = vand.u32 2147483647, %v5945
        %v5953 = vand.u32 2147483647, %v5946
        %v5954 = vand.u32 2147483647, %v5947
        %v5955 = vand.u32 2147483647, %v5948
        %v5956 = vsub.f32 1.0, %v5949
        %v5957 = vsub.f32 1.0, %v5950
        %v5958 = vsub.f32 1.0, %v5951
        %v5959 = vsub.f32 1.0, %v5952
        %v5960 = vsub.f32 1.0, %v5953
        %v5961 = vsub.f32 1.0, %v5954
        %v5962 = vsub.f32 1.0, %v5955
        %v5963 = vadd.f32 %v5956, 1e-08
        %v5964 = vadd.f32 %v5957, 1e-08
        %v5965 = vadd.f32 %v5958, 1e-08
        %v5966 = vadd.f32 %v5959, 1e-08
        %v5967 = vadd.f32 %v5960, 1e-08
        %v5968 = vadd.f32 %v5961, 1e-08
        %v5969 = vadd.f32 %v5962, 1e-08
        %v5970 = vlog2.pop %v5963
        %v5971 = vmul.f32 %v5970, 0.6931472
        %v5972 = vlog2.pop %v5964
        %v5973 = vmul.f32 %v5972, 0.6931472
        %v5974 = vlog2.pop %v5965
        %v5975 = vmul.f32 %v5974, 0.6931472
        %v5976 = vlog2.pop %v5966
        %v5977 = vmul.f32 %v5976, 0.6931472
        %v5978 = vlog2.pop %v5967
        %v5979 = vmul.f32 %v5978, 0.6931472
        %v5980 = vlog2.pop %v5968
        %v5981 = vmul.f32 %v5980, 0.6931472
        %v5982 = vlog2.pop %v5969
        %v5983 = vmul.f32 %v5982, 0.6931472
        %v5984 = vadd.f32 %v5971, %v5973
        %v5985 = vadd.f32 %v5984, %v5975
        %v5986 = vadd.f32 %v5985, %v5977
        %v5987 = vadd.f32 %v5986, %v5979
        %v5988 = vadd.f32 %v5987, %v5981
        %v5989 = vsel %vm2651, %v5983, 0.0
        %v5990 = vadd.f32 %v5988, %v5989
        %5991 = vadd.xlane.f32.xlu0 %v5990
        %v5992 = vpop.xlane.xlu0 %5991
        %5993 = vrot.lane.b32.xlu0 %v259, 116
        %v5994 = vpop.permute.xlu0 %5993
        %v5996 = vmul.f32 %v4011, %v5994
        %v5997 = vadd.f32 %v5996, %v4019
        %5999 = vset.pattern.permute.xlu0 6
        %6000 = vperm.xlu0 %5999, %v5997
        %v6001 = vpop.permute.xlu0 %6000
        %v6003 = vlaneseq
        %v6004 = vshrl.u32 %v6003, 7
        %v6005 = vsub.s32 3, %v6004
        %v6006 = vrot.slane %v245, %v6005
        %v6007 = vlaneseq
        %v6008 = vshrl.u32 %v6007, 7
        %v6009 = vsub.s32 3, %v6008
        %v6010 = vrot.slane %v246, %v6009
        %v6011 = vlaneseq
        %v6012 = vshrl.u32 %v6011, 7
        %v6013 = vsub.s32 3, %v6012
        %v6014 = vrot.slane %v247, %v6013
        %v6015 = vlaneseq
        %v6016 = vshrl.u32 %v6015, 7
        %v6017 = vsub.s32 3, %v6016
        %v6018 = vrot.slane %v248, %v6017
        %v6019 = vmul.f32 %v6001, %v6006
        %v6020 = vmul.f32 %v6001, %v6010
        %v6021 = vmul.f32 %v6001, %v6014
        %v6022 = vmul.f32 %v6001, %v6018
        %6023 = vset.pattern.permute.xlu0 7
        %6024 = vperm.xlu0 %6023, %v5997
        %v6025 = vpop.permute.xlu0 %6024
        %v6027 = vlaneseq
        %v6028 = vshrl.u32 %v6027, 7
        %v6029 = vsub.s32 3, %v6028
        %v6030 = vrot.slane %v249, %v6029
        %v6031 = vlaneseq
        %v6032 = vshrl.u32 %v6031, 7
        %v6033 = vsub.s32 3, %v6032
        %v6034 = vrot.slane %v250, %v6033
        %v6035 = vlaneseq
        %v6036 = vshrl.u32 %v6035, 7
        %v6037 = vsub.s32 3, %v6036
        %v6038 = vrot.slane %v251, %v6037
        %v6039 = vlaneseq
        %v6040 = vshrl.u32 %v6039, 7
        %v6041 = vsub.s32 3, %v6040
        %v6042 = vrot.slane %v252, %v6041
        %v6043 = vmul.f32 %v6025, %v6030
        %v6044 = vmul.f32 %v6025, %v6034
        %v6045 = vmul.f32 %v6025, %v6038
        %v6046 = vmul.f32 %v6025, %v6042
        %v6047 = vadd.f32 %v6019, %v6043
        %v6048 = vadd.f32 %v6020, %v6044
        %v6049 = vadd.f32 %v6021, %v6045
        %v6050 = vadd.f32 %v6022, %v6046
        %v6051 = vlaneseq
        %v6052 = vshrl.u32 %v6051, 7
        %v6053 = vsub.s32 4, %v6052
        %v6054 = vrot.slane %v249, %v6053
        %v6055 = vlaneseq
        %v6056 = vshrl.u32 %v6055, 7
        %v6057 = vsub.s32 4, %v6056
        %v6058 = vrot.slane %v250, %v6057
        %v6059 = vlaneseq
        %v6060 = vshrl.u32 %v6059, 7
        %v6061 = vsub.s32 4, %v6060
        %v6062 = vrot.slane %v251, %v6061
        %v6063 = vlaneseq
        %v6064 = vshrl.u32 %v6063, 7
        %v6065 = vsub.s32 4, %v6064
        %v6066 = vrot.slane %v252, %v6065
        %v6067 = vadd.f32 %v6047, %v6054
        %v6068 = vadd.f32 %v6048, %v6058
        %v6069 = vadd.f32 %v6049, %v6062
        %v6070 = vadd.f32 %v6050, %v6066
        %v6071 = vmax.f32 %v6067, 0.0
        %v6072 = vmax.f32 %v6068, 0.0
        %v6073 = vmax.f32 %v6069, 0.0
        %v6074 = vmax.f32 %v6070, 0.0
        %v6075 = vpack.c.bf16 %v6071, %v6071
        %v6076 = vpack.c.bf16 %v6072, %v6072
        %v6077 = vpack.c.bf16 %v6073, %v6073
        %v6078 = vpack.c.bf16 %v6074, %v6074
        %v6079 = vld [vmem:[%s4] sm:$0xff]
        %v6080 = vld [vmem:[%s4 + $0x8] sm:$0xff]
        %v6081 = vld [vmem:[%s4 + $0x10] sm:$0xff]
        %v6082 = vld [vmem:[%s4 + $0x18] sm:$0xf]
        %v6083 = vld [vmem:[%s4 + $0x1c] sm:$0xff]
        %v6084 = vld [vmem:[%s4 + $0x24] sm:$0xff]
        %v6085 = vld [vmem:[%s4 + $0x2c] sm:$0xff]
        %v6086 = vld [vmem:[%s4 + $0x34] sm:$0xf]
        %v6087 = vld [vmem:[%s4 + $0x38] sm:$0xff]
        %v6088 = vld [vmem:[%s4 + $0x40] sm:$0xff]
        %v6089 = vld [vmem:[%s4 + $0x48] sm:$0xff]
        %v6090 = vld [vmem:[%s4 + $0x50] sm:$0xf]
        %v6091 = vld [vmem:[%s4 + $0x54] sm:$0xff]
        %v6092 = vld [vmem:[%s4 + $0x5c] sm:$0xff]
        %v6093 = vld [vmem:[%s4 + $0x64] sm:$0xff]
        %v6094 = vld [vmem:[%s4 + $0x6c] sm:$0xf]
        %v6095 = vld [vmem:[%s4 + $0x70] sm:$0xff]
        %v6096 = vld [vmem:[%s4 + $0x78] sm:$0xff]
        %v6097 = vld [vmem:[%s4 + $0x80] sm:$0xff]
        %v6098 = vld [vmem:[%s4 + $0x88] sm:$0xf]
        %v6099 = vld [vmem:[%s4 + $0x8c] sm:$0xff]
        %v6100 = vld [vmem:[%s4 + $0x94] sm:$0xff]
        %v6101 = vld [vmem:[%s4 + $0x9c] sm:$0xff]
        %v6102 = vld [vmem:[%s4 + $0xa4] sm:$0xf]
        %v6103 = vld [vmem:[%s4 + $0xa8] sm:$0xff]
        %v6104 = vld [vmem:[%s4 + $0xb0] sm:$0xff]
        %v6105 = vld [vmem:[%s4 + $0xb8] sm:$0xff]
        %v6106 = vld [vmem:[%s4 + $0xc0] sm:$0xf]
        %v6107 = vld [vmem:[%s4 + $0xc4] sm:$0xff]
        %v6108 = vld [vmem:[%s4 + $0xcc] sm:$0xff]
        %v6109 = vld [vmem:[%s4 + $0xd4] sm:$0xff]
        %v6110 = vld [vmem:[%s4 + $0xdc] sm:$0xf]
        %v6111 = vld [vmem:[%s4 + $0xe0] sm:$0xff]
        %v6112 = vld [vmem:[%s4 + $0xe8] sm:$0xff]
        %v6113 = vld [vmem:[%s4 + $0xf0] sm:$0xff]
        %v6114 = vld [vmem:[%s4 + $0xf8] sm:$0xf]
        %v6115 = vld [vmem:[%s4 + $0xfc] sm:$0xff]
        %v6116 = vld [vmem:[%s4 + $0x104] sm:$0xff]
        %v6117 = vld [vmem:[%s4 + $0x10c] sm:$0xff]
        %v6118 = vld [vmem:[%s4 + $0x114] sm:$0xf]
        %v6119 = vld [vmem:[%s4 + $0x118] sm:$0xff]
        %v6120 = vld [vmem:[%s4 + $0x120] sm:$0xff]
        %v6121 = vld [vmem:[%s4 + $0x128] sm:$0xff]
        %v6122 = vld [vmem:[%s4 + $0x130] sm:$0xf]
        %v6123 = vld [vmem:[%s4 + $0x134] sm:$0xff]
        %v6124 = vld [vmem:[%s4 + $0x13c] sm:$0xff]
        %v6125 = vld [vmem:[%s4 + $0x144] sm:$0xff]
        %v6126 = vld [vmem:[%s4 + $0x14c] sm:$0xf]
        %v6127 = vld [vmem:[%s4 + $0x150] sm:$0xff]
        %v6128 = vld [vmem:[%s4 + $0x158] sm:$0xff]
        %v6129 = vld [vmem:[%s4 + $0x160] sm:$0xff]
        %v6130 = vld [vmem:[%s4 + $0x168] sm:$0xf]
        %v6131 = vld [vmem:[%s4 + $0x16c] sm:$0xff]
        %v6132 = vld [vmem:[%s4 + $0x174] sm:$0xff]
        %v6133 = vld [vmem:[%s4 + $0x17c] sm:$0xff]
        %v6134 = vld [vmem:[%s4 + $0x184] sm:$0xf]
        %v6135 = vld [vmem:[%s4 + $0x188] sm:$0xff]
        %v6136 = vld [vmem:[%s4 + $0x190] sm:$0xff]
        %v6137 = vld [vmem:[%s4 + $0x198] sm:$0xff]
        %v6138 = vld [vmem:[%s4 + $0x1a0] sm:$0xf]
        %v6139 = vld [vmem:[%s4 + $0x1a4] sm:$0xff]
        %v6140 = vld [vmem:[%s4 + $0x1ac] sm:$0xff]
        %v6141 = vld [vmem:[%s4 + $0x1b4] sm:$0xff]
        %v6142 = vld [vmem:[%s4 + $0x1bc] sm:$0xf]
        %v6143 = vld [vmem:[%s4 + $0x1c0] sm:$0xff]
        %v6144 = vld [vmem:[%s4 + $0x1c8] sm:$0xff]
        %v6145 = vld [vmem:[%s4 + $0x1d0] sm:$0xff]
        %v6146 = vld [vmem:[%s4 + $0x1d8] sm:$0xf]
        %v6147 = vld [vmem:[%s4 + $0x1dc] sm:$0xff]
        %v6148 = vld [vmem:[%s4 + $0x1e4] sm:$0xff]
        %v6149 = vld [vmem:[%s4 + $0x1ec] sm:$0xff]
        %v6150 = vld [vmem:[%s4 + $0x1f4] sm:$0xf]
        %v6151 = vld [vmem:[%s4 + $0x1f8] sm:$0xff]
        %v6152 = vld [vmem:[%s4 + $0x200] sm:$0xff]
        %v6153 = vld [vmem:[%s4 + $0x208] sm:$0xff]
        %v6154 = vld [vmem:[%s4 + $0x210] sm:$0xf]
        %v6155 = vld [vmem:[%s4 + $0x214] sm:$0xff]
        %v6156 = vld [vmem:[%s4 + $0x21c] sm:$0xff]
        %v6157 = vld [vmem:[%s4 + $0x224] sm:$0xff]
        %v6158 = vld [vmem:[%s4 + $0x22c] sm:$0xf]
        %v6159 = vld [vmem:[%s4 + $0x230] sm:$0xff]
        %v6160 = vld [vmem:[%s4 + $0x238] sm:$0xff]
        %v6161 = vld [vmem:[%s4 + $0x240] sm:$0xff]
        %v6162 = vld [vmem:[%s4 + $0x248] sm:$0xf]
        %v6163 = vld [vmem:[%s4 + $0x24c] sm:$0xff]
        %v6164 = vld [vmem:[%s4 + $0x254] sm:$0xff]
        %v6165 = vld [vmem:[%s4 + $0x25c] sm:$0xff]
        %v6166 = vld [vmem:[%s4 + $0x264] sm:$0xf]
        %v6167 = vld [vmem:[%s4 + $0x268] sm:$0xff]
        %v6168 = vld [vmem:[%s4 + $0x270] sm:$0xff]
        %v6169 = vld [vmem:[%s4 + $0x278] sm:$0xff]
        %v6170 = vld [vmem:[%s4 + $0x280] sm:$0xf]
        %v6171 = vld [vmem:[%s4 + $0x284] sm:$0xff]
        %v6172 = vld [vmem:[%s4 + $0x28c] sm:$0xff]
        %v6173 = vld [vmem:[%s4 + $0x294] sm:$0xff]
        %v6174 = vld [vmem:[%s4 + $0x29c] sm:$0xf]
        %v6175 = vld [vmem:[%s4 + $0x2a0] sm:$0xff]
        %v6176 = vld [vmem:[%s4 + $0x2a8] sm:$0xff]
        %v6177 = vld [vmem:[%s4 + $0x2b0] sm:$0xff]
        %v6178 = vld [vmem:[%s4 + $0x2b8] sm:$0xf]
        %v6179 = vld [vmem:[%s4 + $0x2bc] sm:$0xff]
        %v6180 = vld [vmem:[%s4 + $0x2c4] sm:$0xff]
        %v6181 = vld [vmem:[%s4 + $0x2cc] sm:$0xff]
        %v6182 = vld [vmem:[%s4 + $0x2d4] sm:$0xf]
        %v6183 = vld [vmem:[%s4 + $0x2d8] sm:$0xff]
        %v6184 = vld [vmem:[%s4 + $0x2e0] sm:$0xff]
        %v6185 = vld [vmem:[%s4 + $0x2e8] sm:$0xff]
        %v6186 = vld [vmem:[%s4 + $0x2f0] sm:$0xf]
        %v6187 = vld [vmem:[%s4 + $0x2f4] sm:$0xff]
        %v6188 = vld [vmem:[%s4 + $0x2fc] sm:$0xff]
        %v6189 = vld [vmem:[%s4 + $0x304] sm:$0xff]
        %v6190 = vld [vmem:[%s4 + $0x30c] sm:$0xf]
        %v6191 = vld [vmem:[%s4 + $0x310] sm:$0xff]
        %v6192 = vld [vmem:[%s4 + $0x318] sm:$0xff]
        %v6193 = vld [vmem:[%s4 + $0x320] sm:$0xff]
        %v6194 = vld [vmem:[%s4 + $0x328] sm:$0xf]
        %v6195 = vld [vmem:[%s4 + $0x32c] sm:$0xff]
        %v6196 = vld [vmem:[%s4 + $0x334] sm:$0xff]
        %v6197 = vld [vmem:[%s4 + $0x33c] sm:$0xff]
        %v6198 = vld [vmem:[%s4 + $0x344] sm:$0xf]
        %v6199 = vld [vmem:[%s4 + $0x348] sm:$0xff]
        %v6200 = vld [vmem:[%s4 + $0x350] sm:$0xff]
        %v6201 = vld [vmem:[%s4 + $0x358] sm:$0xff]
        %v6202 = vld [vmem:[%s4 + $0x360] sm:$0xf]
        %v6203 = vld [vmem:[%s4 + $0x364] sm:$0xff]
        %v6204 = vld [vmem:[%s4 + $0x36c] sm:$0xff]
        %v6205 = vld [vmem:[%s4 + $0x374] sm:$0xff]
        %v6206 = vld [vmem:[%s4 + $0x37c] sm:$0xf]
        %v6207 = vld [vmem:[%s4 + $0x380] sm:$0xff]
        %v6208 = vld [vmem:[%s4 + $0x388] sm:$0xff]
        %v6209 = vld [vmem:[%s4 + $0x390] sm:$0xff]
        %v6210 = vld [vmem:[%s4 + $0x398] sm:$0xf]
        %v6211 = vld [vmem:[%s4 + $0x39c] sm:$0xff]
        %v6212 = vld [vmem:[%s4 + $0x3a4] sm:$0xff]
        %v6213 = vld [vmem:[%s4 + $0x3ac] sm:$0xff]
        %v6214 = vld [vmem:[%s4 + $0x3b4] sm:$0xf]
        %v6215 = vld [vmem:[%s4 + $0x3b8] sm:$0xff]
        %v6216 = vld [vmem:[%s4 + $0x3c0] sm:$0xff]
        %v6217 = vld [vmem:[%s4 + $0x3c8] sm:$0xff]
        %v6218 = vld [vmem:[%s4 + $0x3d0] sm:$0xf]
        %v6219 = vld [vmem:[%s4 + $0x3d4] sm:$0xff]
        %v6220 = vld [vmem:[%s4 + $0x3dc] sm:$0xff]
        %v6221 = vld [vmem:[%s4 + $0x3e4] sm:$0xff]
        %v6222 = vld [vmem:[%s4 + $0x3ec] sm:$0xf]
        %v6223 = vld [vmem:[%s4 + $0x3f0] sm:$0xff]
        %v6224 = vld [vmem:[%s4 + $0x3f8] sm:$0xff]
        %v6225 = vld [vmem:[%s4 + $0x400] sm:$0xff]
        %v6226 = vld [vmem:[%s4 + $0x408] sm:$0xf]
        %v6227 = vld [vmem:[%s4 + $0x40c] sm:$0xff]
        %v6228 = vld [vmem:[%s4 + $0x414] sm:$0xff]
        %v6229 = vld [vmem:[%s4 + $0x41c] sm:$0xff]
        %v6230 = vld [vmem:[%s4 + $0x424] sm:$0xf]
        %v6231 = vld [vmem:[%s4 + $0x428] sm:$0xff]
        %v6232 = vld [vmem:[%s4 + $0x430] sm:$0xff]
        %v6233 = vld [vmem:[%s4 + $0x438] sm:$0xff]
        %v6234 = vld [vmem:[%s4 + $0x440] sm:$0xf]
        %v6235 = vld [vmem:[%s4 + $0x444] sm:$0xff]
        %v6236 = vld [vmem:[%s4 + $0x44c] sm:$0xff]
        %v6237 = vld [vmem:[%s4 + $0x454] sm:$0xff]
        %v6238 = vld [vmem:[%s4 + $0x45c] sm:$0xf]
        %v6239 = vld [vmem:[%s4 + $0x460] sm:$0xff]
        %v6240 = vld [vmem:[%s4 + $0x468] sm:$0xff]
        %v6241 = vld [vmem:[%s4 + $0x470] sm:$0xff]
        %v6242 = vld [vmem:[%s4 + $0x478] sm:$0xf]
        %v6243 = vld [vmem:[%s4 + $0x47c] sm:$0xff]
        %v6244 = vld [vmem:[%s4 + $0x484] sm:$0xff]
        %v6245 = vld [vmem:[%s4 + $0x48c] sm:$0xff]
        %v6246 = vld [vmem:[%s4 + $0x494] sm:$0xf]
        %v6247 = vld [vmem:[%s4 + $0x498] sm:$0xff]
        %v6248 = vld [vmem:[%s4 + $0x4a0] sm:$0xff]
        %v6249 = vld [vmem:[%s4 + $0x4a8] sm:$0xff]
        %v6250 = vld [vmem:[%s4 + $0x4b0] sm:$0xf]
        %v6251 = vld [vmem:[%s4 + $0x4b4] sm:$0xff]
        %v6252 = vld [vmem:[%s4 + $0x4bc] sm:$0xff]
        %v6253 = vld [vmem:[%s4 + $0x4c4] sm:$0xff]
        %v6254 = vld [vmem:[%s4 + $0x4cc] sm:$0xf]
        %v6255 = vld [vmem:[%s4 + $0x4d0] sm:$0xff]
        %v6256 = vld [vmem:[%s4 + $0x4d8] sm:$0xff]
        %v6257 = vld [vmem:[%s4 + $0x4e0] sm:$0xff]
        %v6258 = vld [vmem:[%s4 + $0x4e8] sm:$0xf]
        %v6259 = vld [vmem:[%s4 + $0x4ec] sm:$0xff]
        %v6260 = vld [vmem:[%s4 + $0x4f4] sm:$0xff]
        %v6261 = vld [vmem:[%s4 + $0x4fc] sm:$0xff]
        %v6262 = vld [vmem:[%s4 + $0x504] sm:$0xf]
        %v6263 = vld [vmem:[%s4 + $0x508] sm:$0xff]
        %v6264 = vld [vmem:[%s4 + $0x510] sm:$0xff]
        %v6265 = vld [vmem:[%s4 + $0x518] sm:$0xff]
        %v6266 = vld [vmem:[%s4 + $0x520] sm:$0xf]
        %v6267 = vld [vmem:[%s4 + $0x524] sm:$0xff]
        %v6268 = vld [vmem:[%s4 + $0x52c] sm:$0xff]
        %v6269 = vld [vmem:[%s4 + $0x534] sm:$0xff]
        %v6270 = vld [vmem:[%s4 + $0x53c] sm:$0xf]
        %v6271 = vld [vmem:[%s4 + $0x540] sm:$0xff]
        %v6272 = vld [vmem:[%s4 + $0x548] sm:$0xff]
        %v6273 = vld [vmem:[%s4 + $0x550] sm:$0xff]
        %v6274 = vld [vmem:[%s4 + $0x558] sm:$0xf]
        %v6275 = vld [vmem:[%s4 + $0x55c] sm:$0xff]
        %v6276 = vld [vmem:[%s4 + $0x564] sm:$0xff]
        %v6277 = vld [vmem:[%s4 + $0x56c] sm:$0xff]
        %v6278 = vld [vmem:[%s4 + $0x574] sm:$0xf]
        %v6279 = vld [vmem:[%s4 + $0x578] sm:$0xff]
        %v6280 = vld [vmem:[%s4 + $0x580] sm:$0xff]
        %v6281 = vld [vmem:[%s4 + $0x588] sm:$0xff]
        %v6282 = vld [vmem:[%s4 + $0x590] sm:$0xf]
        %v6283 = vld [vmem:[%s4 + $0x594] sm:$0xff]
        %v6284 = vld [vmem:[%s4 + $0x59c] sm:$0xff]
        %v6285 = vld [vmem:[%s4 + $0x5a4] sm:$0xff]
        %v6286 = vld [vmem:[%s4 + $0x5ac] sm:$0xf]
        %v6287 = vld [vmem:[%s4 + $0x5b0] sm:$0xff]
        %v6288 = vld [vmem:[%s4 + $0x5b8] sm:$0xff]
        %v6289 = vld [vmem:[%s4 + $0x5c0] sm:$0xff]
        %v6290 = vld [vmem:[%s4 + $0x5c8] sm:$0xf]
        %v6291 = vld [vmem:[%s4 + $0x5cc] sm:$0xff]
        %v6292 = vld [vmem:[%s4 + $0x5d4] sm:$0xff]
        %v6293 = vld [vmem:[%s4 + $0x5dc] sm:$0xff]
        %v6294 = vld [vmem:[%s4 + $0x5e4] sm:$0xf]
        %v6295 = vld [vmem:[%s4 + $0x5e8] sm:$0xff]
        %v6296 = vld [vmem:[%s4 + $0x5f0] sm:$0xff]
        %v6297 = vld [vmem:[%s4 + $0x5f8] sm:$0xff]
        %v6298 = vld [vmem:[%s4 + $0x600] sm:$0xf]
        %v6299 = vld [vmem:[%s4 + $0x604] sm:$0xff]
        %v6300 = vld [vmem:[%s4 + $0x60c] sm:$0xff]
        %v6301 = vld [vmem:[%s4 + $0x614] sm:$0xff]
        %v6302 = vld [vmem:[%s4 + $0x61c] sm:$0xf]
        %v6303 = vld [vmem:[%s4 + $0x620] sm:$0xff]
        %v6304 = vld [vmem:[%s4 + $0x628] sm:$0xff]
        %v6305 = vld [vmem:[%s4 + $0x630] sm:$0xff]
        %v6306 = vld [vmem:[%s4 + $0x638] sm:$0xf]
        %v6307 = vld [vmem:[%s4 + $0x63c] sm:$0xff]
        %v6308 = vld [vmem:[%s4 + $0x644] sm:$0xff]
        %v6309 = vld [vmem:[%s4 + $0x64c] sm:$0xff]
        %v6310 = vld [vmem:[%s4 + $0x654] sm:$0xf]
        %v6311 = vld [vmem:[%s4 + $0x658] sm:$0xff]
        %v6312 = vld [vmem:[%s4 + $0x660] sm:$0xff]
        %v6313 = vld [vmem:[%s4 + $0x668] sm:$0xff]
        %v6314 = vld [vmem:[%s4 + $0x670] sm:$0xf]
        %v6315 = vld [vmem:[%s4 + $0x674] sm:$0xff]
        %v6316 = vld [vmem:[%s4 + $0x67c] sm:$0xff]
        %v6317 = vld [vmem:[%s4 + $0x684] sm:$0xff]
        %v6318 = vld [vmem:[%s4 + $0x68c] sm:$0xf]
        %v6319 = vld [vmem:[%s4 + $0x690] sm:$0xff]
        %v6320 = vld [vmem:[%s4 + $0x698] sm:$0xff]
        %v6321 = vld [vmem:[%s4 + $0x6a0] sm:$0xff]
        %v6322 = vld [vmem:[%s4 + $0x6a8] sm:$0xf]
        %v6323 = vld [vmem:[%s4 + $0x6ac] sm:$0xff]
        %v6324 = vld [vmem:[%s4 + $0x6b4] sm:$0xff]
        %v6325 = vld [vmem:[%s4 + $0x6bc] sm:$0xff]
        %v6326 = vld [vmem:[%s4 + $0x6c4] sm:$0xf]
        %v6327 = vld [vmem:[%s4 + $0x6c8] sm:$0xff]
        %v6328 = vld [vmem:[%s4 + $0x6d0] sm:$0xff]
        %v6329 = vld [vmem:[%s4 + $0x6d8] sm:$0xff]
        %v6330 = vld [vmem:[%s4 + $0x6e0] sm:$0xf]
        %v6331 = vld [vmem:[%s4 + $0x6e4] sm:$0xff]
        %v6332 = vld [vmem:[%s4 + $0x6ec] sm:$0xff]
        %v6333 = vld [vmem:[%s4 + $0x6f4] sm:$0xff]
        %v6334 = vld [vmem:[%s4 + $0x6fc] sm:$0xf]
        %v6335 = vlaneseq
        %v6336 = vshrl.u32 %v6335, 7
        %v6337 = vsub.s32 6, %v6336
        %v6338 = vrot.slane %v245, %v6337
        %v6339 = vlaneseq
        %v6340 = vshrl.u32 %v6339, 7
        %v6341 = vsub.s32 6, %v6340
        %v6342 = vrot.slane %v246, %v6341
        %v6343 = vlaneseq
        %v6344 = vshrl.u32 %v6343, 7
        %v6345 = vsub.s32 6, %v6344
        %v6346 = vrot.slane %v247, %v6345
        %v6347 = vlaneseq
        %v6348 = vshrl.u32 %v6347, 7
        %v6349 = vsub.s32 6, %v6348
        %v6350 = vrot.slane %v248, %v6349
        %v6351 = vlaneseq
        %v6352 = vshrl.u32 %v6351, 7
        %v6353 = vsub.s32 6, %v6352
        %v6354 = vrot.slane %v249, %v6353
        %v6355 = vlaneseq
        %v6356 = vshrl.u32 %v6355, 7
        %v6357 = vsub.s32 6, %v6356
        %v6358 = vrot.slane %v250, %v6357
        %v6359 = vlaneseq
        %v6360 = vshrl.u32 %v6359, 7
        %v6361 = vsub.s32 6, %v6360
        %v6362 = vrot.slane %v251, %v6361
        %v6619 = vunpack.c.l.b16 %v6079
        %v6620 = vunpack.c.h.b16 %v6079
        %v6621 = vunpack.c.l.b16 %v6080
        %v6622 = vunpack.c.h.b16 %v6080
        %v6623 = vunpack.c.l.b16 %v6081
        %v6624 = vunpack.c.h.b16 %v6081
        %v6625 = vunpack.c.l.b16 %v6082
        %v6626 = vunpack.c.l.b16 %v6083
        %v6627 = vunpack.c.h.b16 %v6083
        %v6628 = vunpack.c.l.b16 %v6084
        %v6629 = vunpack.c.h.b16 %v6084
        %v6630 = vunpack.c.l.b16 %v6085
        %v6631 = vunpack.c.h.b16 %v6085
        %v6632 = vunpack.c.l.b16 %v6086
        %v6633 = vunpack.c.l.b16 %v6087
        %v6634 = vunpack.c.h.b16 %v6087
        %v6635 = vunpack.c.l.b16 %v6088
        %v6636 = vunpack.c.h.b16 %v6088
        %v6637 = vunpack.c.l.b16 %v6089
        %v6638 = vunpack.c.h.b16 %v6089
        %v6639 = vunpack.c.l.b16 %v6090
        %v6640 = vunpack.c.l.b16 %v6091
        %v6641 = vunpack.c.h.b16 %v6091
        %v6642 = vunpack.c.l.b16 %v6092
        %v6643 = vunpack.c.h.b16 %v6092
        %v6644 = vunpack.c.l.b16 %v6093
        %v6645 = vunpack.c.h.b16 %v6093
        %v6646 = vunpack.c.l.b16 %v6094
        %v6647 = vunpack.c.l.b16 %v6095
        %v6648 = vunpack.c.h.b16 %v6095
        %v6649 = vunpack.c.l.b16 %v6096
        %v6650 = vunpack.c.h.b16 %v6096
        %v6651 = vunpack.c.l.b16 %v6097
        %v6652 = vunpack.c.h.b16 %v6097
        %v6653 = vunpack.c.l.b16 %v6098
        %v6654 = vunpack.c.l.b16 %v6099
        %v6655 = vunpack.c.h.b16 %v6099
        %v6656 = vunpack.c.l.b16 %v6100
        %v6657 = vunpack.c.h.b16 %v6100
        %v6658 = vunpack.c.l.b16 %v6101
        %v6659 = vunpack.c.h.b16 %v6101
        %v6660 = vunpack.c.l.b16 %v6102
        %v6661 = vunpack.c.l.b16 %v6103
        %v6662 = vunpack.c.h.b16 %v6103
        %v6663 = vunpack.c.l.b16 %v6104
        %v6664 = vunpack.c.h.b16 %v6104
        %v6665 = vunpack.c.l.b16 %v6105
        %v6666 = vunpack.c.h.b16 %v6105
        %v6667 = vunpack.c.l.b16 %v6106
        %v6668 = vunpack.c.l.b16 %v6107
        %v6669 = vunpack.c.h.b16 %v6107
        %v6670 = vunpack.c.l.b16 %v6108
        %v6671 = vunpack.c.h.b16 %v6108
        %v6672 = vunpack.c.l.b16 %v6109
        %v6673 = vunpack.c.h.b16 %v6109
        %v6674 = vunpack.c.l.b16 %v6110
        %v6675 = vunpack.c.l.b16 %v6111
        %v6676 = vunpack.c.h.b16 %v6111
        %v6677 = vunpack.c.l.b16 %v6112
        %v6678 = vunpack.c.h.b16 %v6112
        %v6679 = vunpack.c.l.b16 %v6113
        %v6680 = vunpack.c.h.b16 %v6113
        %v6681 = vunpack.c.l.b16 %v6114
        %v6682 = vunpack.c.l.b16 %v6115
        %v6683 = vunpack.c.h.b16 %v6115
        %v6684 = vunpack.c.l.b16 %v6116
        %v6685 = vunpack.c.h.b16 %v6116
        %v6686 = vunpack.c.l.b16 %v6117
        %v6687 = vunpack.c.h.b16 %v6117
        %v6688 = vunpack.c.l.b16 %v6118
        %v6689 = vunpack.c.l.b16 %v6119
        %v6690 = vunpack.c.h.b16 %v6119
        %v6691 = vunpack.c.l.b16 %v6120
        %v6692 = vunpack.c.h.b16 %v6120
        %v6693 = vunpack.c.l.b16 %v6121
        %v6694 = vunpack.c.h.b16 %v6121
        %v6695 = vunpack.c.l.b16 %v6122
        %v6696 = vunpack.c.l.b16 %v6123
        %v6697 = vunpack.c.h.b16 %v6123
        %v6698 = vunpack.c.l.b16 %v6124
        %v6699 = vunpack.c.h.b16 %v6124
        %v6700 = vunpack.c.l.b16 %v6125
        %v6701 = vunpack.c.h.b16 %v6125
        %v6702 = vunpack.c.l.b16 %v6126
        %v6703 = vunpack.c.l.b16 %v6127
        %v6704 = vunpack.c.h.b16 %v6127
        %v6705 = vunpack.c.l.b16 %v6128
        %v6706 = vunpack.c.h.b16 %v6128
        %v6707 = vunpack.c.l.b16 %v6129
        %v6708 = vunpack.c.h.b16 %v6129
        %v6709 = vunpack.c.l.b16 %v6130
        %v6710 = vunpack.c.l.b16 %v6131
        %v6711 = vunpack.c.h.b16 %v6131
        %v6712 = vunpack.c.l.b16 %v6132
        %v6713 = vunpack.c.h.b16 %v6132
        %v6714 = vunpack.c.l.b16 %v6133
        %v6715 = vunpack.c.h.b16 %v6133
        %v6716 = vunpack.c.l.b16 %v6134
        %v6717 = vunpack.c.l.b16 %v6135
        %v6718 = vunpack.c.h.b16 %v6135
        %v6719 = vunpack.c.l.b16 %v6136
        %v6720 = vunpack.c.h.b16 %v6136
        %v6721 = vunpack.c.l.b16 %v6137
        %v6722 = vunpack.c.h.b16 %v6137
        %v6723 = vunpack.c.l.b16 %v6138
        %v6724 = vunpack.c.l.b16 %v6139
        %v6725 = vunpack.c.h.b16 %v6139
        %v6726 = vunpack.c.l.b16 %v6140
        %v6727 = vunpack.c.h.b16 %v6140
        %v6728 = vunpack.c.l.b16 %v6141
        %v6729 = vunpack.c.h.b16 %v6141
        %v6730 = vunpack.c.l.b16 %v6142
        %v6731 = vunpack.c.l.b16 %v6143
        %v6732 = vunpack.c.h.b16 %v6143
        %v6733 = vunpack.c.l.b16 %v6144
        %v6734 = vunpack.c.h.b16 %v6144
        %v6735 = vunpack.c.l.b16 %v6145
        %v6736 = vunpack.c.h.b16 %v6145
        %v6737 = vunpack.c.l.b16 %v6146
        %v6738 = vunpack.c.l.b16 %v6147
        %v6739 = vunpack.c.h.b16 %v6147
        %v6740 = vunpack.c.l.b16 %v6148
        %v6741 = vunpack.c.h.b16 %v6148
        %v6742 = vunpack.c.l.b16 %v6149
        %v6743 = vunpack.c.h.b16 %v6149
        %v6744 = vunpack.c.l.b16 %v6150
        %v6745 = vunpack.c.l.b16 %v6151
        %v6746 = vunpack.c.h.b16 %v6151
        %v6747 = vunpack.c.l.b16 %v6152
        %v6748 = vunpack.c.h.b16 %v6152
        %v6749 = vunpack.c.l.b16 %v6153
        %v6750 = vunpack.c.h.b16 %v6153
        %v6751 = vunpack.c.l.b16 %v6154
        %v6752 = vunpack.c.l.b16 %v6155
        %v6753 = vunpack.c.h.b16 %v6155
        %v6754 = vunpack.c.l.b16 %v6156
        %v6755 = vunpack.c.h.b16 %v6156
        %v6756 = vunpack.c.l.b16 %v6157
        %v6757 = vunpack.c.h.b16 %v6157
        %v6758 = vunpack.c.l.b16 %v6158
        %v6759 = vunpack.c.l.b16 %v6159
        %v6760 = vunpack.c.h.b16 %v6159
        %v6761 = vunpack.c.l.b16 %v6160
        %v6762 = vunpack.c.h.b16 %v6160
        %v6763 = vunpack.c.l.b16 %v6161
        %v6764 = vunpack.c.h.b16 %v6161
        %v6765 = vunpack.c.l.b16 %v6162
        %v6766 = vunpack.c.l.b16 %v6163
        %v6767 = vunpack.c.h.b16 %v6163
        %v6768 = vunpack.c.l.b16 %v6164
        %v6769 = vunpack.c.h.b16 %v6164
        %v6770 = vunpack.c.l.b16 %v6165
        %v6771 = vunpack.c.h.b16 %v6165
        %v6772 = vunpack.c.l.b16 %v6166
        %v6773 = vunpack.c.l.b16 %v6167
        %v6774 = vunpack.c.h.b16 %v6167
        %v6775 = vunpack.c.l.b16 %v6168
        %v6776 = vunpack.c.h.b16 %v6168
        %v6777 = vunpack.c.l.b16 %v6169
        %v6778 = vunpack.c.h.b16 %v6169
        %v6779 = vunpack.c.l.b16 %v6170
        %v6780 = vunpack.c.l.b16 %v6171
        %v6781 = vunpack.c.h.b16 %v6171
        %v6782 = vunpack.c.l.b16 %v6172
        %v6783 = vunpack.c.h.b16 %v6172
        %v6784 = vunpack.c.l.b16 %v6173
        %v6785 = vunpack.c.h.b16 %v6173
        %v6786 = vunpack.c.l.b16 %v6174
        %v6787 = vunpack.c.l.b16 %v6175
        %v6788 = vunpack.c.h.b16 %v6175
        %v6789 = vunpack.c.l.b16 %v6176
        %v6790 = vunpack.c.h.b16 %v6176
        %v6791 = vunpack.c.l.b16 %v6177
        %v6792 = vunpack.c.h.b16 %v6177
        %v6793 = vunpack.c.l.b16 %v6178
        %v6794 = vunpack.c.l.b16 %v6179
        %v6795 = vunpack.c.h.b16 %v6179
        %v6796 = vunpack.c.l.b16 %v6180
        %v6797 = vunpack.c.h.b16 %v6180
        %v6798 = vunpack.c.l.b16 %v6181
        %v6799 = vunpack.c.h.b16 %v6181
        %v6800 = vunpack.c.l.b16 %v6182
        %v6801 = vunpack.c.l.b16 %v6183
        %v6802 = vunpack.c.h.b16 %v6183
        %v6803 = vunpack.c.l.b16 %v6184
        %v6804 = vunpack.c.h.b16 %v6184
        %v6805 = vunpack.c.l.b16 %v6185
        %v6806 = vunpack.c.h.b16 %v6185
        %v6807 = vunpack.c.l.b16 %v6186
        %v6808 = vunpack.c.l.b16 %v6187
        %v6809 = vunpack.c.h.b16 %v6187
        %v6810 = vunpack.c.l.b16 %v6188
        %v6811 = vunpack.c.h.b16 %v6188
        %v6812 = vunpack.c.l.b16 %v6189
        %v6813 = vunpack.c.h.b16 %v6189
        %v6814 = vunpack.c.l.b16 %v6190
        %v6815 = vunpack.c.l.b16 %v6191
        %v6816 = vunpack.c.h.b16 %v6191
        %v6817 = vunpack.c.l.b16 %v6192
        %v6818 = vunpack.c.h.b16 %v6192
        %v6819 = vunpack.c.l.b16 %v6193
        %v6820 = vunpack.c.h.b16 %v6193
        %v6821 = vunpack.c.l.b16 %v6194
        %v6822 = vunpack.c.l.b16 %v6195
        %v6823 = vunpack.c.h.b16 %v6195
        %v6824 = vunpack.c.l.b16 %v6196
        %v6825 = vunpack.c.h.b16 %v6196
        %v6826 = vunpack.c.l.b16 %v6197
        %v6827 = vunpack.c.h.b16 %v6197
        %v6828 = vunpack.c.l.b16 %v6198
        %v6829 = vunpack.c.l.b16 %v6199
        %v6830 = vunpack.c.h.b16 %v6199
        %v6831 = vunpack.c.l.b16 %v6200
        %v6832 = vunpack.c.h.b16 %v6200
        %v6833 = vunpack.c.l.b16 %v6201
        %v6834 = vunpack.c.h.b16 %v6201
        %v6835 = vunpack.c.l.b16 %v6202
        %v6836 = vunpack.c.l.b16 %v6203
        %v6837 = vunpack.c.h.b16 %v6203
        %v6838 = vunpack.c.l.b16 %v6204
        %v6839 = vunpack.c.h.b16 %v6204
        %v6840 = vunpack.c.l.b16 %v6205
        %v6841 = vunpack.c.h.b16 %v6205
        %v6842 = vunpack.c.l.b16 %v6206
        %v6843 = vunpack.c.l.b16 %v6207
        %v6844 = vunpack.c.h.b16 %v6207
        %v6845 = vunpack.c.l.b16 %v6208
        %v6846 = vunpack.c.h.b16 %v6208
        %v6847 = vunpack.c.l.b16 %v6209
        %v6848 = vunpack.c.h.b16 %v6209
        %v6849 = vunpack.c.l.b16 %v6210
        %v6850 = vunpack.c.l.b16 %v6211
        %v6851 = vunpack.c.h.b16 %v6211
        %v6852 = vunpack.c.l.b16 %v6212
        %v6853 = vunpack.c.h.b16 %v6212
        %v6854 = vunpack.c.l.b16 %v6213
        %v6855 = vunpack.c.h.b16 %v6213
        %v6856 = vunpack.c.l.b16 %v6214
        %v6857 = vunpack.c.l.b16 %v6215
        %v6858 = vunpack.c.h.b16 %v6215
        %v6859 = vunpack.c.l.b16 %v6216
        %v6860 = vunpack.c.h.b16 %v6216
        %v6861 = vunpack.c.l.b16 %v6217
        %v6862 = vunpack.c.h.b16 %v6217
        %v6863 = vunpack.c.l.b16 %v6218
        %v6864 = vunpack.c.l.b16 %v6219
        %v6865 = vunpack.c.h.b16 %v6219
        %v6866 = vunpack.c.l.b16 %v6220
        %v6867 = vunpack.c.h.b16 %v6220
        %v6868 = vunpack.c.l.b16 %v6221
        %v6869 = vunpack.c.h.b16 %v6221
        %v6870 = vunpack.c.l.b16 %v6222
        %v6871 = vunpack.c.l.b16 %v6223
        %v6872 = vunpack.c.h.b16 %v6223
        %v6873 = vunpack.c.l.b16 %v6224
        %v6874 = vunpack.c.h.b16 %v6224
        %v6875 = vunpack.c.l.b16 %v6225
        %v6876 = vunpack.c.h.b16 %v6225
        %v6877 = vunpack.c.l.b16 %v6226
        %v6878 = vunpack.c.l.b16 %v6227
        %v6879 = vunpack.c.h.b16 %v6227
        %v6880 = vunpack.c.l.b16 %v6228
        %v6881 = vunpack.c.h.b16 %v6228
        %v6882 = vunpack.c.l.b16 %v6229
        %v6883 = vunpack.c.h.b16 %v6229
        %v6884 = vunpack.c.l.b16 %v6230
        %v6885 = vunpack.c.l.b16 %v6231
        %v6886 = vunpack.c.h.b16 %v6231
        %v6887 = vunpack.c.l.b16 %v6232
        %v6888 = vunpack.c.h.b16 %v6232
        %v6889 = vunpack.c.l.b16 %v6233
        %v6890 = vunpack.c.h.b16 %v6233
        %v6891 = vunpack.c.l.b16 %v6234
        %v6892 = vunpack.c.l.b16 %v6235
        %v6893 = vunpack.c.h.b16 %v6235
        %v6894 = vunpack.c.l.b16 %v6236
        %v6895 = vunpack.c.h.b16 %v6236
        %v6896 = vunpack.c.l.b16 %v6237
        %v6897 = vunpack.c.h.b16 %v6237
        %v6898 = vunpack.c.l.b16 %v6238
        %v6899 = vunpack.c.l.b16 %v6239
        %v6900 = vunpack.c.h.b16 %v6239
        %v6901 = vunpack.c.l.b16 %v6240
        %v6902 = vunpack.c.h.b16 %v6240
        %v6903 = vunpack.c.l.b16 %v6241
        %v6904 = vunpack.c.h.b16 %v6241
        %v6905 = vunpack.c.l.b16 %v6242
        %v6906 = vunpack.c.l.b16 %v6243
        %v6907 = vunpack.c.h.b16 %v6243
        %v6908 = vunpack.c.l.b16 %v6244
        %v6909 = vunpack.c.h.b16 %v6244
        %v6910 = vunpack.c.l.b16 %v6245
        %v6911 = vunpack.c.h.b16 %v6245
        %v6912 = vunpack.c.l.b16 %v6246
        %v6913 = vunpack.c.l.b16 %v6247
        %v6914 = vunpack.c.h.b16 %v6247
        %v6915 = vunpack.c.l.b16 %v6248
        %v6916 = vunpack.c.h.b16 %v6248
        %v6917 = vunpack.c.l.b16 %v6249
        %v6918 = vunpack.c.h.b16 %v6249
        %v6919 = vunpack.c.l.b16 %v6250
        %v6920 = vunpack.c.l.b16 %v6251
        %v6921 = vunpack.c.h.b16 %v6251
        %v6922 = vunpack.c.l.b16 %v6252
        %v6923 = vunpack.c.h.b16 %v6252
        %v6924 = vunpack.c.l.b16 %v6253
        %v6925 = vunpack.c.h.b16 %v6253
        %v6926 = vunpack.c.l.b16 %v6254
        %v6927 = vunpack.c.l.b16 %v6255
        %v6928 = vunpack.c.h.b16 %v6255
        %v6929 = vunpack.c.l.b16 %v6256
        %v6930 = vunpack.c.h.b16 %v6256
        %v6931 = vunpack.c.l.b16 %v6257
        %v6932 = vunpack.c.h.b16 %v6257
        %v6933 = vunpack.c.l.b16 %v6258
        %v6934 = vunpack.c.l.b16 %v6259
        %v6935 = vunpack.c.h.b16 %v6259
        %v6936 = vunpack.c.l.b16 %v6260
        %v6937 = vunpack.c.h.b16 %v6260
        %v6938 = vunpack.c.l.b16 %v6261
        %v6939 = vunpack.c.h.b16 %v6261
        %v6940 = vunpack.c.l.b16 %v6262
        %v6941 = vunpack.c.l.b16 %v6263
        %v6942 = vunpack.c.h.b16 %v6263
        %v6943 = vunpack.c.l.b16 %v6264
        %v6944 = vunpack.c.h.b16 %v6264
        %v6945 = vunpack.c.l.b16 %v6265
        %v6946 = vunpack.c.h.b16 %v6265
        %v6947 = vunpack.c.l.b16 %v6266
        %v6948 = vunpack.c.l.b16 %v6267
        %v6949 = vunpack.c.h.b16 %v6267
        %v6950 = vunpack.c.l.b16 %v6268
        %v6951 = vunpack.c.h.b16 %v6268
        %v6952 = vunpack.c.l.b16 %v6269
        %v6953 = vunpack.c.h.b16 %v6269
        %v6954 = vunpack.c.l.b16 %v6270
        %v6955 = vunpack.c.l.b16 %v6271
        %v6956 = vunpack.c.h.b16 %v6271
        %v6957 = vunpack.c.l.b16 %v6272
        %v6958 = vunpack.c.h.b16 %v6272
        %v6959 = vunpack.c.l.b16 %v6273
        %v6960 = vunpack.c.h.b16 %v6273
        %v6961 = vunpack.c.l.b16 %v6274
        %v6962 = vunpack.c.l.b16 %v6275
        %v6963 = vunpack.c.h.b16 %v6275
        %v6964 = vunpack.c.l.b16 %v6276
        %v6965 = vunpack.c.h.b16 %v6276
        %v6966 = vunpack.c.l.b16 %v6277
        %v6967 = vunpack.c.h.b16 %v6277
        %v6968 = vunpack.c.l.b16 %v6278
        %v6969 = vunpack.c.l.b16 %v6279
        %v6970 = vunpack.c.h.b16 %v6279
        %v6971 = vunpack.c.l.b16 %v6280
        %v6972 = vunpack.c.h.b16 %v6280
        %v6973 = vunpack.c.l.b16 %v6281
        %v6974 = vunpack.c.h.b16 %v6281
        %v6975 = vunpack.c.l.b16 %v6282
        %v6976 = vunpack.c.l.b16 %v6283
        %v6977 = vunpack.c.h.b16 %v6283
        %v6978 = vunpack.c.l.b16 %v6284
        %v6979 = vunpack.c.h.b16 %v6284
        %v6980 = vunpack.c.l.b16 %v6285
        %v6981 = vunpack.c.h.b16 %v6285
        %v6982 = vunpack.c.l.b16 %v6286
        %v6983 = vunpack.c.l.b16 %v6287
        %v6984 = vunpack.c.h.b16 %v6287
        %v6985 = vunpack.c.l.b16 %v6288
        %v6986 = vunpack.c.h.b16 %v6288
        %v6987 = vunpack.c.l.b16 %v6289
        %v6988 = vunpack.c.h.b16 %v6289
        %v6989 = vunpack.c.l.b16 %v6290
        %v6990 = vunpack.c.l.b16 %v6291
        %v6991 = vunpack.c.h.b16 %v6291
        %v6992 = vunpack.c.l.b16 %v6292
        %v6993 = vunpack.c.h.b16 %v6292
        %v6994 = vunpack.c.l.b16 %v6293
        %v6995 = vunpack.c.h.b16 %v6293
        %v6996 = vunpack.c.l.b16 %v6294
        %v6997 = vunpack.c.l.b16 %v6295
        %v6998 = vunpack.c.h.b16 %v6295
        %v6999 = vunpack.c.l.b16 %v6296
        %v7000 = vunpack.c.h.b16 %v6296
        %v7001 = vunpack.c.l.b16 %v6297
        %v7002 = vunpack.c.h.b16 %v6297
        %v7003 = vunpack.c.l.b16 %v6298
        %v7004 = vunpack.c.l.b16 %v6299
        %v7005 = vunpack.c.h.b16 %v6299
        %v7006 = vunpack.c.l.b16 %v6300
        %v7007 = vunpack.c.h.b16 %v6300
        %v7008 = vunpack.c.l.b16 %v6301
        %v7009 = vunpack.c.h.b16 %v6301
        %v7010 = vunpack.c.l.b16 %v6302
        %v7011 = vunpack.c.l.b16 %v6303
        %v7012 = vunpack.c.h.b16 %v6303
        %v7013 = vunpack.c.l.b16 %v6304
        %v7014 = vunpack.c.h.b16 %v6304
        %v7015 = vunpack.c.l.b16 %v6305
        %v7016 = vunpack.c.h.b16 %v6305
        %v7017 = vunpack.c.l.b16 %v6306
        %v7018 = vunpack.c.l.b16 %v6307
        %v7019 = vunpack.c.h.b16 %v6307
        %v7020 = vunpack.c.l.b16 %v6308
        %v7021 = vunpack.c.h.b16 %v6308
        %v7022 = vunpack.c.l.b16 %v6309
        %v7023 = vunpack.c.h.b16 %v6309
        %v7024 = vunpack.c.l.b16 %v6310
        %v7025 = vunpack.c.l.b16 %v6311
        %v7026 = vunpack.c.h.b16 %v6311
        %v7027 = vunpack.c.l.b16 %v6312
        %v7028 = vunpack.c.h.b16 %v6312
        %v7029 = vunpack.c.l.b16 %v6313
        %v7030 = vunpack.c.h.b16 %v6313
        %v7031 = vunpack.c.l.b16 %v6314
        %v7032 = vunpack.c.l.b16 %v6315
        %v7033 = vunpack.c.h.b16 %v6315
        %v7034 = vunpack.c.l.b16 %v6316
        %v7035 = vunpack.c.h.b16 %v6316
        %v7036 = vunpack.c.l.b16 %v6317
        %v7037 = vunpack.c.h.b16 %v6317
        %v7038 = vunpack.c.l.b16 %v6318
        %v7039 = vunpack.c.l.b16 %v6319
        %v7040 = vunpack.c.h.b16 %v6319
        %v7041 = vunpack.c.l.b16 %v6320
        %v7042 = vunpack.c.h.b16 %v6320
        %v7043 = vunpack.c.l.b16 %v6321
        %v7044 = vunpack.c.h.b16 %v6321
        %v7045 = vunpack.c.l.b16 %v6322
        %v7046 = vunpack.c.l.b16 %v6323
        %v7047 = vunpack.c.h.b16 %v6323
        %v7048 = vunpack.c.l.b16 %v6324
        %v7049 = vunpack.c.h.b16 %v6324
        %v7050 = vunpack.c.l.b16 %v6325
        %v7051 = vunpack.c.h.b16 %v6325
        %v7052 = vunpack.c.l.b16 %v6326
        %v7053 = vunpack.c.l.b16 %v6327
        %v7054 = vunpack.c.h.b16 %v6327
        %v7055 = vunpack.c.l.b16 %v6328
        %v7056 = vunpack.c.h.b16 %v6328
        %v7057 = vunpack.c.l.b16 %v6329
        %v7058 = vunpack.c.h.b16 %v6329
        %v7059 = vunpack.c.l.b16 %v6330
        %v7060 = vunpack.c.l.b16 %v6331
        %v7061 = vunpack.c.h.b16 %v6331
        %v7062 = vunpack.c.l.b16 %v6332
        %v7063 = vunpack.c.h.b16 %v6332
        %v7064 = vunpack.c.l.b16 %v6333
        %v7065 = vunpack.c.h.b16 %v6333
        %v7066 = vunpack.c.l.b16 %v6334
        %v7067 = vpack.c.b16 %v6626, %v6619
        %v7068 = vpack.c.b16 %v6627, %v6620
        %v7069 = vpack.c.b16 %v6628, %v6621
        %v7070 = vpack.c.b16 %v6629, %v6622
        %v7071 = vpack.c.b16 %v6630, %v6623
        %v7072 = vpack.c.b16 %v6631, %v6624
        %v7073 = vpack.c.b16 %v6632, %v6625
        %v7074 = vpack.c.b16 %v6640, %v6633
        %v7075 = vpack.c.b16 %v6641, %v6634
        %v7076 = vpack.c.b16 %v6642, %v6635
        %v7077 = vpack.c.b16 %v6643, %v6636
        %v7078 = vpack.c.b16 %v6644, %v6637
        %v7079 = vpack.c.b16 %v6645, %v6638
        %v7080 = vpack.c.b16 %v6646, %v6639
        %v7081 = vpack.c.b16 %v6654, %v6647
        %v7082 = vpack.c.b16 %v6655, %v6648
        %v7083 = vpack.c.b16 %v6656, %v6649
        %v7084 = vpack.c.b16 %v6657, %v6650
        %v7085 = vpack.c.b16 %v6658, %v6651
        %v7086 = vpack.c.b16 %v6659, %v6652
        %v7087 = vpack.c.b16 %v6660, %v6653
        %v7088 = vpack.c.b16 %v6668, %v6661
        %v7089 = vpack.c.b16 %v6669, %v6662
        %v7090 = vpack.c.b16 %v6670, %v6663
        %v7091 = vpack.c.b16 %v6671, %v6664
        %v7092 = vpack.c.b16 %v6672, %v6665
        %v7093 = vpack.c.b16 %v6673, %v6666
        %v7094 = vpack.c.b16 %v6674, %v6667
        %v7095 = vpack.c.b16 %v6682, %v6675
        %v7096 = vpack.c.b16 %v6683, %v6676
        %v7097 = vpack.c.b16 %v6684, %v6677
        %v7098 = vpack.c.b16 %v6685, %v6678
        %v7099 = vpack.c.b16 %v6686, %v6679
        %v7100 = vpack.c.b16 %v6687, %v6680
        %v7101 = vpack.c.b16 %v6688, %v6681
        %v7102 = vpack.c.b16 %v6696, %v6689
        %v7103 = vpack.c.b16 %v6697, %v6690
        %v7104 = vpack.c.b16 %v6698, %v6691
        %v7105 = vpack.c.b16 %v6699, %v6692
        %v7106 = vpack.c.b16 %v6700, %v6693
        %v7107 = vpack.c.b16 %v6701, %v6694
        %v7108 = vpack.c.b16 %v6702, %v6695
        %v7109 = vpack.c.b16 %v6710, %v6703
        %v7110 = vpack.c.b16 %v6711, %v6704
        %v7111 = vpack.c.b16 %v6712, %v6705
        %v7112 = vpack.c.b16 %v6713, %v6706
        %v7113 = vpack.c.b16 %v6714, %v6707
        %v7114 = vpack.c.b16 %v6715, %v6708
        %v7115 = vpack.c.b16 %v6716, %v6709
        %v7116 = vpack.c.b16 %v6724, %v6717
        %v7117 = vpack.c.b16 %v6725, %v6718
        %v7118 = vpack.c.b16 %v6726, %v6719
        %v7119 = vpack.c.b16 %v6727, %v6720
        %v7120 = vpack.c.b16 %v6728, %v6721
        %v7121 = vpack.c.b16 %v6729, %v6722
        %v7122 = vpack.c.b16 %v6730, %v6723
        %v7123 = vpack.c.b16 %v6738, %v6731
        %v7124 = vpack.c.b16 %v6739, %v6732
        %v7125 = vpack.c.b16 %v6740, %v6733
        %v7126 = vpack.c.b16 %v6741, %v6734
        %v7127 = vpack.c.b16 %v6742, %v6735
        %v7128 = vpack.c.b16 %v6743, %v6736
        %v7129 = vpack.c.b16 %v6744, %v6737
        %v7130 = vpack.c.b16 %v6752, %v6745
        %v7131 = vpack.c.b16 %v6753, %v6746
        %v7132 = vpack.c.b16 %v6754, %v6747
        %v7133 = vpack.c.b16 %v6755, %v6748
        %v7134 = vpack.c.b16 %v6756, %v6749
        %v7135 = vpack.c.b16 %v6757, %v6750
        %v7136 = vpack.c.b16 %v6758, %v6751
        %v7137 = vpack.c.b16 %v6766, %v6759
        %v7138 = vpack.c.b16 %v6767, %v6760
        %v7139 = vpack.c.b16 %v6768, %v6761
        %v7140 = vpack.c.b16 %v6769, %v6762
        %v7141 = vpack.c.b16 %v6770, %v6763
        %v7142 = vpack.c.b16 %v6771, %v6764
        %v7143 = vpack.c.b16 %v6772, %v6765
        %v7144 = vpack.c.b16 %v6780, %v6773
        %v7145 = vpack.c.b16 %v6781, %v6774
        %v7146 = vpack.c.b16 %v6782, %v6775
        %v7147 = vpack.c.b16 %v6783, %v6776
        %v7148 = vpack.c.b16 %v6784, %v6777
        %v7149 = vpack.c.b16 %v6785, %v6778
        %v7150 = vpack.c.b16 %v6786, %v6779
        %v7151 = vpack.c.b16 %v6794, %v6787
        %v7152 = vpack.c.b16 %v6795, %v6788
        %v7153 = vpack.c.b16 %v6796, %v6789
        %v7154 = vpack.c.b16 %v6797, %v6790
        %v7155 = vpack.c.b16 %v6798, %v6791
        %v7156 = vpack.c.b16 %v6799, %v6792
        %v7157 = vpack.c.b16 %v6800, %v6793
        %v7158 = vpack.c.b16 %v6808, %v6801
        %v7159 = vpack.c.b16 %v6809, %v6802
        %v7160 = vpack.c.b16 %v6810, %v6803
        %v7161 = vpack.c.b16 %v6811, %v6804
        %v7162 = vpack.c.b16 %v6812, %v6805
        %v7163 = vpack.c.b16 %v6813, %v6806
        %v7164 = vpack.c.b16 %v6814, %v6807
        %v7165 = vpack.c.b16 %v6822, %v6815
        %v7166 = vpack.c.b16 %v6823, %v6816
        %v7167 = vpack.c.b16 %v6824, %v6817
        %v7168 = vpack.c.b16 %v6825, %v6818
        %v7169 = vpack.c.b16 %v6826, %v6819
        %v7170 = vpack.c.b16 %v6827, %v6820
        %v7171 = vpack.c.b16 %v6828, %v6821
        %v7172 = vpack.c.b16 %v6836, %v6829
        %v7173 = vpack.c.b16 %v6837, %v6830
        %v7174 = vpack.c.b16 %v6838, %v6831
        %v7175 = vpack.c.b16 %v6839, %v6832
        %v7176 = vpack.c.b16 %v6840, %v6833
        %v7177 = vpack.c.b16 %v6841, %v6834
        %v7178 = vpack.c.b16 %v6842, %v6835
        %v7179 = vpack.c.b16 %v6850, %v6843
        %v7180 = vpack.c.b16 %v6851, %v6844
        %v7181 = vpack.c.b16 %v6852, %v6845
        %v7182 = vpack.c.b16 %v6853, %v6846
        %v7183 = vpack.c.b16 %v6854, %v6847
        %v7184 = vpack.c.b16 %v6855, %v6848
        %v7185 = vpack.c.b16 %v6856, %v6849
        %v7186 = vpack.c.b16 %v6864, %v6857
        %v7187 = vpack.c.b16 %v6865, %v6858
        %v7188 = vpack.c.b16 %v6866, %v6859
        %v7189 = vpack.c.b16 %v6867, %v6860
        %v7190 = vpack.c.b16 %v6868, %v6861
        %v7191 = vpack.c.b16 %v6869, %v6862
        %v7192 = vpack.c.b16 %v6870, %v6863
        %v7193 = vpack.c.b16 %v6878, %v6871
        %v7194 = vpack.c.b16 %v6879, %v6872
        %v7195 = vpack.c.b16 %v6880, %v6873
        %v7196 = vpack.c.b16 %v6881, %v6874
        %v7197 = vpack.c.b16 %v6882, %v6875
        %v7198 = vpack.c.b16 %v6883, %v6876
        %v7199 = vpack.c.b16 %v6884, %v6877
        %v7200 = vpack.c.b16 %v6892, %v6885
        %v7201 = vpack.c.b16 %v6893, %v6886
        %v7202 = vpack.c.b16 %v6894, %v6887
        %v7203 = vpack.c.b16 %v6895, %v6888
        %v7204 = vpack.c.b16 %v6896, %v6889
        %v7205 = vpack.c.b16 %v6897, %v6890
        %v7206 = vpack.c.b16 %v6898, %v6891
        %v7207 = vpack.c.b16 %v6906, %v6899
        %v7208 = vpack.c.b16 %v6907, %v6900
        %v7209 = vpack.c.b16 %v6908, %v6901
        %v7210 = vpack.c.b16 %v6909, %v6902
        %v7211 = vpack.c.b16 %v6910, %v6903
        %v7212 = vpack.c.b16 %v6911, %v6904
        %v7213 = vpack.c.b16 %v6912, %v6905
        %v7214 = vpack.c.b16 %v6920, %v6913
        %v7215 = vpack.c.b16 %v6921, %v6914
        %v7216 = vpack.c.b16 %v6922, %v6915
        %v7217 = vpack.c.b16 %v6923, %v6916
        %v7218 = vpack.c.b16 %v6924, %v6917
        %v7219 = vpack.c.b16 %v6925, %v6918
        %v7220 = vpack.c.b16 %v6926, %v6919
        %v7221 = vpack.c.b16 %v6934, %v6927
        %v7222 = vpack.c.b16 %v6935, %v6928
        %v7223 = vpack.c.b16 %v6936, %v6929
        %v7224 = vpack.c.b16 %v6937, %v6930
        %v7225 = vpack.c.b16 %v6938, %v6931
        %v7226 = vpack.c.b16 %v6939, %v6932
        %v7227 = vpack.c.b16 %v6940, %v6933
        %v7228 = vpack.c.b16 %v6948, %v6941
        %v7229 = vpack.c.b16 %v6949, %v6942
        %v7230 = vpack.c.b16 %v6950, %v6943
        %v7231 = vpack.c.b16 %v6951, %v6944
        %v7232 = vpack.c.b16 %v6952, %v6945
        %v7233 = vpack.c.b16 %v6953, %v6946
        %v7234 = vpack.c.b16 %v6954, %v6947
        %v7235 = vpack.c.b16 %v6962, %v6955
        %v7236 = vpack.c.b16 %v6963, %v6956
        %v7237 = vpack.c.b16 %v6964, %v6957
        %v7238 = vpack.c.b16 %v6965, %v6958
        %v7239 = vpack.c.b16 %v6966, %v6959
        %v7240 = vpack.c.b16 %v6967, %v6960
        %v7241 = vpack.c.b16 %v6968, %v6961
        %v7242 = vpack.c.b16 %v6976, %v6969
        %v7243 = vpack.c.b16 %v6977, %v6970
        %v7244 = vpack.c.b16 %v6978, %v6971
        %v7245 = vpack.c.b16 %v6979, %v6972
        %v7246 = vpack.c.b16 %v6980, %v6973
        %v7247 = vpack.c.b16 %v6981, %v6974
        %v7248 = vpack.c.b16 %v6982, %v6975
        %v7249 = vpack.c.b16 %v6990, %v6983
        %v7250 = vpack.c.b16 %v6991, %v6984
        %v7251 = vpack.c.b16 %v6992, %v6985
        %v7252 = vpack.c.b16 %v6993, %v6986
        %v7253 = vpack.c.b16 %v6994, %v6987
        %v7254 = vpack.c.b16 %v6995, %v6988
        %v7255 = vpack.c.b16 %v6996, %v6989
        %v7256 = vpack.c.b16 %v7004, %v6997
        %v7257 = vpack.c.b16 %v7005, %v6998
        %v7258 = vpack.c.b16 %v7006, %v6999
        %v7259 = vpack.c.b16 %v7007, %v7000
        %v7260 = vpack.c.b16 %v7008, %v7001
        %v7261 = vpack.c.b16 %v7009, %v7002
        %v7262 = vpack.c.b16 %v7010, %v7003
        %v7263 = vpack.c.b16 %v7018, %v7011
        %v7264 = vpack.c.b16 %v7019, %v7012
        %v7265 = vpack.c.b16 %v7020, %v7013
        %v7266 = vpack.c.b16 %v7021, %v7014
        %v7267 = vpack.c.b16 %v7022, %v7015
        %v7268 = vpack.c.b16 %v7023, %v7016
        %v7269 = vpack.c.b16 %v7024, %v7017
        %v7270 = vpack.c.b16 %v7032, %v7025
        %v7271 = vpack.c.b16 %v7033, %v7026
        %v7272 = vpack.c.b16 %v7034, %v7027
        %v7273 = vpack.c.b16 %v7035, %v7028
        %v7274 = vpack.c.b16 %v7036, %v7029
        %v7275 = vpack.c.b16 %v7037, %v7030
        %v7276 = vpack.c.b16 %v7038, %v7031
        %v7277 = vpack.c.b16 %v7046, %v7039
        %v7278 = vpack.c.b16 %v7047, %v7040
        %v7279 = vpack.c.b16 %v7048, %v7041
        %v7280 = vpack.c.b16 %v7049, %v7042
        %v7281 = vpack.c.b16 %v7050, %v7043
        %v7282 = vpack.c.b16 %v7051, %v7044
        %v7283 = vpack.c.b16 %v7052, %v7045
        %v7284 = vpack.c.b16 %v7060, %v7053
        %v7285 = vpack.c.b16 %v7061, %v7054
        %v7286 = vpack.c.b16 %v7062, %v7055
        %v7287 = vpack.c.b16 %v7063, %v7056
        %v7288 = vpack.c.b16 %v7064, %v7057
        %v7289 = vpack.c.b16 %v7065, %v7058
        %v7290 = vpack.c.b16 %v7066, %v7059
        %7515 = vmatprep.subr.bf16.mxu0 %v7068
        %7516 = vmatpush1.bf16.msra.mxu0 %v7067
        %7517 = vmatprep.subr.bf16.mxu0 %v7075
        %7518 = vmatpush1.bf16.msra.mxu0 %v7074
        %7519 = vmatprep.subr.bf16.mxu0 %v7082
        %7520 = vmatpush1.bf16.msra.mxu0 %v7081
        %7521 = vmatprep.subr.bf16.mxu0 %v7089
        %7522 = vmatpush1.bf16.msra.mxu0 %v7088
        %7523 = vmatprep.subr.bf16.mxu0 %v7096
        %7524 = vmatpush1.bf16.msra.mxu0 %v7095
        %7525 = vmatprep.subr.bf16.mxu0 %v7103
        %7526 = vmatpush1.bf16.msra.mxu0 %v7102
        %7527 = vmatprep.subr.bf16.mxu0 %v7110
        %7528 = vmatpush1.bf16.msra.mxu0 %v7109
        %7529 = vmatprep.subr.bf16.mxu0 %v7117
        %7530 = vmatpush1.bf16.msra.mxu0 %v7116
        %7531 = vmatprep.subr.bf16.mxu0 %v7124
        %7532 = vmatpush1.bf16.msra.mxu0 %v7123
        %7533 = vmatprep.subr.bf16.mxu0 %v7131
        %7534 = vmatpush1.bf16.msra.mxu0 %v7130
        %7535 = vmatprep.subr.bf16.mxu0 %v7138
        %7536 = vmatpush1.bf16.msra.mxu0 %v7137
        %7537 = vmatprep.subr.bf16.mxu0 %v7145
        %7538 = vmatpush1.bf16.msra.mxu0 %v7144
        %7539 = vmatprep.subr.bf16.mxu0 %v7152
        %7540 = vmatpush1.bf16.msra.mxu0 %v7151
        %7541 = vmatprep.subr.bf16.mxu0 %v7159
        %7542 = vmatpush1.bf16.msra.mxu0 %v7158
        %7543 = vmatprep.subr.bf16.mxu0 %v7166
        %7544 = vmatpush1.bf16.msra.mxu0 %v7165
        %7545 = vmatprep.subr.bf16.mxu0 %v7173
        %7546 = vmatpush1.bf16.msra.mxu0 %v7172
        %7547 = vmatprep.mubr.bf16.mxu0 %v6076
        %7548 = vmatmul.mubr.bf16.gmra.mrb[0].mxu0 %v6075
        %v7549 = vpop.f32.mrb[0].mxu0
        %v7550 = vadd.f32 %v6338, %v7549
        %v7551 = vpop.f32.mrb[0].mxu0
        %v7552 = vadd.f32 %v6342, %v7551
        %v7553 = vpop.f32.mrb[0].mxu0
        %v7554 = vpop.f32.mrb[0].mxu0
        %7555 = vdwg.mxu0
        %7556 = vmatprep.subr.bf16.mxu0 %v7180
        %7557 = vmatpush1.bf16.msra.mxu0 %v7179
        %7558 = vmatprep.subr.bf16.mxu0 %v7187
        %7559 = vmatpush1.bf16.msra.mxu0 %v7186
        %7560 = vmatprep.subr.bf16.mxu0 %v7194
        %7561 = vmatpush1.bf16.msra.mxu0 %v7193
        %7562 = vmatprep.subr.bf16.mxu0 %v7201
        %7563 = vmatpush1.bf16.msra.mxu0 %v7200
        %7564 = vmatprep.subr.bf16.mxu0 %v7208
        %7565 = vmatpush1.bf16.msra.mxu0 %v7207
        %7566 = vmatprep.subr.bf16.mxu0 %v7215
        %7567 = vmatpush1.bf16.msra.mxu0 %v7214
        %7568 = vmatprep.subr.bf16.mxu0 %v7222
        %7569 = vmatpush1.bf16.msra.mxu0 %v7221
        %7570 = vmatprep.subr.bf16.mxu0 %v7229
        %7571 = vmatpush1.bf16.msra.mxu0 %v7228
        %7572 = vmatprep.subr.bf16.mxu0 %v7236
        %7573 = vmatpush1.bf16.msra.mxu0 %v7235
        %7574 = vmatprep.subr.bf16.mxu0 %v7243
        %7575 = vmatpush1.bf16.msra.mxu0 %v7242
        %7576 = vmatprep.subr.bf16.mxu0 %v7250
        %7577 = vmatpush1.bf16.msra.mxu0 %v7249
        %7578 = vmatprep.subr.bf16.mxu0 %v7257
        %7579 = vmatpush1.bf16.msra.mxu0 %v7256
        %7580 = vmatprep.subr.bf16.mxu0 %v7264
        %7581 = vmatpush1.bf16.msra.mxu0 %v7263
        %7582 = vmatprep.subr.bf16.mxu0 %v7271
        %7583 = vmatpush1.bf16.msra.mxu0 %v7270
        %7584 = vmatprep.subr.bf16.mxu0 %v7278
        %7585 = vmatpush1.bf16.msra.mxu0 %v7277
        %7586 = vmatprep.subr.bf16.mxu0 %v7285
        %7587 = vmatpush1.bf16.msra.mxu0 %v7284
        %7588 = vmatprep.mubr.bf16.mxu0 %v6078
        %7589 = vmatmul.mubr.bf16.gmra.mrb[0].mxu0 %v6077
        %v7590 = vpop.f32.mrb[0].mxu0
        %v7591 = vadd.f32 %v7550, %v7590
        %v7592 = vpop.f32.mrb[0].mxu0
        %v7593 = vadd.f32 %v7552, %v7592
        %v7594 = vpop.f32.mrb[0].mxu0
        %v7595 = vpop.f32.mrb[0].mxu0
        %7596 = vdwg.mxu0
        %7597 = vmatprep.subr.bf16.mxu0 %v7070
        %7598 = vmatpush1.bf16.msra.mxu0 %v7069
        %7599 = vmatprep.subr.bf16.mxu0 %v7077
        %7600 = vmatpush1.bf16.msra.mxu0 %v7076
        %7601 = vmatprep.subr.bf16.mxu0 %v7084
        %7602 = vmatpush1.bf16.msra.mxu0 %v7083
        %7603 = vmatprep.subr.bf16.mxu0 %v7091
        %7604 = vmatpush1.bf16.msra.mxu0 %v7090
        %7605 = vmatprep.subr.bf16.mxu0 %v7098
        %7606 = vmatpush1.bf16.msra.mxu0 %v7097
        %7607 = vmatprep.subr.bf16.mxu0 %v7105
        %7608 = vmatpush1.bf16.msra.mxu0 %v7104
        %7609 = vmatprep.subr.bf16.mxu0 %v7112
        %7610 = vmatpush1.bf16.msra.mxu0 %v7111
        %7611 = vmatprep.subr.bf16.mxu0 %v7119
        %7612 = vmatpush1.bf16.msra.mxu0 %v7118
        %7613 = vmatprep.subr.bf16.mxu0 %v7126
        %7614 = vmatpush1.bf16.msra.mxu0 %v7125
        %7615 = vmatprep.subr.bf16.mxu0 %v7133
        %7616 = vmatpush1.bf16.msra.mxu0 %v7132
        %7617 = vmatprep.subr.bf16.mxu0 %v7140
        %7618 = vmatpush1.bf16.msra.mxu0 %v7139
        %7619 = vmatprep.subr.bf16.mxu0 %v7147
        %7620 = vmatpush1.bf16.msra.mxu0 %v7146
        %7621 = vmatprep.subr.bf16.mxu0 %v7154
        %7622 = vmatpush1.bf16.msra.mxu0 %v7153
        %7623 = vmatprep.subr.bf16.mxu0 %v7161
        %7624 = vmatpush1.bf16.msra.mxu0 %v7160
        %7625 = vmatprep.subr.bf16.mxu0 %v7168
        %7626 = vmatpush1.bf16.msra.mxu0 %v7167
        %7627 = vmatprep.subr.bf16.mxu0 %v7175
        %7628 = vmatpush1.bf16.msra.mxu0 %v7174
        %7629 = vmatprep.mubr.bf16.mxu0 %v6076
        %7630 = vmatmul.mubr.bf16.gmra.mrb[0].mxu0 %v6075
        %v7631 = vpop.f32.mrb[0].mxu0
        %v7632 = vadd.f32 %v6346, %v7631
        %v7633 = vpop.f32.mrb[0].mxu0
        %v7634 = vadd.f32 %v6350, %v7633
        %v7635 = vpop.f32.mrb[0].mxu0
        %v7636 = vpop.f32.mrb[0].mxu0
        %7637 = vdwg.mxu0
        %7638 = vmatprep.subr.bf16.mxu0 %v7182
        %7639 = vmatpush1.bf16.msra.mxu0 %v7181
        %7640 = vmatprep.subr.bf16.mxu0 %v7189
        %7641 = vmatpush1.bf16.msra.mxu0 %v7188
        %7642 = vmatprep.subr.bf16.mxu0 %v7196
        %7643 = vmatpush1.bf16.msra.mxu0 %v7195
        %7644 = vmatprep.subr.bf16.mxu0 %v7203
        %7645 = vmatpush1.bf16.msra.mxu0 %v7202
        %7646 = vmatprep.subr.bf16.mxu0 %v7210
        %7647 = vmatpush1.bf16.msra.mxu0 %v7209
        %7648 = vmatprep.subr.bf16.mxu0 %v7217
        %7649 = vmatpush1.bf16.msra.mxu0 %v7216
        %7650 = vmatprep.subr.bf16.mxu0 %v7224
        %7651 = vmatpush1.bf16.msra.mxu0 %v7223
        %7652 = vmatprep.subr.bf16.mxu0 %v7231
        %7653 = vmatpush1.bf16.msra.mxu0 %v7230
        %7654 = vmatprep.subr.bf16.mxu0 %v7238
        %7655 = vmatpush1.bf16.msra.mxu0 %v7237
        %7656 = vmatprep.subr.bf16.mxu0 %v7245
        %7657 = vmatpush1.bf16.msra.mxu0 %v7244
        %7658 = vmatprep.subr.bf16.mxu0 %v7252
        %7659 = vmatpush1.bf16.msra.mxu0 %v7251
        %7660 = vmatprep.subr.bf16.mxu0 %v7259
        %7661 = vmatpush1.bf16.msra.mxu0 %v7258
        %7662 = vmatprep.subr.bf16.mxu0 %v7266
        %7663 = vmatpush1.bf16.msra.mxu0 %v7265
        %7664 = vmatprep.subr.bf16.mxu0 %v7273
        %7665 = vmatpush1.bf16.msra.mxu0 %v7272
        %7666 = vmatprep.subr.bf16.mxu0 %v7280
        %7667 = vmatpush1.bf16.msra.mxu0 %v7279
        %7668 = vmatprep.subr.bf16.mxu0 %v7287
        %7669 = vmatpush1.bf16.msra.mxu0 %v7286
        %7670 = vmatprep.mubr.bf16.mxu0 %v6078
        %7671 = vmatmul.mubr.bf16.gmra.mrb[0].mxu0 %v6077
        %v7672 = vpop.f32.mrb[0].mxu0
        %v7673 = vadd.f32 %v7632, %v7672
        %v7674 = vpop.f32.mrb[0].mxu0
        %v7675 = vadd.f32 %v7634, %v7674
        %v7676 = vpop.f32.mrb[0].mxu0
        %v7677 = vpop.f32.mrb[0].mxu0
        %7678 = vdwg.mxu0
        %7679 = vmatprep.subr.bf16.mxu0 %v7072
        %7680 = vmatpush1.bf16.msra.mxu0 %v7071
        %7681 = vmatprep.subr.bf16.mxu0 %v7079
        %7682 = vmatpush1.bf16.msra.mxu0 %v7078
        %7683 = vmatprep.subr.bf16.mxu0 %v7086
        %7684 = vmatpush1.bf16.msra.mxu0 %v7085
        %7685 = vmatprep.subr.bf16.mxu0 %v7093
        %7686 = vmatpush1.bf16.msra.mxu0 %v7092
        %7687 = vmatprep.subr.bf16.mxu0 %v7100
        %7688 = vmatpush1.bf16.msra.mxu0 %v7099
        %7689 = vmatprep.subr.bf16.mxu0 %v7107
        %7690 = vmatpush1.bf16.msra.mxu0 %v7106
        %7691 = vmatprep.subr.bf16.mxu0 %v7114
        %7692 = vmatpush1.bf16.msra.mxu0 %v7113
        %7693 = vmatprep.subr.bf16.mxu0 %v7121
        %7694 = vmatpush1.bf16.msra.mxu0 %v7120
        %7695 = vmatprep.subr.bf16.mxu0 %v7128
        %7696 = vmatpush1.bf16.msra.mxu0 %v7127
        %7697 = vmatprep.subr.bf16.mxu0 %v7135
        %7698 = vmatpush1.bf16.msra.mxu0 %v7134
        %7699 = vmatprep.subr.bf16.mxu0 %v7142
        %7700 = vmatpush1.bf16.msra.mxu0 %v7141
        %7701 = vmatprep.subr.bf16.mxu0 %v7149
        %7702 = vmatpush1.bf16.msra.mxu0 %v7148
        %7703 = vmatprep.subr.bf16.mxu0 %v7156
        %7704 = vmatpush1.bf16.msra.mxu0 %v7155
        %7705 = vmatprep.subr.bf16.mxu0 %v7163
        %7706 = vmatpush1.bf16.msra.mxu0 %v7162
        %7707 = vmatprep.subr.bf16.mxu0 %v7170
        %7708 = vmatpush1.bf16.msra.mxu0 %v7169
        %7709 = vmatprep.subr.bf16.mxu0 %v7177
        %7710 = vmatpush1.bf16.msra.mxu0 %v7176
        %7711 = vmatprep.mubr.bf16.mxu0 %v6076
        %7712 = vmatmul.mubr.bf16.gmra.mrb[0].mxu0 %v6075
        %v7713 = vpop.f32.mrb[0].mxu0
        %v7714 = vadd.f32 %v6354, %v7713
        %v7715 = vpop.f32.mrb[0].mxu0
        %v7716 = vadd.f32 %v6358, %v7715
        %v7717 = vpop.f32.mrb[0].mxu0
        %v7718 = vpop.f32.mrb[0].mxu0
        %7719 = vdwg.mxu0
        %7720 = vmatprep.subr.bf16.mxu0 %v7184
        %7721 = vmatpush1.bf16.msra.mxu0 %v7183
        %7722 = vmatprep.subr.bf16.mxu0 %v7191
        %7723 = vmatpush1.bf16.msra.mxu0 %v7190
        %7724 = vmatprep.subr.bf16.mxu0 %v7198
        %7725 = vmatpush1.bf16.msra.mxu0 %v7197
        %7726 = vmatprep.subr.bf16.mxu0 %v7205
        %7727 = vmatpush1.bf16.msra.mxu0 %v7204
        %7728 = vmatprep.subr.bf16.mxu0 %v7212
        %7729 = vmatpush1.bf16.msra.mxu0 %v7211
        %7730 = vmatprep.subr.bf16.mxu0 %v7219
        %7731 = vmatpush1.bf16.msra.mxu0 %v7218
        %7732 = vmatprep.subr.bf16.mxu0 %v7226
        %7733 = vmatpush1.bf16.msra.mxu0 %v7225
        %7734 = vmatprep.subr.bf16.mxu0 %v7233
        %7735 = vmatpush1.bf16.msra.mxu0 %v7232
        %7736 = vmatprep.subr.bf16.mxu0 %v7240
        %7737 = vmatpush1.bf16.msra.mxu0 %v7239
        %7738 = vmatprep.subr.bf16.mxu0 %v7247
        %7739 = vmatpush1.bf16.msra.mxu0 %v7246
        %7740 = vmatprep.subr.bf16.mxu0 %v7254
        %7741 = vmatpush1.bf16.msra.mxu0 %v7253
        %7742 = vmatprep.subr.bf16.mxu0 %v7261
        %7743 = vmatpush1.bf16.msra.mxu0 %v7260
        %7744 = vmatprep.subr.bf16.mxu0 %v7268
        %7745 = vmatpush1.bf16.msra.mxu0 %v7267
        %7746 = vmatprep.subr.bf16.mxu0 %v7275
        %7747 = vmatpush1.bf16.msra.mxu0 %v7274
        %7748 = vmatprep.subr.bf16.mxu0 %v7282
        %7749 = vmatpush1.bf16.msra.mxu0 %v7281
        %7750 = vmatprep.subr.bf16.mxu0 %v7289
        %7751 = vmatpush1.bf16.msra.mxu0 %v7288
        %7752 = vmatprep.mubr.bf16.mxu0 %v6078
        %7753 = vmatmul.mubr.bf16.gmra.mrb[0].mxu0 %v6077
        %v7754 = vpop.f32.mrb[0].mxu0
        %v7755 = vadd.f32 %v7714, %v7754
        %v7756 = vpop.f32.mrb[0].mxu0
        %v7757 = vadd.f32 %v7716, %v7756
        %v7758 = vpop.f32.mrb[0].mxu0
        %v7759 = vpop.f32.mrb[0].mxu0
        %7760 = vdwg.mxu0
        %7761 = vmatprep.subr.bf16.mxu0 0
        %7762 = vmatpush1.bf16.msra.mxu0 %v7073
        %7763 = vmatprep.subr.bf16.mxu0 0
        %7764 = vmatpush1.bf16.msra.mxu0 %v7080
        %7765 = vmatprep.subr.bf16.mxu0 0
        %7766 = vmatpush1.bf16.msra.mxu0 %v7087
        %7767 = vmatprep.subr.bf16.mxu0 0
        %7768 = vmatpush1.bf16.msra.mxu0 %v7094
        %7769 = vmatprep.subr.bf16.mxu0 0
        %7770 = vmatpush1.bf16.msra.mxu0 %v7101
        %7771 = vmatprep.subr.bf16.mxu0 0
        %7772 = vmatpush1.bf16.msra.mxu0 %v7108
        %7773 = vmatprep.subr.bf16.mxu0 0
        %7774 = vmatpush1.bf16.msra.mxu0 %v7115
        %7775 = vmatprep.subr.bf16.mxu0 0
        %7776 = vmatpush1.bf16.msra.mxu0 %v7122
        %7777 = vmatprep.subr.bf16.mxu0 0
        %7778 = vmatpush1.bf16.msra.mxu0 %v7129
        %7779 = vmatprep.subr.bf16.mxu0 0
        %7780 = vmatpush1.bf16.msra.mxu0 %v7136
        %7781 = vmatprep.subr.bf16.mxu0 0
        %7782 = vmatpush1.bf16.msra.mxu0 %v7143
        %7783 = vmatprep.subr.bf16.mxu0 0
        %7784 = vmatpush1.bf16.msra.mxu0 %v7150
        %7785 = vmatprep.subr.bf16.mxu0 0
        %7786 = vmatpush1.bf16.msra.mxu0 %v7157
        %7787 = vmatprep.subr.bf16.mxu0 0
        %7788 = vmatpush1.bf16.msra.mxu0 %v7164
        %7789 = vmatprep.subr.bf16.mxu0 0
        %7790 = vmatpush1.bf16.msra.mxu0 %v7171
        %7791 = vmatprep.subr.bf16.mxu0 0
        %7792 = vmatpush1.bf16.msra.mxu0 %v7178
        %7793 = vmatprep.mubr.bf16.mxu0 %v6076
        %7794 = vmatmul.mubr.bf16.gmra.mrb[0].mxu0 %v6075
        %v7795 = vpop.f32.mrb[0].mxu0
        %v7796 = vadd.f32 %v6362, %v7795
        %v7797 = vpop.f32.mrb[0].mxu0
        %v7798 = vpop.f32.mrb[0].mxu0
        %v7799 = vpop.f32.mrb[0].mxu0
        %7800 = vdwg.mxu0
        %7801 = vmatprep.subr.bf16.mxu0 0
        %7802 = vmatpush1.bf16.msra.mxu0 %v7185
        %7803 = vmatprep.subr.bf16.mxu0 0
        %7804 = vmatpush1.bf16.msra.mxu0 %v7192
        %7805 = vmatprep.subr.bf16.mxu0 0
        %7806 = vmatpush1.bf16.msra.mxu0 %v7199
        %7807 = vmatprep.subr.bf16.mxu0 0
        %7808 = vmatpush1.bf16.msra.mxu0 %v7206
        %7809 = vmatprep.subr.bf16.mxu0 0
        %7810 = vmatpush1.bf16.msra.mxu0 %v7213
        %7811 = vmatprep.subr.bf16.mxu0 0
        %7812 = vmatpush1.bf16.msra.mxu0 %v7220
        %7813 = vmatprep.subr.bf16.mxu0 0
        %7814 = vmatpush1.bf16.msra.mxu0 %v7227
        %7815 = vmatprep.subr.bf16.mxu0 0
        %7816 = vmatpush1.bf16.msra.mxu0 %v7234
        %7817 = vmatprep.subr.bf16.mxu0 0
        %7818 = vmatpush1.bf16.msra.mxu0 %v7241
        %7819 = vmatprep.subr.bf16.mxu0 0
        %7820 = vmatpush1.bf16.msra.mxu0 %v7248
        %7821 = vmatprep.subr.bf16.mxu0 0
        %7822 = vmatpush1.bf16.msra.mxu0 %v7255
        %7823 = vmatprep.subr.bf16.mxu0 0
        %7824 = vmatpush1.bf16.msra.mxu0 %v7262
        %7825 = vmatprep.subr.bf16.mxu0 0
        %7826 = vmatpush1.bf16.msra.mxu0 %v7269
        %7827 = vmatprep.subr.bf16.mxu0 0
        %7828 = vmatpush1.bf16.msra.mxu0 %v7276
        %7829 = vmatprep.subr.bf16.mxu0 0
        %7830 = vmatpush1.bf16.msra.mxu0 %v7283
        %7831 = vmatprep.subr.bf16.mxu0 0
        %7832 = vmatpush1.bf16.msra.mxu0 %v7290
        %7833 = vmatprep.mubr.bf16.mxu0 %v6078
        %7834 = vmatmul.mubr.bf16.gmra.mrb[0].mxu0 %v6077
        %v7835 = vpop.f32.mrb[0].mxu0
        %v7836 = vadd.f32 %v7796, %v7835
        %v7837 = vpop.f32.mrb[0].mxu0
        %v7838 = vpop.f32.mrb[0].mxu0
        %v7839 = vpop.f32.mrb[0].mxu0
        %7840 = vdwg.mxu0
        %v7841 = vand.u32 2147483647, %v7591
        %v7842 = vand.u32 2147483647, %v7593
        %v7843 = vand.u32 2147483647, %v7673
        %v7844 = vand.u32 2147483647, %v7675
        %v7845 = vand.u32 2147483647, %v7755
        %v7846 = vand.u32 2147483647, %v7757
        %v7847 = vand.u32 2147483647, %v7836
        %v7848 = vsub.f32 0.0, %v7841
        %v7849 = vsub.f32 0.0, %v7842
        %v7850 = vsub.f32 0.0, %v7843
        %v7851 = vsub.f32 0.0, %v7844
        %v7852 = vsub.f32 0.0, %v7845
        %v7853 = vsub.f32 0.0, %v7846
        %v7854 = vsub.f32 0.0, %v7847
        %v7855 = vmul.f32 %v7848, 1.442695
        %v7856 = vpow.pop %v7855
        %v7857 = vmul.f32 %v7849, 1.442695
        %v7858 = vpow.pop %v7857
        %v7859 = vmul.f32 %v7850, 1.442695
        %v7860 = vpow.pop %v7859
        %v7861 = vmul.f32 %v7851, 1.442695
        %v7862 = vpow.pop %v7861
        %v7863 = vmul.f32 %v7852, 1.442695
        %v7864 = vpow.pop %v7863
        %v7865 = vmul.f32 %v7853, 1.442695
        %v7866 = vpow.pop %v7865
        %v7867 = vmul.f32 %v7854, 1.442695
        %v7868 = vpow.pop %v7867
        %vm7869 = vcmp.ge.f32.partialorder %v7591, 0.0
        %vm7870 = vcmp.ge.f32.partialorder %v7593, 0.0
        %vm7871 = vcmp.ge.f32.partialorder %v7673, 0.0
        %vm7872 = vcmp.ge.f32.partialorder %v7675, 0.0
        %vm7873 = vcmp.ge.f32.partialorder %v7755, 0.0
        %vm7874 = vcmp.ge.f32.partialorder %v7757, 0.0
        %vm7875 = vcmp.ge.f32.partialorder %v7836, 0.0
        %v7876 = vsel %vm7869, 1.0, %v7856
        %v7877 = vsel %vm7870, 1.0, %v7858
        %v7878 = vsel %vm7871, 1.0, %v7860
        %v7879 = vsel %vm7872, 1.0, %v7862
        %v7880 = vsel %vm7873, 1.0, %v7864
        %v7881 = vsel %vm7874, 1.0, %v7866
        %v7882 = vsel %vm7875, 1.0, %v7868
        %v7883 = vadd.f32 %v7856, 1.0
        %v7884 = vadd.f32 %v7858, 1.0
        %v7885 = vadd.f32 %v7860, 1.0
        %v7886 = vadd.f32 %v7862, 1.0
        %v7887 = vadd.f32 %v7864, 1.0
        %v7888 = vadd.f32 %v7866, 1.0
        %v7889 = vadd.f32 %v7868, 1.0
        %v7890 = vrcp.pop %v7883
        %v7891 = vrcp.pop %v7884
        %v7892 = vrcp.pop %v7885
        %v7893 = vrcp.pop %v7886
        %v7894 = vrcp.pop %v7887
        %v7895 = vrcp.pop %v7888
        %v7896 = vrcp.pop %v7889
        %v7897 = vmul.f32 %v7876, %v7890
        %v7898 = vmul.f32 %v7877, %v7891
        %v7899 = vmul.f32 %v7878, %v7892
        %v7900 = vmul.f32 %v7879, %v7893
        %v7901 = vmul.f32 %v7880, %v7894
        %v7902 = vmul.f32 %v7881, %v7895
        %v7903 = vmul.f32 %v7882, %v7896
        %v7904 = vmax.f32 %v7897, 0.0
        %v7905 = vmax.f32 %v7898, 0.0
        %v7906 = vmax.f32 %v7899, 0.0
        %v7907 = vmax.f32 %v7900, 0.0
        %v7908 = vmax.f32 %v7901, 0.0
        %v7909 = vmax.f32 %v7902, 0.0
        %v7910 = vmax.f32 %v7903, 0.0
        %v7911 = vmin.f32 %v7904, 1.0
        %v7912 = vmin.f32 %v7905, 1.0
        %v7913 = vmin.f32 %v7906, 1.0
        %v7914 = vmin.f32 %v7907, 1.0
        %v7915 = vmin.f32 %v7908, 1.0
        %v7916 = vmin.f32 %v7909, 1.0
        %v7917 = vmin.f32 %v7910, 1.0
        %v7918 = vsub.f32 %v7911, %v5935
        %v7919 = vsub.f32 %v7912, %v5936
        %v7920 = vsub.f32 %v7913, %v5937
        %v7921 = vsub.f32 %v7914, %v5938
        %v7922 = vsub.f32 %v7915, %v5939
        %v7923 = vsub.f32 %v7916, %v5940
        %v7924 = vsub.f32 %v7917, %v5941
        %v7925 = vand.u32 2147483647, %v7918
        %v7926 = vand.u32 2147483647, %v7919
        %v7927 = vand.u32 2147483647, %v7920
        %v7928 = vand.u32 2147483647, %v7921
        %v7929 = vand.u32 2147483647, %v7922
        %v7930 = vand.u32 2147483647, %v7923
        %v7931 = vand.u32 2147483647, %v7924
        %v7932 = vsub.f32 1.0, %v7925
        %v7933 = vsub.f32 1.0, %v7926
        %v7934 = vsub.f32 1.0, %v7927
        %v7935 = vsub.f32 1.0, %v7928
        %v7936 = vsub.f32 1.0, %v7929
        %v7937 = vsub.f32 1.0, %v7930
        %v7938 = vsub.f32 1.0, %v7931
        %v7939 = vadd.f32 %v7932, 1e-08
        %v7940 = vadd.f32 %v7933, 1e-08
        %v7941 = vadd.f32 %v7934, 1e-08
        %v7942 = vadd.f32 %v7935, 1e-08
        %v7943 = vadd.f32 %v7936, 1e-08
        %v7944 = vadd.f32 %v7937, 1e-08
        %v7945 = vadd.f32 %v7938, 1e-08
        %v7946 = vlog2.pop %v7939
        %v7947 = vmul.f32 %v7946, 0.6931472
        %v7948 = vlog2.pop %v7940
        %v7949 = vmul.f32 %v7948, 0.6931472
        %v7950 = vlog2.pop %v7941
        %v7951 = vmul.f32 %v7950, 0.6931472
        %v7952 = vlog2.pop %v7942
        %v7953 = vmul.f32 %v7952, 0.6931472
        %v7954 = vlog2.pop %v7943
        %v7955 = vmul.f32 %v7954, 0.6931472
        %v7956 = vlog2.pop %v7944
        %v7957 = vmul.f32 %v7956, 0.6931472
        %v7958 = vlog2.pop %v7945
        %v7959 = vmul.f32 %v7958, 0.6931472
        %v7960 = vadd.f32 %v7947, %v7949
        %v7961 = vadd.f32 %v7960, %v7951
        %v7962 = vadd.f32 %v7961, %v7953
        %v7963 = vadd.f32 %v7962, %v7955
        %v7964 = vadd.f32 %v7963, %v7957
        %v7965 = vsel %vm2651, %v7959, 0.0
        %v7966 = vadd.f32 %v7964, %v7965
        %7967 = vadd.xlane.f32.xlu0 %v7966
        %v7968 = vpop.xlane.xlu0 %7967
        %v7969 = vmul.f32 %v4011, %v4011
        %v7970 = vmul.f32 %v3998, %v3998
        %7972 = vrot.lane.b32.xlu0 %v7970, 2
        %v7973 = vpop.permute.xlu0 %7972
        %v7975 = vadd.f32 %v7969, %v7973
        %v7976 = vsub.f32 %v7975, 1.0
        %v7977 = vadd.f32 %v7969, 1e-08
        %v7978 = vlog2.pop %v7977
        %v7979 = vmul.f32 %v7978, 0.6931472
        %v7980 = vsub.f32 %v7976, %v7979
        %v7981 = vmul.f32 %v7980, 0.5
        %7983 = vrot.lane.b32.xlu0 %v7981, 126
        %v7984 = vpop.permute.xlu0 %7983
        %vm7986 = vcmask 15360
        %v7987 = vsel %vm7986, %v7984, 0.0
        %7988 = vadd.xlane.f32.xlu0 %v7987
        %v7989 = vpop.xlane.xlu0 %7988
        %v7990 = vsub.f32 %v7989, %v7968
        %v7991 = vsub.f32 %v7990, %v5992
        %v7992 = vld [vmem:[#allocation2] sm:$0x1]
        %v7993 = vrot.slane %v7991, 4
        %v7994 = vadd.f32 %v7991, %v7993
        %v7995 = vrot.slane %v7994, 2
        %v7996 = vadd.f32 %v7994, %v7995
        %v7997 = vrot.slane %v7996, 1
        %v7998 = vadd.f32 %v7996, %v7997
        %v7999 = vadd.f32 %v7992, %v7998
        %vm8000 = vcmask 0
        %8001 = vst.msk [vmem:[#allocation2] sm:$0x1] %vm8000, %v7999
        // Predicated region
        $region49: #{vae_forward.1} parent=43 // pred_check
          %p8002 = pneg %p162
        $region50: #{vae_forward.1} parent=43 // pred_check_branch
          %8004 = sbr.rel (%p8002) target = $region52
        $region51: #{vae_forward.1} parent=43 // pred_region
          %s8006 = ssub.s32 16, 16
          %8007 = vsyncadd [#allocation3], %s8006
          %s8009 = sshll.u32 [#allocation2], 4
          %s8010 = int_to_ptr.vmem [resolvable:$true] %s8009
          %8012 = dma.vmem_to_hbm [thread:$0]  %s8010, 16, %s6, [#allocation3]
        $region52: #{vae_forward.1} parent=43 // pred_fallthru
          _
        // Predicated region
        $region53: #{vae_forward.1} parent=43 // pred_check
          %p8013 = pneg %p162
        $region54: #{vae_forward.1} parent=43 // pred_check_branch
          %8015 = sbr.rel (%p8013) target = $region56
        $region55: #{vae_forward.1} parent=43 // pred_region
          %8016 = dma.done [#allocation3], 16
        $region56: #{vae_forward.1} parent=43 // pred_fallthru
          _
      $region44: #{vae_forward.1} parent=5 // pred_fallthru
        _
      %p8017 = scmp.le.s32.totalorder 2, %s13
      // Predicated region
      $region57: #{vae_forward.1} parent=5 // pred_check
        %p8018 = pneg %p8017
      $region58: #{vae_forward.1} parent=5 // pred_check_branch
        %8020 = sbr.rel (%p8018) target = $region60
      $region59: #{vae_forward.1} parent=5 // pred_region
        %s8021 = ssub.s32 %s13, 2
      $region60: #{vae_forward.1} parent=5 // pred_fallthru
        _
    $region6: #{vae_forward.1} parent=1 // loop_footer
      %s17 = sadd.s32 1, %s13
    $region7: #{vae_forward.1} parent=1 // loop_footer_branch
      %12 = sbr.rel target = $region3
    $region8: #{vae_forward.1} parent=1 // loop_exit
      _
    %8022 = vsyncpa [#allocation3], 1
    %s8023 = scalar_lea.sflag [#allocation3], 1
    %8024 = vsyncpa %s8023, 1

</llo_original>
